<compile_context>
chip_gen: v7x
topology: tpu7x:2x2x1
jax: 0.10.0
libtpu: 0.0.40
codegen_flags: <defaults>
</compile_context>

<pallas_src>
import math
import functools

import jax
import jax.numpy as jnp
from jax.experimental import pallas as pl
from jax.experimental.pallas import tpu as pltpu

# ---- constants from the PyTorch module ----
N1 = 320
N2 = 320
Nc = 16
FACTOR = 8
RESO = 5
SNR = 2
SIGMA = 0.12 * math.sqrt(8) / SNR


def sample_kernel(row_ref, ks_ref, nz_ref, out_ref, *, n1, r0, r1):
    """out = (mask > 0) * kspace + mask * (sigma * noise).

    row_ref : (1, 2*N2)  sigma-folded inv_sqrt(weight) row (zeros outside the
              inner column window, real/imag interleaved)
    ks_ref  : (BB, N1, 2*N2) kspace slab
    nz_ref  : (BB, N1, 2*N2) standard-normal noise slab
    """
    rows = jax.lax.broadcasted_iota(jnp.int32, (n1, 1), 0)
    inside = (rows >= r0) & (rows < r1)                    # (N1, 1)
    m = jnp.where(inside, row_ref[...], 0.0)               # (N1, 2*N2)
    m = m[None]                                            # (1, N1, 2*N2) -> bcast over BB
    out_ref[...] = jnp.where(m > 0.0, ks_ref[...], 0.0) + m * nz_ref[...]


def sample_forward(kspace, noise_std, weight, sigma=SIGMA):
    """JAX/Pallas equivalent of Sample.forward.

    kspace:    (B, Nc, N1, N2, 2) float32
    noise_std: (B, Nc, N1, N2, 2) float32 standard-normal draws (randn_like)
    weight:    (N2 - 32*reso,)    float32 (the module's self.weight)
    """
    B, C, n1, n2, two = kspace.shape
    assert two == 2

    # --- tiny parameter glue in plain JAX (not the hot path) ---
    inv_sqrt_w = 1.0 / jnp.sqrt(weight)                            # (n2 - 32*reso,)
    row = jnp.zeros((n2,), jnp.float32)
    row = row.at[16 * RESO:n2 - 16 * RESO].set(inv_sqrt_w)
    # interleave real/imag columns to match the (N1, 2*N2) flattening of kspace
    # and fold sigma in once (sigma > 0, so the >0 gate is unchanged).
    row_sigma = (float(sigma) * jnp.broadcast_to(row[:, None], (n2, 2))
                 ).reshape(1, 2 * n2)

    ks = kspace.reshape(B * C, n1, 2 * n2)
    nz = noise_std.reshape(B * C, n1, 2 * n2)

    bc = B * C
    # Batch-axis block size: 4 where possible (8 grid steps for B=2, Nc=16),
    # which keeps per-stream tiles at ~3.1 MiB and splits evenly over v7x's
    # two TensorCores via the "parallel" grid axis.
    BB = next(bb for bb in (4, 2, 1) if bc % bb == 0)

    total_elems = bc * n1 * 2 * n2
    cost = pl.CostEstimate(
        flops=4 * total_elems,
        transcendentals=0,
        bytes_accessed=3 * total_elems * 4 + 2 * n2 * 4,
    )

    out = pl.pallas_call(
        functools.partial(sample_kernel, n1=n1,
                          r0=16 * RESO, r1=n1 - 16 * RESO),
        out_shape=jax.ShapeDtypeStruct((bc, n1, 2 * n2), kspace.dtype),
        grid_spec=pltpu.PrefetchScalarGridSpec(
            num_scalar_prefetch=0,
            grid=(bc // BB,),
            in_specs=[
                pl.BlockSpec((1, 2 * n2), lambda b: (0, 0)),          # mask row (bcast)
                pl.BlockSpec((BB, n1, 2 * n2), lambda b: (b, 0, 0)),  # kspace slab
                pl.BlockSpec((BB, n1, 2 * n2), lambda b: (b, 0, 0)),  # noise slab
            ],
            out_specs=pl.BlockSpec((BB, n1, 2 * n2), lambda b: (b, 0, 0)),
        ),
        compiler_params=pltpu.CompilerParams(
            dimension_semantics=("parallel",),
            # 3 streams x 2 buffers x ~3.1 MiB ≈ 19 MiB; raise above v5e's
            # 16 MiB default scoped VMEM (safe on v6e/v7x as well).
            vmem_limit_bytes=32 * 1024 * 1024,
        ),
        cost_estimate=cost,
    )(row_sigma, ks, nz)

    return out.reshape(B, C, n1, n2, 2)


def sample_forward_ref(kspace, noise_std, weight, sigma=SIGMA):
    """Pure-JAX reference mirroring the PyTorch forward, for verification."""
    B, C, n1, n2, _ = kspace.shape
    inv_sqrt_w = 1.0 / jnp.sqrt(weight)
    inner = jnp.broadcast_to(inv_sqrt_w[None, :],
                             (n1 - 32 * RESO, n2 - 32 * RESO))
    mask = jnp.zeros((n1, n2), jnp.float32)
    mask = mask.at[16 * RESO:n1 - 16 * RESO,
                   16 * RESO:n2 - 16 * RESO].set(inner)
    mask = mask[None, None, :, :, None]                     # (1,1,N1,N2,1)
    mask = jnp.broadcast_to(mask, (B, C, n1, n2, 2))
    noise = sigma * noise_std
    return jnp.where(mask > 0, kspace, 0.0) + mask * noise


if __name__ == "__main__":
    key = jax.random.PRNGKey(0)
    k1, k2 = jax.random.split(key)

    B = 2  # small batch; Nc/N1/N2 are fixed by the module definition
    kspace = jax.random.normal(k1, (B, Nc, N1, N2, 2), dtype=jnp.float32)
    # noise = sigma * randn_like(kspace): pass the standard-normal part,
    # sigma scaling is folded into the mask row inside the wrapper/kernel.
    noise_std = jax.random.normal(k2, (B, Nc, N1, N2, 2), dtype=jnp.float32)

    # self.weight = factor * N1/(N1-32*reso) * N2/(N2-32*reso) * ones(N2-32*reso)
    weight = (FACTOR * N1 / (N1 - 32 * RESO) * N2 / (N2 - 32 * RESO)
              * jnp.ones((N2 - 32 * RESO,), jnp.float32))

    out = sample_forward(kspace, noise_std, weight)
    out = jax.block_until_ready(out)

    ref = sample_forward_ref(kspace, noise_std, weight)
    ref = jax.block_until_ready(ref)

    assert out.shape == (B, Nc, N1, N2, 2)
    assert jnp.max(jnp.abs(out - ref)) < 1e-5

    print("KERNEL_OK")
</pallas_src>

<mosaic_0001>
module attributes {stable_mosaic.version = 11 : i64} {
  func.func @sample_kernel(%arg0: i32, %arg1: memref<1x640xf32, #tpu.memory_space<vmem>>, %arg2: memref<4x320x640xf32, #tpu.memory_space<vmem>>, %arg3: memref<4x320x640xf32, #tpu.memory_space<vmem>>, %arg4: memref<4x320x640xf32, #tpu.memory_space<vmem>>) attributes {dimension_semantics = [#tpu.dimension_semantics<parallel>], iteration_bounds = array<i64: 8>, scalar_prefetch = 0 : i64, scratch_operands = 0 : i64, tpu.core_type = #tpu.core_type<tc>, window_params = [{pipeline_mode = #tpu.pipeline_mode<synchronous>, transform_indices = @transform_0, window_bounds = array<i64: 1, 640>}, {transform_indices = @transform_1, window_bounds = array<i64: 4, 320, 640>}, {transform_indices = @transform_2, window_bounds = array<i64: 4, 320, 640>}, {transform_indices = @transform_3, window_bounds = array<i64: 4, 320, 640>}]} {
    %0 = tpu.iota {dimensions = array<i32: 0>} : vector<320x1xi32>
    %c80_i32 = arith.constant 80 : i32
    %1 = vector.broadcast %c80_i32 : i32 to vector<320x1xi32>
    %2 = arith.cmpi sge, %0, %1 : vector<320x1xi32>
    %c240_i32 = arith.constant 240 : i32
    %3 = vector.broadcast %c240_i32 : i32 to vector<320x1xi32>
    %4 = arith.cmpi slt, %0, %3 : vector<320x1xi32>
    %5 = arith.andi %2, %4 : vector<320x1xi1>
    %c0 = arith.constant 0 : index
    %c0_0 = arith.constant 0 : index
    %6 = vector.load %arg1[%c0, %c0_0] : memref<1x640xf32, #tpu.memory_space<vmem>>, vector<1x640xf32>
    %cst = arith.constant 0.000000e+00 : f32
    %7 = vector.shape_cast %5 : vector<320x1xi1> to vector<320x1xi1>
    %8 = vector.broadcast %7 : vector<320x1xi1> to vector<320x640xi1>
    %9 = vector.shape_cast %6 : vector<1x640xf32> to vector<1x640xf32>
    %10 = vector.broadcast %9 : vector<1x640xf32> to vector<320x640xf32>
    %11 = vector.broadcast %cst : f32 to vector<320x640xf32>
    %12 = arith.select %8, %10, %11 : vector<320x640xi1>, vector<320x640xf32>
    %13 = vector.shape_cast %12 : vector<320x640xf32> to vector<1x320x640xf32>
    %cst_1 = arith.constant 0.000000e+00 : f32
    %14 = vector.broadcast %cst_1 : f32 to vector<1x320x640xf32>
    %15 = arith.cmpf ogt, %13, %14 : vector<1x320x640xf32>
    %c0_2 = arith.constant 0 : index
    %c0_3 = arith.constant 0 : index
    %c0_4 = arith.constant 0 : index
    %16 = vector.load %arg2[%c0_2, %c0_3, %c0_4] : memref<4x320x640xf32, #tpu.memory_space<vmem>>, vector<4x320x640xf32>
    %cst_5 = arith.constant 0.000000e+00 : f32
    %17 = vector.shape_cast %15 : vector<1x320x640xi1> to vector<1x320x640xi1>
    %18 = vector.broadcast %17 : vector<1x320x640xi1> to vector<4x320x640xi1>
    %19 = vector.broadcast %cst_5 : f32 to vector<4x320x640xf32>
    %20 = arith.select %18, %16, %19 : vector<4x320x640xi1>, vector<4x320x640xf32>
    %c0_6 = arith.constant 0 : index
    %c0_7 = arith.constant 0 : index
    %c0_8 = arith.constant 0 : index
    %21 = vector.load %arg3[%c0_6, %c0_7, %c0_8] : memref<4x320x640xf32, #tpu.memory_space<vmem>>, vector<4x320x640xf32>
    %22 = vector.broadcast %13 : vector<1x320x640xf32> to vector<4x320x640xf32>
    %23 = arith.mulf %22, %21 : vector<4x320x640xf32>
    %24 = arith.addf %20, %23 : vector<4x320x640xf32>
    %c0_9 = arith.constant 0 : index
    %c0_10 = arith.constant 0 : index
    %c0_11 = arith.constant 0 : index
    %25 = vector.load %arg4[%c0_9, %c0_10, %c0_11] : memref<4x320x640xf32, #tpu.memory_space<vmem>>, vector<4x320x640xf32>
    tpu.vector_store %arg4[%c0_9, %c0_10, %c0_11], %24 {strides = array<i32>} : memref<4x320x640xf32, #tpu.memory_space<vmem>>, vector<4x320x640xf32>,
    return
  }
  func.func @transform_0(%arg0: i32) -> (i32, i32) {
    %c0_i32 = arith.constant 0 : i32
    %c0_i32_0 = arith.constant 0 : i32
    %c0_i32_1 = arith.constant 0 : i32
    return %c0_i32, %c0_i32_0 : i32, i32
  }
  func.func @transform_1(%arg0: i32) -> (i32, i32, i32) {
    %c0_i32 = arith.constant 0 : i32
    %c0_i32_0 = arith.constant 0 : i32
    %c0_i32_1 = arith.constant 0 : i32
    return %arg0, %c0_i32, %c0_i32_0 : i32, i32, i32
  }
  func.func @transform_2(%arg0: i32) -> (i32, i32, i32) {
    %c0_i32 = arith.constant 0 : i32
    %c0_i32_0 = arith.constant 0 : i32
    %c0_i32_1 = arith.constant 0 : i32
    return %arg0, %c0_i32, %c0_i32_0 : i32, i32, i32
  }
  func.func @transform_3(%arg0: i32) -> (i32, i32, i32) {
    %c0_i32 = arith.constant 0 : i32
    %c0_i32_0 = arith.constant 0 : i32
    %c0_i32_1 = arith.constant 0 : i32
    return %arg0, %c0_i32, %c0_i32_0 : i32, i32, i32
  }
}

</mosaic_0001>

<llo_original>
// kernel: tpu_custom_call.1
$region0: #{tpu_custom_call.1}
  #allocation0 [shape = 'u32[]', space=smem, size = 0x4, offset = 0x4, fixed_abs, tag = 'smem constant byte address 0x4 - core index']
  #allocation1 [shape = 'u32[144,128]{1,0:T(1,128)}', space=vmem, size = 0x12000, scoped, tag = 'internal scratch']
  %s0 = inlined_call_operand.hbm [shape: f32[1,640], index: 0, kind: input, shape index: {}]
  %s1 = inlined_call_operand.hbm [shape: f32[32,320,640], index: 1, kind: input, shape index: {}]
  %s2 = inlined_call_operand.hbm [shape: f32[32,320,640], index: 2, kind: input, shape index: {}]
  %s3 = inlined_call_operand.hbm [shape: f32[32,320,640], index: 3, kind: output, shape index: {}]
  %s4 = sld [smem:[#allocation0]]
  $region57: #{tpu_custom_call.1} parent=0
    _
  %s6 = ssub.s32 1, %s4
  %s7 = scalar_select 0, %s6, %s4
  $region1: #{tpu_custom_call.1} parent=0
    #allocation2 [shape = 'u8[2560]{0}', space=vmem, size = 0xc00, scoped, tag = 'input window, operand 0, single buffered']
    #allocation3 [shape = 's32[2]{0}', space=sflag, size = 0x8, scoped, tag = 'scoped memory for tpu_custom_call.1']
    #allocation4 [shape = 's32[2]{0}', space=sflag, size = 0x8, scoped, tag = 'scoped memory for tpu_custom_call.1']
    #allocation5 [shape = 'u8[6553600]{0}', space=vmem, size = 0x640000, scoped, tag = 'input window, operand 1']
    #allocation6 [shape = 's32[2]{0}', space=sflag, size = 0x8, scoped, tag = 'scoped memory for tpu_custom_call.1']
    #allocation7 [shape = 'u8[6553600]{0}', space=vmem, size = 0x640000, scoped, tag = 'input window, operand 2']
    #allocation8 [shape = 'u8[6553600]{0}', space=vmem, size = 0x640000, scoped, tag = 'output window, operand 0']
    %8 = vsyncpa [#allocation3], 0
    %9 = vsyncpa [#allocation6], 0
    %s10 = scalar_lea.sflag [#allocation6], 1
    %11 = vsyncpa %s10, 0
    %12 = vsyncpa [#allocation4], 0
    %s13 = scalar_lea.sflag [#allocation4], 1
    %14 = vsyncpa %s13, 0
    loop: start=0, step=1, limit=10
    $region2: #{tpu_custom_call.1} parent=1 // loop_pre_header
      _
    $region3: #{tpu_custom_call.1} parent=1 // loop_header
      %s16 = sphi 0, %s20
      %p17 = scmp.ge.s32.totalorder %s16, 10
      %s24 = sphi 0, %s24
      %s26 = sphi 0, %s24
      %s27 = sphi 0, %s26
      %s41 = sphi 0, %s27
      %s47 = sphi 0, %s49
      %s50 = sphi 0, %s47
      %s51 = sphi 0, %s50
      %s67 = sphi 0, %s51
      %s73 = sphi 0, %s75
      %s76 = sphi 0, %s73
      %s77 = sphi 0, %s76
      %s93 = sphi 0, %s77
      %s99 = sphi 0, %s101
      %s102 = sphi 0, %s99
      %s103 = sphi 0, %s102
      %s119 = sphi 0, %s103
    $region4: #{tpu_custom_call.1} parent=1 // loop_header_branch
      %19 = sbr.rel (%p17) target = $region8
    $region5: #{tpu_custom_call.1} parent=1 // loop_body
      %s21 = ssub.s32 %s16, 1
      %s22 = ssub.s32 %s16, 2
      %s23 = sadd.s32 %s16, 1
      %s25 = sadd.s32 %s24, 1
      %p28 = scmp.eq.s32.totalorder %s16, 7
      %p29 = scmp.ne.s32.totalorder %s24, %s26
      %p30 = scmp.eq.s32.totalorder %s16, 0
      %p31 = por %p29, %p30
      %p32 = scmp.ne.s32.totalorder %s24, %s26
      %p33 = scmp.eq.s32.totalorder %s21, 7
      %p34 = por %p32, %p33
      %p35 = scmp.ne.s32.totalorder %s26, %s27
      %p36 = scmp.eq.s32.totalorder %s21, 0
      %p37 = por %p35, %p36
      %p38 = scmp.ne.s32.totalorder %s26, %s27
      %p39 = scmp.eq.s32.totalorder %s22, 7
      %p40 = por %p38, %p39
      %p42 = scmp.ne.s32.totalorder %s27, %s41
      %p43 = scmp.eq.s32.totalorder %s22, 0
      %p44 = por %p42, %p43
      %s45 = ssub.s32 %s16, %s23
      %p46 = scmp.eq.s32.totalorder %s45, 0
      %s48 = sadd.s32 %s47, 1
      %s49 = scalar_select %p46, %s47, %s48
      %p52 = pneg %p46
      %p53 = scmp.eq.s32.totalorder %s16, 7
      %p54 = por %p52, %p53
      %p55 = scmp.ne.s32.totalorder %s47, %s50
      %p56 = scmp.eq.s32.totalorder %s16, 0
      %p57 = por %p55, %p56
      %p58 = scmp.ne.s32.totalorder %s47, %s50
      %p59 = scmp.eq.s32.totalorder %s21, 7
      %p60 = por %p58, %p59
      %p61 = scmp.ne.s32.totalorder %s50, %s51
      %p62 = scmp.eq.s32.totalorder %s21, 0
      %p63 = por %p61, %p62
      %p64 = scmp.ne.s32.totalorder %s50, %s51
      %p65 = scmp.eq.s32.totalorder %s22, 7
      %p66 = por %p64, %p65
      %p68 = scmp.ne.s32.totalorder %s51, %s67
      %p69 = scmp.eq.s32.totalorder %s22, 0
      %p70 = por %p68, %p69
      %s71 = ssub.s32 %s16, %s23
      %p72 = scmp.eq.s32.totalorder %s71, 0
      %s74 = sadd.s32 %s73, 1
      %s75 = scalar_select %p72, %s73, %s74
      %p78 = pneg %p72
      %p79 = scmp.eq.s32.totalorder %s16, 7
      %p80 = por %p78, %p79
      %p81 = scmp.ne.s32.totalorder %s73, %s76
      %p82 = scmp.eq.s32.totalorder %s16, 0
      %p83 = por %p81, %p82
      %p84 = scmp.ne.s32.totalorder %s73, %s76
      %p85 = scmp.eq.s32.totalorder %s21, 7
      %p86 = por %p84, %p85
      %p87 = scmp.ne.s32.totalorder %s76, %s77
      %p88 = scmp.eq.s32.totalorder %s21, 0
      %p89 = por %p87, %p88
      %p90 = scmp.ne.s32.totalorder %s76, %s77
      %p91 = scmp.eq.s32.totalorder %s22, 7
      %p92 = por %p90, %p91
      %p94 = scmp.ne.s32.totalorder %s77, %s93
      %p95 = scmp.eq.s32.totalorder %s22, 0
      %p96 = por %p94, %p95
      %s97 = ssub.s32 %s16, %s23
      %p98 = scmp.eq.s32.totalorder %s97, 0
      %s100 = sadd.s32 %s99, 1
      %s101 = scalar_select %p98, %s99, %s100
      %p104 = pneg %p98
      %p105 = scmp.eq.s32.totalorder %s16, 7
      %p106 = por %p104, %p105
      %p107 = scmp.ne.s32.totalorder %s99, %s102
      %p108 = scmp.eq.s32.totalorder %s16, 0
      %p109 = por %p107, %p108
      %p110 = scmp.ne.s32.totalorder %s99, %s102
      %p111 = scmp.eq.s32.totalorder %s21, 7
      %p112 = por %p110, %p111
      %p113 = scmp.ne.s32.totalorder %s102, %s103
      %p114 = scmp.eq.s32.totalorder %s21, 0
      %p115 = por %p113, %p114
      %p116 = scmp.ne.s32.totalorder %s102, %s103
      %p117 = scmp.eq.s32.totalorder %s22, 7
      %p118 = por %p116, %p117
      %p120 = scmp.ne.s32.totalorder %s103, %s119
      %p121 = scmp.eq.s32.totalorder %s22, 0
      %p122 = por %p120, %p121
      %p123 = scmp.le.s32.totalorder 1, %s16
      %p124 = scmp.lt.s32.totalorder %s16, 9
      %p125 = pnand %p123, %p124
      %p126 = pneg %p125
      // Predicated region
      $region9: #{tpu_custom_call.1} parent=5 // pred_check
        _
      $region10: #{tpu_custom_call.1} parent=5 // pred_check_branch
        %128 = sbr.rel (%p125) target = $region12
      $region11: #{tpu_custom_call.1} parent=5 // pred_region
        %s129 = ssub.s32 %s16, 1
        // Predicated region
        $region13: #{tpu_custom_call.1} parent=11 // pred_check
          %p130 = pneg %p37
        $region14: #{tpu_custom_call.1} parent=11 // pred_check_branch
          %132 = sbr.rel (%p130) target = $region16
        $region15: #{tpu_custom_call.1} parent=11 // pred_region
          %s134 = ssub.s32 80, 80
          %135 = vsyncadd [#allocation3], %s134
          %s137 = sshll.u32 [#allocation2], 4
          %s138 = int_to_ptr.vmem [resolvable:$true] %s137
          %140 = dma.hbm_to_vmem [thread:$0]  %s0, 80, %s138, [#allocation3]
        $region16: #{tpu_custom_call.1} parent=11 // pred_fallthru
          _
      $region12: #{tpu_custom_call.1} parent=5 // pred_fallthru
        _
      %p141 = scmp.lt.s32.totalorder %s16, 8
      // Predicated region
      $region17: #{tpu_custom_call.1} parent=5 // pred_check
        %p142 = pneg %p141
      $region18: #{tpu_custom_call.1} parent=5 // pred_check_branch
        %144 = sbr.rel (%p142) target = $region20
      $region19: #{tpu_custom_call.1} parent=5 // pred_region
        // Predicated region
        $region21: #{tpu_custom_call.1} parent=19 // pred_check
          %p145 = pneg %p57
        $region22: #{tpu_custom_call.1} parent=19 // pred_check_branch
          %147 = sbr.rel (%p145) target = $region24
        $region23: #{tpu_custom_call.1} parent=19 // pred_region
          %s148 = sand.u32 %s16, 1
          %s149 = scalar_lea.sflag [#allocation6], %s148
          %s150 = sand.u32 %s47, 1
          %s151 = smul.addr %s150, 6400
          %s152 = scalar_lea.vmem [#allocation5], %s151
          %s153 = smul.u32 4, %s16
          %s155 = ssub.s32 102400, 102400
          %156 = vsyncadd %s149, %s155
          %s157 = smul.addr %s153, 200
          %s158 = smul.addr %s157, 128
          %s159 = scalar_lea.hbm %s1, %s158
          %s160 = sshll.u32 %s152, 4
          %s161 = int_to_ptr.vmem [resolvable:$true] %s160
          %166 = dma.hbm_to_vmem [thread:$0]  %s159, 102400, %s161, %s149, 640, 640, 40
        $region24: #{tpu_custom_call.1} parent=19 // pred_fallthru
          _
        // Predicated region
        $region25: #{tpu_custom_call.1} parent=19 // pred_check
          %p167 = pneg %p83
        $region26: #{tpu_custom_call.1} parent=19 // pred_check_branch
          %169 = sbr.rel (%p167) target = $region28
        $region27: #{tpu_custom_call.1} parent=19 // pred_region
          %s170 = sand.u32 %s16, 1
          %s171 = scalar_lea.sflag [#allocation6], %s170
          %s172 = sand.u32 %s73, 1
          %s173 = smul.addr %s172, 6400
          %s174 = scalar_lea.vmem [#allocation7], %s173
          %s175 = smul.u32 4, %s16
          %s177 = ssub.s32 102400, 102400
          %178 = vsyncadd %s171, %s177
          %s179 = smul.addr %s175, 200
          %s180 = smul.addr %s179, 128
          %s181 = scalar_lea.hbm %s2, %s180
          %s182 = sshll.u32 %s174, 4
          %s183 = int_to_ptr.vmem [resolvable:$true] %s182
          %188 = dma.hbm_to_vmem [thread:$0]  %s181, 102400, %s183, %s171, 640, 640, 40
        $region28: #{tpu_custom_call.1} parent=19 // pred_fallthru
          _
      $region20: #{tpu_custom_call.1} parent=5 // pred_fallthru
        _
      %p189 = scmp.le.s32.totalorder 1, %s16
      %p190 = scmp.lt.s32.totalorder %s16, 9
      %p191 = pnand %p189, %p190
      %p192 = pneg %p191
      // Predicated region
      $region29: #{tpu_custom_call.1} parent=5 // pred_check
        _
      $region30: #{tpu_custom_call.1} parent=5 // pred_check_branch
        %194 = sbr.rel (%p191) target = $region32
      $region31: #{tpu_custom_call.1} parent=5 // pred_region
        %s195 = ssub.s32 %s16, 1
        // Predicated region
        $region33: #{tpu_custom_call.1} parent=31 // pred_check
          %p196 = pneg %p37
        $region34: #{tpu_custom_call.1} parent=31 // pred_check_branch
          %198 = sbr.rel (%p196) target = $region36
        $region35: #{tpu_custom_call.1} parent=31 // pred_region
          %199 = dma.done [#allocation3], 80
        $region36: #{tpu_custom_call.1} parent=31 // pred_fallthru
          _
        %s200 = sand.u32 %s21, 1
        %s201 = scalar_lea.sflag [#allocation6], %s200
        %s202 = sand.u32 %s50, 1
        %s203 = smul.addr %s202, 6400
        %s204 = scalar_lea.vmem [#allocation5], %s203
        // Predicated region
        $region37: #{tpu_custom_call.1} parent=31 // pred_check
          %p205 = pneg %p63
        $region38: #{tpu_custom_call.1} parent=31 // pred_check_branch
          %207 = sbr.rel (%p205) target = $region40
        $region39: #{tpu_custom_call.1} parent=31 // pred_region
          %208 = dma.done %s201, 102400
        $region40: #{tpu_custom_call.1} parent=31 // pred_fallthru
          _
        %s209 = sand.u32 %s21, 1
        %s210 = scalar_lea.sflag [#allocation6], %s209
        %s211 = sand.u32 %s76, 1
        %s212 = smul.addr %s211, 6400
        %s213 = scalar_lea.vmem [#allocation7], %s212
        // Predicated region
        $region41: #{tpu_custom_call.1} parent=31 // pred_check
          %p214 = pneg %p89
        $region42: #{tpu_custom_call.1} parent=31 // pred_check_branch
          %216 = sbr.rel (%p214) target = $region44
        $region43: #{tpu_custom_call.1} parent=31 // pred_region
          %217 = dma.done %s210, 102400
        $region44: #{tpu_custom_call.1} parent=31 // pred_fallthru
          _
        %p218 = pneg %p37
        %p219 = pneg %p34
        %s220 = sand.u32 %s21, 1
        %s221 = scalar_lea.sflag [#allocation6], %s220
        %s222 = sand.u32 %s50, 1
        %s223 = smul.addr %s222, 6400
        %s224 = scalar_lea.vmem [#allocation5], %s223
        %p225 = pneg %p63
        %p226 = pneg %p60
        %s227 = sand.u32 %s21, 1
        %s228 = scalar_lea.sflag [#allocation6], %s227
        %s229 = sand.u32 %s76, 1
        %s230 = smul.addr %s229, 6400
        %s231 = scalar_lea.vmem [#allocation7], %s230
        %p232 = pneg %p89
        %p233 = pneg %p86
        %p234 = pneg %p115
        %p235 = pneg %p112
        %s236 = sand.u32 %s102, 1
        %s237 = scalar_lea.sflag [#allocation4], %s236
        %s238 = sand.u32 %s102, 1
        %s239 = smul.addr %s238, 6400
        %s240 = scalar_lea.vmem [#allocation8], %s239
        %s241 = smul.u32 4, %s21
        %s242 = smul.u32 4, %s21
        %s243 = smul.u32 4, %s21
        %v244 = vlaneseq
        %v245 = vshrl.u32 %v244, 7
        %v246 = vadd.s32 %v245, 8
        %v247 = vadd.s32 %v245, 16
        %v248 = vadd.s32 %v245, 24
        %v249 = vadd.s32 %v245, 32
        %v250 = vadd.s32 %v245, 40
        %v251 = vadd.s32 %v245, 48
        %v252 = vadd.s32 %v245, 56
        %v253 = vadd.s32 %v245, 64
        %v254 = vadd.s32 %v245, 72
        %v255 = vadd.s32 %v245, 80
        %v256 = vadd.s32 %v245, 88
        %v257 = vadd.s32 %v245, 96
        %v258 = vadd.s32 %v245, 104
        %v259 = vadd.s32 %v245, 112
        %v260 = vadd.s32 %v245, 120
        %v261 = vadd.s32 %v245, 128
        %v262 = vadd.s32 %v245, 136
        %v263 = vadd.s32 %v245, 144
        %v264 = vadd.s32 %v245, 152
        %v265 = vadd.s32 %v245, 160
        %v266 = vadd.s32 %v245, 168
        %v267 = vadd.s32 %v245, 176
        %v268 = vadd.s32 %v245, 184
        %v269 = vadd.s32 %v245, 192
        %v270 = vadd.s32 %v245, 200
        %v271 = vadd.s32 %v245, 208
        %v272 = vadd.s32 %v245, 216
        %v273 = vadd.s32 %v245, 224
        %v274 = vadd.s32 %v245, 232
        %v275 = vadd.s32 %v245, 240
        %v276 = vadd.s32 %v245, 248
        %v277 = vadd.s32 %v245, 256
        %v278 = vadd.s32 %v245, 264
        %v279 = vadd.s32 %v245, 272
        %v280 = vadd.s32 %v245, 280
        %v281 = vadd.s32 %v245, 288
        %v282 = vadd.s32 %v245, 296
        %v283 = vadd.s32 %v245, 304
        %v284 = vadd.s32 %v245, 312
        %vm285 = vcmp.ge.s32.totalorder %v245, 80
        %vm286 = vcmp.ge.s32.totalorder %v246, 80
        %vm287 = vcmp.ge.s32.totalorder %v247, 80
        %vm288 = vcmp.ge.s32.totalorder %v248, 80
        %vm289 = vcmp.ge.s32.totalorder %v249, 80
        %vm290 = vcmp.ge.s32.totalorder %v250, 80
        %vm291 = vcmp.ge.s32.totalorder %v251, 80
        %vm292 = vcmp.ge.s32.totalorder %v252, 80
        %vm293 = vcmp.ge.s32.totalorder %v253, 80
        %vm294 = vcmp.ge.s32.totalorder %v254, 80
        %vm295 = vcmp.ge.s32.totalorder %v255, 80
        %vm296 = vcmp.ge.s32.totalorder %v256, 80
        %vm297 = vcmp.ge.s32.totalorder %v257, 80
        %vm298 = vcmp.ge.s32.totalorder %v258, 80
        %vm299 = vcmp.ge.s32.totalorder %v259, 80
        %vm300 = vcmp.ge.s32.totalorder %v260, 80
        %vm301 = vcmp.ge.s32.totalorder %v261, 80
        %vm302 = vcmp.ge.s32.totalorder %v262, 80
        %vm303 = vcmp.ge.s32.totalorder %v263, 80
        %vm304 = vcmp.ge.s32.totalorder %v264, 80
        %vm305 = vcmp.ge.s32.totalorder %v265, 80
        %vm306 = vcmp.ge.s32.totalorder %v266, 80
        %vm307 = vcmp.ge.s32.totalorder %v267, 80
        %vm308 = vcmp.ge.s32.totalorder %v268, 80
        %vm309 = vcmp.ge.s32.totalorder %v269, 80
        %vm310 = vcmp.ge.s32.totalorder %v270, 80
        %vm311 = vcmp.ge.s32.totalorder %v271, 80
        %vm312 = vcmp.ge.s32.totalorder %v272, 80
        %vm313 = vcmp.ge.s32.totalorder %v273, 80
        %vm314 = vcmp.ge.s32.totalorder %v274, 80
        %vm315 = vcmp.ge.s32.totalorder %v275, 80
        %vm316 = vcmp.ge.s32.totalorder %v276, 80
        %vm317 = vcmp.ge.s32.totalorder %v277, 80
        %vm318 = vcmp.ge.s32.totalorder %v278, 80
        %vm319 = vcmp.ge.s32.totalorder %v279, 80
        %vm320 = vcmp.ge.s32.totalorder %v280, 80
        %vm321 = vcmp.ge.s32.totalorder %v281, 80
        %vm322 = vcmp.ge.s32.totalorder %v282, 80
        %vm323 = vcmp.ge.s32.totalorder %v283, 80
        %vm324 = vcmp.ge.s32.totalorder %v284, 80
        %vm325 = vcmp.lt.s32.totalorder %v245, 240
        %vm326 = vcmp.lt.s32.totalorder %v246, 240
        %vm327 = vcmp.lt.s32.totalorder %v247, 240
        %vm328 = vcmp.lt.s32.totalorder %v248, 240
        %vm329 = vcmp.lt.s32.totalorder %v249, 240
        %vm330 = vcmp.lt.s32.totalorder %v250, 240
        %vm331 = vcmp.lt.s32.totalorder %v251, 240
        %vm332 = vcmp.lt.s32.totalorder %v252, 240
        %vm333 = vcmp.lt.s32.totalorder %v253, 240
        %vm334 = vcmp.lt.s32.totalorder %v254, 240
        %vm335 = vcmp.lt.s32.totalorder %v255, 240
        %vm336 = vcmp.lt.s32.totalorder %v256, 240
        %vm337 = vcmp.lt.s32.totalorder %v257, 240
        %vm338 = vcmp.lt.s32.totalorder %v258, 240
        %vm339 = vcmp.lt.s32.totalorder %v259, 240
        %vm340 = vcmp.lt.s32.totalorder %v260, 240
        %vm341 = vcmp.lt.s32.totalorder %v261, 240
        %vm342 = vcmp.lt.s32.totalorder %v262, 240
        %vm343 = vcmp.lt.s32.totalorder %v263, 240
        %vm344 = vcmp.lt.s32.totalorder %v264, 240
        %vm345 = vcmp.lt.s32.totalorder %v265, 240
        %vm346 = vcmp.lt.s32.totalorder %v266, 240
        %vm347 = vcmp.lt.s32.totalorder %v267, 240
        %vm348 = vcmp.lt.s32.totalorder %v268, 240
        %vm349 = vcmp.lt.s32.totalorder %v269, 240
        %vm350 = vcmp.lt.s32.totalorder %v270, 240
        %vm351 = vcmp.lt.s32.totalorder %v271, 240
        %vm352 = vcmp.lt.s32.totalorder %v272, 240
        %vm353 = vcmp.lt.s32.totalorder %v273, 240
        %vm354 = vcmp.lt.s32.totalorder %v274, 240
        %vm355 = vcmp.lt.s32.totalorder %v275, 240
        %vm356 = vcmp.lt.s32.totalorder %v276, 240
        %vm357 = vcmp.lt.s32.totalorder %v277, 240
        %vm358 = vcmp.lt.s32.totalorder %v278, 240
        %vm359 = vcmp.lt.s32.totalorder %v279, 240
        %vm360 = vcmp.lt.s32.totalorder %v280, 240
        %vm361 = vcmp.lt.s32.totalorder %v281, 240
        %vm362 = vcmp.lt.s32.totalorder %v282, 240
        %vm363 = vcmp.lt.s32.totalorder %v283, 240
        %vm364 = vcmp.lt.s32.totalorder %v284, 240
        %vm365 = vmand %vm285, %vm325
        %vm366 = vmand %vm286, %vm326
        %vm367 = vmand %vm287, %vm327
        %vm368 = vmand %vm288, %vm328
        %vm369 = vmand %vm289, %vm329
        %vm370 = vmand %vm290, %vm330
        %vm371 = vmand %vm291, %vm331
        %vm372 = vmand %vm292, %vm332
        %vm373 = vmand %vm293, %vm333
        %vm374 = vmand %vm294, %vm334
        %vm375 = vmand %vm295, %vm335
        %vm376 = vmand %vm296, %vm336
        %vm377 = vmand %vm297, %vm337
        %vm378 = vmand %vm298, %vm338
        %vm379 = vmand %vm299, %vm339
        %vm380 = vmand %vm300, %vm340
        %vm381 = vmand %vm301, %vm341
        %vm382 = vmand %vm302, %vm342
        %vm383 = vmand %vm303, %vm343
        %vm384 = vmand %vm304, %vm344
        %vm385 = vmand %vm305, %vm345
        %vm386 = vmand %vm306, %vm346
        %vm387 = vmand %vm307, %vm347
        %vm388 = vmand %vm308, %vm348
        %vm389 = vmand %vm309, %vm349
        %vm390 = vmand %vm310, %vm350
        %vm391 = vmand %vm311, %vm351
        %vm392 = vmand %vm312, %vm352
        %vm393 = vmand %vm313, %vm353
        %vm394 = vmand %vm314, %vm354
        %vm395 = vmand %vm315, %vm355
        %vm396 = vmand %vm316, %vm356
        %vm397 = vmand %vm317, %vm357
        %vm398 = vmand %vm318, %vm358
        %vm399 = vmand %vm319, %vm359
        %vm400 = vmand %vm320, %vm360
        %vm401 = vmand %vm321, %vm361
        %vm402 = vmand %vm322, %vm362
        %vm403 = vmand %vm323, %vm363
        %vm404 = vmand %vm324, %vm364
        %v405 = vld [vmem:[#allocation2] sm:$0x1f]
        %v406 = vsel %vm365, 1, 0
        %v407 = vsel %vm366, 1, 0
        %v408 = vsel %vm367, 1, 0
        %v409 = vsel %vm368, 1, 0
        %v410 = vsel %vm369, 1, 0
        %v411 = vsel %vm370, 1, 0
        %v412 = vsel %vm371, 1, 0
        %v413 = vsel %vm372, 1, 0
        %v414 = vsel %vm373, 1, 0
        %v415 = vsel %vm374, 1, 0
        %v416 = vsel %vm375, 1, 0
        %v417 = vsel %vm376, 1, 0
        %v418 = vsel %vm377, 1, 0
        %v419 = vsel %vm378, 1, 0
        %v420 = vsel %vm379, 1, 0
        %v421 = vsel %vm380, 1, 0
        %v422 = vsel %vm381, 1, 0
        %v423 = vsel %vm382, 1, 0
        %v424 = vsel %vm383, 1, 0
        %v425 = vsel %vm384, 1, 0
        %v426 = vsel %vm385, 1, 0
        %v427 = vsel %vm386, 1, 0
        %v428 = vsel %vm387, 1, 0
        %v429 = vsel %vm388, 1, 0
        %v430 = vsel %vm389, 1, 0
        %v431 = vsel %vm390, 1, 0
        %v432 = vsel %vm391, 1, 0
        %v433 = vsel %vm392, 1, 0
        %v434 = vsel %vm393, 1, 0
        %v435 = vsel %vm394, 1, 0
        %v436 = vsel %vm395, 1, 0
        %v437 = vsel %vm396, 1, 0
        %v438 = vsel %vm397, 1, 0
        %v439 = vsel %vm398, 1, 0
        %v440 = vsel %vm399, 1, 0
        %v441 = vsel %vm400, 1, 0
        %v442 = vsel %vm401, 1, 0
        %v443 = vsel %vm402, 1, 0
        %v444 = vsel %vm403, 1, 0
        %v445 = vsel %vm404, 1, 0
        %vm446 = vcmp.eq.s32.totalorder %v406, 1
        %vm447 = vcmp.eq.s32.totalorder %v407, 1
        %vm448 = vcmp.eq.s32.totalorder %v408, 1
        %vm449 = vcmp.eq.s32.totalorder %v409, 1
        %vm450 = vcmp.eq.s32.totalorder %v410, 1
        %vm451 = vcmp.eq.s32.totalorder %v411, 1
        %vm452 = vcmp.eq.s32.totalorder %v412, 1
        %vm453 = vcmp.eq.s32.totalorder %v413, 1
        %vm454 = vcmp.eq.s32.totalorder %v414, 1
        %vm455 = vcmp.eq.s32.totalorder %v415, 1
        %vm456 = vcmp.eq.s32.totalorder %v416, 1
        %vm457 = vcmp.eq.s32.totalorder %v417, 1
        %vm458 = vcmp.eq.s32.totalorder %v418, 1
        %vm459 = vcmp.eq.s32.totalorder %v419, 1
        %vm460 = vcmp.eq.s32.totalorder %v420, 1
        %vm461 = vcmp.eq.s32.totalorder %v421, 1
        %vm462 = vcmp.eq.s32.totalorder %v422, 1
        %vm463 = vcmp.eq.s32.totalorder %v423, 1
        %vm464 = vcmp.eq.s32.totalorder %v424, 1
        %vm465 = vcmp.eq.s32.totalorder %v425, 1
        %vm466 = vcmp.eq.s32.totalorder %v426, 1
        %vm467 = vcmp.eq.s32.totalorder %v427, 1
        %vm468 = vcmp.eq.s32.totalorder %v428, 1
        %vm469 = vcmp.eq.s32.totalorder %v429, 1
        %vm470 = vcmp.eq.s32.totalorder %v430, 1
        %vm471 = vcmp.eq.s32.totalorder %v431, 1
        %vm472 = vcmp.eq.s32.totalorder %v432, 1
        %vm473 = vcmp.eq.s32.totalorder %v433, 1
        %vm474 = vcmp.eq.s32.totalorder %v434, 1
        %vm475 = vcmp.eq.s32.totalorder %v435, 1
        %vm476 = vcmp.eq.s32.totalorder %v436, 1
        %vm477 = vcmp.eq.s32.totalorder %v437, 1
        %vm478 = vcmp.eq.s32.totalorder %v438, 1
        %vm479 = vcmp.eq.s32.totalorder %v439, 1
        %vm480 = vcmp.eq.s32.totalorder %v440, 1
        %vm481 = vcmp.eq.s32.totalorder %v441, 1
        %vm482 = vcmp.eq.s32.totalorder %v442, 1
        %vm483 = vcmp.eq.s32.totalorder %v443, 1
        %vm484 = vcmp.eq.s32.totalorder %v444, 1
        %vm485 = vcmp.eq.s32.totalorder %v445, 1
        %v487 = vlaneseq
        %v488 = vshrl.u32 %v487, 7
        %v489 = vsub.s32 0, %v488
        %v490 = vrot.slane %v405, %v489
        %v491 = vlaneseq
        %v492 = vshrl.u32 %v491, 7
        %v493 = vsub.s32 1, %v492
        %v494 = vrot.slane %v405, %v493
        %v495 = vlaneseq
        %v496 = vshrl.u32 %v495, 7
        %v497 = vsub.s32 2, %v496
        %v498 = vrot.slane %v405, %v497
        %v499 = vlaneseq
        %v500 = vshrl.u32 %v499, 7
        %v501 = vsub.s32 3, %v500
        %v502 = vrot.slane %v405, %v501
        %v503 = vlaneseq
        %v504 = vshrl.u32 %v503, 7
        %v505 = vsub.s32 4, %v504
        %v506 = vrot.slane %v405, %v505
        %v512 = vsel %vm446, %v490, 0.0
        %v513 = vsel %vm446, %v494, 0.0
        %v514 = vsel %vm446, %v498, 0.0
        %v515 = vsel %vm446, %v502, 0.0
        %v516 = vsel %vm446, %v506, 0.0
        %v517 = vsel %vm447, %v490, 0.0
        %v518 = vsel %vm447, %v494, 0.0
        %v519 = vsel %vm447, %v498, 0.0
        %v520 = vsel %vm447, %v502, 0.0
        %v521 = vsel %vm447, %v506, 0.0
        %v522 = vsel %vm448, %v490, 0.0
        %v523 = vsel %vm448, %v494, 0.0
        %v524 = vsel %vm448, %v498, 0.0
        %v525 = vsel %vm448, %v502, 0.0
        %v526 = vsel %vm448, %v506, 0.0
        %v527 = vsel %vm449, %v490, 0.0
        %v528 = vsel %vm449, %v494, 0.0
        %v529 = vsel %vm449, %v498, 0.0
        %v530 = vsel %vm449, %v502, 0.0
        %v531 = vsel %vm449, %v506, 0.0
        %v532 = vsel %vm450, %v490, 0.0
        %v533 = vsel %vm450, %v494, 0.0
        %v534 = vsel %vm450, %v498, 0.0
        %v535 = vsel %vm450, %v502, 0.0
        %v536 = vsel %vm450, %v506, 0.0
        %v537 = vsel %vm451, %v490, 0.0
        %v538 = vsel %vm451, %v494, 0.0
        %v539 = vsel %vm451, %v498, 0.0
        %v540 = vsel %vm451, %v502, 0.0
        %v541 = vsel %vm451, %v506, 0.0
        %v542 = vsel %vm452, %v490, 0.0
        %v543 = vsel %vm452, %v494, 0.0
        %v544 = vsel %vm452, %v498, 0.0
        %v545 = vsel %vm452, %v502, 0.0
        %v546 = vsel %vm452, %v506, 0.0
        %v547 = vsel %vm453, %v490, 0.0
        %v548 = vsel %vm453, %v494, 0.0
        %v549 = vsel %vm453, %v498, 0.0
        %v550 = vsel %vm453, %v502, 0.0
        %v551 = vsel %vm453, %v506, 0.0
        %v552 = vsel %vm454, %v490, 0.0
        %v553 = vsel %vm454, %v494, 0.0
        %v554 = vsel %vm454, %v498, 0.0
        %v555 = vsel %vm454, %v502, 0.0
        %v556 = vsel %vm454, %v506, 0.0
        %v557 = vsel %vm455, %v490, 0.0
        %v558 = vsel %vm455, %v494, 0.0
        %v559 = vsel %vm455, %v498, 0.0
        %v560 = vsel %vm455, %v502, 0.0
        %v561 = vsel %vm455, %v506, 0.0
        %v562 = vsel %vm456, %v490, 0.0
        %v563 = vsel %vm456, %v494, 0.0
        %v564 = vsel %vm456, %v498, 0.0
        %v565 = vsel %vm456, %v502, 0.0
        %v566 = vsel %vm456, %v506, 0.0
        %v567 = vsel %vm457, %v490, 0.0
        %v568 = vsel %vm457, %v494, 0.0
        %v569 = vsel %vm457, %v498, 0.0
        %v570 = vsel %vm457, %v502, 0.0
        %v571 = vsel %vm457, %v506, 0.0
        %v572 = vsel %vm458, %v490, 0.0
        %v573 = vsel %vm458, %v494, 0.0
        %v574 = vsel %vm458, %v498, 0.0
        %v575 = vsel %vm458, %v502, 0.0
        %v576 = vsel %vm458, %v506, 0.0
        %v577 = vsel %vm459, %v490, 0.0
        %v578 = vsel %vm459, %v494, 0.0
        %v579 = vsel %vm459, %v498, 0.0
        %v580 = vsel %vm459, %v502, 0.0
        %v581 = vsel %vm459, %v506, 0.0
        %v582 = vsel %vm460, %v490, 0.0
        %v583 = vsel %vm460, %v494, 0.0
        %v584 = vsel %vm460, %v498, 0.0
        %v585 = vsel %vm460, %v502, 0.0
        %v586 = vsel %vm460, %v506, 0.0
        %v587 = vsel %vm461, %v490, 0.0
        %v588 = vsel %vm461, %v494, 0.0
        %v589 = vsel %vm461, %v498, 0.0
        %v590 = vsel %vm461, %v502, 0.0
        %v591 = vsel %vm461, %v506, 0.0
        %v592 = vsel %vm462, %v490, 0.0
        %v593 = vsel %vm462, %v494, 0.0
        %v594 = vsel %vm462, %v498, 0.0
        %v595 = vsel %vm462, %v502, 0.0
        %v596 = vsel %vm462, %v506, 0.0
        %v597 = vsel %vm463, %v490, 0.0
        %v598 = vsel %vm463, %v494, 0.0
        %v599 = vsel %vm463, %v498, 0.0
        %v600 = vsel %vm463, %v502, 0.0
        %v601 = vsel %vm463, %v506, 0.0
        %v602 = vsel %vm464, %v490, 0.0
        %v603 = vsel %vm464, %v494, 0.0
        %v604 = vsel %vm464, %v498, 0.0
        %v605 = vsel %vm464, %v502, 0.0
        %v606 = vsel %vm464, %v506, 0.0
        %v607 = vsel %vm465, %v490, 0.0
        %v608 = vsel %vm465, %v494, 0.0
        %v609 = vsel %vm465, %v498, 0.0
        %v610 = vsel %vm465, %v502, 0.0
        %v611 = vsel %vm465, %v506, 0.0
        %v612 = vsel %vm466, %v490, 0.0
        %v613 = vsel %vm466, %v494, 0.0
        %v614 = vsel %vm466, %v498, 0.0
        %v615 = vsel %vm466, %v502, 0.0
        %v616 = vsel %vm466, %v506, 0.0
        %v617 = vsel %vm467, %v490, 0.0
        %v618 = vsel %vm467, %v494, 0.0
        %v619 = vsel %vm467, %v498, 0.0
        %v620 = vsel %vm467, %v502, 0.0
        %v621 = vsel %vm467, %v506, 0.0
        %v622 = vsel %vm468, %v490, 0.0
        %v623 = vsel %vm468, %v494, 0.0
        %v624 = vsel %vm468, %v498, 0.0
        %v625 = vsel %vm468, %v502, 0.0
        %v626 = vsel %vm468, %v506, 0.0
        %v627 = vsel %vm469, %v490, 0.0
        %v628 = vsel %vm469, %v494, 0.0
        %v629 = vsel %vm469, %v498, 0.0
        %v630 = vsel %vm469, %v502, 0.0
        %v631 = vsel %vm469, %v506, 0.0
        %v632 = vsel %vm470, %v490, 0.0
        %v633 = vsel %vm470, %v494, 0.0
        %v634 = vsel %vm470, %v498, 0.0
        %v635 = vsel %vm470, %v502, 0.0
        %v636 = vsel %vm470, %v506, 0.0
        %v637 = vsel %vm471, %v490, 0.0
        %v638 = vsel %vm471, %v494, 0.0
        %v639 = vsel %vm471, %v498, 0.0
        %v640 = vsel %vm471, %v502, 0.0
        %v641 = vsel %vm471, %v506, 0.0
        %v642 = vsel %vm472, %v490, 0.0
        %v643 = vsel %vm472, %v494, 0.0
        %v644 = vsel %vm472, %v498, 0.0
        %v645 = vsel %vm472, %v502, 0.0
        %v646 = vsel %vm472, %v506, 0.0
        %v647 = vsel %vm473, %v490, 0.0
        %v648 = vsel %vm473, %v494, 0.0
        %v649 = vsel %vm473, %v498, 0.0
        %v650 = vsel %vm473, %v502, 0.0
        %v651 = vsel %vm473, %v506, 0.0
        %v652 = vsel %vm474, %v490, 0.0
        %v653 = vsel %vm474, %v494, 0.0
        %v654 = vsel %vm474, %v498, 0.0
        %v655 = vsel %vm474, %v502, 0.0
        %v656 = vsel %vm474, %v506, 0.0
        %v657 = vsel %vm475, %v490, 0.0
        %v658 = vsel %vm475, %v494, 0.0
        %v659 = vsel %vm475, %v498, 0.0
        %v660 = vsel %vm475, %v502, 0.0
        %v661 = vsel %vm475, %v506, 0.0
        %v662 = vsel %vm476, %v490, 0.0
        %v663 = vsel %vm476, %v494, 0.0
        %v664 = vsel %vm476, %v498, 0.0
        %v665 = vsel %vm476, %v502, 0.0
        %v666 = vsel %vm476, %v506, 0.0
        %v667 = vsel %vm477, %v490, 0.0
        %v668 = vsel %vm477, %v494, 0.0
        %v669 = vsel %vm477, %v498, 0.0
        %v670 = vsel %vm477, %v502, 0.0
        %v671 = vsel %vm477, %v506, 0.0
        %v672 = vsel %vm478, %v490, 0.0
        %v673 = vsel %vm478, %v494, 0.0
        %v674 = vsel %vm478, %v498, 0.0
        %v675 = vsel %vm478, %v502, 0.0
        %v676 = vsel %vm478, %v506, 0.0
        %v677 = vsel %vm479, %v490, 0.0
        %v678 = vsel %vm479, %v494, 0.0
        %v679 = vsel %vm479, %v498, 0.0
        %v680 = vsel %vm479, %v502, 0.0
        %v681 = vsel %vm479, %v506, 0.0
        %v682 = vsel %vm480, %v490, 0.0
        %v683 = vsel %vm480, %v494, 0.0
        %v684 = vsel %vm480, %v498, 0.0
        %v685 = vsel %vm480, %v502, 0.0
        %v686 = vsel %vm480, %v506, 0.0
        %v687 = vsel %vm481, %v490, 0.0
        %v688 = vsel %vm481, %v494, 0.0
        %v689 = vsel %vm481, %v498, 0.0
        %v690 = vsel %vm481, %v502, 0.0
        %v691 = vsel %vm481, %v506, 0.0
        %v692 = vsel %vm482, %v490, 0.0
        %v693 = vsel %vm482, %v494, 0.0
        %v694 = vsel %vm482, %v498, 0.0
        %v695 = vsel %vm482, %v502, 0.0
        %v696 = vsel %vm482, %v506, 0.0
        %v697 = vsel %vm483, %v490, 0.0
        %v698 = vsel %vm483, %v494, 0.0
        %v699 = vsel %vm483, %v498, 0.0
        %v700 = vsel %vm483, %v502, 0.0
        %v701 = vsel %vm483, %v506, 0.0
        %v702 = vsel %vm484, %v490, 0.0
        %v703 = vsel %vm484, %v494, 0.0
        %v704 = vsel %vm484, %v498, 0.0
        %v705 = vsel %vm484, %v502, 0.0
        %v706 = vsel %vm484, %v506, 0.0
        %v707 = vsel %vm485, %v490, 0.0
        %v708 = vsel %vm485, %v494, 0.0
        %v709 = vsel %vm485, %v498, 0.0
        %v710 = vsel %vm485, %v502, 0.0
        %v711 = vsel %vm485, %v506, 0.0
        %vm712 = vcmp.gt.f32.partialorder %v512, 0.0
        %vm713 = vcmp.gt.f32.partialorder %v513, 0.0
        %vm714 = vcmp.gt.f32.partialorder %v514, 0.0
        %vm715 = vcmp.gt.f32.partialorder %v515, 0.0
        %vm716 = vcmp.gt.f32.partialorder %v516, 0.0
        %vm717 = vcmp.gt.f32.partialorder %v517, 0.0
        %vm718 = vcmp.gt.f32.partialorder %v518, 0.0
        %vm719 = vcmp.gt.f32.partialorder %v519, 0.0
        %vm720 = vcmp.gt.f32.partialorder %v520, 0.0
        %vm721 = vcmp.gt.f32.partialorder %v521, 0.0
        %vm722 = vcmp.gt.f32.partialorder %v522, 0.0
        %vm723 = vcmp.gt.f32.partialorder %v523, 0.0
        %vm724 = vcmp.gt.f32.partialorder %v524, 0.0
        %vm725 = vcmp.gt.f32.partialorder %v525, 0.0
        %vm726 = vcmp.gt.f32.partialorder %v526, 0.0
        %vm727 = vcmp.gt.f32.partialorder %v527, 0.0
        %vm728 = vcmp.gt.f32.partialorder %v528, 0.0
        %vm729 = vcmp.gt.f32.partialorder %v529, 0.0
        %vm730 = vcmp.gt.f32.partialorder %v530, 0.0
        %vm731 = vcmp.gt.f32.partialorder %v531, 0.0
        %vm732 = vcmp.gt.f32.partialorder %v532, 0.0
        %vm733 = vcmp.gt.f32.partialorder %v533, 0.0
        %vm734 = vcmp.gt.f32.partialorder %v534, 0.0
        %vm735 = vcmp.gt.f32.partialorder %v535, 0.0
        %vm736 = vcmp.gt.f32.partialorder %v536, 0.0
        %vm737 = vcmp.gt.f32.partialorder %v537, 0.0
        %vm738 = vcmp.gt.f32.partialorder %v538, 0.0
        %vm739 = vcmp.gt.f32.partialorder %v539, 0.0
        %vm740 = vcmp.gt.f32.partialorder %v540, 0.0
        %vm741 = vcmp.gt.f32.partialorder %v541, 0.0
        %vm742 = vcmp.gt.f32.partialorder %v542, 0.0
        %vm743 = vcmp.gt.f32.partialorder %v543, 0.0
        %vm744 = vcmp.gt.f32.partialorder %v544, 0.0
        %vm745 = vcmp.gt.f32.partialorder %v545, 0.0
        %vm746 = vcmp.gt.f32.partialorder %v546, 0.0
        %vm747 = vcmp.gt.f32.partialorder %v547, 0.0
        %vm748 = vcmp.gt.f32.partialorder %v548, 0.0
        %vm749 = vcmp.gt.f32.partialorder %v549, 0.0
        %vm750 = vcmp.gt.f32.partialorder %v550, 0.0
        %vm751 = vcmp.gt.f32.partialorder %v551, 0.0
        %vm752 = vcmp.gt.f32.partialorder %v552, 0.0
        %vm753 = vcmp.gt.f32.partialorder %v553, 0.0
        %vm754 = vcmp.gt.f32.partialorder %v554, 0.0
        %vm755 = vcmp.gt.f32.partialorder %v555, 0.0
        %vm756 = vcmp.gt.f32.partialorder %v556, 0.0
        %vm757 = vcmp.gt.f32.partialorder %v557, 0.0
        %vm758 = vcmp.gt.f32.partialorder %v558, 0.0
        %vm759 = vcmp.gt.f32.partialorder %v559, 0.0
        %vm760 = vcmp.gt.f32.partialorder %v560, 0.0
        %vm761 = vcmp.gt.f32.partialorder %v561, 0.0
        %vm762 = vcmp.gt.f32.partialorder %v562, 0.0
        %vm763 = vcmp.gt.f32.partialorder %v563, 0.0
        %vm764 = vcmp.gt.f32.partialorder %v564, 0.0
        %vm765 = vcmp.gt.f32.partialorder %v565, 0.0
        %vm766 = vcmp.gt.f32.partialorder %v566, 0.0
        %vm767 = vcmp.gt.f32.partialorder %v567, 0.0
        %vm768 = vcmp.gt.f32.partialorder %v568, 0.0
        %vm769 = vcmp.gt.f32.partialorder %v569, 0.0
        %vm770 = vcmp.gt.f32.partialorder %v570, 0.0
        %vm771 = vcmp.gt.f32.partialorder %v571, 0.0
        %vm772 = vcmp.gt.f32.partialorder %v572, 0.0
        %vm773 = vcmp.gt.f32.partialorder %v573, 0.0
        %vm774 = vcmp.gt.f32.partialorder %v574, 0.0
        %vm775 = vcmp.gt.f32.partialorder %v575, 0.0
        %vm776 = vcmp.gt.f32.partialorder %v576, 0.0
        %vm777 = vcmp.gt.f32.partialorder %v577, 0.0
        %vm778 = vcmp.gt.f32.partialorder %v578, 0.0
        %vm779 = vcmp.gt.f32.partialorder %v579, 0.0
        %vm780 = vcmp.gt.f32.partialorder %v580, 0.0
        %vm781 = vcmp.gt.f32.partialorder %v581, 0.0
        %vm782 = vcmp.gt.f32.partialorder %v582, 0.0
        %vm783 = vcmp.gt.f32.partialorder %v583, 0.0
        %vm784 = vcmp.gt.f32.partialorder %v584, 0.0
        %vm785 = vcmp.gt.f32.partialorder %v585, 0.0
        %vm786 = vcmp.gt.f32.partialorder %v586, 0.0
        %vm787 = vcmp.gt.f32.partialorder %v587, 0.0
        %vm788 = vcmp.gt.f32.partialorder %v588, 0.0
        %vm789 = vcmp.gt.f32.partialorder %v589, 0.0
        %vm790 = vcmp.gt.f32.partialorder %v590, 0.0
        %vm791 = vcmp.gt.f32.partialorder %v591, 0.0
        %vm792 = vcmp.gt.f32.partialorder %v592, 0.0
        %vm793 = vcmp.gt.f32.partialorder %v593, 0.0
        %vm794 = vcmp.gt.f32.partialorder %v594, 0.0
        %vm795 = vcmp.gt.f32.partialorder %v595, 0.0
        %vm796 = vcmp.gt.f32.partialorder %v596, 0.0
        %vm797 = vcmp.gt.f32.partialorder %v597, 0.0
        %vm798 = vcmp.gt.f32.partialorder %v598, 0.0
        %vm799 = vcmp.gt.f32.partialorder %v599, 0.0
        %vm800 = vcmp.gt.f32.partialorder %v600, 0.0
        %vm801 = vcmp.gt.f32.partialorder %v601, 0.0
        %vm802 = vcmp.gt.f32.partialorder %v602, 0.0
        %vm803 = vcmp.gt.f32.partialorder %v603, 0.0
        %vm804 = vcmp.gt.f32.partialorder %v604, 0.0
        %vm805 = vcmp.gt.f32.partialorder %v605, 0.0
        %vm806 = vcmp.gt.f32.partialorder %v606, 0.0
        %vm807 = vcmp.gt.f32.partialorder %v607, 0.0
        %vm808 = vcmp.gt.f32.partialorder %v608, 0.0
        %vm809 = vcmp.gt.f32.partialorder %v609, 0.0
        %vm810 = vcmp.gt.f32.partialorder %v610, 0.0
        %vm811 = vcmp.gt.f32.partialorder %v611, 0.0
        %vm812 = vcmp.gt.f32.partialorder %v612, 0.0
        %vm813 = vcmp.gt.f32.partialorder %v613, 0.0
        %vm814 = vcmp.gt.f32.partialorder %v614, 0.0
        %vm815 = vcmp.gt.f32.partialorder %v615, 0.0
        %vm816 = vcmp.gt.f32.partialorder %v616, 0.0
        %vm817 = vcmp.gt.f32.partialorder %v617, 0.0
        %vm818 = vcmp.gt.f32.partialorder %v618, 0.0
        %vm819 = vcmp.gt.f32.partialorder %v619, 0.0
        %vm820 = vcmp.gt.f32.partialorder %v620, 0.0
        %vm821 = vcmp.gt.f32.partialorder %v621, 0.0
        %vm822 = vcmp.gt.f32.partialorder %v622, 0.0
        %vm823 = vcmp.gt.f32.partialorder %v623, 0.0
        %vm824 = vcmp.gt.f32.partialorder %v624, 0.0
        %vm825 = vcmp.gt.f32.partialorder %v625, 0.0
        %vm826 = vcmp.gt.f32.partialorder %v626, 0.0
        %vm827 = vcmp.gt.f32.partialorder %v627, 0.0
        %vm828 = vcmp.gt.f32.partialorder %v628, 0.0
        %vm829 = vcmp.gt.f32.partialorder %v629, 0.0
        %vm830 = vcmp.gt.f32.partialorder %v630, 0.0
        %vm831 = vcmp.gt.f32.partialorder %v631, 0.0
        %vm832 = vcmp.gt.f32.partialorder %v632, 0.0
        %vm833 = vcmp.gt.f32.partialorder %v633, 0.0
        %vm834 = vcmp.gt.f32.partialorder %v634, 0.0
        %vm835 = vcmp.gt.f32.partialorder %v635, 0.0
        %vm836 = vcmp.gt.f32.partialorder %v636, 0.0
        %vm837 = vcmp.gt.f32.partialorder %v637, 0.0
        %vm838 = vcmp.gt.f32.partialorder %v638, 0.0
        %vm839 = vcmp.gt.f32.partialorder %v639, 0.0
        %vm840 = vcmp.gt.f32.partialorder %v640, 0.0
        %vm841 = vcmp.gt.f32.partialorder %v641, 0.0
        %vm842 = vcmp.gt.f32.partialorder %v642, 0.0
        %vm843 = vcmp.gt.f32.partialorder %v643, 0.0
        %vm844 = vcmp.gt.f32.partialorder %v644, 0.0
        %vm845 = vcmp.gt.f32.partialorder %v645, 0.0
        %vm846 = vcmp.gt.f32.partialorder %v646, 0.0
        %vm847 = vcmp.gt.f32.partialorder %v647, 0.0
        %vm848 = vcmp.gt.f32.partialorder %v648, 0.0
        %vm849 = vcmp.gt.f32.partialorder %v649, 0.0
        %vm850 = vcmp.gt.f32.partialorder %v650, 0.0
        %vm851 = vcmp.gt.f32.partialorder %v651, 0.0
        %vm852 = vcmp.gt.f32.partialorder %v652, 0.0
        %vm853 = vcmp.gt.f32.partialorder %v653, 0.0
        %vm854 = vcmp.gt.f32.partialorder %v654, 0.0
        %vm855 = vcmp.gt.f32.partialorder %v655, 0.0
        %vm856 = vcmp.gt.f32.partialorder %v656, 0.0
        %vm857 = vcmp.gt.f32.partialorder %v657, 0.0
        %vm858 = vcmp.gt.f32.partialorder %v658, 0.0
        %vm859 = vcmp.gt.f32.partialorder %v659, 0.0
        %vm860 = vcmp.gt.f32.partialorder %v660, 0.0
        %vm861 = vcmp.gt.f32.partialorder %v661, 0.0
        %vm862 = vcmp.gt.f32.partialorder %v662, 0.0
        %vm863 = vcmp.gt.f32.partialorder %v663, 0.0
        %vm864 = vcmp.gt.f32.partialorder %v664, 0.0
        %vm865 = vcmp.gt.f32.partialorder %v665, 0.0
        %vm866 = vcmp.gt.f32.partialorder %v666, 0.0
        %vm867 = vcmp.gt.f32.partialorder %v667, 0.0
        %vm868 = vcmp.gt.f32.partialorder %v668, 0.0
        %vm869 = vcmp.gt.f32.partialorder %v669, 0.0
        %vm870 = vcmp.gt.f32.partialorder %v670, 0.0
        %vm871 = vcmp.gt.f32.partialorder %v671, 0.0
        %vm872 = vcmp.gt.f32.partialorder %v672, 0.0
        %vm873 = vcmp.gt.f32.partialorder %v673, 0.0
        %vm874 = vcmp.gt.f32.partialorder %v674, 0.0
        %vm875 = vcmp.gt.f32.partialorder %v675, 0.0
        %vm876 = vcmp.gt.f32.partialorder %v676, 0.0
        %vm877 = vcmp.gt.f32.partialorder %v677, 0.0
        %vm878 = vcmp.gt.f32.partialorder %v678, 0.0
        %vm879 = vcmp.gt.f32.partialorder %v679, 0.0
        %vm880 = vcmp.gt.f32.partialorder %v680, 0.0
        %vm881 = vcmp.gt.f32.partialorder %v681, 0.0
        %vm882 = vcmp.gt.f32.partialorder %v682, 0.0
        %vm883 = vcmp.gt.f32.partialorder %v683, 0.0
        %vm884 = vcmp.gt.f32.partialorder %v684, 0.0
        %vm885 = vcmp.gt.f32.partialorder %v685, 0.0
        %vm886 = vcmp.gt.f32.partialorder %v686, 0.0
        %vm887 = vcmp.gt.f32.partialorder %v687, 0.0
        %vm888 = vcmp.gt.f32.partialorder %v688, 0.0
        %vm889 = vcmp.gt.f32.partialorder %v689, 0.0
        %vm890 = vcmp.gt.f32.partialorder %v690, 0.0
        %vm891 = vcmp.gt.f32.partialorder %v691, 0.0
        %vm892 = vcmp.gt.f32.partialorder %v692, 0.0
        %vm893 = vcmp.gt.f32.partialorder %v693, 0.0
        %vm894 = vcmp.gt.f32.partialorder %v694, 0.0
        %vm895 = vcmp.gt.f32.partialorder %v695, 0.0
        %vm896 = vcmp.gt.f32.partialorder %v696, 0.0
        %vm897 = vcmp.gt.f32.partialorder %v697, 0.0
        %vm898 = vcmp.gt.f32.partialorder %v698, 0.0
        %vm899 = vcmp.gt.f32.partialorder %v699, 0.0
        %vm900 = vcmp.gt.f32.partialorder %v700, 0.0
        %vm901 = vcmp.gt.f32.partialorder %v701, 0.0
        %vm902 = vcmp.gt.f32.partialorder %v702, 0.0
        %vm903 = vcmp.gt.f32.partialorder %v703, 0.0
        %vm904 = vcmp.gt.f32.partialorder %v704, 0.0
        %vm905 = vcmp.gt.f32.partialorder %v705, 0.0
        %vm906 = vcmp.gt.f32.partialorder %v706, 0.0
        %vm907 = vcmp.gt.f32.partialorder %v707, 0.0
        %vm908 = vcmp.gt.f32.partialorder %v708, 0.0
        %vm909 = vcmp.gt.f32.partialorder %v709, 0.0
        %vm910 = vcmp.gt.f32.partialorder %v710, 0.0
        %vm911 = vcmp.gt.f32.partialorder %v711, 0.0
        %v912 = vld [vmem:[%s204] sm:$0xff]
        %v913 = vld [vmem:[%s204 + $0x8] sm:$0xff]
        %v914 = vld [vmem:[%s204 + $0x10] sm:$0xff]
        %v915 = vld [vmem:[%s204 + $0x18] sm:$0xff]
        %v916 = vld [vmem:[%s204 + $0x20] sm:$0xff]
        %v917 = vld [vmem:[%s204 + $0x28] sm:$0xff]
        %v918 = vld [vmem:[%s204 + $0x30] sm:$0xff]
        %v919 = vld [vmem:[%s204 + $0x38] sm:$0xff]
        %v920 = vld [vmem:[%s204 + $0x40] sm:$0xff]
        %v921 = vld [vmem:[%s204 + $0x48] sm:$0xff]
        %v922 = vld [vmem:[%s204 + $0x50] sm:$0xff]
        %v923 = vld [vmem:[%s204 + $0x58] sm:$0xff]
        %v924 = vld [vmem:[%s204 + $0x60] sm:$0xff]
        %v925 = vld [vmem:[%s204 + $0x68] sm:$0xff]
        %v926 = vld [vmem:[%s204 + $0x70] sm:$0xff]
        %v927 = vld [vmem:[%s204 + $0x78] sm:$0xff]
        %v928 = vld [vmem:[%s204 + $0x80] sm:$0xff]
        %v929 = vld [vmem:[%s204 + $0x88] sm:$0xff]
        %v930 = vld [vmem:[%s204 + $0x90] sm:$0xff]
        %v931 = vld [vmem:[%s204 + $0x98] sm:$0xff]
        %v932 = vld [vmem:[%s204 + $0xa0] sm:$0xff]
        %v933 = vld [vmem:[%s204 + $0xa8] sm:$0xff]
        %v934 = vld [vmem:[%s204 + $0xb0] sm:$0xff]
        %v935 = vld [vmem:[%s204 + $0xb8] sm:$0xff]
        %v936 = vld [vmem:[%s204 + $0xc0] sm:$0xff]
        %v937 = vld [vmem:[%s204 + $0xc8] sm:$0xff]
        %v938 = vld [vmem:[%s204 + $0xd0] sm:$0xff]
        %v939 = vld [vmem:[%s204 + $0xd8] sm:$0xff]
        %v940 = vld [vmem:[%s204 + $0xe0] sm:$0xff]
        %v941 = vld [vmem:[%s204 + $0xe8] sm:$0xff]
        %v942 = vld [vmem:[%s204 + $0xf0] sm:$0xff]
        %v943 = vld [vmem:[%s204 + $0xf8] sm:$0xff]
        %v944 = vld [vmem:[%s204 + $0x100] sm:$0xff]
        %v945 = vld [vmem:[%s204 + $0x108] sm:$0xff]
        %v946 = vld [vmem:[%s204 + $0x110] sm:$0xff]
        %v947 = vld [vmem:[%s204 + $0x118] sm:$0xff]
        %v948 = vld [vmem:[%s204 + $0x120] sm:$0xff]
        %v949 = vld [vmem:[%s204 + $0x128] sm:$0xff]
        %v950 = vld [vmem:[%s204 + $0x130] sm:$0xff]
        %v951 = vld [vmem:[%s204 + $0x138] sm:$0xff]
        %v952 = vld [vmem:[%s204 + $0x140] sm:$0xff]
        %v953 = vld [vmem:[%s204 + $0x148] sm:$0xff]
        %v954 = vld [vmem:[%s204 + $0x150] sm:$0xff]
        %v955 = vld [vmem:[%s204 + $0x158] sm:$0xff]
        %v956 = vld [vmem:[%s204 + $0x160] sm:$0xff]
        %v957 = vld [vmem:[%s204 + $0x168] sm:$0xff]
        %v958 = vld [vmem:[%s204 + $0x170] sm:$0xff]
        %v959 = vld [vmem:[%s204 + $0x178] sm:$0xff]
        %v960 = vld [vmem:[%s204 + $0x180] sm:$0xff]
        %v961 = vld [vmem:[%s204 + $0x188] sm:$0xff]
        %v962 = vld [vmem:[%s204 + $0x190] sm:$0xff]
        %v963 = vld [vmem:[%s204 + $0x198] sm:$0xff]
        %v964 = vld [vmem:[%s204 + $0x1a0] sm:$0xff]
        %v965 = vld [vmem:[%s204 + $0x1a8] sm:$0xff]
        %v966 = vld [vmem:[%s204 + $0x1b0] sm:$0xff]
        %v967 = vld [vmem:[%s204 + $0x1b8] sm:$0xff]
        %v968 = vld [vmem:[%s204 + $0x1c0] sm:$0xff]
        %v969 = vld [vmem:[%s204 + $0x1c8] sm:$0xff]
        %v970 = vld [vmem:[%s204 + $0x1d0] sm:$0xff]
        %v971 = vld [vmem:[%s204 + $0x1d8] sm:$0xff]
        %v972 = vld [vmem:[%s204 + $0x1e0] sm:$0xff]
        %v973 = vld [vmem:[%s204 + $0x1e8] sm:$0xff]
        %v974 = vld [vmem:[%s204 + $0x1f0] sm:$0xff]
        %v975 = vld [vmem:[%s204 + $0x1f8] sm:$0xff]
        %v976 = vld [vmem:[%s204 + $0x200] sm:$0xff]
        %v977 = vld [vmem:[%s204 + $0x208] sm:$0xff]
        %v978 = vld [vmem:[%s204 + $0x210] sm:$0xff]
        %v979 = vld [vmem:[%s204 + $0x218] sm:$0xff]
        %v980 = vld [vmem:[%s204 + $0x220] sm:$0xff]
        %v981 = vld [vmem:[%s204 + $0x228] sm:$0xff]
        %v982 = vld [vmem:[%s204 + $0x230] sm:$0xff]
        %v983 = vld [vmem:[%s204 + $0x238] sm:$0xff]
        %v984 = vld [vmem:[%s204 + $0x240] sm:$0xff]
        %v985 = vld [vmem:[%s204 + $0x248] sm:$0xff]
        %v986 = vld [vmem:[%s204 + $0x250] sm:$0xff]
        %v987 = vld [vmem:[%s204 + $0x258] sm:$0xff]
        %v988 = vld [vmem:[%s204 + $0x260] sm:$0xff]
        %v989 = vld [vmem:[%s204 + $0x268] sm:$0xff]
        %v990 = vld [vmem:[%s204 + $0x270] sm:$0xff]
        %v991 = vld [vmem:[%s204 + $0x278] sm:$0xff]
        %v992 = vld [vmem:[%s204 + $0x280] sm:$0xff]
        %v993 = vld [vmem:[%s204 + $0x288] sm:$0xff]
        %v994 = vld [vmem:[%s204 + $0x290] sm:$0xff]
        %v995 = vld [vmem:[%s204 + $0x298] sm:$0xff]
        %v996 = vld [vmem:[%s204 + $0x2a0] sm:$0xff]
        %v997 = vld [vmem:[%s204 + $0x2a8] sm:$0xff]
        %v998 = vld [vmem:[%s204 + $0x2b0] sm:$0xff]
        %v999 = vld [vmem:[%s204 + $0x2b8] sm:$0xff]
        %v1000 = vld [vmem:[%s204 + $0x2c0] sm:$0xff]
        %v1001 = vld [vmem:[%s204 + $0x2c8] sm:$0xff]
        %v1002 = vld [vmem:[%s204 + $0x2d0] sm:$0xff]
        %v1003 = vld [vmem:[%s204 + $0x2d8] sm:$0xff]
        %v1004 = vld [vmem:[%s204 + $0x2e0] sm:$0xff]
        %v1005 = vld [vmem:[%s204 + $0x2e8] sm:$0xff]
        %v1006 = vld [vmem:[%s204 + $0x2f0] sm:$0xff]
        %v1007 = vld [vmem:[%s204 + $0x2f8] sm:$0xff]
        %v1008 = vld [vmem:[%s204 + $0x300] sm:$0xff]
        %v1009 = vld [vmem:[%s204 + $0x308] sm:$0xff]
        %v1010 = vld [vmem:[%s204 + $0x310] sm:$0xff]
        %v1011 = vld [vmem:[%s204 + $0x318] sm:$0xff]
        %v1012 = vld [vmem:[%s204 + $0x320] sm:$0xff]
        %v1013 = vld [vmem:[%s204 + $0x328] sm:$0xff]
        %v1014 = vld [vmem:[%s204 + $0x330] sm:$0xff]
        %v1015 = vld [vmem:[%s204 + $0x338] sm:$0xff]
        %v1016 = vld [vmem:[%s204 + $0x340] sm:$0xff]
        %v1017 = vld [vmem:[%s204 + $0x348] sm:$0xff]
        %v1018 = vld [vmem:[%s204 + $0x350] sm:$0xff]
        %v1019 = vld [vmem:[%s204 + $0x358] sm:$0xff]
        %v1020 = vld [vmem:[%s204 + $0x360] sm:$0xff]
        %v1021 = vld [vmem:[%s204 + $0x368] sm:$0xff]
        %v1022 = vld [vmem:[%s204 + $0x370] sm:$0xff]
        %v1023 = vld [vmem:[%s204 + $0x378] sm:$0xff]
        %v1024 = vld [vmem:[%s204 + $0x380] sm:$0xff]
        %v1025 = vld [vmem:[%s204 + $0x388] sm:$0xff]
        %v1026 = vld [vmem:[%s204 + $0x390] sm:$0xff]
        %v1027 = vld [vmem:[%s204 + $0x398] sm:$0xff]
        %v1028 = vld [vmem:[%s204 + $0x3a0] sm:$0xff]
        %v1029 = vld [vmem:[%s204 + $0x3a8] sm:$0xff]
        %v1030 = vld [vmem:[%s204 + $0x3b0] sm:$0xff]
        %v1031 = vld [vmem:[%s204 + $0x3b8] sm:$0xff]
        %v1032 = vld [vmem:[%s204 + $0x3c0] sm:$0xff]
        %v1033 = vld [vmem:[%s204 + $0x3c8] sm:$0xff]
        %v1034 = vld [vmem:[%s204 + $0x3d0] sm:$0xff]
        %v1035 = vld [vmem:[%s204 + $0x3d8] sm:$0xff]
        %v1036 = vld [vmem:[%s204 + $0x3e0] sm:$0xff]
        %v1037 = vld [vmem:[%s204 + $0x3e8] sm:$0xff]
        %v1038 = vld [vmem:[%s204 + $0x3f0] sm:$0xff]
        %v1039 = vld [vmem:[%s204 + $0x3f8] sm:$0xff]
        %v1040 = vld [vmem:[%s204 + $0x400] sm:$0xff]
        %v1041 = vld [vmem:[%s204 + $0x408] sm:$0xff]
        %v1042 = vld [vmem:[%s204 + $0x410] sm:$0xff]
        %v1043 = vld [vmem:[%s204 + $0x418] sm:$0xff]
        %v1044 = vld [vmem:[%s204 + $0x420] sm:$0xff]
        %v1045 = vld [vmem:[%s204 + $0x428] sm:$0xff]
        %v1046 = vld [vmem:[%s204 + $0x430] sm:$0xff]
        %v1047 = vld [vmem:[%s204 + $0x438] sm:$0xff]
        %v1048 = vld [vmem:[%s204 + $0x440] sm:$0xff]
        %v1049 = vld [vmem:[%s204 + $0x448] sm:$0xff]
        %v1050 = vld [vmem:[%s204 + $0x450] sm:$0xff]
        %v1051 = vld [vmem:[%s204 + $0x458] sm:$0xff]
        %v1052 = vld [vmem:[%s204 + $0x460] sm:$0xff]
        %v1053 = vld [vmem:[%s204 + $0x468] sm:$0xff]
        %v1054 = vld [vmem:[%s204 + $0x470] sm:$0xff]
        %v1055 = vld [vmem:[%s204 + $0x478] sm:$0xff]
        %v1056 = vld [vmem:[%s204 + $0x480] sm:$0xff]
        %v1057 = vld [vmem:[%s204 + $0x488] sm:$0xff]
        %v1058 = vld [vmem:[%s204 + $0x490] sm:$0xff]
        %v1059 = vld [vmem:[%s204 + $0x498] sm:$0xff]
        %v1060 = vld [vmem:[%s204 + $0x4a0] sm:$0xff]
        %v1061 = vld [vmem:[%s204 + $0x4a8] sm:$0xff]
        %v1062 = vld [vmem:[%s204 + $0x4b0] sm:$0xff]
        %v1063 = vld [vmem:[%s204 + $0x4b8] sm:$0xff]
        %v1064 = vld [vmem:[%s204 + $0x4c0] sm:$0xff]
        %v1065 = vld [vmem:[%s204 + $0x4c8] sm:$0xff]
        %v1066 = vld [vmem:[%s204 + $0x4d0] sm:$0xff]
        %v1067 = vld [vmem:[%s204 + $0x4d8] sm:$0xff]
        %v1068 = vld [vmem:[%s204 + $0x4e0] sm:$0xff]
        %v1069 = vld [vmem:[%s204 + $0x4e8] sm:$0xff]
        %v1070 = vld [vmem:[%s204 + $0x4f0] sm:$0xff]
        %v1071 = vld [vmem:[%s204 + $0x4f8] sm:$0xff]
        %v1072 = vld [vmem:[%s204 + $0x500] sm:$0xff]
        %v1073 = vld [vmem:[%s204 + $0x508] sm:$0xff]
        %v1074 = vld [vmem:[%s204 + $0x510] sm:$0xff]
        %v1075 = vld [vmem:[%s204 + $0x518] sm:$0xff]
        %v1076 = vld [vmem:[%s204 + $0x520] sm:$0xff]
        %v1077 = vld [vmem:[%s204 + $0x528] sm:$0xff]
        %v1078 = vld [vmem:[%s204 + $0x530] sm:$0xff]
        %v1079 = vld [vmem:[%s204 + $0x538] sm:$0xff]
        %v1080 = vld [vmem:[%s204 + $0x540] sm:$0xff]
        %v1081 = vld [vmem:[%s204 + $0x548] sm:$0xff]
        %v1082 = vld [vmem:[%s204 + $0x550] sm:$0xff]
        %v1083 = vld [vmem:[%s204 + $0x558] sm:$0xff]
        %v1084 = vld [vmem:[%s204 + $0x560] sm:$0xff]
        %v1085 = vld [vmem:[%s204 + $0x568] sm:$0xff]
        %v1086 = vld [vmem:[%s204 + $0x570] sm:$0xff]
        %v1087 = vld [vmem:[%s204 + $0x578] sm:$0xff]
        %v1088 = vld [vmem:[%s204 + $0x580] sm:$0xff]
        %v1089 = vld [vmem:[%s204 + $0x588] sm:$0xff]
        %v1090 = vld [vmem:[%s204 + $0x590] sm:$0xff]
        %v1091 = vld [vmem:[%s204 + $0x598] sm:$0xff]
        %v1092 = vld [vmem:[%s204 + $0x5a0] sm:$0xff]
        %v1093 = vld [vmem:[%s204 + $0x5a8] sm:$0xff]
        %v1094 = vld [vmem:[%s204 + $0x5b0] sm:$0xff]
        %v1095 = vld [vmem:[%s204 + $0x5b8] sm:$0xff]
        %v1096 = vld [vmem:[%s204 + $0x5c0] sm:$0xff]
        %v1097 = vld [vmem:[%s204 + $0x5c8] sm:$0xff]
        %v1098 = vld [vmem:[%s204 + $0x5d0] sm:$0xff]
        %v1099 = vld [vmem:[%s204 + $0x5d8] sm:$0xff]
        %v1100 = vld [vmem:[%s204 + $0x5e0] sm:$0xff]
        %v1101 = vld [vmem:[%s204 + $0x5e8] sm:$0xff]
        %v1102 = vld [vmem:[%s204 + $0x5f0] sm:$0xff]
        %v1103 = vld [vmem:[%s204 + $0x5f8] sm:$0xff]
        %v1104 = vld [vmem:[%s204 + $0x600] sm:$0xff]
        %v1105 = vld [vmem:[%s204 + $0x608] sm:$0xff]
        %v1106 = vld [vmem:[%s204 + $0x610] sm:$0xff]
        %v1107 = vld [vmem:[%s204 + $0x618] sm:$0xff]
        %v1108 = vld [vmem:[%s204 + $0x620] sm:$0xff]
        %v1109 = vld [vmem:[%s204 + $0x628] sm:$0xff]
        %v1110 = vld [vmem:[%s204 + $0x630] sm:$0xff]
        %v1111 = vld [vmem:[%s204 + $0x638] sm:$0xff]
        %v1112 = vld [vmem:[%s204 + $0x640] sm:$0xff]
        %v1113 = vld [vmem:[%s204 + $0x648] sm:$0xff]
        %v1114 = vld [vmem:[%s204 + $0x650] sm:$0xff]
        %v1115 = vld [vmem:[%s204 + $0x658] sm:$0xff]
        %v1116 = vld [vmem:[%s204 + $0x660] sm:$0xff]
        %v1117 = vld [vmem:[%s204 + $0x668] sm:$0xff]
        %v1118 = vld [vmem:[%s204 + $0x670] sm:$0xff]
        %v1119 = vld [vmem:[%s204 + $0x678] sm:$0xff]
        %v1120 = vld [vmem:[%s204 + $0x680] sm:$0xff]
        %v1121 = vld [vmem:[%s204 + $0x688] sm:$0xff]
        %v1122 = vld [vmem:[%s204 + $0x690] sm:$0xff]
        %v1123 = vld [vmem:[%s204 + $0x698] sm:$0xff]
        %v1124 = vld [vmem:[%s204 + $0x6a0] sm:$0xff]
        %v1125 = vld [vmem:[%s204 + $0x6a8] sm:$0xff]
        %v1126 = vld [vmem:[%s204 + $0x6b0] sm:$0xff]
        %v1127 = vld [vmem:[%s204 + $0x6b8] sm:$0xff]
        %v1128 = vld [vmem:[%s204 + $0x6c0] sm:$0xff]
        %v1129 = vld [vmem:[%s204 + $0x6c8] sm:$0xff]
        %v1130 = vld [vmem:[%s204 + $0x6d0] sm:$0xff]
        %v1131 = vld [vmem:[%s204 + $0x6d8] sm:$0xff]
        %v1132 = vld [vmem:[%s204 + $0x6e0] sm:$0xff]
        %v1133 = vld [vmem:[%s204 + $0x6e8] sm:$0xff]
        %v1134 = vld [vmem:[%s204 + $0x6f0] sm:$0xff]
        %v1135 = vld [vmem:[%s204 + $0x6f8] sm:$0xff]
        %v1136 = vld [vmem:[%s204 + $0x700] sm:$0xff]
        %v1137 = vld [vmem:[%s204 + $0x708] sm:$0xff]
        %v1138 = vld [vmem:[%s204 + $0x710] sm:$0xff]
        %v1139 = vld [vmem:[%s204 + $0x718] sm:$0xff]
        %v1140 = vld [vmem:[%s204 + $0x720] sm:$0xff]
        %v1141 = vld [vmem:[%s204 + $0x728] sm:$0xff]
        %v1142 = vld [vmem:[%s204 + $0x730] sm:$0xff]
        %v1143 = vld [vmem:[%s204 + $0x738] sm:$0xff]
        %v1144 = vld [vmem:[%s204 + $0x740] sm:$0xff]
        %v1145 = vld [vmem:[%s204 + $0x748] sm:$0xff]
        %v1146 = vld [vmem:[%s204 + $0x750] sm:$0xff]
        %v1147 = vld [vmem:[%s204 + $0x758] sm:$0xff]
        %v1148 = vld [vmem:[%s204 + $0x760] sm:$0xff]
        %v1149 = vld [vmem:[%s204 + $0x768] sm:$0xff]
        %v1150 = vld [vmem:[%s204 + $0x770] sm:$0xff]
        %v1151 = vld [vmem:[%s204 + $0x778] sm:$0xff]
        %v1152 = vld [vmem:[%s204 + $0x780] sm:$0xff]
        %v1153 = vld [vmem:[%s204 + $0x788] sm:$0xff]
        %v1154 = vld [vmem:[%s204 + $0x790] sm:$0xff]
        %v1155 = vld [vmem:[%s204 + $0x798] sm:$0xff]
        %v1156 = vld [vmem:[%s204 + $0x7a0] sm:$0xff]
        %v1157 = vld [vmem:[%s204 + $0x7a8] sm:$0xff]
        %v1158 = vld [vmem:[%s204 + $0x7b0] sm:$0xff]
        %v1159 = vld [vmem:[%s204 + $0x7b8] sm:$0xff]
        %v1160 = vld [vmem:[%s204 + $0x7c0] sm:$0xff]
        %v1161 = vld [vmem:[%s204 + $0x7c8] sm:$0xff]
        %v1162 = vld [vmem:[%s204 + $0x7d0] sm:$0xff]
        %v1163 = vld [vmem:[%s204 + $0x7d8] sm:$0xff]
        %v1164 = vld [vmem:[%s204 + $0x7e0] sm:$0xff]
        %v1165 = vld [vmem:[%s204 + $0x7e8] sm:$0xff]
        %v1166 = vld [vmem:[%s204 + $0x7f0] sm:$0xff]
        %v1167 = vld [vmem:[%s204 + $0x7f8] sm:$0xff]
        %v1168 = vld [vmem:[%s204 + $0x800] sm:$0xff]
        %v1169 = vld [vmem:[%s204 + $0x808] sm:$0xff]
        %v1170 = vld [vmem:[%s204 + $0x810] sm:$0xff]
        %v1171 = vld [vmem:[%s204 + $0x818] sm:$0xff]
        %v1172 = vld [vmem:[%s204 + $0x820] sm:$0xff]
        %v1173 = vld [vmem:[%s204 + $0x828] sm:$0xff]
        %v1174 = vld [vmem:[%s204 + $0x830] sm:$0xff]
        %v1175 = vld [vmem:[%s204 + $0x838] sm:$0xff]
        %v1176 = vld [vmem:[%s204 + $0x840] sm:$0xff]
        %v1177 = vld [vmem:[%s204 + $0x848] sm:$0xff]
        %v1178 = vld [vmem:[%s204 + $0x850] sm:$0xff]
        %v1179 = vld [vmem:[%s204 + $0x858] sm:$0xff]
        %v1180 = vld [vmem:[%s204 + $0x860] sm:$0xff]
        %v1181 = vld [vmem:[%s204 + $0x868] sm:$0xff]
        %v1182 = vld [vmem:[%s204 + $0x870] sm:$0xff]
        %v1183 = vld [vmem:[%s204 + $0x878] sm:$0xff]
        %v1184 = vld [vmem:[%s204 + $0x880] sm:$0xff]
        %v1185 = vld [vmem:[%s204 + $0x888] sm:$0xff]
        %v1186 = vld [vmem:[%s204 + $0x890] sm:$0xff]
        %v1187 = vld [vmem:[%s204 + $0x898] sm:$0xff]
        %v1188 = vld [vmem:[%s204 + $0x8a0] sm:$0xff]
        %v1189 = vld [vmem:[%s204 + $0x8a8] sm:$0xff]
        %v1190 = vld [vmem:[%s204 + $0x8b0] sm:$0xff]
        %v1191 = vld [vmem:[%s204 + $0x8b8] sm:$0xff]
        %v1192 = vld [vmem:[%s204 + $0x8c0] sm:$0xff]
        %v1193 = vld [vmem:[%s204 + $0x8c8] sm:$0xff]
        %v1194 = vld [vmem:[%s204 + $0x8d0] sm:$0xff]
        %v1195 = vld [vmem:[%s204 + $0x8d8] sm:$0xff]
        %v1196 = vld [vmem:[%s204 + $0x8e0] sm:$0xff]
        %v1197 = vld [vmem:[%s204 + $0x8e8] sm:$0xff]
        %v1198 = vld [vmem:[%s204 + $0x8f0] sm:$0xff]
        %v1199 = vld [vmem:[%s204 + $0x8f8] sm:$0xff]
        %v1200 = vld [vmem:[%s204 + $0x900] sm:$0xff]
        %v1201 = vld [vmem:[%s204 + $0x908] sm:$0xff]
        %v1202 = vld [vmem:[%s204 + $0x910] sm:$0xff]
        %v1203 = vld [vmem:[%s204 + $0x918] sm:$0xff]
        %v1204 = vld [vmem:[%s204 + $0x920] sm:$0xff]
        %v1205 = vld [vmem:[%s204 + $0x928] sm:$0xff]
        %v1206 = vld [vmem:[%s204 + $0x930] sm:$0xff]
        %v1207 = vld [vmem:[%s204 + $0x938] sm:$0xff]
        %v1208 = vld [vmem:[%s204 + $0x940] sm:$0xff]
        %v1209 = vld [vmem:[%s204 + $0x948] sm:$0xff]
        %v1210 = vld [vmem:[%s204 + $0x950] sm:$0xff]
        %v1211 = vld [vmem:[%s204 + $0x958] sm:$0xff]
        %v1212 = vld [vmem:[%s204 + $0x960] sm:$0xff]
        %v1213 = vld [vmem:[%s204 + $0x968] sm:$0xff]
        %v1214 = vld [vmem:[%s204 + $0x970] sm:$0xff]
        %v1215 = vld [vmem:[%s204 + $0x978] sm:$0xff]
        %v1216 = vld [vmem:[%s204 + $0x980] sm:$0xff]
        %v1217 = vld [vmem:[%s204 + $0x988] sm:$0xff]
        %v1218 = vld [vmem:[%s204 + $0x990] sm:$0xff]
        %v1219 = vld [vmem:[%s204 + $0x998] sm:$0xff]
        %v1220 = vld [vmem:[%s204 + $0x9a0] sm:$0xff]
        %v1221 = vld [vmem:[%s204 + $0x9a8] sm:$0xff]
        %v1222 = vld [vmem:[%s204 + $0x9b0] sm:$0xff]
        %v1223 = vld [vmem:[%s204 + $0x9b8] sm:$0xff]
        %v1224 = vld [vmem:[%s204 + $0x9c0] sm:$0xff]
        %v1225 = vld [vmem:[%s204 + $0x9c8] sm:$0xff]
        %v1226 = vld [vmem:[%s204 + $0x9d0] sm:$0xff]
        %v1227 = vld [vmem:[%s204 + $0x9d8] sm:$0xff]
        %v1228 = vld [vmem:[%s204 + $0x9e0] sm:$0xff]
        %v1229 = vld [vmem:[%s204 + $0x9e8] sm:$0xff]
        %v1230 = vld [vmem:[%s204 + $0x9f0] sm:$0xff]
        %v1231 = vld [vmem:[%s204 + $0x9f8] sm:$0xff]
        %v1232 = vld [vmem:[%s204 + $0xa00] sm:$0xff]
        %v1233 = vld [vmem:[%s204 + $0xa08] sm:$0xff]
        %v1234 = vld [vmem:[%s204 + $0xa10] sm:$0xff]
        %v1235 = vld [vmem:[%s204 + $0xa18] sm:$0xff]
        %v1236 = vld [vmem:[%s204 + $0xa20] sm:$0xff]
        %v1237 = vld [vmem:[%s204 + $0xa28] sm:$0xff]
        %v1238 = vld [vmem:[%s204 + $0xa30] sm:$0xff]
        %v1239 = vld [vmem:[%s204 + $0xa38] sm:$0xff]
        %v1240 = vld [vmem:[%s204 + $0xa40] sm:$0xff]
        %v1241 = vld [vmem:[%s204 + $0xa48] sm:$0xff]
        %v1242 = vld [vmem:[%s204 + $0xa50] sm:$0xff]
        %v1243 = vld [vmem:[%s204 + $0xa58] sm:$0xff]
        %v1244 = vld [vmem:[%s204 + $0xa60] sm:$0xff]
        %v1245 = vld [vmem:[%s204 + $0xa68] sm:$0xff]
        %v1246 = vld [vmem:[%s204 + $0xa70] sm:$0xff]
        %v1247 = vld [vmem:[%s204 + $0xa78] sm:$0xff]
        %v1248 = vld [vmem:[%s204 + $0xa80] sm:$0xff]
        %v1249 = vld [vmem:[%s204 + $0xa88] sm:$0xff]
        %v1250 = vld [vmem:[%s204 + $0xa90] sm:$0xff]
        %v1251 = vld [vmem:[%s204 + $0xa98] sm:$0xff]
        %v1252 = vld [vmem:[%s204 + $0xaa0] sm:$0xff]
        %v1253 = vld [vmem:[%s204 + $0xaa8] sm:$0xff]
        %v1254 = vld [vmem:[%s204 + $0xab0] sm:$0xff]
        %v1255 = vld [vmem:[%s204 + $0xab8] sm:$0xff]
        %v1256 = vld [vmem:[%s204 + $0xac0] sm:$0xff]
        %v1257 = vld [vmem:[%s204 + $0xac8] sm:$0xff]
        %v1258 = vld [vmem:[%s204 + $0xad0] sm:$0xff]
        %v1259 = vld [vmem:[%s204 + $0xad8] sm:$0xff]
        %v1260 = vld [vmem:[%s204 + $0xae0] sm:$0xff]
        %v1261 = vld [vmem:[%s204 + $0xae8] sm:$0xff]
        %v1262 = vld [vmem:[%s204 + $0xaf0] sm:$0xff]
        %v1263 = vld [vmem:[%s204 + $0xaf8] sm:$0xff]
        %v1264 = vld [vmem:[%s204 + $0xb00] sm:$0xff]
        %v1265 = vld [vmem:[%s204 + $0xb08] sm:$0xff]
        %v1266 = vld [vmem:[%s204 + $0xb10] sm:$0xff]
        %v1267 = vld [vmem:[%s204 + $0xb18] sm:$0xff]
        %v1268 = vld [vmem:[%s204 + $0xb20] sm:$0xff]
        %v1269 = vld [vmem:[%s204 + $0xb28] sm:$0xff]
        %v1270 = vld [vmem:[%s204 + $0xb30] sm:$0xff]
        %v1271 = vld [vmem:[%s204 + $0xb38] sm:$0xff]
        %v1272 = vld [vmem:[%s204 + $0xb40] sm:$0xff]
        %v1273 = vld [vmem:[%s204 + $0xb48] sm:$0xff]
        %v1274 = vld [vmem:[%s204 + $0xb50] sm:$0xff]
        %v1275 = vld [vmem:[%s204 + $0xb58] sm:$0xff]
        %v1276 = vld [vmem:[%s204 + $0xb60] sm:$0xff]
        %v1277 = vld [vmem:[%s204 + $0xb68] sm:$0xff]
        %v1278 = vld [vmem:[%s204 + $0xb70] sm:$0xff]
        %v1279 = vld [vmem:[%s204 + $0xb78] sm:$0xff]
        %v1280 = vld [vmem:[%s204 + $0xb80] sm:$0xff]
        %v1281 = vld [vmem:[%s204 + $0xb88] sm:$0xff]
        %v1282 = vld [vmem:[%s204 + $0xb90] sm:$0xff]
        %v1283 = vld [vmem:[%s204 + $0xb98] sm:$0xff]
        %v1284 = vld [vmem:[%s204 + $0xba0] sm:$0xff]
        %v1285 = vld [vmem:[%s204 + $0xba8] sm:$0xff]
        %v1286 = vld [vmem:[%s204 + $0xbb0] sm:$0xff]
        %v1287 = vld [vmem:[%s204 + $0xbb8] sm:$0xff]
        %v1288 = vld [vmem:[%s204 + $0xbc0] sm:$0xff]
        %v1289 = vld [vmem:[%s204 + $0xbc8] sm:$0xff]
        %v1290 = vld [vmem:[%s204 + $0xbd0] sm:$0xff]
        %v1291 = vld [vmem:[%s204 + $0xbd8] sm:$0xff]
        %v1292 = vld [vmem:[%s204 + $0xbe0] sm:$0xff]
        %v1293 = vld [vmem:[%s204 + $0xbe8] sm:$0xff]
        %v1294 = vld [vmem:[%s204 + $0xbf0] sm:$0xff]
        %v1295 = vld [vmem:[%s204 + $0xbf8] sm:$0xff]
        %v1296 = vld [vmem:[%s204 + $0xc00] sm:$0xff]
        %v1297 = vld [vmem:[%s204 + $0xc08] sm:$0xff]
        %v1298 = vld [vmem:[%s204 + $0xc10] sm:$0xff]
        %v1299 = vld [vmem:[%s204 + $0xc18] sm:$0xff]
        %v1300 = vld [vmem:[%s204 + $0xc20] sm:$0xff]
        %v1301 = vld [vmem:[%s204 + $0xc28] sm:$0xff]
        %v1302 = vld [vmem:[%s204 + $0xc30] sm:$0xff]
        %v1303 = vld [vmem:[%s204 + $0xc38] sm:$0xff]
        %v1304 = vld [vmem:[%s204 + $0xc40] sm:$0xff]
        %v1305 = vld [vmem:[%s204 + $0xc48] sm:$0xff]
        %v1306 = vld [vmem:[%s204 + $0xc50] sm:$0xff]
        %v1307 = vld [vmem:[%s204 + $0xc58] sm:$0xff]
        %v1308 = vld [vmem:[%s204 + $0xc60] sm:$0xff]
        %v1309 = vld [vmem:[%s204 + $0xc68] sm:$0xff]
        %v1310 = vld [vmem:[%s204 + $0xc70] sm:$0xff]
        %v1311 = vld [vmem:[%s204 + $0xc78] sm:$0xff]
        %v1312 = vld [vmem:[%s204 + $0xc80] sm:$0xff]
        %v1313 = vld [vmem:[%s204 + $0xc88] sm:$0xff]
        %v1314 = vld [vmem:[%s204 + $0xc90] sm:$0xff]
        %v1315 = vld [vmem:[%s204 + $0xc98] sm:$0xff]
        %v1316 = vld [vmem:[%s204 + $0xca0] sm:$0xff]
        %v1317 = vld [vmem:[%s204 + $0xca8] sm:$0xff]
        %v1318 = vld [vmem:[%s204 + $0xcb0] sm:$0xff]
        %v1319 = vld [vmem:[%s204 + $0xcb8] sm:$0xff]
        %v1320 = vld [vmem:[%s204 + $0xcc0] sm:$0xff]
        %v1321 = vld [vmem:[%s204 + $0xcc8] sm:$0xff]
        %v1322 = vld [vmem:[%s204 + $0xcd0] sm:$0xff]
        %v1323 = vld [vmem:[%s204 + $0xcd8] sm:$0xff]
        %v1324 = vld [vmem:[%s204 + $0xce0] sm:$0xff]
        %v1325 = vld [vmem:[%s204 + $0xce8] sm:$0xff]
        %v1326 = vld [vmem:[%s204 + $0xcf0] sm:$0xff]
        %v1327 = vld [vmem:[%s204 + $0xcf8] sm:$0xff]
        %v1328 = vld [vmem:[%s204 + $0xd00] sm:$0xff]
        %v1329 = vld [vmem:[%s204 + $0xd08] sm:$0xff]
        %v1330 = vld [vmem:[%s204 + $0xd10] sm:$0xff]
        %v1331 = vld [vmem:[%s204 + $0xd18] sm:$0xff]
        %v1332 = vld [vmem:[%s204 + $0xd20] sm:$0xff]
        %v1333 = vld [vmem:[%s204 + $0xd28] sm:$0xff]
        %v1334 = vld [vmem:[%s204 + $0xd30] sm:$0xff]
        %v1335 = vld [vmem:[%s204 + $0xd38] sm:$0xff]
        %v1336 = vld [vmem:[%s204 + $0xd40] sm:$0xff]
        %v1337 = vld [vmem:[%s204 + $0xd48] sm:$0xff]
        %v1338 = vld [vmem:[%s204 + $0xd50] sm:$0xff]
        %v1339 = vld [vmem:[%s204 + $0xd58] sm:$0xff]
        %v1340 = vld [vmem:[%s204 + $0xd60] sm:$0xff]
        %v1341 = vld [vmem:[%s204 + $0xd68] sm:$0xff]
        %v1342 = vld [vmem:[%s204 + $0xd70] sm:$0xff]
        %v1343 = vld [vmem:[%s204 + $0xd78] sm:$0xff]
        %v1344 = vld [vmem:[%s204 + $0xd80] sm:$0xff]
        %v1345 = vld [vmem:[%s204 + $0xd88] sm:$0xff]
        %v1346 = vld [vmem:[%s204 + $0xd90] sm:$0xff]
        %v1347 = vld [vmem:[%s204 + $0xd98] sm:$0xff]
        %v1348 = vld [vmem:[%s204 + $0xda0] sm:$0xff]
        %v1349 = vld [vmem:[%s204 + $0xda8] sm:$0xff]
        %v1350 = vld [vmem:[%s204 + $0xdb0] sm:$0xff]
        %v1351 = vld [vmem:[%s204 + $0xdb8] sm:$0xff]
        %v1352 = vld [vmem:[%s204 + $0xdc0] sm:$0xff]
        %v1353 = vld [vmem:[%s204 + $0xdc8] sm:$0xff]
        %v1354 = vld [vmem:[%s204 + $0xdd0] sm:$0xff]
        %v1355 = vld [vmem:[%s204 + $0xdd8] sm:$0xff]
        %v1356 = vld [vmem:[%s204 + $0xde0] sm:$0xff]
        %v1357 = vld [vmem:[%s204 + $0xde8] sm:$0xff]
        %v1358 = vld [vmem:[%s204 + $0xdf0] sm:$0xff]
        %v1359 = vld [vmem:[%s204 + $0xdf8] sm:$0xff]
        %v1360 = vld [vmem:[%s204 + $0xe00] sm:$0xff]
        %v1361 = vld [vmem:[%s204 + $0xe08] sm:$0xff]
        %v1362 = vld [vmem:[%s204 + $0xe10] sm:$0xff]
        %v1363 = vld [vmem:[%s204 + $0xe18] sm:$0xff]
        %v1364 = vld [vmem:[%s204 + $0xe20] sm:$0xff]
        %v1365 = vld [vmem:[%s204 + $0xe28] sm:$0xff]
        %v1366 = vld [vmem:[%s204 + $0xe30] sm:$0xff]
        %v1367 = vld [vmem:[%s204 + $0xe38] sm:$0xff]
        %v1368 = vld [vmem:[%s204 + $0xe40] sm:$0xff]
        %v1369 = vld [vmem:[%s204 + $0xe48] sm:$0xff]
        %v1370 = vld [vmem:[%s204 + $0xe50] sm:$0xff]
        %v1371 = vld [vmem:[%s204 + $0xe58] sm:$0xff]
        %v1372 = vld [vmem:[%s204 + $0xe60] sm:$0xff]
        %v1373 = vld [vmem:[%s204 + $0xe68] sm:$0xff]
        %v1374 = vld [vmem:[%s204 + $0xe70] sm:$0xff]
        %v1375 = vld [vmem:[%s204 + $0xe78] sm:$0xff]
        %v1376 = vld [vmem:[%s204 + $0xe80] sm:$0xff]
        %v1377 = vld [vmem:[%s204 + $0xe88] sm:$0xff]
        %v1378 = vld [vmem:[%s204 + $0xe90] sm:$0xff]
        %v1379 = vld [vmem:[%s204 + $0xe98] sm:$0xff]
        %v1380 = vld [vmem:[%s204 + $0xea0] sm:$0xff]
        %v1381 = vld [vmem:[%s204 + $0xea8] sm:$0xff]
        %v1382 = vld [vmem:[%s204 + $0xeb0] sm:$0xff]
        %v1383 = vld [vmem:[%s204 + $0xeb8] sm:$0xff]
        %v1384 = vld [vmem:[%s204 + $0xec0] sm:$0xff]
        %v1385 = vld [vmem:[%s204 + $0xec8] sm:$0xff]
        %v1386 = vld [vmem:[%s204 + $0xed0] sm:$0xff]
        %v1387 = vld [vmem:[%s204 + $0xed8] sm:$0xff]
        %v1388 = vld [vmem:[%s204 + $0xee0] sm:$0xff]
        %v1389 = vld [vmem:[%s204 + $0xee8] sm:$0xff]
        %v1390 = vld [vmem:[%s204 + $0xef0] sm:$0xff]
        %v1391 = vld [vmem:[%s204 + $0xef8] sm:$0xff]
        %v1392 = vld [vmem:[%s204 + $0xf00] sm:$0xff]
        %v1393 = vld [vmem:[%s204 + $0xf08] sm:$0xff]
        %v1394 = vld [vmem:[%s204 + $0xf10] sm:$0xff]
        %v1395 = vld [vmem:[%s204 + $0xf18] sm:$0xff]
        %v1396 = vld [vmem:[%s204 + $0xf20] sm:$0xff]
        %v1397 = vld [vmem:[%s204 + $0xf28] sm:$0xff]
        %v1398 = vld [vmem:[%s204 + $0xf30] sm:$0xff]
        %v1399 = vld [vmem:[%s204 + $0xf38] sm:$0xff]
        %v1400 = vld [vmem:[%s204 + $0xf40] sm:$0xff]
        %v1401 = vld [vmem:[%s204 + $0xf48] sm:$0xff]
        %v1402 = vld [vmem:[%s204 + $0xf50] sm:$0xff]
        %v1403 = vld [vmem:[%s204 + $0xf58] sm:$0xff]
        %v1404 = vld [vmem:[%s204 + $0xf60] sm:$0xff]
        %v1405 = vld [vmem:[%s204 + $0xf68] sm:$0xff]
        %v1406 = vld [vmem:[%s204 + $0xf70] sm:$0xff]
        %v1407 = vld [vmem:[%s204 + $0xf78] sm:$0xff]
        %v1408 = vld [vmem:[%s204 + $0xf80] sm:$0xff]
        %v1409 = vld [vmem:[%s204 + $0xf88] sm:$0xff]
        %v1410 = vld [vmem:[%s204 + $0xf90] sm:$0xff]
        %v1411 = vld [vmem:[%s204 + $0xf98] sm:$0xff]
        %v1412 = vld [vmem:[%s204 + $0xfa0] sm:$0xff]
        %v1413 = vld [vmem:[%s204 + $0xfa8] sm:$0xff]
        %v1414 = vld [vmem:[%s204 + $0xfb0] sm:$0xff]
        %v1415 = vld [vmem:[%s204 + $0xfb8] sm:$0xff]
        %v1416 = vld [vmem:[%s204 + $0xfc0] sm:$0xff]
        %v1417 = vld [vmem:[%s204 + $0xfc8] sm:$0xff]
        %v1418 = vld [vmem:[%s204 + $0xfd0] sm:$0xff]
        %v1419 = vld [vmem:[%s204 + $0xfd8] sm:$0xff]
        %v1420 = vld [vmem:[%s204 + $0xfe0] sm:$0xff]
        %v1421 = vld [vmem:[%s204 + $0xfe8] sm:$0xff]
        %v1422 = vld [vmem:[%s204 + $0xff0] sm:$0xff]
        %v1423 = vld [vmem:[%s204 + $0xff8] sm:$0xff]
        %v1424 = vld [vmem:[%s204 + $0x1000] sm:$0xff]
        %v1425 = vld [vmem:[%s204 + $0x1008] sm:$0xff]
        %v1426 = vld [vmem:[%s204 + $0x1010] sm:$0xff]
        %v1427 = vld [vmem:[%s204 + $0x1018] sm:$0xff]
        %v1428 = vld [vmem:[%s204 + $0x1020] sm:$0xff]
        %v1429 = vld [vmem:[%s204 + $0x1028] sm:$0xff]
        %v1430 = vld [vmem:[%s204 + $0x1030] sm:$0xff]
        %v1431 = vld [vmem:[%s204 + $0x1038] sm:$0xff]
        %v1432 = vld [vmem:[%s204 + $0x1040] sm:$0xff]
        %v1433 = vld [vmem:[%s204 + $0x1048] sm:$0xff]
        %v1434 = vld [vmem:[%s204 + $0x1050] sm:$0xff]
        %v1435 = vld [vmem:[%s204 + $0x1058] sm:$0xff]
        %v1436 = vld [vmem:[%s204 + $0x1060] sm:$0xff]
        %v1437 = vld [vmem:[%s204 + $0x1068] sm:$0xff]
        %v1438 = vld [vmem:[%s204 + $0x1070] sm:$0xff]
        %v1439 = vld [vmem:[%s204 + $0x1078] sm:$0xff]
        %v1440 = vld [vmem:[%s204 + $0x1080] sm:$0xff]
        %v1441 = vld [vmem:[%s204 + $0x1088] sm:$0xff]
        %v1442 = vld [vmem:[%s204 + $0x1090] sm:$0xff]
        %v1443 = vld [vmem:[%s204 + $0x1098] sm:$0xff]
        %v1444 = vld [vmem:[%s204 + $0x10a0] sm:$0xff]
        %v1445 = vld [vmem:[%s204 + $0x10a8] sm:$0xff]
        %v1446 = vld [vmem:[%s204 + $0x10b0] sm:$0xff]
        %v1447 = vld [vmem:[%s204 + $0x10b8] sm:$0xff]
        %v1448 = vld [vmem:[%s204 + $0x10c0] sm:$0xff]
        %v1449 = vld [vmem:[%s204 + $0x10c8] sm:$0xff]
        %v1450 = vld [vmem:[%s204 + $0x10d0] sm:$0xff]
        %v1451 = vld [vmem:[%s204 + $0x10d8] sm:$0xff]
        %v1452 = vld [vmem:[%s204 + $0x10e0] sm:$0xff]
        %v1453 = vld [vmem:[%s204 + $0x10e8] sm:$0xff]
        %v1454 = vld [vmem:[%s204 + $0x10f0] sm:$0xff]
        %v1455 = vld [vmem:[%s204 + $0x10f8] sm:$0xff]
        %v1456 = vld [vmem:[%s204 + $0x1100] sm:$0xff]
        %v1457 = vld [vmem:[%s204 + $0x1108] sm:$0xff]
        %v1458 = vld [vmem:[%s204 + $0x1110] sm:$0xff]
        %v1459 = vld [vmem:[%s204 + $0x1118] sm:$0xff]
        %v1460 = vld [vmem:[%s204 + $0x1120] sm:$0xff]
        %v1461 = vld [vmem:[%s204 + $0x1128] sm:$0xff]
        %v1462 = vld [vmem:[%s204 + $0x1130] sm:$0xff]
        %v1463 = vld [vmem:[%s204 + $0x1138] sm:$0xff]
        %v1464 = vld [vmem:[%s204 + $0x1140] sm:$0xff]
        %v1465 = vld [vmem:[%s204 + $0x1148] sm:$0xff]
        %v1466 = vld [vmem:[%s204 + $0x1150] sm:$0xff]
        %v1467 = vld [vmem:[%s204 + $0x1158] sm:$0xff]
        %v1468 = vld [vmem:[%s204 + $0x1160] sm:$0xff]
        %v1469 = vld [vmem:[%s204 + $0x1168] sm:$0xff]
        %v1470 = vld [vmem:[%s204 + $0x1170] sm:$0xff]
        %v1471 = vld [vmem:[%s204 + $0x1178] sm:$0xff]
        %v1472 = vld [vmem:[%s204 + $0x1180] sm:$0xff]
        %v1473 = vld [vmem:[%s204 + $0x1188] sm:$0xff]
        %v1474 = vld [vmem:[%s204 + $0x1190] sm:$0xff]
        %v1475 = vld [vmem:[%s204 + $0x1198] sm:$0xff]
        %v1476 = vld [vmem:[%s204 + $0x11a0] sm:$0xff]
        %v1477 = vld [vmem:[%s204 + $0x11a8] sm:$0xff]
        %v1478 = vld [vmem:[%s204 + $0x11b0] sm:$0xff]
        %v1479 = vld [vmem:[%s204 + $0x11b8] sm:$0xff]
        %v1480 = vld [vmem:[%s204 + $0x11c0] sm:$0xff]
        %v1481 = vld [vmem:[%s204 + $0x11c8] sm:$0xff]
        %v1482 = vld [vmem:[%s204 + $0x11d0] sm:$0xff]
        %v1483 = vld [vmem:[%s204 + $0x11d8] sm:$0xff]
        %v1484 = vld [vmem:[%s204 + $0x11e0] sm:$0xff]
        %v1485 = vld [vmem:[%s204 + $0x11e8] sm:$0xff]
        %v1486 = vld [vmem:[%s204 + $0x11f0] sm:$0xff]
        %v1487 = vld [vmem:[%s204 + $0x11f8] sm:$0xff]
        %v1488 = vld [vmem:[%s204 + $0x1200] sm:$0xff]
        %v1489 = vld [vmem:[%s204 + $0x1208] sm:$0xff]
        %v1490 = vld [vmem:[%s204 + $0x1210] sm:$0xff]
        %v1491 = vld [vmem:[%s204 + $0x1218] sm:$0xff]
        %v1492 = vld [vmem:[%s204 + $0x1220] sm:$0xff]
        %v1493 = vld [vmem:[%s204 + $0x1228] sm:$0xff]
        %v1494 = vld [vmem:[%s204 + $0x1230] sm:$0xff]
        %v1495 = vld [vmem:[%s204 + $0x1238] sm:$0xff]
        %v1496 = vld [vmem:[%s204 + $0x1240] sm:$0xff]
        %v1497 = vld [vmem:[%s204 + $0x1248] sm:$0xff]
        %v1498 = vld [vmem:[%s204 + $0x1250] sm:$0xff]
        %v1499 = vld [vmem:[%s204 + $0x1258] sm:$0xff]
        %v1500 = vld [vmem:[%s204 + $0x1260] sm:$0xff]
        %v1501 = vld [vmem:[%s204 + $0x1268] sm:$0xff]
        %v1502 = vld [vmem:[%s204 + $0x1270] sm:$0xff]
        %v1503 = vld [vmem:[%s204 + $0x1278] sm:$0xff]
        %v1504 = vld [vmem:[%s204 + $0x1280] sm:$0xff]
        %v1505 = vld [vmem:[%s204 + $0x1288] sm:$0xff]
        %v1506 = vld [vmem:[%s204 + $0x1290] sm:$0xff]
        %v1507 = vld [vmem:[%s204 + $0x1298] sm:$0xff]
        %v1508 = vld [vmem:[%s204 + $0x12a0] sm:$0xff]
        %v1509 = vld [vmem:[%s204 + $0x12a8] sm:$0xff]
        %v1510 = vld [vmem:[%s204 + $0x12b0] sm:$0xff]
        %v1511 = vld [vmem:[%s204 + $0x12b8] sm:$0xff]
        %v1512 = vld [vmem:[%s204 + $0x12c0] sm:$0xff]
        %v1513 = vld [vmem:[%s204 + $0x12c8] sm:$0xff]
        %v1514 = vld [vmem:[%s204 + $0x12d0] sm:$0xff]
        %v1515 = vld [vmem:[%s204 + $0x12d8] sm:$0xff]
        %v1516 = vld [vmem:[%s204 + $0x12e0] sm:$0xff]
        %v1517 = vld [vmem:[%s204 + $0x12e8] sm:$0xff]
        %v1518 = vld [vmem:[%s204 + $0x12f0] sm:$0xff]
        %v1519 = vld [vmem:[%s204 + $0x12f8] sm:$0xff]
        %v1520 = vld [vmem:[%s204 + $0x1300] sm:$0xff]
        %v1521 = vld [vmem:[%s204 + $0x1308] sm:$0xff]
        %v1522 = vld [vmem:[%s204 + $0x1310] sm:$0xff]
        %v1523 = vld [vmem:[%s204 + $0x1318] sm:$0xff]
        %v1524 = vld [vmem:[%s204 + $0x1320] sm:$0xff]
        %v1525 = vld [vmem:[%s204 + $0x1328] sm:$0xff]
        %v1526 = vld [vmem:[%s204 + $0x1330] sm:$0xff]
        %v1527 = vld [vmem:[%s204 + $0x1338] sm:$0xff]
        %v1528 = vld [vmem:[%s204 + $0x1340] sm:$0xff]
        %v1529 = vld [vmem:[%s204 + $0x1348] sm:$0xff]
        %v1530 = vld [vmem:[%s204 + $0x1350] sm:$0xff]
        %v1531 = vld [vmem:[%s204 + $0x1358] sm:$0xff]
        %v1532 = vld [vmem:[%s204 + $0x1360] sm:$0xff]
        %v1533 = vld [vmem:[%s204 + $0x1368] sm:$0xff]
        %v1534 = vld [vmem:[%s204 + $0x1370] sm:$0xff]
        %v1535 = vld [vmem:[%s204 + $0x1378] sm:$0xff]
        %v1536 = vld [vmem:[%s204 + $0x1380] sm:$0xff]
        %v1537 = vld [vmem:[%s204 + $0x1388] sm:$0xff]
        %v1538 = vld [vmem:[%s204 + $0x1390] sm:$0xff]
        %v1539 = vld [vmem:[%s204 + $0x1398] sm:$0xff]
        %v1540 = vld [vmem:[%s204 + $0x13a0] sm:$0xff]
        %v1541 = vld [vmem:[%s204 + $0x13a8] sm:$0xff]
        %v1542 = vld [vmem:[%s204 + $0x13b0] sm:$0xff]
        %v1543 = vld [vmem:[%s204 + $0x13b8] sm:$0xff]
        %v1544 = vld [vmem:[%s204 + $0x13c0] sm:$0xff]
        %v1545 = vld [vmem:[%s204 + $0x13c8] sm:$0xff]
        %v1546 = vld [vmem:[%s204 + $0x13d0] sm:$0xff]
        %v1547 = vld [vmem:[%s204 + $0x13d8] sm:$0xff]
        %v1548 = vld [vmem:[%s204 + $0x13e0] sm:$0xff]
        %v1549 = vld [vmem:[%s204 + $0x13e8] sm:$0xff]
        %v1550 = vld [vmem:[%s204 + $0x13f0] sm:$0xff]
        %v1551 = vld [vmem:[%s204 + $0x13f8] sm:$0xff]
        %v1552 = vld [vmem:[%s204 + $0x1400] sm:$0xff]
        %v1553 = vld [vmem:[%s204 + $0x1408] sm:$0xff]
        %v1554 = vld [vmem:[%s204 + $0x1410] sm:$0xff]
        %v1555 = vld [vmem:[%s204 + $0x1418] sm:$0xff]
        %v1556 = vld [vmem:[%s204 + $0x1420] sm:$0xff]
        %v1557 = vld [vmem:[%s204 + $0x1428] sm:$0xff]
        %v1558 = vld [vmem:[%s204 + $0x1430] sm:$0xff]
        %v1559 = vld [vmem:[%s204 + $0x1438] sm:$0xff]
        %v1560 = vld [vmem:[%s204 + $0x1440] sm:$0xff]
        %v1561 = vld [vmem:[%s204 + $0x1448] sm:$0xff]
        %v1562 = vld [vmem:[%s204 + $0x1450] sm:$0xff]
        %v1563 = vld [vmem:[%s204 + $0x1458] sm:$0xff]
        %v1564 = vld [vmem:[%s204 + $0x1460] sm:$0xff]
        %v1565 = vld [vmem:[%s204 + $0x1468] sm:$0xff]
        %v1566 = vld [vmem:[%s204 + $0x1470] sm:$0xff]
        %v1567 = vld [vmem:[%s204 + $0x1478] sm:$0xff]
        %v1568 = vld [vmem:[%s204 + $0x1480] sm:$0xff]
        %v1569 = vld [vmem:[%s204 + $0x1488] sm:$0xff]
        %v1570 = vld [vmem:[%s204 + $0x1490] sm:$0xff]
        %v1571 = vld [vmem:[%s204 + $0x1498] sm:$0xff]
        %v1572 = vld [vmem:[%s204 + $0x14a0] sm:$0xff]
        %v1573 = vld [vmem:[%s204 + $0x14a8] sm:$0xff]
        %v1574 = vld [vmem:[%s204 + $0x14b0] sm:$0xff]
        %v1575 = vld [vmem:[%s204 + $0x14b8] sm:$0xff]
        %v1576 = vld [vmem:[%s204 + $0x14c0] sm:$0xff]
        %v1577 = vld [vmem:[%s204 + $0x14c8] sm:$0xff]
        %v1578 = vld [vmem:[%s204 + $0x14d0] sm:$0xff]
        %v1579 = vld [vmem:[%s204 + $0x14d8] sm:$0xff]
        %v1580 = vld [vmem:[%s204 + $0x14e0] sm:$0xff]
        %v1581 = vld [vmem:[%s204 + $0x14e8] sm:$0xff]
        %v1582 = vld [vmem:[%s204 + $0x14f0] sm:$0xff]
        %v1583 = vld [vmem:[%s204 + $0x14f8] sm:$0xff]
        %v1584 = vld [vmem:[%s204 + $0x1500] sm:$0xff]
        %v1585 = vld [vmem:[%s204 + $0x1508] sm:$0xff]
        %v1586 = vld [vmem:[%s204 + $0x1510] sm:$0xff]
        %v1587 = vld [vmem:[%s204 + $0x1518] sm:$0xff]
        %v1588 = vld [vmem:[%s204 + $0x1520] sm:$0xff]
        %v1589 = vld [vmem:[%s204 + $0x1528] sm:$0xff]
        %v1590 = vld [vmem:[%s204 + $0x1530] sm:$0xff]
        %v1591 = vld [vmem:[%s204 + $0x1538] sm:$0xff]
        %v1592 = vld [vmem:[%s204 + $0x1540] sm:$0xff]
        %v1593 = vld [vmem:[%s204 + $0x1548] sm:$0xff]
        %v1594 = vld [vmem:[%s204 + $0x1550] sm:$0xff]
        %v1595 = vld [vmem:[%s204 + $0x1558] sm:$0xff]
        %v1596 = vld [vmem:[%s204 + $0x1560] sm:$0xff]
        %v1597 = vld [vmem:[%s204 + $0x1568] sm:$0xff]
        %v1598 = vld [vmem:[%s204 + $0x1570] sm:$0xff]
        %v1599 = vld [vmem:[%s204 + $0x1578] sm:$0xff]
        %v1600 = vld [vmem:[%s204 + $0x1580] sm:$0xff]
        %v1601 = vld [vmem:[%s204 + $0x1588] sm:$0xff]
        %v1602 = vld [vmem:[%s204 + $0x1590] sm:$0xff]
        %v1603 = vld [vmem:[%s204 + $0x1598] sm:$0xff]
        %v1604 = vld [vmem:[%s204 + $0x15a0] sm:$0xff]
        %v1605 = vld [vmem:[%s204 + $0x15a8] sm:$0xff]
        %v1606 = vld [vmem:[%s204 + $0x15b0] sm:$0xff]
        %v1607 = vld [vmem:[%s204 + $0x15b8] sm:$0xff]
        %v1608 = vld [vmem:[%s204 + $0x15c0] sm:$0xff]
        %v1609 = vld [vmem:[%s204 + $0x15c8] sm:$0xff]
        %v1610 = vld [vmem:[%s204 + $0x15d0] sm:$0xff]
        %v1611 = vld [vmem:[%s204 + $0x15d8] sm:$0xff]
        %v1612 = vld [vmem:[%s204 + $0x15e0] sm:$0xff]
        %v1613 = vld [vmem:[%s204 + $0x15e8] sm:$0xff]
        %v1614 = vld [vmem:[%s204 + $0x15f0] sm:$0xff]
        %v1615 = vld [vmem:[%s204 + $0x15f8] sm:$0xff]
        %v1616 = vld [vmem:[%s204 + $0x1600] sm:$0xff]
        %v1617 = vld [vmem:[%s204 + $0x1608] sm:$0xff]
        %v1618 = vld [vmem:[%s204 + $0x1610] sm:$0xff]
        %v1619 = vld [vmem:[%s204 + $0x1618] sm:$0xff]
        %v1620 = vld [vmem:[%s204 + $0x1620] sm:$0xff]
        %v1621 = vld [vmem:[%s204 + $0x1628] sm:$0xff]
        %v1622 = vld [vmem:[%s204 + $0x1630] sm:$0xff]
        %v1623 = vld [vmem:[%s204 + $0x1638] sm:$0xff]
        %v1624 = vld [vmem:[%s204 + $0x1640] sm:$0xff]
        %v1625 = vld [vmem:[%s204 + $0x1648] sm:$0xff]
        %v1626 = vld [vmem:[%s204 + $0x1650] sm:$0xff]
        %v1627 = vld [vmem:[%s204 + $0x1658] sm:$0xff]
        %v1628 = vld [vmem:[%s204 + $0x1660] sm:$0xff]
        %v1629 = vld [vmem:[%s204 + $0x1668] sm:$0xff]
        %v1630 = vld [vmem:[%s204 + $0x1670] sm:$0xff]
        %v1631 = vld [vmem:[%s204 + $0x1678] sm:$0xff]
        %v1632 = vld [vmem:[%s204 + $0x1680] sm:$0xff]
        %v1633 = vld [vmem:[%s204 + $0x1688] sm:$0xff]
        %v1634 = vld [vmem:[%s204 + $0x1690] sm:$0xff]
        %v1635 = vld [vmem:[%s204 + $0x1698] sm:$0xff]
        %v1636 = vld [vmem:[%s204 + $0x16a0] sm:$0xff]
        %v1637 = vld [vmem:[%s204 + $0x16a8] sm:$0xff]
        %v1638 = vld [vmem:[%s204 + $0x16b0] sm:$0xff]
        %v1639 = vld [vmem:[%s204 + $0x16b8] sm:$0xff]
        %v1640 = vld [vmem:[%s204 + $0x16c0] sm:$0xff]
        %v1641 = vld [vmem:[%s204 + $0x16c8] sm:$0xff]
        %v1642 = vld [vmem:[%s204 + $0x16d0] sm:$0xff]
        %v1643 = vld [vmem:[%s204 + $0x16d8] sm:$0xff]
        %v1644 = vld [vmem:[%s204 + $0x16e0] sm:$0xff]
        %v1645 = vld [vmem:[%s204 + $0x16e8] sm:$0xff]
        %v1646 = vld [vmem:[%s204 + $0x16f0] sm:$0xff]
        %v1647 = vld [vmem:[%s204 + $0x16f8] sm:$0xff]
        %v1648 = vld [vmem:[%s204 + $0x1700] sm:$0xff]
        %v1649 = vld [vmem:[%s204 + $0x1708] sm:$0xff]
        %v1650 = vld [vmem:[%s204 + $0x1710] sm:$0xff]
        %v1651 = vld [vmem:[%s204 + $0x1718] sm:$0xff]
        %v1652 = vld [vmem:[%s204 + $0x1720] sm:$0xff]
        %v1653 = vld [vmem:[%s204 + $0x1728] sm:$0xff]
        %v1654 = vld [vmem:[%s204 + $0x1730] sm:$0xff]
        %v1655 = vld [vmem:[%s204 + $0x1738] sm:$0xff]
        %v1656 = vld [vmem:[%s204 + $0x1740] sm:$0xff]
        %v1657 = vld [vmem:[%s204 + $0x1748] sm:$0xff]
        %v1658 = vld [vmem:[%s204 + $0x1750] sm:$0xff]
        %v1659 = vld [vmem:[%s204 + $0x1758] sm:$0xff]
        %v1660 = vld [vmem:[%s204 + $0x1760] sm:$0xff]
        %v1661 = vld [vmem:[%s204 + $0x1768] sm:$0xff]
        %v1662 = vld [vmem:[%s204 + $0x1770] sm:$0xff]
        %v1663 = vld [vmem:[%s204 + $0x1778] sm:$0xff]
        %v1664 = vld [vmem:[%s204 + $0x1780] sm:$0xff]
        %v1665 = vld [vmem:[%s204 + $0x1788] sm:$0xff]
        %v1666 = vld [vmem:[%s204 + $0x1790] sm:$0xff]
        %v1667 = vld [vmem:[%s204 + $0x1798] sm:$0xff]
        %v1668 = vld [vmem:[%s204 + $0x17a0] sm:$0xff]
        %v1669 = vld [vmem:[%s204 + $0x17a8] sm:$0xff]
        %v1670 = vld [vmem:[%s204 + $0x17b0] sm:$0xff]
        %v1671 = vld [vmem:[%s204 + $0x17b8] sm:$0xff]
        %v1672 = vld [vmem:[%s204 + $0x17c0] sm:$0xff]
        %v1673 = vld [vmem:[%s204 + $0x17c8] sm:$0xff]
        %v1674 = vld [vmem:[%s204 + $0x17d0] sm:$0xff]
        %v1675 = vld [vmem:[%s204 + $0x17d8] sm:$0xff]
        %v1676 = vld [vmem:[%s204 + $0x17e0] sm:$0xff]
        %v1677 = vld [vmem:[%s204 + $0x17e8] sm:$0xff]
        %v1678 = vld [vmem:[%s204 + $0x17f0] sm:$0xff]
        %v1679 = vld [vmem:[%s204 + $0x17f8] sm:$0xff]
        %v1680 = vld [vmem:[%s204 + $0x1800] sm:$0xff]
        %v1681 = vld [vmem:[%s204 + $0x1808] sm:$0xff]
        %v1682 = vld [vmem:[%s204 + $0x1810] sm:$0xff]
        %v1683 = vld [vmem:[%s204 + $0x1818] sm:$0xff]
        %v1684 = vld [vmem:[%s204 + $0x1820] sm:$0xff]
        %v1685 = vld [vmem:[%s204 + $0x1828] sm:$0xff]
        %v1686 = vld [vmem:[%s204 + $0x1830] sm:$0xff]
        %v1687 = vld [vmem:[%s204 + $0x1838] sm:$0xff]
        %v1688 = vld [vmem:[%s204 + $0x1840] sm:$0xff]
        %v1689 = vld [vmem:[%s204 + $0x1848] sm:$0xff]
        %v1690 = vld [vmem:[%s204 + $0x1850] sm:$0xff]
        %v1691 = vld [vmem:[%s204 + $0x1858] sm:$0xff]
        %v1692 = vld [vmem:[%s204 + $0x1860] sm:$0xff]
        %v1693 = vld [vmem:[%s204 + $0x1868] sm:$0xff]
        %v1694 = vld [vmem:[%s204 + $0x1870] sm:$0xff]
        %v1695 = vld [vmem:[%s204 + $0x1878] sm:$0xff]
        %v1696 = vld [vmem:[%s204 + $0x1880] sm:$0xff]
        %v1697 = vld [vmem:[%s204 + $0x1888] sm:$0xff]
        %v1698 = vld [vmem:[%s204 + $0x1890] sm:$0xff]
        %v1699 = vld [vmem:[%s204 + $0x1898] sm:$0xff]
        %v1700 = vld [vmem:[%s204 + $0x18a0] sm:$0xff]
        %v1701 = vld [vmem:[%s204 + $0x18a8] sm:$0xff]
        %v1702 = vld [vmem:[%s204 + $0x18b0] sm:$0xff]
        %v1703 = vld [vmem:[%s204 + $0x18b8] sm:$0xff]
        %v1704 = vld [vmem:[%s204 + $0x18c0] sm:$0xff]
        %v1705 = vld [vmem:[%s204 + $0x18c8] sm:$0xff]
        %v1706 = vld [vmem:[%s204 + $0x18d0] sm:$0xff]
        %v1707 = vld [vmem:[%s204 + $0x18d8] sm:$0xff]
        %v1708 = vld [vmem:[%s204 + $0x18e0] sm:$0xff]
        %v1709 = vld [vmem:[%s204 + $0x18e8] sm:$0xff]
        %v1710 = vld [vmem:[%s204 + $0x18f0] sm:$0xff]
        %v1711 = vld [vmem:[%s204 + $0x18f8] sm:$0xff]
        %v1712 = vsel %vm712, 1, 0
        %v1713 = vsel %vm713, 1, 0
        %v1714 = vsel %vm714, 1, 0
        %v1715 = vsel %vm715, 1, 0
        %v1716 = vsel %vm716, 1, 0
        %v1717 = vsel %vm717, 1, 0
        %v1718 = vsel %vm718, 1, 0
        %v1719 = vsel %vm719, 1, 0
        %v1720 = vsel %vm720, 1, 0
        %v1721 = vsel %vm721, 1, 0
        %v1722 = vsel %vm722, 1, 0
        %v1723 = vsel %vm723, 1, 0
        %v1724 = vsel %vm724, 1, 0
        %v1725 = vsel %vm725, 1, 0
        %v1726 = vsel %vm726, 1, 0
        %v1727 = vsel %vm727, 1, 0
        %v1728 = vsel %vm728, 1, 0
        %v1729 = vsel %vm729, 1, 0
        %v1730 = vsel %vm730, 1, 0
        %v1731 = vsel %vm731, 1, 0
        %v1732 = vsel %vm732, 1, 0
        %v1733 = vsel %vm733, 1, 0
        %v1734 = vsel %vm734, 1, 0
        %v1735 = vsel %vm735, 1, 0
        %v1736 = vsel %vm736, 1, 0
        %v1737 = vsel %vm737, 1, 0
        %v1738 = vsel %vm738, 1, 0
        %v1739 = vsel %vm739, 1, 0
        %v1740 = vsel %vm740, 1, 0
        %v1741 = vsel %vm741, 1, 0
        %v1742 = vsel %vm742, 1, 0
        %v1743 = vsel %vm743, 1, 0
        %v1744 = vsel %vm744, 1, 0
        %v1745 = vsel %vm745, 1, 0
        %v1746 = vsel %vm746, 1, 0
        %v1747 = vsel %vm747, 1, 0
        %v1748 = vsel %vm748, 1, 0
        %v1749 = vsel %vm749, 1, 0
        %v1750 = vsel %vm750, 1, 0
        %v1751 = vsel %vm751, 1, 0
        %v1752 = vsel %vm752, 1, 0
        %v1753 = vsel %vm753, 1, 0
        %v1754 = vsel %vm754, 1, 0
        %v1755 = vsel %vm755, 1, 0
        %v1756 = vsel %vm756, 1, 0
        %v1757 = vsel %vm757, 1, 0
        %v1758 = vsel %vm758, 1, 0
        %v1759 = vsel %vm759, 1, 0
        %v1760 = vsel %vm760, 1, 0
        %v1761 = vsel %vm761, 1, 0
        %v1762 = vsel %vm762, 1, 0
        %v1763 = vsel %vm763, 1, 0
        %v1764 = vsel %vm764, 1, 0
        %v1765 = vsel %vm765, 1, 0
        %v1766 = vsel %vm766, 1, 0
        %v1767 = vsel %vm767, 1, 0
        %v1768 = vsel %vm768, 1, 0
        %v1769 = vsel %vm769, 1, 0
        %v1770 = vsel %vm770, 1, 0
        %v1771 = vsel %vm771, 1, 0
        %v1772 = vsel %vm772, 1, 0
        %v1773 = vsel %vm773, 1, 0
        %v1774 = vsel %vm774, 1, 0
        %v1775 = vsel %vm775, 1, 0
        %v1776 = vsel %vm776, 1, 0
        %v1777 = vsel %vm777, 1, 0
        %v1778 = vsel %vm778, 1, 0
        %v1779 = vsel %vm779, 1, 0
        %v1780 = vsel %vm780, 1, 0
        %v1781 = vsel %vm781, 1, 0
        %v1782 = vsel %vm782, 1, 0
        %v1783 = vsel %vm783, 1, 0
        %v1784 = vsel %vm784, 1, 0
        %v1785 = vsel %vm785, 1, 0
        %v1786 = vsel %vm786, 1, 0
        %v1787 = vsel %vm787, 1, 0
        %v1788 = vsel %vm788, 1, 0
        %v1789 = vsel %vm789, 1, 0
        %v1790 = vsel %vm790, 1, 0
        %v1791 = vsel %vm791, 1, 0
        %v1792 = vsel %vm792, 1, 0
        %v1793 = vsel %vm793, 1, 0
        %v1794 = vsel %vm794, 1, 0
        %v1795 = vsel %vm795, 1, 0
        %v1796 = vsel %vm796, 1, 0
        %v1797 = vsel %vm797, 1, 0
        %v1798 = vsel %vm798, 1, 0
        %v1799 = vsel %vm799, 1, 0
        %v1800 = vsel %vm800, 1, 0
        %v1801 = vsel %vm801, 1, 0
        %v1802 = vsel %vm802, 1, 0
        %v1803 = vsel %vm803, 1, 0
        %v1804 = vsel %vm804, 1, 0
        %v1805 = vsel %vm805, 1, 0
        %v1806 = vsel %vm806, 1, 0
        %v1807 = vsel %vm807, 1, 0
        %v1808 = vsel %vm808, 1, 0
        %v1809 = vsel %vm809, 1, 0
        %v1810 = vsel %vm810, 1, 0
        %v1811 = vsel %vm811, 1, 0
        %v1812 = vsel %vm812, 1, 0
        %v1813 = vsel %vm813, 1, 0
        %v1814 = vsel %vm814, 1, 0
        %v1815 = vsel %vm815, 1, 0
        %v1816 = vsel %vm816, 1, 0
        %v1817 = vsel %vm817, 1, 0
        %v1818 = vsel %vm818, 1, 0
        %v1819 = vsel %vm819, 1, 0
        %v1820 = vsel %vm820, 1, 0
        %v1821 = vsel %vm821, 1, 0
        %v1822 = vsel %vm822, 1, 0
        %v1823 = vsel %vm823, 1, 0
        %v1824 = vsel %vm824, 1, 0
        %v1825 = vsel %vm825, 1, 0
        %v1826 = vsel %vm826, 1, 0
        %v1827 = vsel %vm827, 1, 0
        %v1828 = vsel %vm828, 1, 0
        %v1829 = vsel %vm829, 1, 0
        %v1830 = vsel %vm830, 1, 0
        %v1831 = vsel %vm831, 1, 0
        %v1832 = vsel %vm832, 1, 0
        %v1833 = vsel %vm833, 1, 0
        %v1834 = vsel %vm834, 1, 0
        %v1835 = vsel %vm835, 1, 0
        %v1836 = vsel %vm836, 1, 0
        %v1837 = vsel %vm837, 1, 0
        %v1838 = vsel %vm838, 1, 0
        %v1839 = vsel %vm839, 1, 0
        %v1840 = vsel %vm840, 1, 0
        %v1841 = vsel %vm841, 1, 0
        %v1842 = vsel %vm842, 1, 0
        %v1843 = vsel %vm843, 1, 0
        %v1844 = vsel %vm844, 1, 0
        %v1845 = vsel %vm845, 1, 0
        %v1846 = vsel %vm846, 1, 0
        %v1847 = vsel %vm847, 1, 0
        %v1848 = vsel %vm848, 1, 0
        %v1849 = vsel %vm849, 1, 0
        %v1850 = vsel %vm850, 1, 0
        %v1851 = vsel %vm851, 1, 0
        %v1852 = vsel %vm852, 1, 0
        %v1853 = vsel %vm853, 1, 0
        %v1854 = vsel %vm854, 1, 0
        %v1855 = vsel %vm855, 1, 0
        %v1856 = vsel %vm856, 1, 0
        %v1857 = vsel %vm857, 1, 0
        %v1858 = vsel %vm858, 1, 0
        %v1859 = vsel %vm859, 1, 0
        %v1860 = vsel %vm860, 1, 0
        %v1861 = vsel %vm861, 1, 0
        %v1862 = vsel %vm862, 1, 0
        %v1863 = vsel %vm863, 1, 0
        %v1864 = vsel %vm864, 1, 0
        %v1865 = vsel %vm865, 1, 0
        %v1866 = vsel %vm866, 1, 0
        %v1867 = vsel %vm867, 1, 0
        %v1868 = vsel %vm868, 1, 0
        %v1869 = vsel %vm869, 1, 0
        %v1870 = vsel %vm870, 1, 0
        %v1871 = vsel %vm871, 1, 0
        %v1872 = vsel %vm872, 1, 0
        %v1873 = vsel %vm873, 1, 0
        %v1874 = vsel %vm874, 1, 0
        %v1875 = vsel %vm875, 1, 0
        %v1876 = vsel %vm876, 1, 0
        %v1877 = vsel %vm877, 1, 0
        %v1878 = vsel %vm878, 1, 0
        %v1879 = vsel %vm879, 1, 0
        %v1880 = vsel %vm880, 1, 0
        %v1881 = vsel %vm881, 1, 0
        %v1882 = vsel %vm882, 1, 0
        %v1883 = vsel %vm883, 1, 0
        %v1884 = vsel %vm884, 1, 0
        %v1885 = vsel %vm885, 1, 0
        %v1886 = vsel %vm886, 1, 0
        %v1887 = vsel %vm887, 1, 0
        %v1888 = vsel %vm888, 1, 0
        %v1889 = vsel %vm889, 1, 0
        %v1890 = vsel %vm890, 1, 0
        %v1891 = vsel %vm891, 1, 0
        %v1892 = vsel %vm892, 1, 0
        %v1893 = vsel %vm893, 1, 0
        %v1894 = vsel %vm894, 1, 0
        %v1895 = vsel %vm895, 1, 0
        %v1896 = vsel %vm896, 1, 0
        %v1897 = vsel %vm897, 1, 0
        %v1898 = vsel %vm898, 1, 0
        %v1899 = vsel %vm899, 1, 0
        %v1900 = vsel %vm900, 1, 0
        %v1901 = vsel %vm901, 1, 0
        %v1902 = vsel %vm902, 1, 0
        %v1903 = vsel %vm903, 1, 0
        %v1904 = vsel %vm904, 1, 0
        %v1905 = vsel %vm905, 1, 0
        %v1906 = vsel %vm906, 1, 0
        %v1907 = vsel %vm907, 1, 0
        %v1908 = vsel %vm908, 1, 0
        %v1909 = vsel %vm909, 1, 0
        %v1910 = vsel %vm910, 1, 0
        %v1911 = vsel %vm911, 1, 0
        %vm1912 = vcmp.eq.s32.totalorder %v1712, 1
        %vm1913 = vcmp.eq.s32.totalorder %v1713, 1
        %vm1914 = vcmp.eq.s32.totalorder %v1714, 1
        %vm1915 = vcmp.eq.s32.totalorder %v1715, 1
        %vm1916 = vcmp.eq.s32.totalorder %v1716, 1
        %vm1917 = vcmp.eq.s32.totalorder %v1717, 1
        %vm1918 = vcmp.eq.s32.totalorder %v1718, 1
        %vm1919 = vcmp.eq.s32.totalorder %v1719, 1
        %vm1920 = vcmp.eq.s32.totalorder %v1720, 1
        %vm1921 = vcmp.eq.s32.totalorder %v1721, 1
        %vm1922 = vcmp.eq.s32.totalorder %v1722, 1
        %vm1923 = vcmp.eq.s32.totalorder %v1723, 1
        %vm1924 = vcmp.eq.s32.totalorder %v1724, 1
        %vm1925 = vcmp.eq.s32.totalorder %v1725, 1
        %vm1926 = vcmp.eq.s32.totalorder %v1726, 1
        %vm1927 = vcmp.eq.s32.totalorder %v1727, 1
        %vm1928 = vcmp.eq.s32.totalorder %v1728, 1
        %vm1929 = vcmp.eq.s32.totalorder %v1729, 1
        %vm1930 = vcmp.eq.s32.totalorder %v1730, 1
        %vm1931 = vcmp.eq.s32.totalorder %v1731, 1
        %vm1932 = vcmp.eq.s32.totalorder %v1732, 1
        %vm1933 = vcmp.eq.s32.totalorder %v1733, 1
        %vm1934 = vcmp.eq.s32.totalorder %v1734, 1
        %vm1935 = vcmp.eq.s32.totalorder %v1735, 1
        %vm1936 = vcmp.eq.s32.totalorder %v1736, 1
        %vm1937 = vcmp.eq.s32.totalorder %v1737, 1
        %vm1938 = vcmp.eq.s32.totalorder %v1738, 1
        %vm1939 = vcmp.eq.s32.totalorder %v1739, 1
        %vm1940 = vcmp.eq.s32.totalorder %v1740, 1
        %vm1941 = vcmp.eq.s32.totalorder %v1741, 1
        %vm1942 = vcmp.eq.s32.totalorder %v1742, 1
        %vm1943 = vcmp.eq.s32.totalorder %v1743, 1
        %vm1944 = vcmp.eq.s32.totalorder %v1744, 1
        %vm1945 = vcmp.eq.s32.totalorder %v1745, 1
        %vm1946 = vcmp.eq.s32.totalorder %v1746, 1
        %vm1947 = vcmp.eq.s32.totalorder %v1747, 1
        %vm1948 = vcmp.eq.s32.totalorder %v1748, 1
        %vm1949 = vcmp.eq.s32.totalorder %v1749, 1
        %vm1950 = vcmp.eq.s32.totalorder %v1750, 1
        %vm1951 = vcmp.eq.s32.totalorder %v1751, 1
        %vm1952 = vcmp.eq.s32.totalorder %v1752, 1
        %vm1953 = vcmp.eq.s32.totalorder %v1753, 1
        %vm1954 = vcmp.eq.s32.totalorder %v1754, 1
        %vm1955 = vcmp.eq.s32.totalorder %v1755, 1
        %vm1956 = vcmp.eq.s32.totalorder %v1756, 1
        %vm1957 = vcmp.eq.s32.totalorder %v1757, 1
        %vm1958 = vcmp.eq.s32.totalorder %v1758, 1
        %vm1959 = vcmp.eq.s32.totalorder %v1759, 1
        %vm1960 = vcmp.eq.s32.totalorder %v1760, 1
        %vm1961 = vcmp.eq.s32.totalorder %v1761, 1
        %vm1962 = vcmp.eq.s32.totalorder %v1762, 1
        %vm1963 = vcmp.eq.s32.totalorder %v1763, 1
        %vm1964 = vcmp.eq.s32.totalorder %v1764, 1
        %vm1965 = vcmp.eq.s32.totalorder %v1765, 1
        %vm1966 = vcmp.eq.s32.totalorder %v1766, 1
        %vm1967 = vcmp.eq.s32.totalorder %v1767, 1
        %vm1968 = vcmp.eq.s32.totalorder %v1768, 1
        %vm1969 = vcmp.eq.s32.totalorder %v1769, 1
        %vm1970 = vcmp.eq.s32.totalorder %v1770, 1
        %vm1971 = vcmp.eq.s32.totalorder %v1771, 1
        %vm1972 = vcmp.eq.s32.totalorder %v1772, 1
        %vm1973 = vcmp.eq.s32.totalorder %v1773, 1
        %vm1974 = vcmp.eq.s32.totalorder %v1774, 1
        %vm1975 = vcmp.eq.s32.totalorder %v1775, 1
        %vm1976 = vcmp.eq.s32.totalorder %v1776, 1
        %vm1977 = vcmp.eq.s32.totalorder %v1777, 1
        %vm1978 = vcmp.eq.s32.totalorder %v1778, 1
        %vm1979 = vcmp.eq.s32.totalorder %v1779, 1
        %vm1980 = vcmp.eq.s32.totalorder %v1780, 1
        %vm1981 = vcmp.eq.s32.totalorder %v1781, 1
        %vm1982 = vcmp.eq.s32.totalorder %v1782, 1
        %vm1983 = vcmp.eq.s32.totalorder %v1783, 1
        %vm1984 = vcmp.eq.s32.totalorder %v1784, 1
        %vm1985 = vcmp.eq.s32.totalorder %v1785, 1
        %vm1986 = vcmp.eq.s32.totalorder %v1786, 1
        %vm1987 = vcmp.eq.s32.totalorder %v1787, 1
        %vm1988 = vcmp.eq.s32.totalorder %v1788, 1
        %vm1989 = vcmp.eq.s32.totalorder %v1789, 1
        %vm1990 = vcmp.eq.s32.totalorder %v1790, 1
        %vm1991 = vcmp.eq.s32.totalorder %v1791, 1
        %vm1992 = vcmp.eq.s32.totalorder %v1792, 1
        %vm1993 = vcmp.eq.s32.totalorder %v1793, 1
        %vm1994 = vcmp.eq.s32.totalorder %v1794, 1
        %vm1995 = vcmp.eq.s32.totalorder %v1795, 1
        %vm1996 = vcmp.eq.s32.totalorder %v1796, 1
        %vm1997 = vcmp.eq.s32.totalorder %v1797, 1
        %vm1998 = vcmp.eq.s32.totalorder %v1798, 1
        %vm1999 = vcmp.eq.s32.totalorder %v1799, 1
        %vm2000 = vcmp.eq.s32.totalorder %v1800, 1
        %vm2001 = vcmp.eq.s32.totalorder %v1801, 1
        %vm2002 = vcmp.eq.s32.totalorder %v1802, 1
        %vm2003 = vcmp.eq.s32.totalorder %v1803, 1
        %vm2004 = vcmp.eq.s32.totalorder %v1804, 1
        %vm2005 = vcmp.eq.s32.totalorder %v1805, 1
        %vm2006 = vcmp.eq.s32.totalorder %v1806, 1
        %vm2007 = vcmp.eq.s32.totalorder %v1807, 1
        %vm2008 = vcmp.eq.s32.totalorder %v1808, 1
        %vm2009 = vcmp.eq.s32.totalorder %v1809, 1
        %vm2010 = vcmp.eq.s32.totalorder %v1810, 1
        %vm2011 = vcmp.eq.s32.totalorder %v1811, 1
        %vm2012 = vcmp.eq.s32.totalorder %v1812, 1
        %vm2013 = vcmp.eq.s32.totalorder %v1813, 1
        %vm2014 = vcmp.eq.s32.totalorder %v1814, 1
        %vm2015 = vcmp.eq.s32.totalorder %v1815, 1
        %vm2016 = vcmp.eq.s32.totalorder %v1816, 1
        %vm2017 = vcmp.eq.s32.totalorder %v1817, 1
        %vm2018 = vcmp.eq.s32.totalorder %v1818, 1
        %vm2019 = vcmp.eq.s32.totalorder %v1819, 1
        %vm2020 = vcmp.eq.s32.totalorder %v1820, 1
        %vm2021 = vcmp.eq.s32.totalorder %v1821, 1
        %vm2022 = vcmp.eq.s32.totalorder %v1822, 1
        %vm2023 = vcmp.eq.s32.totalorder %v1823, 1
        %vm2024 = vcmp.eq.s32.totalorder %v1824, 1
        %vm2025 = vcmp.eq.s32.totalorder %v1825, 1
        %vm2026 = vcmp.eq.s32.totalorder %v1826, 1
        %vm2027 = vcmp.eq.s32.totalorder %v1827, 1
        %vm2028 = vcmp.eq.s32.totalorder %v1828, 1
        %vm2029 = vcmp.eq.s32.totalorder %v1829, 1
        %vm2030 = vcmp.eq.s32.totalorder %v1830, 1
        %vm2031 = vcmp.eq.s32.totalorder %v1831, 1
        %vm2032 = vcmp.eq.s32.totalorder %v1832, 1
        %vm2033 = vcmp.eq.s32.totalorder %v1833, 1
        %vm2034 = vcmp.eq.s32.totalorder %v1834, 1
        %vm2035 = vcmp.eq.s32.totalorder %v1835, 1
        %vm2036 = vcmp.eq.s32.totalorder %v1836, 1
        %vm2037 = vcmp.eq.s32.totalorder %v1837, 1
        %vm2038 = vcmp.eq.s32.totalorder %v1838, 1
        %vm2039 = vcmp.eq.s32.totalorder %v1839, 1
        %vm2040 = vcmp.eq.s32.totalorder %v1840, 1
        %vm2041 = vcmp.eq.s32.totalorder %v1841, 1
        %vm2042 = vcmp.eq.s32.totalorder %v1842, 1
        %vm2043 = vcmp.eq.s32.totalorder %v1843, 1
        %vm2044 = vcmp.eq.s32.totalorder %v1844, 1
        %vm2045 = vcmp.eq.s32.totalorder %v1845, 1
        %vm2046 = vcmp.eq.s32.totalorder %v1846, 1
        %vm2047 = vcmp.eq.s32.totalorder %v1847, 1
        %vm2048 = vcmp.eq.s32.totalorder %v1848, 1
        %vm2049 = vcmp.eq.s32.totalorder %v1849, 1
        %vm2050 = vcmp.eq.s32.totalorder %v1850, 1
        %vm2051 = vcmp.eq.s32.totalorder %v1851, 1
        %vm2052 = vcmp.eq.s32.totalorder %v1852, 1
        %vm2053 = vcmp.eq.s32.totalorder %v1853, 1
        %vm2054 = vcmp.eq.s32.totalorder %v1854, 1
        %vm2055 = vcmp.eq.s32.totalorder %v1855, 1
        %vm2056 = vcmp.eq.s32.totalorder %v1856, 1
        %vm2057 = vcmp.eq.s32.totalorder %v1857, 1
        %vm2058 = vcmp.eq.s32.totalorder %v1858, 1
        %vm2059 = vcmp.eq.s32.totalorder %v1859, 1
        %vm2060 = vcmp.eq.s32.totalorder %v1860, 1
        %vm2061 = vcmp.eq.s32.totalorder %v1861, 1
        %vm2062 = vcmp.eq.s32.totalorder %v1862, 1
        %vm2063 = vcmp.eq.s32.totalorder %v1863, 1
        %vm2064 = vcmp.eq.s32.totalorder %v1864, 1
        %vm2065 = vcmp.eq.s32.totalorder %v1865, 1
        %vm2066 = vcmp.eq.s32.totalorder %v1866, 1
        %vm2067 = vcmp.eq.s32.totalorder %v1867, 1
        %vm2068 = vcmp.eq.s32.totalorder %v1868, 1
        %vm2069 = vcmp.eq.s32.totalorder %v1869, 1
        %vm2070 = vcmp.eq.s32.totalorder %v1870, 1
        %vm2071 = vcmp.eq.s32.totalorder %v1871, 1
        %vm2072 = vcmp.eq.s32.totalorder %v1872, 1
        %vm2073 = vcmp.eq.s32.totalorder %v1873, 1
        %vm2074 = vcmp.eq.s32.totalorder %v1874, 1
        %vm2075 = vcmp.eq.s32.totalorder %v1875, 1
        %vm2076 = vcmp.eq.s32.totalorder %v1876, 1
        %vm2077 = vcmp.eq.s32.totalorder %v1877, 1
        %vm2078 = vcmp.eq.s32.totalorder %v1878, 1
        %vm2079 = vcmp.eq.s32.totalorder %v1879, 1
        %vm2080 = vcmp.eq.s32.totalorder %v1880, 1
        %vm2081 = vcmp.eq.s32.totalorder %v1881, 1
        %vm2082 = vcmp.eq.s32.totalorder %v1882, 1
        %vm2083 = vcmp.eq.s32.totalorder %v1883, 1
        %vm2084 = vcmp.eq.s32.totalorder %v1884, 1
        %vm2085 = vcmp.eq.s32.totalorder %v1885, 1
        %vm2086 = vcmp.eq.s32.totalorder %v1886, 1
        %vm2087 = vcmp.eq.s32.totalorder %v1887, 1
        %vm2088 = vcmp.eq.s32.totalorder %v1888, 1
        %vm2089 = vcmp.eq.s32.totalorder %v1889, 1
        %vm2090 = vcmp.eq.s32.totalorder %v1890, 1
        %vm2091 = vcmp.eq.s32.totalorder %v1891, 1
        %vm2092 = vcmp.eq.s32.totalorder %v1892, 1
        %vm2093 = vcmp.eq.s32.totalorder %v1893, 1
        %vm2094 = vcmp.eq.s32.totalorder %v1894, 1
        %vm2095 = vcmp.eq.s32.totalorder %v1895, 1
        %vm2096 = vcmp.eq.s32.totalorder %v1896, 1
        %vm2097 = vcmp.eq.s32.totalorder %v1897, 1
        %vm2098 = vcmp.eq.s32.totalorder %v1898, 1
        %vm2099 = vcmp.eq.s32.totalorder %v1899, 1
        %vm2100 = vcmp.eq.s32.totalorder %v1900, 1
        %vm2101 = vcmp.eq.s32.totalorder %v1901, 1
        %vm2102 = vcmp.eq.s32.totalorder %v1902, 1
        %vm2103 = vcmp.eq.s32.totalorder %v1903, 1
        %vm2104 = vcmp.eq.s32.totalorder %v1904, 1
        %vm2105 = vcmp.eq.s32.totalorder %v1905, 1
        %vm2106 = vcmp.eq.s32.totalorder %v1906, 1
        %vm2107 = vcmp.eq.s32.totalorder %v1907, 1
        %vm2108 = vcmp.eq.s32.totalorder %v1908, 1
        %vm2109 = vcmp.eq.s32.totalorder %v1909, 1
        %vm2110 = vcmp.eq.s32.totalorder %v1910, 1
        %vm2111 = vcmp.eq.s32.totalorder %v1911, 1
        %v2112 = vsel %vm1912, %v912, 0.0
        %v2113 = vsel %vm1913, %v913, 0.0
        %v2114 = vsel %vm1914, %v914, 0.0
        %v2115 = vsel %vm1915, %v915, 0.0
        %v2116 = vsel %vm1916, %v916, 0.0
        %v2117 = vsel %vm1917, %v917, 0.0
        %v2118 = vsel %vm1918, %v918, 0.0
        %v2119 = vsel %vm1919, %v919, 0.0
        %v2120 = vsel %vm1920, %v920, 0.0
        %v2121 = vsel %vm1921, %v921, 0.0
        %v2122 = vsel %vm1922, %v922, 0.0
        %v2123 = vsel %vm1923, %v923, 0.0
        %v2124 = vsel %vm1924, %v924, 0.0
        %v2125 = vsel %vm1925, %v925, 0.0
        %v2126 = vsel %vm1926, %v926, 0.0
        %v2127 = vsel %vm1927, %v927, 0.0
        %v2128 = vsel %vm1928, %v928, 0.0
        %v2129 = vsel %vm1929, %v929, 0.0
        %v2130 = vsel %vm1930, %v930, 0.0
        %v2131 = vsel %vm1931, %v931, 0.0
        %v2132 = vsel %vm1932, %v932, 0.0
        %v2133 = vsel %vm1933, %v933, 0.0
        %v2134 = vsel %vm1934, %v934, 0.0
        %v2135 = vsel %vm1935, %v935, 0.0
        %v2136 = vsel %vm1936, %v936, 0.0
        %v2137 = vsel %vm1937, %v937, 0.0
        %v2138 = vsel %vm1938, %v938, 0.0
        %v2139 = vsel %vm1939, %v939, 0.0
        %v2140 = vsel %vm1940, %v940, 0.0
        %v2141 = vsel %vm1941, %v941, 0.0
        %v2142 = vsel %vm1942, %v942, 0.0
        %v2143 = vsel %vm1943, %v943, 0.0
        %v2144 = vsel %vm1944, %v944, 0.0
        %v2145 = vsel %vm1945, %v945, 0.0
        %v2146 = vsel %vm1946, %v946, 0.0
        %v2147 = vsel %vm1947, %v947, 0.0
        %v2148 = vsel %vm1948, %v948, 0.0
        %v2149 = vsel %vm1949, %v949, 0.0
        %v2150 = vsel %vm1950, %v950, 0.0
        %v2151 = vsel %vm1951, %v951, 0.0
        %v2152 = vsel %vm1952, %v952, 0.0
        %v2153 = vsel %vm1953, %v953, 0.0
        %v2154 = vsel %vm1954, %v954, 0.0
        %v2155 = vsel %vm1955, %v955, 0.0
        %v2156 = vsel %vm1956, %v956, 0.0
        %v2157 = vsel %vm1957, %v957, 0.0
        %v2158 = vsel %vm1958, %v958, 0.0
        %v2159 = vsel %vm1959, %v959, 0.0
        %v2160 = vsel %vm1960, %v960, 0.0
        %v2161 = vsel %vm1961, %v961, 0.0
        %v2162 = vsel %vm1962, %v962, 0.0
        %v2163 = vsel %vm1963, %v963, 0.0
        %v2164 = vsel %vm1964, %v964, 0.0
        %v2165 = vsel %vm1965, %v965, 0.0
        %v2166 = vsel %vm1966, %v966, 0.0
        %v2167 = vsel %vm1967, %v967, 0.0
        %v2168 = vsel %vm1968, %v968, 0.0
        %v2169 = vsel %vm1969, %v969, 0.0
        %v2170 = vsel %vm1970, %v970, 0.0
        %v2171 = vsel %vm1971, %v971, 0.0
        %v2172 = vsel %vm1972, %v972, 0.0
        %v2173 = vsel %vm1973, %v973, 0.0
        %v2174 = vsel %vm1974, %v974, 0.0
        %v2175 = vsel %vm1975, %v975, 0.0
        %v2176 = vsel %vm1976, %v976, 0.0
        %v2177 = vsel %vm1977, %v977, 0.0
        %v2178 = vsel %vm1978, %v978, 0.0
        %v2179 = vsel %vm1979, %v979, 0.0
        %v2180 = vsel %vm1980, %v980, 0.0
        %v2181 = vsel %vm1981, %v981, 0.0
        %v2182 = vsel %vm1982, %v982, 0.0
        %v2183 = vsel %vm1983, %v983, 0.0
        %v2184 = vsel %vm1984, %v984, 0.0
        %v2185 = vsel %vm1985, %v985, 0.0
        %v2186 = vsel %vm1986, %v986, 0.0
        %v2187 = vsel %vm1987, %v987, 0.0
        %v2188 = vsel %vm1988, %v988, 0.0
        %v2189 = vsel %vm1989, %v989, 0.0
        %v2190 = vsel %vm1990, %v990, 0.0
        %v2191 = vsel %vm1991, %v991, 0.0
        %v2192 = vsel %vm1992, %v992, 0.0
        %v2193 = vsel %vm1993, %v993, 0.0
        %v2194 = vsel %vm1994, %v994, 0.0
        %v2195 = vsel %vm1995, %v995, 0.0
        %v2196 = vsel %vm1996, %v996, 0.0
        %v2197 = vsel %vm1997, %v997, 0.0
        %v2198 = vsel %vm1998, %v998, 0.0
        %v2199 = vsel %vm1999, %v999, 0.0
        %v2200 = vsel %vm2000, %v1000, 0.0
        %v2201 = vsel %vm2001, %v1001, 0.0
        %v2202 = vsel %vm2002, %v1002, 0.0
        %v2203 = vsel %vm2003, %v1003, 0.0
        %v2204 = vsel %vm2004, %v1004, 0.0
        %v2205 = vsel %vm2005, %v1005, 0.0
        %v2206 = vsel %vm2006, %v1006, 0.0
        %v2207 = vsel %vm2007, %v1007, 0.0
        %v2208 = vsel %vm2008, %v1008, 0.0
        %v2209 = vsel %vm2009, %v1009, 0.0
        %v2210 = vsel %vm2010, %v1010, 0.0
        %v2211 = vsel %vm2011, %v1011, 0.0
        %v2212 = vsel %vm2012, %v1012, 0.0
        %v2213 = vsel %vm2013, %v1013, 0.0
        %v2214 = vsel %vm2014, %v1014, 0.0
        %v2215 = vsel %vm2015, %v1015, 0.0
        %v2216 = vsel %vm2016, %v1016, 0.0
        %v2217 = vsel %vm2017, %v1017, 0.0
        %v2218 = vsel %vm2018, %v1018, 0.0
        %v2219 = vsel %vm2019, %v1019, 0.0
        %v2220 = vsel %vm2020, %v1020, 0.0
        %v2221 = vsel %vm2021, %v1021, 0.0
        %v2222 = vsel %vm2022, %v1022, 0.0
        %v2223 = vsel %vm2023, %v1023, 0.0
        %v2224 = vsel %vm2024, %v1024, 0.0
        %v2225 = vsel %vm2025, %v1025, 0.0
        %v2226 = vsel %vm2026, %v1026, 0.0
        %v2227 = vsel %vm2027, %v1027, 0.0
        %v2228 = vsel %vm2028, %v1028, 0.0
        %v2229 = vsel %vm2029, %v1029, 0.0
        %v2230 = vsel %vm2030, %v1030, 0.0
        %v2231 = vsel %vm2031, %v1031, 0.0
        %v2232 = vsel %vm2032, %v1032, 0.0
        %v2233 = vsel %vm2033, %v1033, 0.0
        %v2234 = vsel %vm2034, %v1034, 0.0
        %v2235 = vsel %vm2035, %v1035, 0.0
        %v2236 = vsel %vm2036, %v1036, 0.0
        %v2237 = vsel %vm2037, %v1037, 0.0
        %v2238 = vsel %vm2038, %v1038, 0.0
        %v2239 = vsel %vm2039, %v1039, 0.0
        %v2240 = vsel %vm2040, %v1040, 0.0
        %v2241 = vsel %vm2041, %v1041, 0.0
        %v2242 = vsel %vm2042, %v1042, 0.0
        %v2243 = vsel %vm2043, %v1043, 0.0
        %v2244 = vsel %vm2044, %v1044, 0.0
        %v2245 = vsel %vm2045, %v1045, 0.0
        %v2246 = vsel %vm2046, %v1046, 0.0
        %v2247 = vsel %vm2047, %v1047, 0.0
        %v2248 = vsel %vm2048, %v1048, 0.0
        %v2249 = vsel %vm2049, %v1049, 0.0
        %v2250 = vsel %vm2050, %v1050, 0.0
        %v2251 = vsel %vm2051, %v1051, 0.0
        %v2252 = vsel %vm2052, %v1052, 0.0
        %v2253 = vsel %vm2053, %v1053, 0.0
        %v2254 = vsel %vm2054, %v1054, 0.0
        %v2255 = vsel %vm2055, %v1055, 0.0
        %v2256 = vsel %vm2056, %v1056, 0.0
        %v2257 = vsel %vm2057, %v1057, 0.0
        %v2258 = vsel %vm2058, %v1058, 0.0
        %v2259 = vsel %vm2059, %v1059, 0.0
        %v2260 = vsel %vm2060, %v1060, 0.0
        %v2261 = vsel %vm2061, %v1061, 0.0
        %v2262 = vsel %vm2062, %v1062, 0.0
        %v2263 = vsel %vm2063, %v1063, 0.0
        %v2264 = vsel %vm2064, %v1064, 0.0
        %v2265 = vsel %vm2065, %v1065, 0.0
        %v2266 = vsel %vm2066, %v1066, 0.0
        %v2267 = vsel %vm2067, %v1067, 0.0
        %v2268 = vsel %vm2068, %v1068, 0.0
        %v2269 = vsel %vm2069, %v1069, 0.0
        %v2270 = vsel %vm2070, %v1070, 0.0
        %v2271 = vsel %vm2071, %v1071, 0.0
        %v2272 = vsel %vm2072, %v1072, 0.0
        %v2273 = vsel %vm2073, %v1073, 0.0
        %v2274 = vsel %vm2074, %v1074, 0.0
        %v2275 = vsel %vm2075, %v1075, 0.0
        %v2276 = vsel %vm2076, %v1076, 0.0
        %v2277 = vsel %vm2077, %v1077, 0.0
        %v2278 = vsel %vm2078, %v1078, 0.0
        %v2279 = vsel %vm2079, %v1079, 0.0
        %v2280 = vsel %vm2080, %v1080, 0.0
        %v2281 = vsel %vm2081, %v1081, 0.0
        %v2282 = vsel %vm2082, %v1082, 0.0
        %v2283 = vsel %vm2083, %v1083, 0.0
        %v2284 = vsel %vm2084, %v1084, 0.0
        %v2285 = vsel %vm2085, %v1085, 0.0
        %v2286 = vsel %vm2086, %v1086, 0.0
        %v2287 = vsel %vm2087, %v1087, 0.0
        %v2288 = vsel %vm2088, %v1088, 0.0
        %v2289 = vsel %vm2089, %v1089, 0.0
        %v2290 = vsel %vm2090, %v1090, 0.0
        %v2291 = vsel %vm2091, %v1091, 0.0
        %v2292 = vsel %vm2092, %v1092, 0.0
        %v2293 = vsel %vm2093, %v1093, 0.0
        %v2294 = vsel %vm2094, %v1094, 0.0
        %v2295 = vsel %vm2095, %v1095, 0.0
        %v2296 = vsel %vm2096, %v1096, 0.0
        %v2297 = vsel %vm2097, %v1097, 0.0
        %v2298 = vsel %vm2098, %v1098, 0.0
        %v2299 = vsel %vm2099, %v1099, 0.0
        %v2300 = vsel %vm2100, %v1100, 0.0
        %v2301 = vsel %vm2101, %v1101, 0.0
        %v2302 = vsel %vm2102, %v1102, 0.0
        %v2303 = vsel %vm2103, %v1103, 0.0
        %v2304 = vsel %vm2104, %v1104, 0.0
        %v2305 = vsel %vm2105, %v1105, 0.0
        %v2306 = vsel %vm2106, %v1106, 0.0
        %v2307 = vsel %vm2107, %v1107, 0.0
        %v2308 = vsel %vm2108, %v1108, 0.0
        %v2309 = vsel %vm2109, %v1109, 0.0
        %v2310 = vsel %vm2110, %v1110, 0.0
        %v2311 = vsel %vm2111, %v1111, 0.0
        %v2312 = vsel %vm1912, %v1112, 0.0
        %v2313 = vsel %vm1913, %v1113, 0.0
        %v2314 = vsel %vm1914, %v1114, 0.0
        %v2315 = vsel %vm1915, %v1115, 0.0
        %v2316 = vsel %vm1916, %v1116, 0.0
        %v2317 = vsel %vm1917, %v1117, 0.0
        %v2318 = vsel %vm1918, %v1118, 0.0
        %v2319 = vsel %vm1919, %v1119, 0.0
        %v2320 = vsel %vm1920, %v1120, 0.0
        %v2321 = vsel %vm1921, %v1121, 0.0
        %v2322 = vsel %vm1922, %v1122, 0.0
        %v2323 = vsel %vm1923, %v1123, 0.0
        %v2324 = vsel %vm1924, %v1124, 0.0
        %v2325 = vsel %vm1925, %v1125, 0.0
        %v2326 = vsel %vm1926, %v1126, 0.0
        %v2327 = vsel %vm1927, %v1127, 0.0
        %v2328 = vsel %vm1928, %v1128, 0.0
        %v2329 = vsel %vm1929, %v1129, 0.0
        %v2330 = vsel %vm1930, %v1130, 0.0
        %v2331 = vsel %vm1931, %v1131, 0.0
        %v2332 = vsel %vm1932, %v1132, 0.0
        %v2333 = vsel %vm1933, %v1133, 0.0
        %v2334 = vsel %vm1934, %v1134, 0.0
        %v2335 = vsel %vm1935, %v1135, 0.0
        %v2336 = vsel %vm1936, %v1136, 0.0
        %v2337 = vsel %vm1937, %v1137, 0.0
        %v2338 = vsel %vm1938, %v1138, 0.0
        %v2339 = vsel %vm1939, %v1139, 0.0
        %v2340 = vsel %vm1940, %v1140, 0.0
        %v2341 = vsel %vm1941, %v1141, 0.0
        %v2342 = vsel %vm1942, %v1142, 0.0
        %v2343 = vsel %vm1943, %v1143, 0.0
        %v2344 = vsel %vm1944, %v1144, 0.0
        %v2345 = vsel %vm1945, %v1145, 0.0
        %v2346 = vsel %vm1946, %v1146, 0.0
        %v2347 = vsel %vm1947, %v1147, 0.0
        %v2348 = vsel %vm1948, %v1148, 0.0
        %v2349 = vsel %vm1949, %v1149, 0.0
        %v2350 = vsel %vm1950, %v1150, 0.0
        %v2351 = vsel %vm1951, %v1151, 0.0
        %v2352 = vsel %vm1952, %v1152, 0.0
        %v2353 = vsel %vm1953, %v1153, 0.0
        %v2354 = vsel %vm1954, %v1154, 0.0
        %v2355 = vsel %vm1955, %v1155, 0.0
        %v2356 = vsel %vm1956, %v1156, 0.0
        %v2357 = vsel %vm1957, %v1157, 0.0
        %v2358 = vsel %vm1958, %v1158, 0.0
        %v2359 = vsel %vm1959, %v1159, 0.0
        %v2360 = vsel %vm1960, %v1160, 0.0
        %v2361 = vsel %vm1961, %v1161, 0.0
        %v2362 = vsel %vm1962, %v1162, 0.0
        %v2363 = vsel %vm1963, %v1163, 0.0
        %v2364 = vsel %vm1964, %v1164, 0.0
        %v2365 = vsel %vm1965, %v1165, 0.0
        %v2366 = vsel %vm1966, %v1166, 0.0
        %v2367 = vsel %vm1967, %v1167, 0.0
        %v2368 = vsel %vm1968, %v1168, 0.0
        %v2369 = vsel %vm1969, %v1169, 0.0
        %v2370 = vsel %vm1970, %v1170, 0.0
        %v2371 = vsel %vm1971, %v1171, 0.0
        %v2372 = vsel %vm1972, %v1172, 0.0
        %v2373 = vsel %vm1973, %v1173, 0.0
        %v2374 = vsel %vm1974, %v1174, 0.0
        %v2375 = vsel %vm1975, %v1175, 0.0
        %v2376 = vsel %vm1976, %v1176, 0.0
        %v2377 = vsel %vm1977, %v1177, 0.0
        %v2378 = vsel %vm1978, %v1178, 0.0
        %v2379 = vsel %vm1979, %v1179, 0.0
        %v2380 = vsel %vm1980, %v1180, 0.0
        %v2381 = vsel %vm1981, %v1181, 0.0
        %v2382 = vsel %vm1982, %v1182, 0.0
        %v2383 = vsel %vm1983, %v1183, 0.0
        %v2384 = vsel %vm1984, %v1184, 0.0
        %v2385 = vsel %vm1985, %v1185, 0.0
        %v2386 = vsel %vm1986, %v1186, 0.0
        %v2387 = vsel %vm1987, %v1187, 0.0
        %v2388 = vsel %vm1988, %v1188, 0.0
        %v2389 = vsel %vm1989, %v1189, 0.0
        %v2390 = vsel %vm1990, %v1190, 0.0
        %v2391 = vsel %vm1991, %v1191, 0.0
        %v2392 = vsel %vm1992, %v1192, 0.0
        %v2393 = vsel %vm1993, %v1193, 0.0
        %v2394 = vsel %vm1994, %v1194, 0.0
        %v2395 = vsel %vm1995, %v1195, 0.0
        %v2396 = vsel %vm1996, %v1196, 0.0
        %v2397 = vsel %vm1997, %v1197, 0.0
        %v2398 = vsel %vm1998, %v1198, 0.0
        %v2399 = vsel %vm1999, %v1199, 0.0
        %v2400 = vsel %vm2000, %v1200, 0.0
        %v2401 = vsel %vm2001, %v1201, 0.0
        %v2402 = vsel %vm2002, %v1202, 0.0
        %v2403 = vsel %vm2003, %v1203, 0.0
        %v2404 = vsel %vm2004, %v1204, 0.0
        %v2405 = vsel %vm2005, %v1205, 0.0
        %v2406 = vsel %vm2006, %v1206, 0.0
        %v2407 = vsel %vm2007, %v1207, 0.0
        %v2408 = vsel %vm2008, %v1208, 0.0
        %v2409 = vsel %vm2009, %v1209, 0.0
        %v2410 = vsel %vm2010, %v1210, 0.0
        %v2411 = vsel %vm2011, %v1211, 0.0
        %v2412 = vsel %vm2012, %v1212, 0.0
        %v2413 = vsel %vm2013, %v1213, 0.0
        %v2414 = vsel %vm2014, %v1214, 0.0
        %v2415 = vsel %vm2015, %v1215, 0.0
        %v2416 = vsel %vm2016, %v1216, 0.0
        %v2417 = vsel %vm2017, %v1217, 0.0
        %v2418 = vsel %vm2018, %v1218, 0.0
        %v2419 = vsel %vm2019, %v1219, 0.0
        %v2420 = vsel %vm2020, %v1220, 0.0
        %v2421 = vsel %vm2021, %v1221, 0.0
        %v2422 = vsel %vm2022, %v1222, 0.0
        %v2423 = vsel %vm2023, %v1223, 0.0
        %v2424 = vsel %vm2024, %v1224, 0.0
        %v2425 = vsel %vm2025, %v1225, 0.0
        %v2426 = vsel %vm2026, %v1226, 0.0
        %v2427 = vsel %vm2027, %v1227, 0.0
        %v2428 = vsel %vm2028, %v1228, 0.0
        %v2429 = vsel %vm2029, %v1229, 0.0
        %v2430 = vsel %vm2030, %v1230, 0.0
        %v2431 = vsel %vm2031, %v1231, 0.0
        %v2432 = vsel %vm2032, %v1232, 0.0
        %v2433 = vsel %vm2033, %v1233, 0.0
        %v2434 = vsel %vm2034, %v1234, 0.0
        %v2435 = vsel %vm2035, %v1235, 0.0
        %v2436 = vsel %vm2036, %v1236, 0.0
        %v2437 = vsel %vm2037, %v1237, 0.0
        %v2438 = vsel %vm2038, %v1238, 0.0
        %v2439 = vsel %vm2039, %v1239, 0.0
        %v2440 = vsel %vm2040, %v1240, 0.0
        %v2441 = vsel %vm2041, %v1241, 0.0
        %v2442 = vsel %vm2042, %v1242, 0.0
        %v2443 = vsel %vm2043, %v1243, 0.0
        %v2444 = vsel %vm2044, %v1244, 0.0
        %v2445 = vsel %vm2045, %v1245, 0.0
        %v2446 = vsel %vm2046, %v1246, 0.0
        %v2447 = vsel %vm2047, %v1247, 0.0
        %v2448 = vsel %vm2048, %v1248, 0.0
        %v2449 = vsel %vm2049, %v1249, 0.0
        %v2450 = vsel %vm2050, %v1250, 0.0
        %v2451 = vsel %vm2051, %v1251, 0.0
        %v2452 = vsel %vm2052, %v1252, 0.0
        %v2453 = vsel %vm2053, %v1253, 0.0
        %v2454 = vsel %vm2054, %v1254, 0.0
        %v2455 = vsel %vm2055, %v1255, 0.0
        %v2456 = vsel %vm2056, %v1256, 0.0
        %v2457 = vsel %vm2057, %v1257, 0.0
        %v2458 = vsel %vm2058, %v1258, 0.0
        %v2459 = vsel %vm2059, %v1259, 0.0
        %v2460 = vsel %vm2060, %v1260, 0.0
        %v2461 = vsel %vm2061, %v1261, 0.0
        %v2462 = vsel %vm2062, %v1262, 0.0
        %v2463 = vsel %vm2063, %v1263, 0.0
        %v2464 = vsel %vm2064, %v1264, 0.0
        %v2465 = vsel %vm2065, %v1265, 0.0
        %v2466 = vsel %vm2066, %v1266, 0.0
        %v2467 = vsel %vm2067, %v1267, 0.0
        %v2468 = vsel %vm2068, %v1268, 0.0
        %v2469 = vsel %vm2069, %v1269, 0.0
        %v2470 = vsel %vm2070, %v1270, 0.0
        %v2471 = vsel %vm2071, %v1271, 0.0
        %v2472 = vsel %vm2072, %v1272, 0.0
        %v2473 = vsel %vm2073, %v1273, 0.0
        %v2474 = vsel %vm2074, %v1274, 0.0
        %v2475 = vsel %vm2075, %v1275, 0.0
        %v2476 = vsel %vm2076, %v1276, 0.0
        %v2477 = vsel %vm2077, %v1277, 0.0
        %v2478 = vsel %vm2078, %v1278, 0.0
        %v2479 = vsel %vm2079, %v1279, 0.0
        %v2480 = vsel %vm2080, %v1280, 0.0
        %v2481 = vsel %vm2081, %v1281, 0.0
        %v2482 = vsel %vm2082, %v1282, 0.0
        %v2483 = vsel %vm2083, %v1283, 0.0
        %v2484 = vsel %vm2084, %v1284, 0.0
        %v2485 = vsel %vm2085, %v1285, 0.0
        %v2486 = vsel %vm2086, %v1286, 0.0
        %v2487 = vsel %vm2087, %v1287, 0.0
        %v2488 = vsel %vm2088, %v1288, 0.0
        %v2489 = vsel %vm2089, %v1289, 0.0
        %v2490 = vsel %vm2090, %v1290, 0.0
        %v2491 = vsel %vm2091, %v1291, 0.0
        %v2492 = vsel %vm2092, %v1292, 0.0
        %v2493 = vsel %vm2093, %v1293, 0.0
        %v2494 = vsel %vm2094, %v1294, 0.0
        %v2495 = vsel %vm2095, %v1295, 0.0
        %v2496 = vsel %vm2096, %v1296, 0.0
        %v2497 = vsel %vm2097, %v1297, 0.0
        %v2498 = vsel %vm2098, %v1298, 0.0
        %v2499 = vsel %vm2099, %v1299, 0.0
        %v2500 = vsel %vm2100, %v1300, 0.0
        %v2501 = vsel %vm2101, %v1301, 0.0
        %v2502 = vsel %vm2102, %v1302, 0.0
        %v2503 = vsel %vm2103, %v1303, 0.0
        %v2504 = vsel %vm2104, %v1304, 0.0
        %v2505 = vsel %vm2105, %v1305, 0.0
        %v2506 = vsel %vm2106, %v1306, 0.0
        %v2507 = vsel %vm2107, %v1307, 0.0
        %v2508 = vsel %vm2108, %v1308, 0.0
        %v2509 = vsel %vm2109, %v1309, 0.0
        %v2510 = vsel %vm2110, %v1310, 0.0
        %v2511 = vsel %vm2111, %v1311, 0.0
        %v2512 = vsel %vm1912, %v1312, 0.0
        %v2513 = vsel %vm1913, %v1313, 0.0
        %v2514 = vsel %vm1914, %v1314, 0.0
        %v2515 = vsel %vm1915, %v1315, 0.0
        %v2516 = vsel %vm1916, %v1316, 0.0
        %v2517 = vsel %vm1917, %v1317, 0.0
        %v2518 = vsel %vm1918, %v1318, 0.0
        %v2519 = vsel %vm1919, %v1319, 0.0
        %v2520 = vsel %vm1920, %v1320, 0.0
        %v2521 = vsel %vm1921, %v1321, 0.0
        %v2522 = vsel %vm1922, %v1322, 0.0
        %v2523 = vsel %vm1923, %v1323, 0.0
        %v2524 = vsel %vm1924, %v1324, 0.0
        %v2525 = vsel %vm1925, %v1325, 0.0
        %v2526 = vsel %vm1926, %v1326, 0.0
        %v2527 = vsel %vm1927, %v1327, 0.0
        %v2528 = vsel %vm1928, %v1328, 0.0
        %v2529 = vsel %vm1929, %v1329, 0.0
        %v2530 = vsel %vm1930, %v1330, 0.0
        %v2531 = vsel %vm1931, %v1331, 0.0
        %v2532 = vsel %vm1932, %v1332, 0.0
        %v2533 = vsel %vm1933, %v1333, 0.0
        %v2534 = vsel %vm1934, %v1334, 0.0
        %v2535 = vsel %vm1935, %v1335, 0.0
        %v2536 = vsel %vm1936, %v1336, 0.0
        %v2537 = vsel %vm1937, %v1337, 0.0
        %v2538 = vsel %vm1938, %v1338, 0.0
        %v2539 = vsel %vm1939, %v1339, 0.0
        %v2540 = vsel %vm1940, %v1340, 0.0
        %v2541 = vsel %vm1941, %v1341, 0.0
        %v2542 = vsel %vm1942, %v1342, 0.0
        %v2543 = vsel %vm1943, %v1343, 0.0
        %v2544 = vsel %vm1944, %v1344, 0.0
        %v2545 = vsel %vm1945, %v1345, 0.0
        %v2546 = vsel %vm1946, %v1346, 0.0
        %v2547 = vsel %vm1947, %v1347, 0.0
        %v2548 = vsel %vm1948, %v1348, 0.0
        %v2549 = vsel %vm1949, %v1349, 0.0
        %v2550 = vsel %vm1950, %v1350, 0.0
        %v2551 = vsel %vm1951, %v1351, 0.0
        %v2552 = vsel %vm1952, %v1352, 0.0
        %v2553 = vsel %vm1953, %v1353, 0.0
        %v2554 = vsel %vm1954, %v1354, 0.0
        %v2555 = vsel %vm1955, %v1355, 0.0
        %v2556 = vsel %vm1956, %v1356, 0.0
        %v2557 = vsel %vm1957, %v1357, 0.0
        %v2558 = vsel %vm1958, %v1358, 0.0
        %v2559 = vsel %vm1959, %v1359, 0.0
        %v2560 = vsel %vm1960, %v1360, 0.0
        %v2561 = vsel %vm1961, %v1361, 0.0
        %v2562 = vsel %vm1962, %v1362, 0.0
        %v2563 = vsel %vm1963, %v1363, 0.0
        %v2564 = vsel %vm1964, %v1364, 0.0
        %v2565 = vsel %vm1965, %v1365, 0.0
        %v2566 = vsel %vm1966, %v1366, 0.0
        %v2567 = vsel %vm1967, %v1367, 0.0
        %v2568 = vsel %vm1968, %v1368, 0.0
        %v2569 = vsel %vm1969, %v1369, 0.0
        %v2570 = vsel %vm1970, %v1370, 0.0
        %v2571 = vsel %vm1971, %v1371, 0.0
        %v2572 = vsel %vm1972, %v1372, 0.0
        %v2573 = vsel %vm1973, %v1373, 0.0
        %v2574 = vsel %vm1974, %v1374, 0.0
        %v2575 = vsel %vm1975, %v1375, 0.0
        %v2576 = vsel %vm1976, %v1376, 0.0
        %v2577 = vsel %vm1977, %v1377, 0.0
        %v2578 = vsel %vm1978, %v1378, 0.0
        %v2579 = vsel %vm1979, %v1379, 0.0
        %v2580 = vsel %vm1980, %v1380, 0.0
        %v2581 = vsel %vm1981, %v1381, 0.0
        %v2582 = vsel %vm1982, %v1382, 0.0
        %v2583 = vsel %vm1983, %v1383, 0.0
        %v2584 = vsel %vm1984, %v1384, 0.0
        %v2585 = vsel %vm1985, %v1385, 0.0
        %v2586 = vsel %vm1986, %v1386, 0.0
        %v2587 = vsel %vm1987, %v1387, 0.0
        %v2588 = vsel %vm1988, %v1388, 0.0
        %v2589 = vsel %vm1989, %v1389, 0.0
        %v2590 = vsel %vm1990, %v1390, 0.0
        %v2591 = vsel %vm1991, %v1391, 0.0
        %v2592 = vsel %vm1992, %v1392, 0.0
        %v2593 = vsel %vm1993, %v1393, 0.0
        %v2594 = vsel %vm1994, %v1394, 0.0
        %v2595 = vsel %vm1995, %v1395, 0.0
        %v2596 = vsel %vm1996, %v1396, 0.0
        %v2597 = vsel %vm1997, %v1397, 0.0
        %v2598 = vsel %vm1998, %v1398, 0.0
        %v2599 = vsel %vm1999, %v1399, 0.0
        %v2600 = vsel %vm2000, %v1400, 0.0
        %v2601 = vsel %vm2001, %v1401, 0.0
        %v2602 = vsel %vm2002, %v1402, 0.0
        %v2603 = vsel %vm2003, %v1403, 0.0
        %v2604 = vsel %vm2004, %v1404, 0.0
        %v2605 = vsel %vm2005, %v1405, 0.0
        %v2606 = vsel %vm2006, %v1406, 0.0
        %v2607 = vsel %vm2007, %v1407, 0.0
        %v2608 = vsel %vm2008, %v1408, 0.0
        %v2609 = vsel %vm2009, %v1409, 0.0
        %v2610 = vsel %vm2010, %v1410, 0.0
        %v2611 = vsel %vm2011, %v1411, 0.0
        %v2612 = vsel %vm2012, %v1412, 0.0
        %v2613 = vsel %vm2013, %v1413, 0.0
        %v2614 = vsel %vm2014, %v1414, 0.0
        %v2615 = vsel %vm2015, %v1415, 0.0
        %v2616 = vsel %vm2016, %v1416, 0.0
        %v2617 = vsel %vm2017, %v1417, 0.0
        %v2618 = vsel %vm2018, %v1418, 0.0
        %v2619 = vsel %vm2019, %v1419, 0.0
        %v2620 = vsel %vm2020, %v1420, 0.0
        %v2621 = vsel %vm2021, %v1421, 0.0
        %v2622 = vsel %vm2022, %v1422, 0.0
        %v2623 = vsel %vm2023, %v1423, 0.0
        %v2624 = vsel %vm2024, %v1424, 0.0
        %v2625 = vsel %vm2025, %v1425, 0.0
        %v2626 = vsel %vm2026, %v1426, 0.0
        %v2627 = vsel %vm2027, %v1427, 0.0
        %v2628 = vsel %vm2028, %v1428, 0.0
        %v2629 = vsel %vm2029, %v1429, 0.0
        %v2630 = vsel %vm2030, %v1430, 0.0
        %v2631 = vsel %vm2031, %v1431, 0.0
        %v2632 = vsel %vm2032, %v1432, 0.0
        %v2633 = vsel %vm2033, %v1433, 0.0
        %v2634 = vsel %vm2034, %v1434, 0.0
        %v2635 = vsel %vm2035, %v1435, 0.0
        %v2636 = vsel %vm2036, %v1436, 0.0
        %v2637 = vsel %vm2037, %v1437, 0.0
        %v2638 = vsel %vm2038, %v1438, 0.0
        %v2639 = vsel %vm2039, %v1439, 0.0
        %v2640 = vsel %vm2040, %v1440, 0.0
        %v2641 = vsel %vm2041, %v1441, 0.0
        %v2642 = vsel %vm2042, %v1442, 0.0
        %v2643 = vsel %vm2043, %v1443, 0.0
        %v2644 = vsel %vm2044, %v1444, 0.0
        %v2645 = vsel %vm2045, %v1445, 0.0
        %v2646 = vsel %vm2046, %v1446, 0.0
        %v2647 = vsel %vm2047, %v1447, 0.0
        %v2648 = vsel %vm2048, %v1448, 0.0
        %v2649 = vsel %vm2049, %v1449, 0.0
        %v2650 = vsel %vm2050, %v1450, 0.0
        %v2651 = vsel %vm2051, %v1451, 0.0
        %v2652 = vsel %vm2052, %v1452, 0.0
        %v2653 = vsel %vm2053, %v1453, 0.0
        %v2654 = vsel %vm2054, %v1454, 0.0
        %v2655 = vsel %vm2055, %v1455, 0.0
        %v2656 = vsel %vm2056, %v1456, 0.0
        %v2657 = vsel %vm2057, %v1457, 0.0
        %v2658 = vsel %vm2058, %v1458, 0.0
        %v2659 = vsel %vm2059, %v1459, 0.0
        %v2660 = vsel %vm2060, %v1460, 0.0
        %v2661 = vsel %vm2061, %v1461, 0.0
        %v2662 = vsel %vm2062, %v1462, 0.0
        %v2663 = vsel %vm2063, %v1463, 0.0
        %v2664 = vsel %vm2064, %v1464, 0.0
        %v2665 = vsel %vm2065, %v1465, 0.0
        %v2666 = vsel %vm2066, %v1466, 0.0
        %v2667 = vsel %vm2067, %v1467, 0.0
        %v2668 = vsel %vm2068, %v1468, 0.0
        %v2669 = vsel %vm2069, %v1469, 0.0
        %v2670 = vsel %vm2070, %v1470, 0.0
        %v2671 = vsel %vm2071, %v1471, 0.0
        %v2672 = vsel %vm2072, %v1472, 0.0
        %v2673 = vsel %vm2073, %v1473, 0.0
        %v2674 = vsel %vm2074, %v1474, 0.0
        %v2675 = vsel %vm2075, %v1475, 0.0
        %v2676 = vsel %vm2076, %v1476, 0.0
        %v2677 = vsel %vm2077, %v1477, 0.0
        %v2678 = vsel %vm2078, %v1478, 0.0
        %v2679 = vsel %vm2079, %v1479, 0.0
        %v2680 = vsel %vm2080, %v1480, 0.0
        %v2681 = vsel %vm2081, %v1481, 0.0
        %v2682 = vsel %vm2082, %v1482, 0.0
        %v2683 = vsel %vm2083, %v1483, 0.0
        %v2684 = vsel %vm2084, %v1484, 0.0
        %v2685 = vsel %vm2085, %v1485, 0.0
        %v2686 = vsel %vm2086, %v1486, 0.0
        %v2687 = vsel %vm2087, %v1487, 0.0
        %v2688 = vsel %vm2088, %v1488, 0.0
        %v2689 = vsel %vm2089, %v1489, 0.0
        %v2690 = vsel %vm2090, %v1490, 0.0
        %v2691 = vsel %vm2091, %v1491, 0.0
        %v2692 = vsel %vm2092, %v1492, 0.0
        %v2693 = vsel %vm2093, %v1493, 0.0
        %v2694 = vsel %vm2094, %v1494, 0.0
        %v2695 = vsel %vm2095, %v1495, 0.0
        %v2696 = vsel %vm2096, %v1496, 0.0
        %v2697 = vsel %vm2097, %v1497, 0.0
        %v2698 = vsel %vm2098, %v1498, 0.0
        %v2699 = vsel %vm2099, %v1499, 0.0
        %v2700 = vsel %vm2100, %v1500, 0.0
        %v2701 = vsel %vm2101, %v1501, 0.0
        %v2702 = vsel %vm2102, %v1502, 0.0
        %v2703 = vsel %vm2103, %v1503, 0.0
        %v2704 = vsel %vm2104, %v1504, 0.0
        %v2705 = vsel %vm2105, %v1505, 0.0
        %v2706 = vsel %vm2106, %v1506, 0.0
        %v2707 = vsel %vm2107, %v1507, 0.0
        %v2708 = vsel %vm2108, %v1508, 0.0
        %v2709 = vsel %vm2109, %v1509, 0.0
        %v2710 = vsel %vm2110, %v1510, 0.0
        %v2711 = vsel %vm2111, %v1511, 0.0
        %v2712 = vsel %vm1912, %v1512, 0.0
        %v2713 = vsel %vm1913, %v1513, 0.0
        %v2714 = vsel %vm1914, %v1514, 0.0
        %v2715 = vsel %vm1915, %v1515, 0.0
        %v2716 = vsel %vm1916, %v1516, 0.0
        %v2717 = vsel %vm1917, %v1517, 0.0
        %v2718 = vsel %vm1918, %v1518, 0.0
        %v2719 = vsel %vm1919, %v1519, 0.0
        %v2720 = vsel %vm1920, %v1520, 0.0
        %v2721 = vsel %vm1921, %v1521, 0.0
        %v2722 = vsel %vm1922, %v1522, 0.0
        %v2723 = vsel %vm1923, %v1523, 0.0
        %v2724 = vsel %vm1924, %v1524, 0.0
        %v2725 = vsel %vm1925, %v1525, 0.0
        %v2726 = vsel %vm1926, %v1526, 0.0
        %v2727 = vsel %vm1927, %v1527, 0.0
        %v2728 = vsel %vm1928, %v1528, 0.0
        %v2729 = vsel %vm1929, %v1529, 0.0
        %v2730 = vsel %vm1930, %v1530, 0.0
        %v2731 = vsel %vm1931, %v1531, 0.0
        %v2732 = vsel %vm1932, %v1532, 0.0
        %v2733 = vsel %vm1933, %v1533, 0.0
        %v2734 = vsel %vm1934, %v1534, 0.0
        %v2735 = vsel %vm1935, %v1535, 0.0
        %v2736 = vsel %vm1936, %v1536, 0.0
        %v2737 = vsel %vm1937, %v1537, 0.0
        %v2738 = vsel %vm1938, %v1538, 0.0
        %v2739 = vsel %vm1939, %v1539, 0.0
        %v2740 = vsel %vm1940, %v1540, 0.0
        %v2741 = vsel %vm1941, %v1541, 0.0
        %v2742 = vsel %vm1942, %v1542, 0.0
        %v2743 = vsel %vm1943, %v1543, 0.0
        %v2744 = vsel %vm1944, %v1544, 0.0
        %v2745 = vsel %vm1945, %v1545, 0.0
        %v2746 = vsel %vm1946, %v1546, 0.0
        %v2747 = vsel %vm1947, %v1547, 0.0
        %v2748 = vsel %vm1948, %v1548, 0.0
        %v2749 = vsel %vm1949, %v1549, 0.0
        %v2750 = vsel %vm1950, %v1550, 0.0
        %v2751 = vsel %vm1951, %v1551, 0.0
        %v2752 = vsel %vm1952, %v1552, 0.0
        %v2753 = vsel %vm1953, %v1553, 0.0
        %v2754 = vsel %vm1954, %v1554, 0.0
        %v2755 = vsel %vm1955, %v1555, 0.0
        %v2756 = vsel %vm1956, %v1556, 0.0
        %v2757 = vsel %vm1957, %v1557, 0.0
        %v2758 = vsel %vm1958, %v1558, 0.0
        %v2759 = vsel %vm1959, %v1559, 0.0
        %v2760 = vsel %vm1960, %v1560, 0.0
        %v2761 = vsel %vm1961, %v1561, 0.0
        %v2762 = vsel %vm1962, %v1562, 0.0
        %v2763 = vsel %vm1963, %v1563, 0.0
        %v2764 = vsel %vm1964, %v1564, 0.0
        %v2765 = vsel %vm1965, %v1565, 0.0
        %v2766 = vsel %vm1966, %v1566, 0.0
        %v2767 = vsel %vm1967, %v1567, 0.0
        %v2768 = vsel %vm1968, %v1568, 0.0
        %v2769 = vsel %vm1969, %v1569, 0.0
        %v2770 = vsel %vm1970, %v1570, 0.0
        %v2771 = vsel %vm1971, %v1571, 0.0
        %v2772 = vsel %vm1972, %v1572, 0.0
        %v2773 = vsel %vm1973, %v1573, 0.0
        %v2774 = vsel %vm1974, %v1574, 0.0
        %v2775 = vsel %vm1975, %v1575, 0.0
        %v2776 = vsel %vm1976, %v1576, 0.0
        %v2777 = vsel %vm1977, %v1577, 0.0
        %v2778 = vsel %vm1978, %v1578, 0.0
        %v2779 = vsel %vm1979, %v1579, 0.0
        %v2780 = vsel %vm1980, %v1580, 0.0
        %v2781 = vsel %vm1981, %v1581, 0.0
        %v2782 = vsel %vm1982, %v1582, 0.0
        %v2783 = vsel %vm1983, %v1583, 0.0
        %v2784 = vsel %vm1984, %v1584, 0.0
        %v2785 = vsel %vm1985, %v1585, 0.0
        %v2786 = vsel %vm1986, %v1586, 0.0
        %v2787 = vsel %vm1987, %v1587, 0.0
        %v2788 = vsel %vm1988, %v1588, 0.0
        %v2789 = vsel %vm1989, %v1589, 0.0
        %v2790 = vsel %vm1990, %v1590, 0.0
        %v2791 = vsel %vm1991, %v1591, 0.0
        %v2792 = vsel %vm1992, %v1592, 0.0
        %v2793 = vsel %vm1993, %v1593, 0.0
        %v2794 = vsel %vm1994, %v1594, 0.0
        %v2795 = vsel %vm1995, %v1595, 0.0
        %v2796 = vsel %vm1996, %v1596, 0.0
        %v2797 = vsel %vm1997, %v1597, 0.0
        %v2798 = vsel %vm1998, %v1598, 0.0
        %v2799 = vsel %vm1999, %v1599, 0.0
        %v2800 = vsel %vm2000, %v1600, 0.0
        %v2801 = vsel %vm2001, %v1601, 0.0
        %v2802 = vsel %vm2002, %v1602, 0.0
        %v2803 = vsel %vm2003, %v1603, 0.0
        %v2804 = vsel %vm2004, %v1604, 0.0
        %v2805 = vsel %vm2005, %v1605, 0.0
        %v2806 = vsel %vm2006, %v1606, 0.0
        %v2807 = vsel %vm2007, %v1607, 0.0
        %v2808 = vsel %vm2008, %v1608, 0.0
        %v2809 = vsel %vm2009, %v1609, 0.0
        %v2810 = vsel %vm2010, %v1610, 0.0
        %v2811 = vsel %vm2011, %v1611, 0.0
        %v2812 = vsel %vm2012, %v1612, 0.0
        %v2813 = vsel %vm2013, %v1613, 0.0
        %v2814 = vsel %vm2014, %v1614, 0.0
        %v2815 = vsel %vm2015, %v1615, 0.0
        %v2816 = vsel %vm2016, %v1616, 0.0
        %v2817 = vsel %vm2017, %v1617, 0.0
        %v2818 = vsel %vm2018, %v1618, 0.0
        %v2819 = vsel %vm2019, %v1619, 0.0
        %v2820 = vsel %vm2020, %v1620, 0.0
        %v2821 = vsel %vm2021, %v1621, 0.0
        %v2822 = vsel %vm2022, %v1622, 0.0
        %v2823 = vsel %vm2023, %v1623, 0.0
        %v2824 = vsel %vm2024, %v1624, 0.0
        %v2825 = vsel %vm2025, %v1625, 0.0
        %v2826 = vsel %vm2026, %v1626, 0.0
        %v2827 = vsel %vm2027, %v1627, 0.0
        %v2828 = vsel %vm2028, %v1628, 0.0
        %v2829 = vsel %vm2029, %v1629, 0.0
        %v2830 = vsel %vm2030, %v1630, 0.0
        %v2831 = vsel %vm2031, %v1631, 0.0
        %v2832 = vsel %vm2032, %v1632, 0.0
        %v2833 = vsel %vm2033, %v1633, 0.0
        %v2834 = vsel %vm2034, %v1634, 0.0
        %v2835 = vsel %vm2035, %v1635, 0.0
        %v2836 = vsel %vm2036, %v1636, 0.0
        %v2837 = vsel %vm2037, %v1637, 0.0
        %v2838 = vsel %vm2038, %v1638, 0.0
        %v2839 = vsel %vm2039, %v1639, 0.0
        %v2840 = vsel %vm2040, %v1640, 0.0
        %v2841 = vsel %vm2041, %v1641, 0.0
        %v2842 = vsel %vm2042, %v1642, 0.0
        %v2843 = vsel %vm2043, %v1643, 0.0
        %v2844 = vsel %vm2044, %v1644, 0.0
        %v2845 = vsel %vm2045, %v1645, 0.0
        %v2846 = vsel %vm2046, %v1646, 0.0
        %v2847 = vsel %vm2047, %v1647, 0.0
        %v2848 = vsel %vm2048, %v1648, 0.0
        %v2849 = vsel %vm2049, %v1649, 0.0
        %v2850 = vsel %vm2050, %v1650, 0.0
        %v2851 = vsel %vm2051, %v1651, 0.0
        %v2852 = vsel %vm2052, %v1652, 0.0
        %v2853 = vsel %vm2053, %v1653, 0.0
        %v2854 = vsel %vm2054, %v1654, 0.0
        %v2855 = vsel %vm2055, %v1655, 0.0
        %v2856 = vsel %vm2056, %v1656, 0.0
        %v2857 = vsel %vm2057, %v1657, 0.0
        %v2858 = vsel %vm2058, %v1658, 0.0
        %v2859 = vsel %vm2059, %v1659, 0.0
        %v2860 = vsel %vm2060, %v1660, 0.0
        %v2861 = vsel %vm2061, %v1661, 0.0
        %v2862 = vsel %vm2062, %v1662, 0.0
        %v2863 = vsel %vm2063, %v1663, 0.0
        %v2864 = vsel %vm2064, %v1664, 0.0
        %v2865 = vsel %vm2065, %v1665, 0.0
        %v2866 = vsel %vm2066, %v1666, 0.0
        %v2867 = vsel %vm2067, %v1667, 0.0
        %v2868 = vsel %vm2068, %v1668, 0.0
        %v2869 = vsel %vm2069, %v1669, 0.0
        %v2870 = vsel %vm2070, %v1670, 0.0
        %v2871 = vsel %vm2071, %v1671, 0.0
        %v2872 = vsel %vm2072, %v1672, 0.0
        %v2873 = vsel %vm2073, %v1673, 0.0
        %v2874 = vsel %vm2074, %v1674, 0.0
        %v2875 = vsel %vm2075, %v1675, 0.0
        %v2876 = vsel %vm2076, %v1676, 0.0
        %v2877 = vsel %vm2077, %v1677, 0.0
        %v2878 = vsel %vm2078, %v1678, 0.0
        %v2879 = vsel %vm2079, %v1679, 0.0
        %v2880 = vsel %vm2080, %v1680, 0.0
        %v2881 = vsel %vm2081, %v1681, 0.0
        %v2882 = vsel %vm2082, %v1682, 0.0
        %v2883 = vsel %vm2083, %v1683, 0.0
        %v2884 = vsel %vm2084, %v1684, 0.0
        %v2885 = vsel %vm2085, %v1685, 0.0
        %v2886 = vsel %vm2086, %v1686, 0.0
        %v2887 = vsel %vm2087, %v1687, 0.0
        %v2888 = vsel %vm2088, %v1688, 0.0
        %v2889 = vsel %vm2089, %v1689, 0.0
        %v2890 = vsel %vm2090, %v1690, 0.0
        %v2891 = vsel %vm2091, %v1691, 0.0
        %v2892 = vsel %vm2092, %v1692, 0.0
        %v2893 = vsel %vm2093, %v1693, 0.0
        %v2894 = vsel %vm2094, %v1694, 0.0
        %v2895 = vsel %vm2095, %v1695, 0.0
        %v2896 = vsel %vm2096, %v1696, 0.0
        %v2897 = vsel %vm2097, %v1697, 0.0
        %v2898 = vsel %vm2098, %v1698, 0.0
        %v2899 = vsel %vm2099, %v1699, 0.0
        %v2900 = vsel %vm2100, %v1700, 0.0
        %v2901 = vsel %vm2101, %v1701, 0.0
        %v2902 = vsel %vm2102, %v1702, 0.0
        %v2903 = vsel %vm2103, %v1703, 0.0
        %v2904 = vsel %vm2104, %v1704, 0.0
        %v2905 = vsel %vm2105, %v1705, 0.0
        %v2906 = vsel %vm2106, %v1706, 0.0
        %v2907 = vsel %vm2107, %v1707, 0.0
        %v2908 = vsel %vm2108, %v1708, 0.0
        %v2909 = vsel %vm2109, %v1709, 0.0
        %v2910 = vsel %vm2110, %v1710, 0.0
        %v2911 = vsel %vm2111, %v1711, 0.0
        %v2912 = vld [vmem:[%s213] sm:$0xff]
        %v2913 = vld [vmem:[%s213 + $0x8] sm:$0xff]
        %v2914 = vld [vmem:[%s213 + $0x10] sm:$0xff]
        %v2915 = vld [vmem:[%s213 + $0x18] sm:$0xff]
        %v2916 = vld [vmem:[%s213 + $0x20] sm:$0xff]
        %v2917 = vld [vmem:[%s213 + $0x28] sm:$0xff]
        %v2918 = vld [vmem:[%s213 + $0x30] sm:$0xff]
        %v2919 = vld [vmem:[%s213 + $0x38] sm:$0xff]
        %v2920 = vld [vmem:[%s213 + $0x40] sm:$0xff]
        %v2921 = vld [vmem:[%s213 + $0x48] sm:$0xff]
        %v2922 = vld [vmem:[%s213 + $0x50] sm:$0xff]
        %v2923 = vld [vmem:[%s213 + $0x58] sm:$0xff]
        %v2924 = vld [vmem:[%s213 + $0x60] sm:$0xff]
        %v2925 = vld [vmem:[%s213 + $0x68] sm:$0xff]
        %v2926 = vld [vmem:[%s213 + $0x70] sm:$0xff]
        %v2927 = vld [vmem:[%s213 + $0x78] sm:$0xff]
        %v2928 = vld [vmem:[%s213 + $0x80] sm:$0xff]
        %v2929 = vld [vmem:[%s213 + $0x88] sm:$0xff]
        %v2930 = vld [vmem:[%s213 + $0x90] sm:$0xff]
        %v2931 = vld [vmem:[%s213 + $0x98] sm:$0xff]
        %v2932 = vld [vmem:[%s213 + $0xa0] sm:$0xff]
        %v2933 = vld [vmem:[%s213 + $0xa8] sm:$0xff]
        %v2934 = vld [vmem:[%s213 + $0xb0] sm:$0xff]
        %v2935 = vld [vmem:[%s213 + $0xb8] sm:$0xff]
        %v2936 = vld [vmem:[%s213 + $0xc0] sm:$0xff]
        %v2937 = vld [vmem:[%s213 + $0xc8] sm:$0xff]
        %v2938 = vld [vmem:[%s213 + $0xd0] sm:$0xff]
        %v2939 = vld [vmem:[%s213 + $0xd8] sm:$0xff]
        %v2940 = vld [vmem:[%s213 + $0xe0] sm:$0xff]
        %v2941 = vld [vmem:[%s213 + $0xe8] sm:$0xff]
        %v2942 = vld [vmem:[%s213 + $0xf0] sm:$0xff]
        %v2943 = vld [vmem:[%s213 + $0xf8] sm:$0xff]
        %v2944 = vld [vmem:[%s213 + $0x100] sm:$0xff]
        %v2945 = vld [vmem:[%s213 + $0x108] sm:$0xff]
        %v2946 = vld [vmem:[%s213 + $0x110] sm:$0xff]
        %v2947 = vld [vmem:[%s213 + $0x118] sm:$0xff]
        %v2948 = vld [vmem:[%s213 + $0x120] sm:$0xff]
        %v2949 = vld [vmem:[%s213 + $0x128] sm:$0xff]
        %v2950 = vld [vmem:[%s213 + $0x130] sm:$0xff]
        %v2951 = vld [vmem:[%s213 + $0x138] sm:$0xff]
        %v2952 = vld [vmem:[%s213 + $0x140] sm:$0xff]
        %v2953 = vld [vmem:[%s213 + $0x148] sm:$0xff]
        %v2954 = vld [vmem:[%s213 + $0x150] sm:$0xff]
        %v2955 = vld [vmem:[%s213 + $0x158] sm:$0xff]
        %v2956 = vld [vmem:[%s213 + $0x160] sm:$0xff]
        %v2957 = vld [vmem:[%s213 + $0x168] sm:$0xff]
        %v2958 = vld [vmem:[%s213 + $0x170] sm:$0xff]
        %v2959 = vld [vmem:[%s213 + $0x178] sm:$0xff]
        %v2960 = vld [vmem:[%s213 + $0x180] sm:$0xff]
        %v2961 = vld [vmem:[%s213 + $0x188] sm:$0xff]
        %v2962 = vld [vmem:[%s213 + $0x190] sm:$0xff]
        %v2963 = vld [vmem:[%s213 + $0x198] sm:$0xff]
        %v2964 = vld [vmem:[%s213 + $0x1a0] sm:$0xff]
        %v2965 = vld [vmem:[%s213 + $0x1a8] sm:$0xff]
        %v2966 = vld [vmem:[%s213 + $0x1b0] sm:$0xff]
        %v2967 = vld [vmem:[%s213 + $0x1b8] sm:$0xff]
        %v2968 = vld [vmem:[%s213 + $0x1c0] sm:$0xff]
        %v2969 = vld [vmem:[%s213 + $0x1c8] sm:$0xff]
        %v2970 = vld [vmem:[%s213 + $0x1d0] sm:$0xff]
        %v2971 = vld [vmem:[%s213 + $0x1d8] sm:$0xff]
        %v2972 = vld [vmem:[%s213 + $0x1e0] sm:$0xff]
        %v2973 = vld [vmem:[%s213 + $0x1e8] sm:$0xff]
        %v2974 = vld [vmem:[%s213 + $0x1f0] sm:$0xff]
        %v2975 = vld [vmem:[%s213 + $0x1f8] sm:$0xff]
        %v2976 = vld [vmem:[%s213 + $0x200] sm:$0xff]
        %v2977 = vld [vmem:[%s213 + $0x208] sm:$0xff]
        %v2978 = vld [vmem:[%s213 + $0x210] sm:$0xff]
        %v2979 = vld [vmem:[%s213 + $0x218] sm:$0xff]
        %v2980 = vld [vmem:[%s213 + $0x220] sm:$0xff]
        %v2981 = vld [vmem:[%s213 + $0x228] sm:$0xff]
        %v2982 = vld [vmem:[%s213 + $0x230] sm:$0xff]
        %v2983 = vld [vmem:[%s213 + $0x238] sm:$0xff]
        %v2984 = vld [vmem:[%s213 + $0x240] sm:$0xff]
        %v2985 = vld [vmem:[%s213 + $0x248] sm:$0xff]
        %v2986 = vld [vmem:[%s213 + $0x250] sm:$0xff]
        %v2987 = vld [vmem:[%s213 + $0x258] sm:$0xff]
        %v2988 = vld [vmem:[%s213 + $0x260] sm:$0xff]
        %v2989 = vld [vmem:[%s213 + $0x268] sm:$0xff]
        %v2990 = vld [vmem:[%s213 + $0x270] sm:$0xff]
        %v2991 = vld [vmem:[%s213 + $0x278] sm:$0xff]
        %v2992 = vld [vmem:[%s213 + $0x280] sm:$0xff]
        %v2993 = vld [vmem:[%s213 + $0x288] sm:$0xff]
        %v2994 = vld [vmem:[%s213 + $0x290] sm:$0xff]
        %v2995 = vld [vmem:[%s213 + $0x298] sm:$0xff]
        %v2996 = vld [vmem:[%s213 + $0x2a0] sm:$0xff]
        %v2997 = vld [vmem:[%s213 + $0x2a8] sm:$0xff]
        %v2998 = vld [vmem:[%s213 + $0x2b0] sm:$0xff]
        %v2999 = vld [vmem:[%s213 + $0x2b8] sm:$0xff]
        %v3000 = vld [vmem:[%s213 + $0x2c0] sm:$0xff]
        %v3001 = vld [vmem:[%s213 + $0x2c8] sm:$0xff]
        %v3002 = vld [vmem:[%s213 + $0x2d0] sm:$0xff]
        %v3003 = vld [vmem:[%s213 + $0x2d8] sm:$0xff]
        %v3004 = vld [vmem:[%s213 + $0x2e0] sm:$0xff]
        %v3005 = vld [vmem:[%s213 + $0x2e8] sm:$0xff]
        %v3006 = vld [vmem:[%s213 + $0x2f0] sm:$0xff]
        %v3007 = vld [vmem:[%s213 + $0x2f8] sm:$0xff]
        %v3008 = vld [vmem:[%s213 + $0x300] sm:$0xff]
        %v3009 = vld [vmem:[%s213 + $0x308] sm:$0xff]
        %v3010 = vld [vmem:[%s213 + $0x310] sm:$0xff]
        %v3011 = vld [vmem:[%s213 + $0x318] sm:$0xff]
        %v3012 = vld [vmem:[%s213 + $0x320] sm:$0xff]
        %v3013 = vld [vmem:[%s213 + $0x328] sm:$0xff]
        %v3014 = vld [vmem:[%s213 + $0x330] sm:$0xff]
        %v3015 = vld [vmem:[%s213 + $0x338] sm:$0xff]
        %v3016 = vld [vmem:[%s213 + $0x340] sm:$0xff]
        %v3017 = vld [vmem:[%s213 + $0x348] sm:$0xff]
        %v3018 = vld [vmem:[%s213 + $0x350] sm:$0xff]
        %v3019 = vld [vmem:[%s213 + $0x358] sm:$0xff]
        %v3020 = vld [vmem:[%s213 + $0x360] sm:$0xff]
        %v3021 = vld [vmem:[%s213 + $0x368] sm:$0xff]
        %v3022 = vld [vmem:[%s213 + $0x370] sm:$0xff]
        %v3023 = vld [vmem:[%s213 + $0x378] sm:$0xff]
        %v3024 = vld [vmem:[%s213 + $0x380] sm:$0xff]
        %v3025 = vld [vmem:[%s213 + $0x388] sm:$0xff]
        %v3026 = vld [vmem:[%s213 + $0x390] sm:$0xff]
        %v3027 = vld [vmem:[%s213 + $0x398] sm:$0xff]
        %v3028 = vld [vmem:[%s213 + $0x3a0] sm:$0xff]
        %v3029 = vld [vmem:[%s213 + $0x3a8] sm:$0xff]
        %v3030 = vld [vmem:[%s213 + $0x3b0] sm:$0xff]
        %v3031 = vld [vmem:[%s213 + $0x3b8] sm:$0xff]
        %v3032 = vld [vmem:[%s213 + $0x3c0] sm:$0xff]
        %v3033 = vld [vmem:[%s213 + $0x3c8] sm:$0xff]
        %v3034 = vld [vmem:[%s213 + $0x3d0] sm:$0xff]
        %v3035 = vld [vmem:[%s213 + $0x3d8] sm:$0xff]
        %v3036 = vld [vmem:[%s213 + $0x3e0] sm:$0xff]
        %v3037 = vld [vmem:[%s213 + $0x3e8] sm:$0xff]
        %v3038 = vld [vmem:[%s213 + $0x3f0] sm:$0xff]
        %v3039 = vld [vmem:[%s213 + $0x3f8] sm:$0xff]
        %v3040 = vld [vmem:[%s213 + $0x400] sm:$0xff]
        %v3041 = vld [vmem:[%s213 + $0x408] sm:$0xff]
        %v3042 = vld [vmem:[%s213 + $0x410] sm:$0xff]
        %v3043 = vld [vmem:[%s213 + $0x418] sm:$0xff]
        %v3044 = vld [vmem:[%s213 + $0x420] sm:$0xff]
        %v3045 = vld [vmem:[%s213 + $0x428] sm:$0xff]
        %v3046 = vld [vmem:[%s213 + $0x430] sm:$0xff]
        %v3047 = vld [vmem:[%s213 + $0x438] sm:$0xff]
        %v3048 = vld [vmem:[%s213 + $0x440] sm:$0xff]
        %v3049 = vld [vmem:[%s213 + $0x448] sm:$0xff]
        %v3050 = vld [vmem:[%s213 + $0x450] sm:$0xff]
        %v3051 = vld [vmem:[%s213 + $0x458] sm:$0xff]
        %v3052 = vld [vmem:[%s213 + $0x460] sm:$0xff]
        %v3053 = vld [vmem:[%s213 + $0x468] sm:$0xff]
        %v3054 = vld [vmem:[%s213 + $0x470] sm:$0xff]
        %v3055 = vld [vmem:[%s213 + $0x478] sm:$0xff]
        %v3056 = vld [vmem:[%s213 + $0x480] sm:$0xff]
        %v3057 = vld [vmem:[%s213 + $0x488] sm:$0xff]
        %v3058 = vld [vmem:[%s213 + $0x490] sm:$0xff]
        %v3059 = vld [vmem:[%s213 + $0x498] sm:$0xff]
        %v3060 = vld [vmem:[%s213 + $0x4a0] sm:$0xff]
        %v3061 = vld [vmem:[%s213 + $0x4a8] sm:$0xff]
        %v3062 = vld [vmem:[%s213 + $0x4b0] sm:$0xff]
        %v3063 = vld [vmem:[%s213 + $0x4b8] sm:$0xff]
        %v3064 = vld [vmem:[%s213 + $0x4c0] sm:$0xff]
        %v3065 = vld [vmem:[%s213 + $0x4c8] sm:$0xff]
        %v3066 = vld [vmem:[%s213 + $0x4d0] sm:$0xff]
        %v3067 = vld [vmem:[%s213 + $0x4d8] sm:$0xff]
        %v3068 = vld [vmem:[%s213 + $0x4e0] sm:$0xff]
        %v3069 = vld [vmem:[%s213 + $0x4e8] sm:$0xff]
        %v3070 = vld [vmem:[%s213 + $0x4f0] sm:$0xff]
        %v3071 = vld [vmem:[%s213 + $0x4f8] sm:$0xff]
        %v3072 = vld [vmem:[%s213 + $0x500] sm:$0xff]
        %v3073 = vld [vmem:[%s213 + $0x508] sm:$0xff]
        %v3074 = vld [vmem:[%s213 + $0x510] sm:$0xff]
        %v3075 = vld [vmem:[%s213 + $0x518] sm:$0xff]
        %v3076 = vld [vmem:[%s213 + $0x520] sm:$0xff]
        %v3077 = vld [vmem:[%s213 + $0x528] sm:$0xff]
        %v3078 = vld [vmem:[%s213 + $0x530] sm:$0xff]
        %v3079 = vld [vmem:[%s213 + $0x538] sm:$0xff]
        %v3080 = vld [vmem:[%s213 + $0x540] sm:$0xff]
        %v3081 = vld [vmem:[%s213 + $0x548] sm:$0xff]
        %v3082 = vld [vmem:[%s213 + $0x550] sm:$0xff]
        %v3083 = vld [vmem:[%s213 + $0x558] sm:$0xff]
        %v3084 = vld [vmem:[%s213 + $0x560] sm:$0xff]
        %v3085 = vld [vmem:[%s213 + $0x568] sm:$0xff]
        %v3086 = vld [vmem:[%s213 + $0x570] sm:$0xff]
        %v3087 = vld [vmem:[%s213 + $0x578] sm:$0xff]
        %v3088 = vld [vmem:[%s213 + $0x580] sm:$0xff]
        %v3089 = vld [vmem:[%s213 + $0x588] sm:$0xff]
        %v3090 = vld [vmem:[%s213 + $0x590] sm:$0xff]
        %v3091 = vld [vmem:[%s213 + $0x598] sm:$0xff]
        %v3092 = vld [vmem:[%s213 + $0x5a0] sm:$0xff]
        %v3093 = vld [vmem:[%s213 + $0x5a8] sm:$0xff]
        %v3094 = vld [vmem:[%s213 + $0x5b0] sm:$0xff]
        %v3095 = vld [vmem:[%s213 + $0x5b8] sm:$0xff]
        %v3096 = vld [vmem:[%s213 + $0x5c0] sm:$0xff]
        %v3097 = vld [vmem:[%s213 + $0x5c8] sm:$0xff]
        %v3098 = vld [vmem:[%s213 + $0x5d0] sm:$0xff]
        %v3099 = vld [vmem:[%s213 + $0x5d8] sm:$0xff]
        %v3100 = vld [vmem:[%s213 + $0x5e0] sm:$0xff]
        %v3101 = vld [vmem:[%s213 + $0x5e8] sm:$0xff]
        %v3102 = vld [vmem:[%s213 + $0x5f0] sm:$0xff]
        %v3103 = vld [vmem:[%s213 + $0x5f8] sm:$0xff]
        %v3104 = vld [vmem:[%s213 + $0x600] sm:$0xff]
        %v3105 = vld [vmem:[%s213 + $0x608] sm:$0xff]
        %v3106 = vld [vmem:[%s213 + $0x610] sm:$0xff]
        %v3107 = vld [vmem:[%s213 + $0x618] sm:$0xff]
        %v3108 = vld [vmem:[%s213 + $0x620] sm:$0xff]
        %v3109 = vld [vmem:[%s213 + $0x628] sm:$0xff]
        %v3110 = vld [vmem:[%s213 + $0x630] sm:$0xff]
        %v3111 = vld [vmem:[%s213 + $0x638] sm:$0xff]
        %v3112 = vld [vmem:[%s213 + $0x640] sm:$0xff]
        %v3113 = vld [vmem:[%s213 + $0x648] sm:$0xff]
        %v3114 = vld [vmem:[%s213 + $0x650] sm:$0xff]
        %v3115 = vld [vmem:[%s213 + $0x658] sm:$0xff]
        %v3116 = vld [vmem:[%s213 + $0x660] sm:$0xff]
        %v3117 = vld [vmem:[%s213 + $0x668] sm:$0xff]
        %v3118 = vld [vmem:[%s213 + $0x670] sm:$0xff]
        %v3119 = vld [vmem:[%s213 + $0x678] sm:$0xff]
        %v3120 = vld [vmem:[%s213 + $0x680] sm:$0xff]
        %v3121 = vld [vmem:[%s213 + $0x688] sm:$0xff]
        %v3122 = vld [vmem:[%s213 + $0x690] sm:$0xff]
        %v3123 = vld [vmem:[%s213 + $0x698] sm:$0xff]
        %v3124 = vld [vmem:[%s213 + $0x6a0] sm:$0xff]
        %v3125 = vld [vmem:[%s213 + $0x6a8] sm:$0xff]
        %v3126 = vld [vmem:[%s213 + $0x6b0] sm:$0xff]
        %v3127 = vld [vmem:[%s213 + $0x6b8] sm:$0xff]
        %v3128 = vld [vmem:[%s213 + $0x6c0] sm:$0xff]
        %v3129 = vld [vmem:[%s213 + $0x6c8] sm:$0xff]
        %v3130 = vld [vmem:[%s213 + $0x6d0] sm:$0xff]
        %v3131 = vld [vmem:[%s213 + $0x6d8] sm:$0xff]
        %v3132 = vld [vmem:[%s213 + $0x6e0] sm:$0xff]
        %v3133 = vld [vmem:[%s213 + $0x6e8] sm:$0xff]
        %v3134 = vld [vmem:[%s213 + $0x6f0] sm:$0xff]
        %v3135 = vld [vmem:[%s213 + $0x6f8] sm:$0xff]
        %v3136 = vld [vmem:[%s213 + $0x700] sm:$0xff]
        %v3137 = vld [vmem:[%s213 + $0x708] sm:$0xff]
        %v3138 = vld [vmem:[%s213 + $0x710] sm:$0xff]
        %v3139 = vld [vmem:[%s213 + $0x718] sm:$0xff]
        %v3140 = vld [vmem:[%s213 + $0x720] sm:$0xff]
        %v3141 = vld [vmem:[%s213 + $0x728] sm:$0xff]
        %v3142 = vld [vmem:[%s213 + $0x730] sm:$0xff]
        %v3143 = vld [vmem:[%s213 + $0x738] sm:$0xff]
        %v3144 = vld [vmem:[%s213 + $0x740] sm:$0xff]
        %v3145 = vld [vmem:[%s213 + $0x748] sm:$0xff]
        %v3146 = vld [vmem:[%s213 + $0x750] sm:$0xff]
        %v3147 = vld [vmem:[%s213 + $0x758] sm:$0xff]
        %v3148 = vld [vmem:[%s213 + $0x760] sm:$0xff]
        %v3149 = vld [vmem:[%s213 + $0x768] sm:$0xff]
        %v3150 = vld [vmem:[%s213 + $0x770] sm:$0xff]
        %v3151 = vld [vmem:[%s213 + $0x778] sm:$0xff]
        %v3152 = vld [vmem:[%s213 + $0x780] sm:$0xff]
        %v3153 = vld [vmem:[%s213 + $0x788] sm:$0xff]
        %v3154 = vld [vmem:[%s213 + $0x790] sm:$0xff]
        %v3155 = vld [vmem:[%s213 + $0x798] sm:$0xff]
        %v3156 = vld [vmem:[%s213 + $0x7a0] sm:$0xff]
        %v3157 = vld [vmem:[%s213 + $0x7a8] sm:$0xff]
        %v3158 = vld [vmem:[%s213 + $0x7b0] sm:$0xff]
        %v3159 = vld [vmem:[%s213 + $0x7b8] sm:$0xff]
        %v3160 = vld [vmem:[%s213 + $0x7c0] sm:$0xff]
        %v3161 = vld [vmem:[%s213 + $0x7c8] sm:$0xff]
        %v3162 = vld [vmem:[%s213 + $0x7d0] sm:$0xff]
        %v3163 = vld [vmem:[%s213 + $0x7d8] sm:$0xff]
        %v3164 = vld [vmem:[%s213 + $0x7e0] sm:$0xff]
        %v3165 = vld [vmem:[%s213 + $0x7e8] sm:$0xff]
        %v3166 = vld [vmem:[%s213 + $0x7f0] sm:$0xff]
        %v3167 = vld [vmem:[%s213 + $0x7f8] sm:$0xff]
        %v3168 = vld [vmem:[%s213 + $0x800] sm:$0xff]
        %v3169 = vld [vmem:[%s213 + $0x808] sm:$0xff]
        %v3170 = vld [vmem:[%s213 + $0x810] sm:$0xff]
        %v3171 = vld [vmem:[%s213 + $0x818] sm:$0xff]
        %v3172 = vld [vmem:[%s213 + $0x820] sm:$0xff]
        %v3173 = vld [vmem:[%s213 + $0x828] sm:$0xff]
        %v3174 = vld [vmem:[%s213 + $0x830] sm:$0xff]
        %v3175 = vld [vmem:[%s213 + $0x838] sm:$0xff]
        %v3176 = vld [vmem:[%s213 + $0x840] sm:$0xff]
        %v3177 = vld [vmem:[%s213 + $0x848] sm:$0xff]
        %v3178 = vld [vmem:[%s213 + $0x850] sm:$0xff]
        %v3179 = vld [vmem:[%s213 + $0x858] sm:$0xff]
        %v3180 = vld [vmem:[%s213 + $0x860] sm:$0xff]
        %v3181 = vld [vmem:[%s213 + $0x868] sm:$0xff]
        %v3182 = vld [vmem:[%s213 + $0x870] sm:$0xff]
        %v3183 = vld [vmem:[%s213 + $0x878] sm:$0xff]
        %v3184 = vld [vmem:[%s213 + $0x880] sm:$0xff]
        %v3185 = vld [vmem:[%s213 + $0x888] sm:$0xff]
        %v3186 = vld [vmem:[%s213 + $0x890] sm:$0xff]
        %v3187 = vld [vmem:[%s213 + $0x898] sm:$0xff]
        %v3188 = vld [vmem:[%s213 + $0x8a0] sm:$0xff]
        %v3189 = vld [vmem:[%s213 + $0x8a8] sm:$0xff]
        %v3190 = vld [vmem:[%s213 + $0x8b0] sm:$0xff]
        %v3191 = vld [vmem:[%s213 + $0x8b8] sm:$0xff]
        %v3192 = vld [vmem:[%s213 + $0x8c0] sm:$0xff]
        %v3193 = vld [vmem:[%s213 + $0x8c8] sm:$0xff]
        %v3194 = vld [vmem:[%s213 + $0x8d0] sm:$0xff]
        %v3195 = vld [vmem:[%s213 + $0x8d8] sm:$0xff]
        %v3196 = vld [vmem:[%s213 + $0x8e0] sm:$0xff]
        %v3197 = vld [vmem:[%s213 + $0x8e8] sm:$0xff]
        %v3198 = vld [vmem:[%s213 + $0x8f0] sm:$0xff]
        %v3199 = vld [vmem:[%s213 + $0x8f8] sm:$0xff]
        %v3200 = vld [vmem:[%s213 + $0x900] sm:$0xff]
        %v3201 = vld [vmem:[%s213 + $0x908] sm:$0xff]
        %v3202 = vld [vmem:[%s213 + $0x910] sm:$0xff]
        %v3203 = vld [vmem:[%s213 + $0x918] sm:$0xff]
        %v3204 = vld [vmem:[%s213 + $0x920] sm:$0xff]
        %v3205 = vld [vmem:[%s213 + $0x928] sm:$0xff]
        %v3206 = vld [vmem:[%s213 + $0x930] sm:$0xff]
        %v3207 = vld [vmem:[%s213 + $0x938] sm:$0xff]
        %v3208 = vld [vmem:[%s213 + $0x940] sm:$0xff]
        %v3209 = vld [vmem:[%s213 + $0x948] sm:$0xff]
        %v3210 = vld [vmem:[%s213 + $0x950] sm:$0xff]
        %v3211 = vld [vmem:[%s213 + $0x958] sm:$0xff]
        %v3212 = vld [vmem:[%s213 + $0x960] sm:$0xff]
        %v3213 = vld [vmem:[%s213 + $0x968] sm:$0xff]
        %v3214 = vld [vmem:[%s213 + $0x970] sm:$0xff]
        %v3215 = vld [vmem:[%s213 + $0x978] sm:$0xff]
        %v3216 = vld [vmem:[%s213 + $0x980] sm:$0xff]
        %v3217 = vld [vmem:[%s213 + $0x988] sm:$0xff]
        %v3218 = vld [vmem:[%s213 + $0x990] sm:$0xff]
        %v3219 = vld [vmem:[%s213 + $0x998] sm:$0xff]
        %v3220 = vld [vmem:[%s213 + $0x9a0] sm:$0xff]
        %v3221 = vld [vmem:[%s213 + $0x9a8] sm:$0xff]
        %v3222 = vld [vmem:[%s213 + $0x9b0] sm:$0xff]
        %v3223 = vld [vmem:[%s213 + $0x9b8] sm:$0xff]
        %v3224 = vld [vmem:[%s213 + $0x9c0] sm:$0xff]
        %v3225 = vld [vmem:[%s213 + $0x9c8] sm:$0xff]
        %v3226 = vld [vmem:[%s213 + $0x9d0] sm:$0xff]
        %v3227 = vld [vmem:[%s213 + $0x9d8] sm:$0xff]
        %v3228 = vld [vmem:[%s213 + $0x9e0] sm:$0xff]
        %v3229 = vld [vmem:[%s213 + $0x9e8] sm:$0xff]
        %v3230 = vld [vmem:[%s213 + $0x9f0] sm:$0xff]
        %v3231 = vld [vmem:[%s213 + $0x9f8] sm:$0xff]
        %v3232 = vld [vmem:[%s213 + $0xa00] sm:$0xff]
        %v3233 = vld [vmem:[%s213 + $0xa08] sm:$0xff]
        %v3234 = vld [vmem:[%s213 + $0xa10] sm:$0xff]
        %v3235 = vld [vmem:[%s213 + $0xa18] sm:$0xff]
        %v3236 = vld [vmem:[%s213 + $0xa20] sm:$0xff]
        %v3237 = vld [vmem:[%s213 + $0xa28] sm:$0xff]
        %v3238 = vld [vmem:[%s213 + $0xa30] sm:$0xff]
        %v3239 = vld [vmem:[%s213 + $0xa38] sm:$0xff]
        %v3240 = vld [vmem:[%s213 + $0xa40] sm:$0xff]
        %v3241 = vld [vmem:[%s213 + $0xa48] sm:$0xff]
        %v3242 = vld [vmem:[%s213 + $0xa50] sm:$0xff]
        %v3243 = vld [vmem:[%s213 + $0xa58] sm:$0xff]
        %v3244 = vld [vmem:[%s213 + $0xa60] sm:$0xff]
        %v3245 = vld [vmem:[%s213 + $0xa68] sm:$0xff]
        %v3246 = vld [vmem:[%s213 + $0xa70] sm:$0xff]
        %v3247 = vld [vmem:[%s213 + $0xa78] sm:$0xff]
        %v3248 = vld [vmem:[%s213 + $0xa80] sm:$0xff]
        %v3249 = vld [vmem:[%s213 + $0xa88] sm:$0xff]
        %v3250 = vld [vmem:[%s213 + $0xa90] sm:$0xff]
        %v3251 = vld [vmem:[%s213 + $0xa98] sm:$0xff]
        %v3252 = vld [vmem:[%s213 + $0xaa0] sm:$0xff]
        %v3253 = vld [vmem:[%s213 + $0xaa8] sm:$0xff]
        %v3254 = vld [vmem:[%s213 + $0xab0] sm:$0xff]
        %v3255 = vld [vmem:[%s213 + $0xab8] sm:$0xff]
        %v3256 = vld [vmem:[%s213 + $0xac0] sm:$0xff]
        %v3257 = vld [vmem:[%s213 + $0xac8] sm:$0xff]
        %v3258 = vld [vmem:[%s213 + $0xad0] sm:$0xff]
        %v3259 = vld [vmem:[%s213 + $0xad8] sm:$0xff]
        %v3260 = vld [vmem:[%s213 + $0xae0] sm:$0xff]
        %v3261 = vld [vmem:[%s213 + $0xae8] sm:$0xff]
        %v3262 = vld [vmem:[%s213 + $0xaf0] sm:$0xff]
        %v3263 = vld [vmem:[%s213 + $0xaf8] sm:$0xff]
        %v3264 = vld [vmem:[%s213 + $0xb00] sm:$0xff]
        %v3265 = vld [vmem:[%s213 + $0xb08] sm:$0xff]
        %v3266 = vld [vmem:[%s213 + $0xb10] sm:$0xff]
        %v3267 = vld [vmem:[%s213 + $0xb18] sm:$0xff]
        %v3268 = vld [vmem:[%s213 + $0xb20] sm:$0xff]
        %v3269 = vld [vmem:[%s213 + $0xb28] sm:$0xff]
        %v3270 = vld [vmem:[%s213 + $0xb30] sm:$0xff]
        %v3271 = vld [vmem:[%s213 + $0xb38] sm:$0xff]
        %v3272 = vld [vmem:[%s213 + $0xb40] sm:$0xff]
        %v3273 = vld [vmem:[%s213 + $0xb48] sm:$0xff]
        %v3274 = vld [vmem:[%s213 + $0xb50] sm:$0xff]
        %v3275 = vld [vmem:[%s213 + $0xb58] sm:$0xff]
        %v3276 = vld [vmem:[%s213 + $0xb60] sm:$0xff]
        %v3277 = vld [vmem:[%s213 + $0xb68] sm:$0xff]
        %v3278 = vld [vmem:[%s213 + $0xb70] sm:$0xff]
        %v3279 = vld [vmem:[%s213 + $0xb78] sm:$0xff]
        %v3280 = vld [vmem:[%s213 + $0xb80] sm:$0xff]
        %v3281 = vld [vmem:[%s213 + $0xb88] sm:$0xff]
        %v3282 = vld [vmem:[%s213 + $0xb90] sm:$0xff]
        %v3283 = vld [vmem:[%s213 + $0xb98] sm:$0xff]
        %v3284 = vld [vmem:[%s213 + $0xba0] sm:$0xff]
        %v3285 = vld [vmem:[%s213 + $0xba8] sm:$0xff]
        %v3286 = vld [vmem:[%s213 + $0xbb0] sm:$0xff]
        %v3287 = vld [vmem:[%s213 + $0xbb8] sm:$0xff]
        %v3288 = vld [vmem:[%s213 + $0xbc0] sm:$0xff]
        %v3289 = vld [vmem:[%s213 + $0xbc8] sm:$0xff]
        %v3290 = vld [vmem:[%s213 + $0xbd0] sm:$0xff]
        %v3291 = vld [vmem:[%s213 + $0xbd8] sm:$0xff]
        %v3292 = vld [vmem:[%s213 + $0xbe0] sm:$0xff]
        %v3293 = vld [vmem:[%s213 + $0xbe8] sm:$0xff]
        %v3294 = vld [vmem:[%s213 + $0xbf0] sm:$0xff]
        %v3295 = vld [vmem:[%s213 + $0xbf8] sm:$0xff]
        %v3296 = vld [vmem:[%s213 + $0xc00] sm:$0xff]
        %v3297 = vld [vmem:[%s213 + $0xc08] sm:$0xff]
        %v3298 = vld [vmem:[%s213 + $0xc10] sm:$0xff]
        %v3299 = vld [vmem:[%s213 + $0xc18] sm:$0xff]
        %v3300 = vld [vmem:[%s213 + $0xc20] sm:$0xff]
        %v3301 = vld [vmem:[%s213 + $0xc28] sm:$0xff]
        %v3302 = vld [vmem:[%s213 + $0xc30] sm:$0xff]
        %v3303 = vld [vmem:[%s213 + $0xc38] sm:$0xff]
        %v3304 = vld [vmem:[%s213 + $0xc40] sm:$0xff]
        %v3305 = vld [vmem:[%s213 + $0xc48] sm:$0xff]
        %v3306 = vld [vmem:[%s213 + $0xc50] sm:$0xff]
        %v3307 = vld [vmem:[%s213 + $0xc58] sm:$0xff]
        %v3308 = vld [vmem:[%s213 + $0xc60] sm:$0xff]
        %v3309 = vld [vmem:[%s213 + $0xc68] sm:$0xff]
        %v3310 = vld [vmem:[%s213 + $0xc70] sm:$0xff]
        %v3311 = vld [vmem:[%s213 + $0xc78] sm:$0xff]
        %v3312 = vld [vmem:[%s213 + $0xc80] sm:$0xff]
        %v3313 = vld [vmem:[%s213 + $0xc88] sm:$0xff]
        %v3314 = vld [vmem:[%s213 + $0xc90] sm:$0xff]
        %v3315 = vld [vmem:[%s213 + $0xc98] sm:$0xff]
        %v3316 = vld [vmem:[%s213 + $0xca0] sm:$0xff]
        %v3317 = vld [vmem:[%s213 + $0xca8] sm:$0xff]
        %v3318 = vld [vmem:[%s213 + $0xcb0] sm:$0xff]
        %v3319 = vld [vmem:[%s213 + $0xcb8] sm:$0xff]
        %v3320 = vld [vmem:[%s213 + $0xcc0] sm:$0xff]
        %v3321 = vld [vmem:[%s213 + $0xcc8] sm:$0xff]
        %v3322 = vld [vmem:[%s213 + $0xcd0] sm:$0xff]
        %v3323 = vld [vmem:[%s213 + $0xcd8] sm:$0xff]
        %v3324 = vld [vmem:[%s213 + $0xce0] sm:$0xff]
        %v3325 = vld [vmem:[%s213 + $0xce8] sm:$0xff]
        %v3326 = vld [vmem:[%s213 + $0xcf0] sm:$0xff]
        %v3327 = vld [vmem:[%s213 + $0xcf8] sm:$0xff]
        %v3328 = vld [vmem:[%s213 + $0xd00] sm:$0xff]
        %v3329 = vld [vmem:[%s213 + $0xd08] sm:$0xff]
        %v3330 = vld [vmem:[%s213 + $0xd10] sm:$0xff]
        %v3331 = vld [vmem:[%s213 + $0xd18] sm:$0xff]
        %v3332 = vld [vmem:[%s213 + $0xd20] sm:$0xff]
        %v3333 = vld [vmem:[%s213 + $0xd28] sm:$0xff]
        %v3334 = vld [vmem:[%s213 + $0xd30] sm:$0xff]
        %v3335 = vld [vmem:[%s213 + $0xd38] sm:$0xff]
        %v3336 = vld [vmem:[%s213 + $0xd40] sm:$0xff]
        %v3337 = vld [vmem:[%s213 + $0xd48] sm:$0xff]
        %v3338 = vld [vmem:[%s213 + $0xd50] sm:$0xff]
        %v3339 = vld [vmem:[%s213 + $0xd58] sm:$0xff]
        %v3340 = vld [vmem:[%s213 + $0xd60] sm:$0xff]
        %v3341 = vld [vmem:[%s213 + $0xd68] sm:$0xff]
        %v3342 = vld [vmem:[%s213 + $0xd70] sm:$0xff]
        %v3343 = vld [vmem:[%s213 + $0xd78] sm:$0xff]
        %v3344 = vld [vmem:[%s213 + $0xd80] sm:$0xff]
        %v3345 = vld [vmem:[%s213 + $0xd88] sm:$0xff]
        %v3346 = vld [vmem:[%s213 + $0xd90] sm:$0xff]
        %v3347 = vld [vmem:[%s213 + $0xd98] sm:$0xff]
        %v3348 = vld [vmem:[%s213 + $0xda0] sm:$0xff]
        %v3349 = vld [vmem:[%s213 + $0xda8] sm:$0xff]
        %v3350 = vld [vmem:[%s213 + $0xdb0] sm:$0xff]
        %v3351 = vld [vmem:[%s213 + $0xdb8] sm:$0xff]
        %v3352 = vld [vmem:[%s213 + $0xdc0] sm:$0xff]
        %v3353 = vld [vmem:[%s213 + $0xdc8] sm:$0xff]
        %v3354 = vld [vmem:[%s213 + $0xdd0] sm:$0xff]
        %v3355 = vld [vmem:[%s213 + $0xdd8] sm:$0xff]
        %v3356 = vld [vmem:[%s213 + $0xde0] sm:$0xff]
        %v3357 = vld [vmem:[%s213 + $0xde8] sm:$0xff]
        %v3358 = vld [vmem:[%s213 + $0xdf0] sm:$0xff]
        %v3359 = vld [vmem:[%s213 + $0xdf8] sm:$0xff]
        %v3360 = vld [vmem:[%s213 + $0xe00] sm:$0xff]
        %v3361 = vld [vmem:[%s213 + $0xe08] sm:$0xff]
        %v3362 = vld [vmem:[%s213 + $0xe10] sm:$0xff]
        %v3363 = vld [vmem:[%s213 + $0xe18] sm:$0xff]
        %v3364 = vld [vmem:[%s213 + $0xe20] sm:$0xff]
        %v3365 = vld [vmem:[%s213 + $0xe28] sm:$0xff]
        %v3366 = vld [vmem:[%s213 + $0xe30] sm:$0xff]
        %v3367 = vld [vmem:[%s213 + $0xe38] sm:$0xff]
        %v3368 = vld [vmem:[%s213 + $0xe40] sm:$0xff]
        %v3369 = vld [vmem:[%s213 + $0xe48] sm:$0xff]
        %v3370 = vld [vmem:[%s213 + $0xe50] sm:$0xff]
        %v3371 = vld [vmem:[%s213 + $0xe58] sm:$0xff]
        %v3372 = vld [vmem:[%s213 + $0xe60] sm:$0xff]
        %v3373 = vld [vmem:[%s213 + $0xe68] sm:$0xff]
        %v3374 = vld [vmem:[%s213 + $0xe70] sm:$0xff]
        %v3375 = vld [vmem:[%s213 + $0xe78] sm:$0xff]
        %v3376 = vld [vmem:[%s213 + $0xe80] sm:$0xff]
        %v3377 = vld [vmem:[%s213 + $0xe88] sm:$0xff]
        %v3378 = vld [vmem:[%s213 + $0xe90] sm:$0xff]
        %v3379 = vld [vmem:[%s213 + $0xe98] sm:$0xff]
        %v3380 = vld [vmem:[%s213 + $0xea0] sm:$0xff]
        %v3381 = vld [vmem:[%s213 + $0xea8] sm:$0xff]
        %v3382 = vld [vmem:[%s213 + $0xeb0] sm:$0xff]
        %v3383 = vld [vmem:[%s213 + $0xeb8] sm:$0xff]
        %v3384 = vld [vmem:[%s213 + $0xec0] sm:$0xff]
        %v3385 = vld [vmem:[%s213 + $0xec8] sm:$0xff]
        %v3386 = vld [vmem:[%s213 + $0xed0] sm:$0xff]
        %v3387 = vld [vmem:[%s213 + $0xed8] sm:$0xff]
        %v3388 = vld [vmem:[%s213 + $0xee0] sm:$0xff]
        %v3389 = vld [vmem:[%s213 + $0xee8] sm:$0xff]
        %v3390 = vld [vmem:[%s213 + $0xef0] sm:$0xff]
        %v3391 = vld [vmem:[%s213 + $0xef8] sm:$0xff]
        %v3392 = vld [vmem:[%s213 + $0xf00] sm:$0xff]
        %v3393 = vld [vmem:[%s213 + $0xf08] sm:$0xff]
        %v3394 = vld [vmem:[%s213 + $0xf10] sm:$0xff]
        %v3395 = vld [vmem:[%s213 + $0xf18] sm:$0xff]
        %v3396 = vld [vmem:[%s213 + $0xf20] sm:$0xff]
        %v3397 = vld [vmem:[%s213 + $0xf28] sm:$0xff]
        %v3398 = vld [vmem:[%s213 + $0xf30] sm:$0xff]
        %v3399 = vld [vmem:[%s213 + $0xf38] sm:$0xff]
        %v3400 = vld [vmem:[%s213 + $0xf40] sm:$0xff]
        %v3401 = vld [vmem:[%s213 + $0xf48] sm:$0xff]
        %v3402 = vld [vmem:[%s213 + $0xf50] sm:$0xff]
        %v3403 = vld [vmem:[%s213 + $0xf58] sm:$0xff]
        %v3404 = vld [vmem:[%s213 + $0xf60] sm:$0xff]
        %v3405 = vld [vmem:[%s213 + $0xf68] sm:$0xff]
        %v3406 = vld [vmem:[%s213 + $0xf70] sm:$0xff]
        %v3407 = vld [vmem:[%s213 + $0xf78] sm:$0xff]
        %v3408 = vld [vmem:[%s213 + $0xf80] sm:$0xff]
        %v3409 = vld [vmem:[%s213 + $0xf88] sm:$0xff]
        %v3410 = vld [vmem:[%s213 + $0xf90] sm:$0xff]
        %v3411 = vld [vmem:[%s213 + $0xf98] sm:$0xff]
        %v3412 = vld [vmem:[%s213 + $0xfa0] sm:$0xff]
        %v3413 = vld [vmem:[%s213 + $0xfa8] sm:$0xff]
        %v3414 = vld [vmem:[%s213 + $0xfb0] sm:$0xff]
        %v3415 = vld [vmem:[%s213 + $0xfb8] sm:$0xff]
        %v3416 = vld [vmem:[%s213 + $0xfc0] sm:$0xff]
        %v3417 = vld [vmem:[%s213 + $0xfc8] sm:$0xff]
        %v3418 = vld [vmem:[%s213 + $0xfd0] sm:$0xff]
        %v3419 = vld [vmem:[%s213 + $0xfd8] sm:$0xff]
        %v3420 = vld [vmem:[%s213 + $0xfe0] sm:$0xff]
        %v3421 = vld [vmem:[%s213 + $0xfe8] sm:$0xff]
        %v3422 = vld [vmem:[%s213 + $0xff0] sm:$0xff]
        %v3423 = vld [vmem:[%s213 + $0xff8] sm:$0xff]
        %v3424 = vld [vmem:[%s213 + $0x1000] sm:$0xff]
        %v3425 = vld [vmem:[%s213 + $0x1008] sm:$0xff]
        %v3426 = vld [vmem:[%s213 + $0x1010] sm:$0xff]
        %v3427 = vld [vmem:[%s213 + $0x1018] sm:$0xff]
        %v3428 = vld [vmem:[%s213 + $0x1020] sm:$0xff]
        %v3429 = vld [vmem:[%s213 + $0x1028] sm:$0xff]
        %v3430 = vld [vmem:[%s213 + $0x1030] sm:$0xff]
        %v3431 = vld [vmem:[%s213 + $0x1038] sm:$0xff]
        %v3432 = vld [vmem:[%s213 + $0x1040] sm:$0xff]
        %v3433 = vld [vmem:[%s213 + $0x1048] sm:$0xff]
        %v3434 = vld [vmem:[%s213 + $0x1050] sm:$0xff]
        %v3435 = vld [vmem:[%s213 + $0x1058] sm:$0xff]
        %v3436 = vld [vmem:[%s213 + $0x1060] sm:$0xff]
        %v3437 = vld [vmem:[%s213 + $0x1068] sm:$0xff]
        %v3438 = vld [vmem:[%s213 + $0x1070] sm:$0xff]
        %v3439 = vld [vmem:[%s213 + $0x1078] sm:$0xff]
        %v3440 = vld [vmem:[%s213 + $0x1080] sm:$0xff]
        %v3441 = vld [vmem:[%s213 + $0x1088] sm:$0xff]
        %v3442 = vld [vmem:[%s213 + $0x1090] sm:$0xff]
        %v3443 = vld [vmem:[%s213 + $0x1098] sm:$0xff]
        %v3444 = vld [vmem:[%s213 + $0x10a0] sm:$0xff]
        %v3445 = vld [vmem:[%s213 + $0x10a8] sm:$0xff]
        %v3446 = vld [vmem:[%s213 + $0x10b0] sm:$0xff]
        %v3447 = vld [vmem:[%s213 + $0x10b8] sm:$0xff]
        %v3448 = vld [vmem:[%s213 + $0x10c0] sm:$0xff]
        %v3449 = vld [vmem:[%s213 + $0x10c8] sm:$0xff]
        %v3450 = vld [vmem:[%s213 + $0x10d0] sm:$0xff]
        %v3451 = vld [vmem:[%s213 + $0x10d8] sm:$0xff]
        %v3452 = vld [vmem:[%s213 + $0x10e0] sm:$0xff]
        %v3453 = vld [vmem:[%s213 + $0x10e8] sm:$0xff]
        %v3454 = vld [vmem:[%s213 + $0x10f0] sm:$0xff]
        %v3455 = vld [vmem:[%s213 + $0x10f8] sm:$0xff]
        %v3456 = vld [vmem:[%s213 + $0x1100] sm:$0xff]
        %v3457 = vld [vmem:[%s213 + $0x1108] sm:$0xff]
        %v3458 = vld [vmem:[%s213 + $0x1110] sm:$0xff]
        %v3459 = vld [vmem:[%s213 + $0x1118] sm:$0xff]
        %v3460 = vld [vmem:[%s213 + $0x1120] sm:$0xff]
        %v3461 = vld [vmem:[%s213 + $0x1128] sm:$0xff]
        %v3462 = vld [vmem:[%s213 + $0x1130] sm:$0xff]
        %v3463 = vld [vmem:[%s213 + $0x1138] sm:$0xff]
        %v3464 = vld [vmem:[%s213 + $0x1140] sm:$0xff]
        %v3465 = vld [vmem:[%s213 + $0x1148] sm:$0xff]
        %v3466 = vld [vmem:[%s213 + $0x1150] sm:$0xff]
        %v3467 = vld [vmem:[%s213 + $0x1158] sm:$0xff]
        %v3468 = vld [vmem:[%s213 + $0x1160] sm:$0xff]
        %v3469 = vld [vmem:[%s213 + $0x1168] sm:$0xff]
        %v3470 = vld [vmem:[%s213 + $0x1170] sm:$0xff]
        %v3471 = vld [vmem:[%s213 + $0x1178] sm:$0xff]
        %v3472 = vld [vmem:[%s213 + $0x1180] sm:$0xff]
        %v3473 = vld [vmem:[%s213 + $0x1188] sm:$0xff]
        %v3474 = vld [vmem:[%s213 + $0x1190] sm:$0xff]
        %v3475 = vld [vmem:[%s213 + $0x1198] sm:$0xff]
        %v3476 = vld [vmem:[%s213 + $0x11a0] sm:$0xff]
        %v3477 = vld [vmem:[%s213 + $0x11a8] sm:$0xff]
        %v3478 = vld [vmem:[%s213 + $0x11b0] sm:$0xff]
        %v3479 = vld [vmem:[%s213 + $0x11b8] sm:$0xff]
        %v3480 = vld [vmem:[%s213 + $0x11c0] sm:$0xff]
        %v3481 = vld [vmem:[%s213 + $0x11c8] sm:$0xff]
        %v3482 = vld [vmem:[%s213 + $0x11d0] sm:$0xff]
        %v3483 = vld [vmem:[%s213 + $0x11d8] sm:$0xff]
        %v3484 = vld [vmem:[%s213 + $0x11e0] sm:$0xff]
        %v3485 = vld [vmem:[%s213 + $0x11e8] sm:$0xff]
        %v3486 = vld [vmem:[%s213 + $0x11f0] sm:$0xff]
        %v3487 = vld [vmem:[%s213 + $0x11f8] sm:$0xff]
        %v3488 = vld [vmem:[%s213 + $0x1200] sm:$0xff]
        %v3489 = vld [vmem:[%s213 + $0x1208] sm:$0xff]
        %v3490 = vld [vmem:[%s213 + $0x1210] sm:$0xff]
        %v3491 = vld [vmem:[%s213 + $0x1218] sm:$0xff]
        %v3492 = vld [vmem:[%s213 + $0x1220] sm:$0xff]
        %v3493 = vld [vmem:[%s213 + $0x1228] sm:$0xff]
        %v3494 = vld [vmem:[%s213 + $0x1230] sm:$0xff]
        %v3495 = vld [vmem:[%s213 + $0x1238] sm:$0xff]
        %v3496 = vld [vmem:[%s213 + $0x1240] sm:$0xff]
        %v3497 = vld [vmem:[%s213 + $0x1248] sm:$0xff]
        %v3498 = vld [vmem:[%s213 + $0x1250] sm:$0xff]
        %v3499 = vld [vmem:[%s213 + $0x1258] sm:$0xff]
        %v3500 = vld [vmem:[%s213 + $0x1260] sm:$0xff]
        %v3501 = vld [vmem:[%s213 + $0x1268] sm:$0xff]
        %v3502 = vld [vmem:[%s213 + $0x1270] sm:$0xff]
        %v3503 = vld [vmem:[%s213 + $0x1278] sm:$0xff]
        %v3504 = vld [vmem:[%s213 + $0x1280] sm:$0xff]
        %v3505 = vld [vmem:[%s213 + $0x1288] sm:$0xff]
        %v3506 = vld [vmem:[%s213 + $0x1290] sm:$0xff]
        %v3507 = vld [vmem:[%s213 + $0x1298] sm:$0xff]
        %v3508 = vld [vmem:[%s213 + $0x12a0] sm:$0xff]
        %v3509 = vld [vmem:[%s213 + $0x12a8] sm:$0xff]
        %v3510 = vld [vmem:[%s213 + $0x12b0] sm:$0xff]
        %v3511 = vld [vmem:[%s213 + $0x12b8] sm:$0xff]
        %v3512 = vld [vmem:[%s213 + $0x12c0] sm:$0xff]
        %v3513 = vld [vmem:[%s213 + $0x12c8] sm:$0xff]
        %v3514 = vld [vmem:[%s213 + $0x12d0] sm:$0xff]
        %v3515 = vld [vmem:[%s213 + $0x12d8] sm:$0xff]
        %v3516 = vld [vmem:[%s213 + $0x12e0] sm:$0xff]
        %v3517 = vld [vmem:[%s213 + $0x12e8] sm:$0xff]
        %v3518 = vld [vmem:[%s213 + $0x12f0] sm:$0xff]
        %v3519 = vld [vmem:[%s213 + $0x12f8] sm:$0xff]
        %v3520 = vld [vmem:[%s213 + $0x1300] sm:$0xff]
        %v3521 = vld [vmem:[%s213 + $0x1308] sm:$0xff]
        %v3522 = vld [vmem:[%s213 + $0x1310] sm:$0xff]
        %v3523 = vld [vmem:[%s213 + $0x1318] sm:$0xff]
        %v3524 = vld [vmem:[%s213 + $0x1320] sm:$0xff]
        %v3525 = vld [vmem:[%s213 + $0x1328] sm:$0xff]
        %v3526 = vld [vmem:[%s213 + $0x1330] sm:$0xff]
        %v3527 = vld [vmem:[%s213 + $0x1338] sm:$0xff]
        %v3528 = vld [vmem:[%s213 + $0x1340] sm:$0xff]
        %v3529 = vld [vmem:[%s213 + $0x1348] sm:$0xff]
        %v3530 = vld [vmem:[%s213 + $0x1350] sm:$0xff]
        %v3531 = vld [vmem:[%s213 + $0x1358] sm:$0xff]
        %v3532 = vld [vmem:[%s213 + $0x1360] sm:$0xff]
        %v3533 = vld [vmem:[%s213 + $0x1368] sm:$0xff]
        %v3534 = vld [vmem:[%s213 + $0x1370] sm:$0xff]
        %v3535 = vld [vmem:[%s213 + $0x1378] sm:$0xff]
        %v3536 = vld [vmem:[%s213 + $0x1380] sm:$0xff]
        %v3537 = vld [vmem:[%s213 + $0x1388] sm:$0xff]
        %v3538 = vld [vmem:[%s213 + $0x1390] sm:$0xff]
        %v3539 = vld [vmem:[%s213 + $0x1398] sm:$0xff]
        %v3540 = vld [vmem:[%s213 + $0x13a0] sm:$0xff]
        %v3541 = vld [vmem:[%s213 + $0x13a8] sm:$0xff]
        %v3542 = vld [vmem:[%s213 + $0x13b0] sm:$0xff]
        %v3543 = vld [vmem:[%s213 + $0x13b8] sm:$0xff]
        %v3544 = vld [vmem:[%s213 + $0x13c0] sm:$0xff]
        %v3545 = vld [vmem:[%s213 + $0x13c8] sm:$0xff]
        %v3546 = vld [vmem:[%s213 + $0x13d0] sm:$0xff]
        %v3547 = vld [vmem:[%s213 + $0x13d8] sm:$0xff]
        %v3548 = vld [vmem:[%s213 + $0x13e0] sm:$0xff]
        %v3549 = vld [vmem:[%s213 + $0x13e8] sm:$0xff]
        %v3550 = vld [vmem:[%s213 + $0x13f0] sm:$0xff]
        %v3551 = vld [vmem:[%s213 + $0x13f8] sm:$0xff]
        %v3552 = vld [vmem:[%s213 + $0x1400] sm:$0xff]
        %v3553 = vld [vmem:[%s213 + $0x1408] sm:$0xff]
        %v3554 = vld [vmem:[%s213 + $0x1410] sm:$0xff]
        %v3555 = vld [vmem:[%s213 + $0x1418] sm:$0xff]
        %v3556 = vld [vmem:[%s213 + $0x1420] sm:$0xff]
        %v3557 = vld [vmem:[%s213 + $0x1428] sm:$0xff]
        %v3558 = vld [vmem:[%s213 + $0x1430] sm:$0xff]
        %v3559 = vld [vmem:[%s213 + $0x1438] sm:$0xff]
        %v3560 = vld [vmem:[%s213 + $0x1440] sm:$0xff]
        %v3561 = vld [vmem:[%s213 + $0x1448] sm:$0xff]
        %v3562 = vld [vmem:[%s213 + $0x1450] sm:$0xff]
        %v3563 = vld [vmem:[%s213 + $0x1458] sm:$0xff]
        %v3564 = vld [vmem:[%s213 + $0x1460] sm:$0xff]
        %v3565 = vld [vmem:[%s213 + $0x1468] sm:$0xff]
        %v3566 = vld [vmem:[%s213 + $0x1470] sm:$0xff]
        %v3567 = vld [vmem:[%s213 + $0x1478] sm:$0xff]
        %v3568 = vld [vmem:[%s213 + $0x1480] sm:$0xff]
        %v3569 = vld [vmem:[%s213 + $0x1488] sm:$0xff]
        %v3570 = vld [vmem:[%s213 + $0x1490] sm:$0xff]
        %v3571 = vld [vmem:[%s213 + $0x1498] sm:$0xff]
        %v3572 = vld [vmem:[%s213 + $0x14a0] sm:$0xff]
        %v3573 = vld [vmem:[%s213 + $0x14a8] sm:$0xff]
        %v3574 = vld [vmem:[%s213 + $0x14b0] sm:$0xff]
        %v3575 = vld [vmem:[%s213 + $0x14b8] sm:$0xff]
        %v3576 = vld [vmem:[%s213 + $0x14c0] sm:$0xff]
        %v3577 = vld [vmem:[%s213 + $0x14c8] sm:$0xff]
        %v3578 = vld [vmem:[%s213 + $0x14d0] sm:$0xff]
        %v3579 = vld [vmem:[%s213 + $0x14d8] sm:$0xff]
        %v3580 = vld [vmem:[%s213 + $0x14e0] sm:$0xff]
        %v3581 = vld [vmem:[%s213 + $0x14e8] sm:$0xff]
        %v3582 = vld [vmem:[%s213 + $0x14f0] sm:$0xff]
        %v3583 = vld [vmem:[%s213 + $0x14f8] sm:$0xff]
        %v3584 = vld [vmem:[%s213 + $0x1500] sm:$0xff]
        %v3585 = vld [vmem:[%s213 + $0x1508] sm:$0xff]
        %v3586 = vld [vmem:[%s213 + $0x1510] sm:$0xff]
        %v3587 = vld [vmem:[%s213 + $0x1518] sm:$0xff]
        %v3588 = vld [vmem:[%s213 + $0x1520] sm:$0xff]
        %v3589 = vld [vmem:[%s213 + $0x1528] sm:$0xff]
        %v3590 = vld [vmem:[%s213 + $0x1530] sm:$0xff]
        %v3591 = vld [vmem:[%s213 + $0x1538] sm:$0xff]
        %v3592 = vld [vmem:[%s213 + $0x1540] sm:$0xff]
        %v3593 = vld [vmem:[%s213 + $0x1548] sm:$0xff]
        %v3594 = vld [vmem:[%s213 + $0x1550] sm:$0xff]
        %v3595 = vld [vmem:[%s213 + $0x1558] sm:$0xff]
        %v3596 = vld [vmem:[%s213 + $0x1560] sm:$0xff]
        %v3597 = vld [vmem:[%s213 + $0x1568] sm:$0xff]
        %v3598 = vld [vmem:[%s213 + $0x1570] sm:$0xff]
        %v3599 = vld [vmem:[%s213 + $0x1578] sm:$0xff]
        %v3600 = vld [vmem:[%s213 + $0x1580] sm:$0xff]
        %v3601 = vld [vmem:[%s213 + $0x1588] sm:$0xff]
        %v3602 = vld [vmem:[%s213 + $0x1590] sm:$0xff]
        %v3603 = vld [vmem:[%s213 + $0x1598] sm:$0xff]
        %v3604 = vld [vmem:[%s213 + $0x15a0] sm:$0xff]
        %v3605 = vld [vmem:[%s213 + $0x15a8] sm:$0xff]
        %v3606 = vld [vmem:[%s213 + $0x15b0] sm:$0xff]
        %v3607 = vld [vmem:[%s213 + $0x15b8] sm:$0xff]
        %v3608 = vld [vmem:[%s213 + $0x15c0] sm:$0xff]
        %v3609 = vld [vmem:[%s213 + $0x15c8] sm:$0xff]
        %v3610 = vld [vmem:[%s213 + $0x15d0] sm:$0xff]
        %v3611 = vld [vmem:[%s213 + $0x15d8] sm:$0xff]
        %v3612 = vld [vmem:[%s213 + $0x15e0] sm:$0xff]
        %v3613 = vld [vmem:[%s213 + $0x15e8] sm:$0xff]
        %v3614 = vld [vmem:[%s213 + $0x15f0] sm:$0xff]
        %v3615 = vld [vmem:[%s213 + $0x15f8] sm:$0xff]
        %v3616 = vld [vmem:[%s213 + $0x1600] sm:$0xff]
        %v3617 = vld [vmem:[%s213 + $0x1608] sm:$0xff]
        %v3618 = vld [vmem:[%s213 + $0x1610] sm:$0xff]
        %v3619 = vld [vmem:[%s213 + $0x1618] sm:$0xff]
        %v3620 = vld [vmem:[%s213 + $0x1620] sm:$0xff]
        %v3621 = vld [vmem:[%s213 + $0x1628] sm:$0xff]
        %v3622 = vld [vmem:[%s213 + $0x1630] sm:$0xff]
        %v3623 = vld [vmem:[%s213 + $0x1638] sm:$0xff]
        %v3624 = vld [vmem:[%s213 + $0x1640] sm:$0xff]
        %v3625 = vld [vmem:[%s213 + $0x1648] sm:$0xff]
        %v3626 = vld [vmem:[%s213 + $0x1650] sm:$0xff]
        %v3627 = vld [vmem:[%s213 + $0x1658] sm:$0xff]
        %v3628 = vld [vmem:[%s213 + $0x1660] sm:$0xff]
        %v3629 = vld [vmem:[%s213 + $0x1668] sm:$0xff]
        %v3630 = vld [vmem:[%s213 + $0x1670] sm:$0xff]
        %v3631 = vld [vmem:[%s213 + $0x1678] sm:$0xff]
        %v3632 = vld [vmem:[%s213 + $0x1680] sm:$0xff]
        %v3633 = vld [vmem:[%s213 + $0x1688] sm:$0xff]
        %v3634 = vld [vmem:[%s213 + $0x1690] sm:$0xff]
        %v3635 = vld [vmem:[%s213 + $0x1698] sm:$0xff]
        %v3636 = vld [vmem:[%s213 + $0x16a0] sm:$0xff]
        %v3637 = vld [vmem:[%s213 + $0x16a8] sm:$0xff]
        %v3638 = vld [vmem:[%s213 + $0x16b0] sm:$0xff]
        %v3639 = vld [vmem:[%s213 + $0x16b8] sm:$0xff]
        %v3640 = vld [vmem:[%s213 + $0x16c0] sm:$0xff]
        %v3641 = vld [vmem:[%s213 + $0x16c8] sm:$0xff]
        %v3642 = vld [vmem:[%s213 + $0x16d0] sm:$0xff]
        %v3643 = vld [vmem:[%s213 + $0x16d8] sm:$0xff]
        %v3644 = vld [vmem:[%s213 + $0x16e0] sm:$0xff]
        %v3645 = vld [vmem:[%s213 + $0x16e8] sm:$0xff]
        %v3646 = vld [vmem:[%s213 + $0x16f0] sm:$0xff]
        %v3647 = vld [vmem:[%s213 + $0x16f8] sm:$0xff]
        %v3648 = vld [vmem:[%s213 + $0x1700] sm:$0xff]
        %v3649 = vld [vmem:[%s213 + $0x1708] sm:$0xff]
        %v3650 = vld [vmem:[%s213 + $0x1710] sm:$0xff]
        %v3651 = vld [vmem:[%s213 + $0x1718] sm:$0xff]
        %v3652 = vld [vmem:[%s213 + $0x1720] sm:$0xff]
        %v3653 = vld [vmem:[%s213 + $0x1728] sm:$0xff]
        %v3654 = vld [vmem:[%s213 + $0x1730] sm:$0xff]
        %v3655 = vld [vmem:[%s213 + $0x1738] sm:$0xff]
        %v3656 = vld [vmem:[%s213 + $0x1740] sm:$0xff]
        %v3657 = vld [vmem:[%s213 + $0x1748] sm:$0xff]
        %v3658 = vld [vmem:[%s213 + $0x1750] sm:$0xff]
        %v3659 = vld [vmem:[%s213 + $0x1758] sm:$0xff]
        %v3660 = vld [vmem:[%s213 + $0x1760] sm:$0xff]
        %v3661 = vld [vmem:[%s213 + $0x1768] sm:$0xff]
        %v3662 = vld [vmem:[%s213 + $0x1770] sm:$0xff]
        %v3663 = vld [vmem:[%s213 + $0x1778] sm:$0xff]
        %v3664 = vld [vmem:[%s213 + $0x1780] sm:$0xff]
        %v3665 = vld [vmem:[%s213 + $0x1788] sm:$0xff]
        %v3666 = vld [vmem:[%s213 + $0x1790] sm:$0xff]
        %v3667 = vld [vmem:[%s213 + $0x1798] sm:$0xff]
        %v3668 = vld [vmem:[%s213 + $0x17a0] sm:$0xff]
        %v3669 = vld [vmem:[%s213 + $0x17a8] sm:$0xff]
        %v3670 = vld [vmem:[%s213 + $0x17b0] sm:$0xff]
        %v3671 = vld [vmem:[%s213 + $0x17b8] sm:$0xff]
        %v3672 = vld [vmem:[%s213 + $0x17c0] sm:$0xff]
        %v3673 = vld [vmem:[%s213 + $0x17c8] sm:$0xff]
        %v3674 = vld [vmem:[%s213 + $0x17d0] sm:$0xff]
        %v3675 = vld [vmem:[%s213 + $0x17d8] sm:$0xff]
        %v3676 = vld [vmem:[%s213 + $0x17e0] sm:$0xff]
        %v3677 = vld [vmem:[%s213 + $0x17e8] sm:$0xff]
        %v3678 = vld [vmem:[%s213 + $0x17f0] sm:$0xff]
        %v3679 = vld [vmem:[%s213 + $0x17f8] sm:$0xff]
        %v3680 = vld [vmem:[%s213 + $0x1800] sm:$0xff]
        %v3681 = vld [vmem:[%s213 + $0x1808] sm:$0xff]
        %v3682 = vld [vmem:[%s213 + $0x1810] sm:$0xff]
        %v3683 = vld [vmem:[%s213 + $0x1818] sm:$0xff]
        %v3684 = vld [vmem:[%s213 + $0x1820] sm:$0xff]
        %v3685 = vld [vmem:[%s213 + $0x1828] sm:$0xff]
        %v3686 = vld [vmem:[%s213 + $0x1830] sm:$0xff]
        %v3687 = vld [vmem:[%s213 + $0x1838] sm:$0xff]
        %v3688 = vld [vmem:[%s213 + $0x1840] sm:$0xff]
        %v3689 = vld [vmem:[%s213 + $0x1848] sm:$0xff]
        %v3690 = vld [vmem:[%s213 + $0x1850] sm:$0xff]
        %v3691 = vld [vmem:[%s213 + $0x1858] sm:$0xff]
        %v3692 = vld [vmem:[%s213 + $0x1860] sm:$0xff]
        %v3693 = vld [vmem:[%s213 + $0x1868] sm:$0xff]
        %v3694 = vld [vmem:[%s213 + $0x1870] sm:$0xff]
        %v3695 = vld [vmem:[%s213 + $0x1878] sm:$0xff]
        %v3696 = vld [vmem:[%s213 + $0x1880] sm:$0xff]
        %v3697 = vld [vmem:[%s213 + $0x1888] sm:$0xff]
        %v3698 = vld [vmem:[%s213 + $0x1890] sm:$0xff]
        %v3699 = vld [vmem:[%s213 + $0x1898] sm:$0xff]
        %v3700 = vld [vmem:[%s213 + $0x18a0] sm:$0xff]
        %v3701 = vld [vmem:[%s213 + $0x18a8] sm:$0xff]
        %v3702 = vld [vmem:[%s213 + $0x18b0] sm:$0xff]
        %v3703 = vld [vmem:[%s213 + $0x18b8] sm:$0xff]
        %v3704 = vld [vmem:[%s213 + $0x18c0] sm:$0xff]
        %v3705 = vld [vmem:[%s213 + $0x18c8] sm:$0xff]
        %v3706 = vld [vmem:[%s213 + $0x18d0] sm:$0xff]
        %v3707 = vld [vmem:[%s213 + $0x18d8] sm:$0xff]
        %v3708 = vld [vmem:[%s213 + $0x18e0] sm:$0xff]
        %v3709 = vld [vmem:[%s213 + $0x18e8] sm:$0xff]
        %v3710 = vld [vmem:[%s213 + $0x18f0] sm:$0xff]
        %v3711 = vld [vmem:[%s213 + $0x18f8] sm:$0xff]
        %v3712 = vmul.f32 %v512, %v2912
        %v3713 = vmul.f32 %v513, %v2913
        %v3714 = vmul.f32 %v514, %v2914
        %v3715 = vmul.f32 %v515, %v2915
        %v3716 = vmul.f32 %v516, %v2916
        %v3717 = vmul.f32 %v517, %v2917
        %v3718 = vmul.f32 %v518, %v2918
        %v3719 = vmul.f32 %v519, %v2919
        %v3720 = vmul.f32 %v520, %v2920
        %v3721 = vmul.f32 %v521, %v2921
        %v3722 = vmul.f32 %v522, %v2922
        %v3723 = vmul.f32 %v523, %v2923
        %v3724 = vmul.f32 %v524, %v2924
        %v3725 = vmul.f32 %v525, %v2925
        %v3726 = vmul.f32 %v526, %v2926
        %v3727 = vmul.f32 %v527, %v2927
        %v3728 = vmul.f32 %v528, %v2928
        %v3729 = vmul.f32 %v529, %v2929
        %v3730 = vmul.f32 %v530, %v2930
        %v3731 = vmul.f32 %v531, %v2931
        %v3732 = vmul.f32 %v532, %v2932
        %v3733 = vmul.f32 %v533, %v2933
        %v3734 = vmul.f32 %v534, %v2934
        %v3735 = vmul.f32 %v535, %v2935
        %v3736 = vmul.f32 %v536, %v2936
        %v3737 = vmul.f32 %v537, %v2937
        %v3738 = vmul.f32 %v538, %v2938
        %v3739 = vmul.f32 %v539, %v2939
        %v3740 = vmul.f32 %v540, %v2940
        %v3741 = vmul.f32 %v541, %v2941
        %v3742 = vmul.f32 %v542, %v2942
        %v3743 = vmul.f32 %v543, %v2943
        %v3744 = vmul.f32 %v544, %v2944
        %v3745 = vmul.f32 %v545, %v2945
        %v3746 = vmul.f32 %v546, %v2946
        %v3747 = vmul.f32 %v547, %v2947
        %v3748 = vmul.f32 %v548, %v2948
        %v3749 = vmul.f32 %v549, %v2949
        %v3750 = vmul.f32 %v550, %v2950
        %v3751 = vmul.f32 %v551, %v2951
        %v3752 = vmul.f32 %v552, %v2952
        %v3753 = vmul.f32 %v553, %v2953
        %v3754 = vmul.f32 %v554, %v2954
        %v3755 = vmul.f32 %v555, %v2955
        %v3756 = vmul.f32 %v556, %v2956
        %v3757 = vmul.f32 %v557, %v2957
        %v3758 = vmul.f32 %v558, %v2958
        %v3759 = vmul.f32 %v559, %v2959
        %v3760 = vmul.f32 %v560, %v2960
        %v3761 = vmul.f32 %v561, %v2961
        %v3762 = vmul.f32 %v562, %v2962
        %v3763 = vmul.f32 %v563, %v2963
        %v3764 = vmul.f32 %v564, %v2964
        %v3765 = vmul.f32 %v565, %v2965
        %v3766 = vmul.f32 %v566, %v2966
        %v3767 = vmul.f32 %v567, %v2967
        %v3768 = vmul.f32 %v568, %v2968
        %v3769 = vmul.f32 %v569, %v2969
        %v3770 = vmul.f32 %v570, %v2970
        %v3771 = vmul.f32 %v571, %v2971
        %v3772 = vmul.f32 %v572, %v2972
        %v3773 = vmul.f32 %v573, %v2973
        %v3774 = vmul.f32 %v574, %v2974
        %v3775 = vmul.f32 %v575, %v2975
        %v3776 = vmul.f32 %v576, %v2976
        %v3777 = vmul.f32 %v577, %v2977
        %v3778 = vmul.f32 %v578, %v2978
        %v3779 = vmul.f32 %v579, %v2979
        %v3780 = vmul.f32 %v580, %v2980
        %v3781 = vmul.f32 %v581, %v2981
        %v3782 = vmul.f32 %v582, %v2982
        %v3783 = vmul.f32 %v583, %v2983
        %v3784 = vmul.f32 %v584, %v2984
        %v3785 = vmul.f32 %v585, %v2985
        %v3786 = vmul.f32 %v586, %v2986
        %v3787 = vmul.f32 %v587, %v2987
        %v3788 = vmul.f32 %v588, %v2988
        %v3789 = vmul.f32 %v589, %v2989
        %v3790 = vmul.f32 %v590, %v2990
        %v3791 = vmul.f32 %v591, %v2991
        %v3792 = vmul.f32 %v592, %v2992
        %v3793 = vmul.f32 %v593, %v2993
        %v3794 = vmul.f32 %v594, %v2994
        %v3795 = vmul.f32 %v595, %v2995
        %v3796 = vmul.f32 %v596, %v2996
        %v3797 = vmul.f32 %v597, %v2997
        %v3798 = vmul.f32 %v598, %v2998
        %v3799 = vmul.f32 %v599, %v2999
        %v3800 = vmul.f32 %v600, %v3000
        %v3801 = vmul.f32 %v601, %v3001
        %v3802 = vmul.f32 %v602, %v3002
        %v3803 = vmul.f32 %v603, %v3003
        %v3804 = vmul.f32 %v604, %v3004
        %v3805 = vmul.f32 %v605, %v3005
        %v3806 = vmul.f32 %v606, %v3006
        %v3807 = vmul.f32 %v607, %v3007
        %v3808 = vmul.f32 %v608, %v3008
        %v3809 = vmul.f32 %v609, %v3009
        %v3810 = vmul.f32 %v610, %v3010
        %v3811 = vmul.f32 %v611, %v3011
        %v3812 = vmul.f32 %v612, %v3012
        %v3813 = vmul.f32 %v613, %v3013
        %v3814 = vmul.f32 %v614, %v3014
        %v3815 = vmul.f32 %v615, %v3015
        %v3816 = vmul.f32 %v616, %v3016
        %v3817 = vmul.f32 %v617, %v3017
        %v3818 = vmul.f32 %v618, %v3018
        %v3819 = vmul.f32 %v619, %v3019
        %v3820 = vmul.f32 %v620, %v3020
        %v3821 = vmul.f32 %v621, %v3021
        %v3822 = vmul.f32 %v622, %v3022
        %v3823 = vmul.f32 %v623, %v3023
        %v3824 = vmul.f32 %v624, %v3024
        %v3825 = vmul.f32 %v625, %v3025
        %v3826 = vmul.f32 %v626, %v3026
        %v3827 = vmul.f32 %v627, %v3027
        %v3828 = vmul.f32 %v628, %v3028
        %v3829 = vmul.f32 %v629, %v3029
        %v3830 = vmul.f32 %v630, %v3030
        %v3831 = vmul.f32 %v631, %v3031
        %v3832 = vmul.f32 %v632, %v3032
        %v3833 = vmul.f32 %v633, %v3033
        %v3834 = vmul.f32 %v634, %v3034
        %v3835 = vmul.f32 %v635, %v3035
        %v3836 = vmul.f32 %v636, %v3036
        %v3837 = vmul.f32 %v637, %v3037
        %v3838 = vmul.f32 %v638, %v3038
        %v3839 = vmul.f32 %v639, %v3039
        %v3840 = vmul.f32 %v640, %v3040
        %v3841 = vmul.f32 %v641, %v3041
        %v3842 = vmul.f32 %v642, %v3042
        %v3843 = vmul.f32 %v643, %v3043
        %v3844 = vmul.f32 %v644, %v3044
        %v3845 = vmul.f32 %v645, %v3045
        %v3846 = vmul.f32 %v646, %v3046
        %v3847 = vmul.f32 %v647, %v3047
        %v3848 = vmul.f32 %v648, %v3048
        %v3849 = vmul.f32 %v649, %v3049
        %v3850 = vmul.f32 %v650, %v3050
        %v3851 = vmul.f32 %v651, %v3051
        %v3852 = vmul.f32 %v652, %v3052
        %v3853 = vmul.f32 %v653, %v3053
        %v3854 = vmul.f32 %v654, %v3054
        %v3855 = vmul.f32 %v655, %v3055
        %v3856 = vmul.f32 %v656, %v3056
        %v3857 = vmul.f32 %v657, %v3057
        %v3858 = vmul.f32 %v658, %v3058
        %v3859 = vmul.f32 %v659, %v3059
        %v3860 = vmul.f32 %v660, %v3060
        %v3861 = vmul.f32 %v661, %v3061
        %v3862 = vmul.f32 %v662, %v3062
        %v3863 = vmul.f32 %v663, %v3063
        %v3864 = vmul.f32 %v664, %v3064
        %v3865 = vmul.f32 %v665, %v3065
        %v3866 = vmul.f32 %v666, %v3066
        %v3867 = vmul.f32 %v667, %v3067
        %v3868 = vmul.f32 %v668, %v3068
        %v3869 = vmul.f32 %v669, %v3069
        %v3870 = vmul.f32 %v670, %v3070
        %v3871 = vmul.f32 %v671, %v3071
        %v3872 = vmul.f32 %v672, %v3072
        %v3873 = vmul.f32 %v673, %v3073
        %v3874 = vmul.f32 %v674, %v3074
        %v3875 = vmul.f32 %v675, %v3075
        %v3876 = vmul.f32 %v676, %v3076
        %v3877 = vmul.f32 %v677, %v3077
        %v3878 = vmul.f32 %v678, %v3078
        %v3879 = vmul.f32 %v679, %v3079
        %v3880 = vmul.f32 %v680, %v3080
        %v3881 = vmul.f32 %v681, %v3081
        %v3882 = vmul.f32 %v682, %v3082
        %v3883 = vmul.f32 %v683, %v3083
        %v3884 = vmul.f32 %v684, %v3084
        %v3885 = vmul.f32 %v685, %v3085
        %v3886 = vmul.f32 %v686, %v3086
        %v3887 = vmul.f32 %v687, %v3087
        %v3888 = vmul.f32 %v688, %v3088
        %v3889 = vmul.f32 %v689, %v3089
        %v3890 = vmul.f32 %v690, %v3090
        %v3891 = vmul.f32 %v691, %v3091
        %v3892 = vmul.f32 %v692, %v3092
        %v3893 = vmul.f32 %v693, %v3093
        %v3894 = vmul.f32 %v694, %v3094
        %v3895 = vmul.f32 %v695, %v3095
        %v3896 = vmul.f32 %v696, %v3096
        %v3897 = vmul.f32 %v697, %v3097
        %v3898 = vmul.f32 %v698, %v3098
        %v3899 = vmul.f32 %v699, %v3099
        %v3900 = vmul.f32 %v700, %v3100
        %v3901 = vmul.f32 %v701, %v3101
        %v3902 = vmul.f32 %v702, %v3102
        %v3903 = vmul.f32 %v703, %v3103
        %v3904 = vmul.f32 %v704, %v3104
        %v3905 = vmul.f32 %v705, %v3105
        %v3906 = vmul.f32 %v706, %v3106
        %v3907 = vmul.f32 %v707, %v3107
        %v3908 = vmul.f32 %v708, %v3108
        %v3909 = vmul.f32 %v709, %v3109
        %v3910 = vmul.f32 %v710, %v3110
        %v3911 = vmul.f32 %v711, %v3111
        %v3912 = vmul.f32 %v512, %v3112
        %v3913 = vmul.f32 %v513, %v3113
        %v3914 = vmul.f32 %v514, %v3114
        %v3915 = vmul.f32 %v515, %v3115
        %v3916 = vmul.f32 %v516, %v3116
        %v3917 = vmul.f32 %v517, %v3117
        %v3918 = vmul.f32 %v518, %v3118
        %v3919 = vmul.f32 %v519, %v3119
        %v3920 = vmul.f32 %v520, %v3120
        %v3921 = vmul.f32 %v521, %v3121
        %v3922 = vmul.f32 %v522, %v3122
        %v3923 = vmul.f32 %v523, %v3123
        %v3924 = vmul.f32 %v524, %v3124
        %v3925 = vmul.f32 %v525, %v3125
        %v3926 = vmul.f32 %v526, %v3126
        %v3927 = vmul.f32 %v527, %v3127
        %v3928 = vmul.f32 %v528, %v3128
        %v3929 = vmul.f32 %v529, %v3129
        %v3930 = vmul.f32 %v530, %v3130
        %v3931 = vmul.f32 %v531, %v3131
        %v3932 = vmul.f32 %v532, %v3132
        %v3933 = vmul.f32 %v533, %v3133
        %v3934 = vmul.f32 %v534, %v3134
        %v3935 = vmul.f32 %v535, %v3135
        %v3936 = vmul.f32 %v536, %v3136
        %v3937 = vmul.f32 %v537, %v3137
        %v3938 = vmul.f32 %v538, %v3138
        %v3939 = vmul.f32 %v539, %v3139
        %v3940 = vmul.f32 %v540, %v3140
        %v3941 = vmul.f32 %v541, %v3141
        %v3942 = vmul.f32 %v542, %v3142
        %v3943 = vmul.f32 %v543, %v3143
        %v3944 = vmul.f32 %v544, %v3144
        %v3945 = vmul.f32 %v545, %v3145
        %v3946 = vmul.f32 %v546, %v3146
        %v3947 = vmul.f32 %v547, %v3147
        %v3948 = vmul.f32 %v548, %v3148
        %v3949 = vmul.f32 %v549, %v3149
        %v3950 = vmul.f32 %v550, %v3150
        %v3951 = vmul.f32 %v551, %v3151
        %v3952 = vmul.f32 %v552, %v3152
        %v3953 = vmul.f32 %v553, %v3153
        %v3954 = vmul.f32 %v554, %v3154
        %v3955 = vmul.f32 %v555, %v3155
        %v3956 = vmul.f32 %v556, %v3156
        %v3957 = vmul.f32 %v557, %v3157
        %v3958 = vmul.f32 %v558, %v3158
        %v3959 = vmul.f32 %v559, %v3159
        %v3960 = vmul.f32 %v560, %v3160
        %v3961 = vmul.f32 %v561, %v3161
        %v3962 = vmul.f32 %v562, %v3162
        %v3963 = vmul.f32 %v563, %v3163
        %v3964 = vmul.f32 %v564, %v3164
        %v3965 = vmul.f32 %v565, %v3165
        %v3966 = vmul.f32 %v566, %v3166
        %v3967 = vmul.f32 %v567, %v3167
        %v3968 = vmul.f32 %v568, %v3168
        %v3969 = vmul.f32 %v569, %v3169
        %v3970 = vmul.f32 %v570, %v3170
        %v3971 = vmul.f32 %v571, %v3171
        %v3972 = vmul.f32 %v572, %v3172
        %v3973 = vmul.f32 %v573, %v3173
        %v3974 = vmul.f32 %v574, %v3174
        %v3975 = vmul.f32 %v575, %v3175
        %v3976 = vmul.f32 %v576, %v3176
        %v3977 = vmul.f32 %v577, %v3177
        %v3978 = vmul.f32 %v578, %v3178
        %v3979 = vmul.f32 %v579, %v3179
        %v3980 = vmul.f32 %v580, %v3180
        %v3981 = vmul.f32 %v581, %v3181
        %v3982 = vmul.f32 %v582, %v3182
        %v3983 = vmul.f32 %v583, %v3183
        %v3984 = vmul.f32 %v584, %v3184
        %v3985 = vmul.f32 %v585, %v3185
        %v3986 = vmul.f32 %v586, %v3186
        %v3987 = vmul.f32 %v587, %v3187
        %v3988 = vmul.f32 %v588, %v3188
        %v3989 = vmul.f32 %v589, %v3189
        %v3990 = vmul.f32 %v590, %v3190
        %v3991 = vmul.f32 %v591, %v3191
        %v3992 = vmul.f32 %v592, %v3192
        %v3993 = vmul.f32 %v593, %v3193
        %v3994 = vmul.f32 %v594, %v3194
        %v3995 = vmul.f32 %v595, %v3195
        %v3996 = vmul.f32 %v596, %v3196
        %v3997 = vmul.f32 %v597, %v3197
        %v3998 = vmul.f32 %v598, %v3198
        %v3999 = vmul.f32 %v599, %v3199
        %v4000 = vmul.f32 %v600, %v3200
        %v4001 = vmul.f32 %v601, %v3201
        %v4002 = vmul.f32 %v602, %v3202
        %v4003 = vmul.f32 %v603, %v3203
        %v4004 = vmul.f32 %v604, %v3204
        %v4005 = vmul.f32 %v605, %v3205
        %v4006 = vmul.f32 %v606, %v3206
        %v4007 = vmul.f32 %v607, %v3207
        %v4008 = vmul.f32 %v608, %v3208
        %v4009 = vmul.f32 %v609, %v3209
        %v4010 = vmul.f32 %v610, %v3210
        %v4011 = vmul.f32 %v611, %v3211
        %v4012 = vmul.f32 %v612, %v3212
        %v4013 = vmul.f32 %v613, %v3213
        %v4014 = vmul.f32 %v614, %v3214
        %v4015 = vmul.f32 %v615, %v3215
        %v4016 = vmul.f32 %v616, %v3216
        %v4017 = vmul.f32 %v617, %v3217
        %v4018 = vmul.f32 %v618, %v3218
        %v4019 = vmul.f32 %v619, %v3219
        %v4020 = vmul.f32 %v620, %v3220
        %v4021 = vmul.f32 %v621, %v3221
        %v4022 = vmul.f32 %v622, %v3222
        %v4023 = vmul.f32 %v623, %v3223
        %v4024 = vmul.f32 %v624, %v3224
        %v4025 = vmul.f32 %v625, %v3225
        %v4026 = vmul.f32 %v626, %v3226
        %v4027 = vmul.f32 %v627, %v3227
        %v4028 = vmul.f32 %v628, %v3228
        %v4029 = vmul.f32 %v629, %v3229
        %v4030 = vmul.f32 %v630, %v3230
        %v4031 = vmul.f32 %v631, %v3231
        %v4032 = vmul.f32 %v632, %v3232
        %v4033 = vmul.f32 %v633, %v3233
        %v4034 = vmul.f32 %v634, %v3234
        %v4035 = vmul.f32 %v635, %v3235
        %v4036 = vmul.f32 %v636, %v3236
        %v4037 = vmul.f32 %v637, %v3237
        %v4038 = vmul.f32 %v638, %v3238
        %v4039 = vmul.f32 %v639, %v3239
        %v4040 = vmul.f32 %v640, %v3240
        %v4041 = vmul.f32 %v641, %v3241
        %v4042 = vmul.f32 %v642, %v3242
        %v4043 = vmul.f32 %v643, %v3243
        %v4044 = vmul.f32 %v644, %v3244
        %v4045 = vmul.f32 %v645, %v3245
        %v4046 = vmul.f32 %v646, %v3246
        %v4047 = vmul.f32 %v647, %v3247
        %v4048 = vmul.f32 %v648, %v3248
        %v4049 = vmul.f32 %v649, %v3249
        %v4050 = vmul.f32 %v650, %v3250
        %v4051 = vmul.f32 %v651, %v3251
        %v4052 = vmul.f32 %v652, %v3252
        %v4053 = vmul.f32 %v653, %v3253
        %v4054 = vmul.f32 %v654, %v3254
        %v4055 = vmul.f32 %v655, %v3255
        %v4056 = vmul.f32 %v656, %v3256
        %v4057 = vmul.f32 %v657, %v3257
        %v4058 = vmul.f32 %v658, %v3258
        %v4059 = vmul.f32 %v659, %v3259
        %v4060 = vmul.f32 %v660, %v3260
        %v4061 = vmul.f32 %v661, %v3261
        %v4062 = vmul.f32 %v662, %v3262
        %v4063 = vmul.f32 %v663, %v3263
        %v4064 = vmul.f32 %v664, %v3264
        %v4065 = vmul.f32 %v665, %v3265
        %v4066 = vmul.f32 %v666, %v3266
        %v4067 = vmul.f32 %v667, %v3267
        %v4068 = vmul.f32 %v668, %v3268
        %v4069 = vmul.f32 %v669, %v3269
        %v4070 = vmul.f32 %v670, %v3270
        %v4071 = vmul.f32 %v671, %v3271
        %v4072 = vmul.f32 %v672, %v3272
        %v4073 = vmul.f32 %v673, %v3273
        %v4074 = vmul.f32 %v674, %v3274
        %v4075 = vmul.f32 %v675, %v3275
        %v4076 = vmul.f32 %v676, %v3276
        %v4077 = vmul.f32 %v677, %v3277
        %v4078 = vmul.f32 %v678, %v3278
        %v4079 = vmul.f32 %v679, %v3279
        %v4080 = vmul.f32 %v680, %v3280
        %v4081 = vmul.f32 %v681, %v3281
        %v4082 = vmul.f32 %v682, %v3282
        %v4083 = vmul.f32 %v683, %v3283
        %v4084 = vmul.f32 %v684, %v3284
        %v4085 = vmul.f32 %v685, %v3285
        %v4086 = vmul.f32 %v686, %v3286
        %v4087 = vmul.f32 %v687, %v3287
        %v4088 = vmul.f32 %v688, %v3288
        %v4089 = vmul.f32 %v689, %v3289
        %v4090 = vmul.f32 %v690, %v3290
        %v4091 = vmul.f32 %v691, %v3291
        %v4092 = vmul.f32 %v692, %v3292
        %v4093 = vmul.f32 %v693, %v3293
        %v4094 = vmul.f32 %v694, %v3294
        %v4095 = vmul.f32 %v695, %v3295
        %v4096 = vmul.f32 %v696, %v3296
        %v4097 = vmul.f32 %v697, %v3297
        %v4098 = vmul.f32 %v698, %v3298
        %v4099 = vmul.f32 %v699, %v3299
        %v4100 = vmul.f32 %v700, %v3300
        %v4101 = vmul.f32 %v701, %v3301
        %v4102 = vmul.f32 %v702, %v3302
        %v4103 = vmul.f32 %v703, %v3303
        %v4104 = vmul.f32 %v704, %v3304
        %v4105 = vmul.f32 %v705, %v3305
        %v4106 = vmul.f32 %v706, %v3306
        %v4107 = vmul.f32 %v707, %v3307
        %v4108 = vmul.f32 %v708, %v3308
        %v4109 = vmul.f32 %v709, %v3309
        %v4110 = vmul.f32 %v710, %v3310
        %v4111 = vmul.f32 %v711, %v3311
        %v4112 = vmul.f32 %v512, %v3312
        %v4113 = vmul.f32 %v513, %v3313
        %v4114 = vmul.f32 %v514, %v3314
        %v4115 = vmul.f32 %v515, %v3315
        %v4116 = vmul.f32 %v516, %v3316
        %v4117 = vmul.f32 %v517, %v3317
        %v4118 = vmul.f32 %v518, %v3318
        %v4119 = vmul.f32 %v519, %v3319
        %v4120 = vmul.f32 %v520, %v3320
        %v4121 = vmul.f32 %v521, %v3321
        %v4122 = vmul.f32 %v522, %v3322
        %v4123 = vmul.f32 %v523, %v3323
        %v4124 = vmul.f32 %v524, %v3324
        %v4125 = vmul.f32 %v525, %v3325
        %v4126 = vmul.f32 %v526, %v3326
        %v4127 = vmul.f32 %v527, %v3327
        %v4128 = vmul.f32 %v528, %v3328
        %v4129 = vmul.f32 %v529, %v3329
        %v4130 = vmul.f32 %v530, %v3330
        %v4131 = vmul.f32 %v531, %v3331
        %v4132 = vmul.f32 %v532, %v3332
        %v4133 = vmul.f32 %v533, %v3333
        %v4134 = vmul.f32 %v534, %v3334
        %v4135 = vmul.f32 %v535, %v3335
        %v4136 = vmul.f32 %v536, %v3336
        %v4137 = vmul.f32 %v537, %v3337
        %v4138 = vmul.f32 %v538, %v3338
        %v4139 = vmul.f32 %v539, %v3339
        %v4140 = vmul.f32 %v540, %v3340
        %v4141 = vmul.f32 %v541, %v3341
        %v4142 = vmul.f32 %v542, %v3342
        %v4143 = vmul.f32 %v543, %v3343
        %v4144 = vmul.f32 %v544, %v3344
        %v4145 = vmul.f32 %v545, %v3345
        %v4146 = vmul.f32 %v546, %v3346
        %v4147 = vmul.f32 %v547, %v3347
        %v4148 = vmul.f32 %v548, %v3348
        %v4149 = vmul.f32 %v549, %v3349
        %v4150 = vmul.f32 %v550, %v3350
        %v4151 = vmul.f32 %v551, %v3351
        %v4152 = vmul.f32 %v552, %v3352
        %v4153 = vmul.f32 %v553, %v3353
        %v4154 = vmul.f32 %v554, %v3354
        %v4155 = vmul.f32 %v555, %v3355
        %v4156 = vmul.f32 %v556, %v3356
        %v4157 = vmul.f32 %v557, %v3357
        %v4158 = vmul.f32 %v558, %v3358
        %v4159 = vmul.f32 %v559, %v3359
        %v4160 = vmul.f32 %v560, %v3360
        %v4161 = vmul.f32 %v561, %v3361
        %v4162 = vmul.f32 %v562, %v3362
        %v4163 = vmul.f32 %v563, %v3363
        %v4164 = vmul.f32 %v564, %v3364
        %v4165 = vmul.f32 %v565, %v3365
        %v4166 = vmul.f32 %v566, %v3366
        %v4167 = vmul.f32 %v567, %v3367
        %v4168 = vmul.f32 %v568, %v3368
        %v4169 = vmul.f32 %v569, %v3369
        %v4170 = vmul.f32 %v570, %v3370
        %v4171 = vmul.f32 %v571, %v3371
        %v4172 = vmul.f32 %v572, %v3372
        %v4173 = vmul.f32 %v573, %v3373
        %v4174 = vmul.f32 %v574, %v3374
        %v4175 = vmul.f32 %v575, %v3375
        %v4176 = vmul.f32 %v576, %v3376
        %v4177 = vmul.f32 %v577, %v3377
        %v4178 = vmul.f32 %v578, %v3378
        %v4179 = vmul.f32 %v579, %v3379
        %v4180 = vmul.f32 %v580, %v3380
        %v4181 = vmul.f32 %v581, %v3381
        %v4182 = vmul.f32 %v582, %v3382
        %v4183 = vmul.f32 %v583, %v3383
        %v4184 = vmul.f32 %v584, %v3384
        %v4185 = vmul.f32 %v585, %v3385
        %v4186 = vmul.f32 %v586, %v3386
        %v4187 = vmul.f32 %v587, %v3387
        %v4188 = vmul.f32 %v588, %v3388
        %v4189 = vmul.f32 %v589, %v3389
        %v4190 = vmul.f32 %v590, %v3390
        %v4191 = vmul.f32 %v591, %v3391
        %v4192 = vmul.f32 %v592, %v3392
        %v4193 = vmul.f32 %v593, %v3393
        %v4194 = vmul.f32 %v594, %v3394
        %v4195 = vmul.f32 %v595, %v3395
        %v4196 = vmul.f32 %v596, %v3396
        %v4197 = vmul.f32 %v597, %v3397
        %v4198 = vmul.f32 %v598, %v3398
        %v4199 = vmul.f32 %v599, %v3399
        %v4200 = vmul.f32 %v600, %v3400
        %v4201 = vmul.f32 %v601, %v3401
        %v4202 = vmul.f32 %v602, %v3402
        %v4203 = vmul.f32 %v603, %v3403
        %v4204 = vmul.f32 %v604, %v3404
        %v4205 = vmul.f32 %v605, %v3405
        %v4206 = vmul.f32 %v606, %v3406
        %v4207 = vmul.f32 %v607, %v3407
        %v4208 = vmul.f32 %v608, %v3408
        %v4209 = vmul.f32 %v609, %v3409
        %v4210 = vmul.f32 %v610, %v3410
        %v4211 = vmul.f32 %v611, %v3411
        %v4212 = vmul.f32 %v612, %v3412
        %v4213 = vmul.f32 %v613, %v3413
        %v4214 = vmul.f32 %v614, %v3414
        %v4215 = vmul.f32 %v615, %v3415
        %v4216 = vmul.f32 %v616, %v3416
        %v4217 = vmul.f32 %v617, %v3417
        %v4218 = vmul.f32 %v618, %v3418
        %v4219 = vmul.f32 %v619, %v3419
        %v4220 = vmul.f32 %v620, %v3420
        %v4221 = vmul.f32 %v621, %v3421
        %v4222 = vmul.f32 %v622, %v3422
        %v4223 = vmul.f32 %v623, %v3423
        %v4224 = vmul.f32 %v624, %v3424
        %v4225 = vmul.f32 %v625, %v3425
        %v4226 = vmul.f32 %v626, %v3426
        %v4227 = vmul.f32 %v627, %v3427
        %v4228 = vmul.f32 %v628, %v3428
        %v4229 = vmul.f32 %v629, %v3429
        %v4230 = vmul.f32 %v630, %v3430
        %v4231 = vmul.f32 %v631, %v3431
        %v4232 = vmul.f32 %v632, %v3432
        %v4233 = vmul.f32 %v633, %v3433
        %v4234 = vmul.f32 %v634, %v3434
        %v4235 = vmul.f32 %v635, %v3435
        %v4236 = vmul.f32 %v636, %v3436
        %v4237 = vmul.f32 %v637, %v3437
        %v4238 = vmul.f32 %v638, %v3438
        %v4239 = vmul.f32 %v639, %v3439
        %v4240 = vmul.f32 %v640, %v3440
        %v4241 = vmul.f32 %v641, %v3441
        %v4242 = vmul.f32 %v642, %v3442
        %v4243 = vmul.f32 %v643, %v3443
        %v4244 = vmul.f32 %v644, %v3444
        %v4245 = vmul.f32 %v645, %v3445
        %v4246 = vmul.f32 %v646, %v3446
        %v4247 = vmul.f32 %v647, %v3447
        %v4248 = vmul.f32 %v648, %v3448
        %v4249 = vmul.f32 %v649, %v3449
        %v4250 = vmul.f32 %v650, %v3450
        %v4251 = vmul.f32 %v651, %v3451
        %v4252 = vmul.f32 %v652, %v3452
        %v4253 = vmul.f32 %v653, %v3453
        %v4254 = vmul.f32 %v654, %v3454
        %v4255 = vmul.f32 %v655, %v3455
        %v4256 = vmul.f32 %v656, %v3456
        %v4257 = vmul.f32 %v657, %v3457
        %v4258 = vmul.f32 %v658, %v3458
        %v4259 = vmul.f32 %v659, %v3459
        %v4260 = vmul.f32 %v660, %v3460
        %v4261 = vmul.f32 %v661, %v3461
        %v4262 = vmul.f32 %v662, %v3462
        %v4263 = vmul.f32 %v663, %v3463
        %v4264 = vmul.f32 %v664, %v3464
        %v4265 = vmul.f32 %v665, %v3465
        %v4266 = vmul.f32 %v666, %v3466
        %v4267 = vmul.f32 %v667, %v3467
        %v4268 = vmul.f32 %v668, %v3468
        %v4269 = vmul.f32 %v669, %v3469
        %v4270 = vmul.f32 %v670, %v3470
        %v4271 = vmul.f32 %v671, %v3471
        %v4272 = vmul.f32 %v672, %v3472
        %v4273 = vmul.f32 %v673, %v3473
        %v4274 = vmul.f32 %v674, %v3474
        %v4275 = vmul.f32 %v675, %v3475
        %v4276 = vmul.f32 %v676, %v3476
        %v4277 = vmul.f32 %v677, %v3477
        %v4278 = vmul.f32 %v678, %v3478
        %v4279 = vmul.f32 %v679, %v3479
        %v4280 = vmul.f32 %v680, %v3480
        %v4281 = vmul.f32 %v681, %v3481
        %v4282 = vmul.f32 %v682, %v3482
        %v4283 = vmul.f32 %v683, %v3483
        %v4284 = vmul.f32 %v684, %v3484
        %v4285 = vmul.f32 %v685, %v3485
        %v4286 = vmul.f32 %v686, %v3486
        %v4287 = vmul.f32 %v687, %v3487
        %v4288 = vmul.f32 %v688, %v3488
        %v4289 = vmul.f32 %v689, %v3489
        %v4290 = vmul.f32 %v690, %v3490
        %v4291 = vmul.f32 %v691, %v3491
        %v4292 = vmul.f32 %v692, %v3492
        %v4293 = vmul.f32 %v693, %v3493
        %v4294 = vmul.f32 %v694, %v3494
        %v4295 = vmul.f32 %v695, %v3495
        %v4296 = vmul.f32 %v696, %v3496
        %v4297 = vmul.f32 %v697, %v3497
        %v4298 = vmul.f32 %v698, %v3498
        %v4299 = vmul.f32 %v699, %v3499
        %v4300 = vmul.f32 %v700, %v3500
        %v4301 = vmul.f32 %v701, %v3501
        %v4302 = vmul.f32 %v702, %v3502
        %v4303 = vmul.f32 %v703, %v3503
        %v4304 = vmul.f32 %v704, %v3504
        %v4305 = vmul.f32 %v705, %v3505
        %v4306 = vmul.f32 %v706, %v3506
        %v4307 = vmul.f32 %v707, %v3507
        %v4308 = vmul.f32 %v708, %v3508
        %v4309 = vmul.f32 %v709, %v3509
        %v4310 = vmul.f32 %v710, %v3510
        %v4311 = vmul.f32 %v711, %v3511
        %v4312 = vmul.f32 %v512, %v3512
        %v4313 = vmul.f32 %v513, %v3513
        %v4314 = vmul.f32 %v514, %v3514
        %v4315 = vmul.f32 %v515, %v3515
        %v4316 = vmul.f32 %v516, %v3516
        %v4317 = vmul.f32 %v517, %v3517
        %v4318 = vmul.f32 %v518, %v3518
        %v4319 = vmul.f32 %v519, %v3519
        %v4320 = vmul.f32 %v520, %v3520
        %v4321 = vmul.f32 %v521, %v3521
        %v4322 = vmul.f32 %v522, %v3522
        %v4323 = vmul.f32 %v523, %v3523
        %v4324 = vmul.f32 %v524, %v3524
        %v4325 = vmul.f32 %v525, %v3525
        %v4326 = vmul.f32 %v526, %v3526
        %v4327 = vmul.f32 %v527, %v3527
        %v4328 = vmul.f32 %v528, %v3528
        %v4329 = vmul.f32 %v529, %v3529
        %v4330 = vmul.f32 %v530, %v3530
        %v4331 = vmul.f32 %v531, %v3531
        %v4332 = vmul.f32 %v532, %v3532
        %v4333 = vmul.f32 %v533, %v3533
        %v4334 = vmul.f32 %v534, %v3534
        %v4335 = vmul.f32 %v535, %v3535
        %v4336 = vmul.f32 %v536, %v3536
        %v4337 = vmul.f32 %v537, %v3537
        %v4338 = vmul.f32 %v538, %v3538
        %v4339 = vmul.f32 %v539, %v3539
        %v4340 = vmul.f32 %v540, %v3540
        %v4341 = vmul.f32 %v541, %v3541
        %v4342 = vmul.f32 %v542, %v3542
        %v4343 = vmul.f32 %v543, %v3543
        %v4344 = vmul.f32 %v544, %v3544
        %v4345 = vmul.f32 %v545, %v3545
        %v4346 = vmul.f32 %v546, %v3546
        %v4347 = vmul.f32 %v547, %v3547
        %v4348 = vmul.f32 %v548, %v3548
        %v4349 = vmul.f32 %v549, %v3549
        %v4350 = vmul.f32 %v550, %v3550
        %v4351 = vmul.f32 %v551, %v3551
        %v4352 = vmul.f32 %v552, %v3552
        %v4353 = vmul.f32 %v553, %v3553
        %v4354 = vmul.f32 %v554, %v3554
        %v4355 = vmul.f32 %v555, %v3555
        %v4356 = vmul.f32 %v556, %v3556
        %v4357 = vmul.f32 %v557, %v3557
        %v4358 = vmul.f32 %v558, %v3558
        %v4359 = vmul.f32 %v559, %v3559
        %v4360 = vmul.f32 %v560, %v3560
        %v4361 = vmul.f32 %v561, %v3561
        %v4362 = vmul.f32 %v562, %v3562
        %v4363 = vmul.f32 %v563, %v3563
        %v4364 = vmul.f32 %v564, %v3564
        %v4365 = vmul.f32 %v565, %v3565
        %v4366 = vmul.f32 %v566, %v3566
        %v4367 = vmul.f32 %v567, %v3567
        %v4368 = vmul.f32 %v568, %v3568
        %v4369 = vmul.f32 %v569, %v3569
        %v4370 = vmul.f32 %v570, %v3570
        %v4371 = vmul.f32 %v571, %v3571
        %v4372 = vmul.f32 %v572, %v3572
        %v4373 = vmul.f32 %v573, %v3573
        %v4374 = vmul.f32 %v574, %v3574
        %v4375 = vmul.f32 %v575, %v3575
        %v4376 = vmul.f32 %v576, %v3576
        %v4377 = vmul.f32 %v577, %v3577
        %v4378 = vmul.f32 %v578, %v3578
        %v4379 = vmul.f32 %v579, %v3579
        %v4380 = vmul.f32 %v580, %v3580
        %v4381 = vmul.f32 %v581, %v3581
        %v4382 = vmul.f32 %v582, %v3582
        %v4383 = vmul.f32 %v583, %v3583
        %v4384 = vmul.f32 %v584, %v3584
        %v4385 = vmul.f32 %v585, %v3585
        %v4386 = vmul.f32 %v586, %v3586
        %v4387 = vmul.f32 %v587, %v3587
        %v4388 = vmul.f32 %v588, %v3588
        %v4389 = vmul.f32 %v589, %v3589
        %v4390 = vmul.f32 %v590, %v3590
        %v4391 = vmul.f32 %v591, %v3591
        %v4392 = vmul.f32 %v592, %v3592
        %v4393 = vmul.f32 %v593, %v3593
        %v4394 = vmul.f32 %v594, %v3594
        %v4395 = vmul.f32 %v595, %v3595
        %v4396 = vmul.f32 %v596, %v3596
        %v4397 = vmul.f32 %v597, %v3597
        %v4398 = vmul.f32 %v598, %v3598
        %v4399 = vmul.f32 %v599, %v3599
        %v4400 = vmul.f32 %v600, %v3600
        %v4401 = vmul.f32 %v601, %v3601
        %v4402 = vmul.f32 %v602, %v3602
        %v4403 = vmul.f32 %v603, %v3603
        %v4404 = vmul.f32 %v604, %v3604
        %v4405 = vmul.f32 %v605, %v3605
        %v4406 = vmul.f32 %v606, %v3606
        %v4407 = vmul.f32 %v607, %v3607
        %v4408 = vmul.f32 %v608, %v3608
        %v4409 = vmul.f32 %v609, %v3609
        %v4410 = vmul.f32 %v610, %v3610
        %v4411 = vmul.f32 %v611, %v3611
        %v4412 = vmul.f32 %v612, %v3612
        %v4413 = vmul.f32 %v613, %v3613
        %v4414 = vmul.f32 %v614, %v3614
        %v4415 = vmul.f32 %v615, %v3615
        %v4416 = vmul.f32 %v616, %v3616
        %v4417 = vmul.f32 %v617, %v3617
        %v4418 = vmul.f32 %v618, %v3618
        %v4419 = vmul.f32 %v619, %v3619
        %v4420 = vmul.f32 %v620, %v3620
        %v4421 = vmul.f32 %v621, %v3621
        %v4422 = vmul.f32 %v622, %v3622
        %v4423 = vmul.f32 %v623, %v3623
        %v4424 = vmul.f32 %v624, %v3624
        %v4425 = vmul.f32 %v625, %v3625
        %v4426 = vmul.f32 %v626, %v3626
        %v4427 = vmul.f32 %v627, %v3627
        %v4428 = vmul.f32 %v628, %v3628
        %v4429 = vmul.f32 %v629, %v3629
        %v4430 = vmul.f32 %v630, %v3630
        %v4431 = vmul.f32 %v631, %v3631
        %v4432 = vmul.f32 %v632, %v3632
        %v4433 = vmul.f32 %v633, %v3633
        %v4434 = vmul.f32 %v634, %v3634
        %v4435 = vmul.f32 %v635, %v3635
        %v4436 = vmul.f32 %v636, %v3636
        %v4437 = vmul.f32 %v637, %v3637
        %v4438 = vmul.f32 %v638, %v3638
        %v4439 = vmul.f32 %v639, %v3639
        %v4440 = vmul.f32 %v640, %v3640
        %v4441 = vmul.f32 %v641, %v3641
        %v4442 = vmul.f32 %v642, %v3642
        %v4443 = vmul.f32 %v643, %v3643
        %v4444 = vmul.f32 %v644, %v3644
        %v4445 = vmul.f32 %v645, %v3645
        %v4446 = vmul.f32 %v646, %v3646
        %v4447 = vmul.f32 %v647, %v3647
        %v4448 = vmul.f32 %v648, %v3648
        %v4449 = vmul.f32 %v649, %v3649
        %v4450 = vmul.f32 %v650, %v3650
        %v4451 = vmul.f32 %v651, %v3651
        %v4452 = vmul.f32 %v652, %v3652
        %v4453 = vmul.f32 %v653, %v3653
        %v4454 = vmul.f32 %v654, %v3654
        %v4455 = vmul.f32 %v655, %v3655
        %v4456 = vmul.f32 %v656, %v3656
        %v4457 = vmul.f32 %v657, %v3657
        %v4458 = vmul.f32 %v658, %v3658
        %v4459 = vmul.f32 %v659, %v3659
        %v4460 = vmul.f32 %v660, %v3660
        %v4461 = vmul.f32 %v661, %v3661
        %v4462 = vmul.f32 %v662, %v3662
        %v4463 = vmul.f32 %v663, %v3663
        %v4464 = vmul.f32 %v664, %v3664
        %v4465 = vmul.f32 %v665, %v3665
        %v4466 = vmul.f32 %v666, %v3666
        %v4467 = vmul.f32 %v667, %v3667
        %v4468 = vmul.f32 %v668, %v3668
        %v4469 = vmul.f32 %v669, %v3669
        %v4470 = vmul.f32 %v670, %v3670
        %v4471 = vmul.f32 %v671, %v3671
        %v4472 = vmul.f32 %v672, %v3672
        %v4473 = vmul.f32 %v673, %v3673
        %v4474 = vmul.f32 %v674, %v3674
        %v4475 = vmul.f32 %v675, %v3675
        %v4476 = vmul.f32 %v676, %v3676
        %v4477 = vmul.f32 %v677, %v3677
        %v4478 = vmul.f32 %v678, %v3678
        %v4479 = vmul.f32 %v679, %v3679
        %v4480 = vmul.f32 %v680, %v3680
        %v4481 = vmul.f32 %v681, %v3681
        %v4482 = vmul.f32 %v682, %v3682
        %v4483 = vmul.f32 %v683, %v3683
        %v4484 = vmul.f32 %v684, %v3684
        %v4485 = vmul.f32 %v685, %v3685
        %v4486 = vmul.f32 %v686, %v3686
        %v4487 = vmul.f32 %v687, %v3687
        %v4488 = vmul.f32 %v688, %v3688
        %v4489 = vmul.f32 %v689, %v3689
        %v4490 = vmul.f32 %v690, %v3690
        %v4491 = vmul.f32 %v691, %v3691
        %v4492 = vmul.f32 %v692, %v3692
        %v4493 = vmul.f32 %v693, %v3693
        %v4494 = vmul.f32 %v694, %v3694
        %v4495 = vmul.f32 %v695, %v3695
        %v4496 = vmul.f32 %v696, %v3696
        %v4497 = vmul.f32 %v697, %v3697
        %v4498 = vmul.f32 %v698, %v3698
        %v4499 = vmul.f32 %v699, %v3699
        %v4500 = vmul.f32 %v700, %v3700
        %v4501 = vmul.f32 %v701, %v3701
        %v4502 = vmul.f32 %v702, %v3702
        %v4503 = vmul.f32 %v703, %v3703
        %v4504 = vmul.f32 %v704, %v3704
        %v4505 = vmul.f32 %v705, %v3705
        %v4506 = vmul.f32 %v706, %v3706
        %v4507 = vmul.f32 %v707, %v3707
        %v4508 = vmul.f32 %v708, %v3708
        %v4509 = vmul.f32 %v709, %v3709
        %v4510 = vmul.f32 %v710, %v3710
        %v4511 = vmul.f32 %v711, %v3711
        %v4512 = vadd.f32 %v2112, %v3712
        %v4513 = vadd.f32 %v2113, %v3713
        %v4514 = vadd.f32 %v2114, %v3714
        %v4515 = vadd.f32 %v2115, %v3715
        %v4516 = vadd.f32 %v2116, %v3716
        %v4517 = vadd.f32 %v2117, %v3717
        %v4518 = vadd.f32 %v2118, %v3718
        %v4519 = vadd.f32 %v2119, %v3719
        %v4520 = vadd.f32 %v2120, %v3720
        %v4521 = vadd.f32 %v2121, %v3721
        %v4522 = vadd.f32 %v2122, %v3722
        %v4523 = vadd.f32 %v2123, %v3723
        %v4524 = vadd.f32 %v2124, %v3724
        %v4525 = vadd.f32 %v2125, %v3725
        %v4526 = vadd.f32 %v2126, %v3726
        %v4527 = vadd.f32 %v2127, %v3727
        %v4528 = vadd.f32 %v2128, %v3728
        %v4529 = vadd.f32 %v2129, %v3729
        %v4530 = vadd.f32 %v2130, %v3730
        %v4531 = vadd.f32 %v2131, %v3731
        %v4532 = vadd.f32 %v2132, %v3732
        %v4533 = vadd.f32 %v2133, %v3733
        %v4534 = vadd.f32 %v2134, %v3734
        %v4535 = vadd.f32 %v2135, %v3735
        %v4536 = vadd.f32 %v2136, %v3736
        %v4537 = vadd.f32 %v2137, %v3737
        %v4538 = vadd.f32 %v2138, %v3738
        %v4539 = vadd.f32 %v2139, %v3739
        %v4540 = vadd.f32 %v2140, %v3740
        %v4541 = vadd.f32 %v2141, %v3741
        %v4542 = vadd.f32 %v2142, %v3742
        %v4543 = vadd.f32 %v2143, %v3743
        %v4544 = vadd.f32 %v2144, %v3744
        %v4545 = vadd.f32 %v2145, %v3745
        %v4546 = vadd.f32 %v2146, %v3746
        %v4547 = vadd.f32 %v2147, %v3747
        %v4548 = vadd.f32 %v2148, %v3748
        %v4549 = vadd.f32 %v2149, %v3749
        %v4550 = vadd.f32 %v2150, %v3750
        %v4551 = vadd.f32 %v2151, %v3751
        %v4552 = vadd.f32 %v2152, %v3752
        %v4553 = vadd.f32 %v2153, %v3753
        %v4554 = vadd.f32 %v2154, %v3754
        %v4555 = vadd.f32 %v2155, %v3755
        %v4556 = vadd.f32 %v2156, %v3756
        %v4557 = vadd.f32 %v2157, %v3757
        %v4558 = vadd.f32 %v2158, %v3758
        %v4559 = vadd.f32 %v2159, %v3759
        %v4560 = vadd.f32 %v2160, %v3760
        %v4561 = vadd.f32 %v2161, %v3761
        %v4562 = vadd.f32 %v2162, %v3762
        %v4563 = vadd.f32 %v2163, %v3763
        %v4564 = vadd.f32 %v2164, %v3764
        %v4565 = vadd.f32 %v2165, %v3765
        %v4566 = vadd.f32 %v2166, %v3766
        %v4567 = vadd.f32 %v2167, %v3767
        %v4568 = vadd.f32 %v2168, %v3768
        %v4569 = vadd.f32 %v2169, %v3769
        %v4570 = vadd.f32 %v2170, %v3770
        %v4571 = vadd.f32 %v2171, %v3771
        %v4572 = vadd.f32 %v2172, %v3772
        %v4573 = vadd.f32 %v2173, %v3773
        %v4574 = vadd.f32 %v2174, %v3774
        %v4575 = vadd.f32 %v2175, %v3775
        %v4576 = vadd.f32 %v2176, %v3776
        %v4577 = vadd.f32 %v2177, %v3777
        %v4578 = vadd.f32 %v2178, %v3778
        %v4579 = vadd.f32 %v2179, %v3779
        %v4580 = vadd.f32 %v2180, %v3780
        %v4581 = vadd.f32 %v2181, %v3781
        %v4582 = vadd.f32 %v2182, %v3782
        %v4583 = vadd.f32 %v2183, %v3783
        %v4584 = vadd.f32 %v2184, %v3784
        %v4585 = vadd.f32 %v2185, %v3785
        %v4586 = vadd.f32 %v2186, %v3786
        %v4587 = vadd.f32 %v2187, %v3787
        %v4588 = vadd.f32 %v2188, %v3788
        %v4589 = vadd.f32 %v2189, %v3789
        %v4590 = vadd.f32 %v2190, %v3790
        %v4591 = vadd.f32 %v2191, %v3791
        %v4592 = vadd.f32 %v2192, %v3792
        %v4593 = vadd.f32 %v2193, %v3793
        %v4594 = vadd.f32 %v2194, %v3794
        %v4595 = vadd.f32 %v2195, %v3795
        %v4596 = vadd.f32 %v2196, %v3796
        %v4597 = vadd.f32 %v2197, %v3797
        %v4598 = vadd.f32 %v2198, %v3798
        %v4599 = vadd.f32 %v2199, %v3799
        %v4600 = vadd.f32 %v2200, %v3800
        %v4601 = vadd.f32 %v2201, %v3801
        %v4602 = vadd.f32 %v2202, %v3802
        %v4603 = vadd.f32 %v2203, %v3803
        %v4604 = vadd.f32 %v2204, %v3804
        %v4605 = vadd.f32 %v2205, %v3805
        %v4606 = vadd.f32 %v2206, %v3806
        %v4607 = vadd.f32 %v2207, %v3807
        %v4608 = vadd.f32 %v2208, %v3808
        %v4609 = vadd.f32 %v2209, %v3809
        %v4610 = vadd.f32 %v2210, %v3810
        %v4611 = vadd.f32 %v2211, %v3811
        %v4612 = vadd.f32 %v2212, %v3812
        %v4613 = vadd.f32 %v2213, %v3813
        %v4614 = vadd.f32 %v2214, %v3814
        %v4615 = vadd.f32 %v2215, %v3815
        %v4616 = vadd.f32 %v2216, %v3816
        %v4617 = vadd.f32 %v2217, %v3817
        %v4618 = vadd.f32 %v2218, %v3818
        %v4619 = vadd.f32 %v2219, %v3819
        %v4620 = vadd.f32 %v2220, %v3820
        %v4621 = vadd.f32 %v2221, %v3821
        %v4622 = vadd.f32 %v2222, %v3822
        %v4623 = vadd.f32 %v2223, %v3823
        %v4624 = vadd.f32 %v2224, %v3824
        %v4625 = vadd.f32 %v2225, %v3825
        %v4626 = vadd.f32 %v2226, %v3826
        %v4627 = vadd.f32 %v2227, %v3827
        %v4628 = vadd.f32 %v2228, %v3828
        %v4629 = vadd.f32 %v2229, %v3829
        %v4630 = vadd.f32 %v2230, %v3830
        %v4631 = vadd.f32 %v2231, %v3831
        %v4632 = vadd.f32 %v2232, %v3832
        %v4633 = vadd.f32 %v2233, %v3833
        %v4634 = vadd.f32 %v2234, %v3834
        %v4635 = vadd.f32 %v2235, %v3835
        %v4636 = vadd.f32 %v2236, %v3836
        %v4637 = vadd.f32 %v2237, %v3837
        %v4638 = vadd.f32 %v2238, %v3838
        %v4639 = vadd.f32 %v2239, %v3839
        %v4640 = vadd.f32 %v2240, %v3840
        %v4641 = vadd.f32 %v2241, %v3841
        %v4642 = vadd.f32 %v2242, %v3842
        %v4643 = vadd.f32 %v2243, %v3843
        %v4644 = vadd.f32 %v2244, %v3844
        %v4645 = vadd.f32 %v2245, %v3845
        %v4646 = vadd.f32 %v2246, %v3846
        %v4647 = vadd.f32 %v2247, %v3847
        %v4648 = vadd.f32 %v2248, %v3848
        %v4649 = vadd.f32 %v2249, %v3849
        %v4650 = vadd.f32 %v2250, %v3850
        %v4651 = vadd.f32 %v2251, %v3851
        %v4652 = vadd.f32 %v2252, %v3852
        %v4653 = vadd.f32 %v2253, %v3853
        %v4654 = vadd.f32 %v2254, %v3854
        %v4655 = vadd.f32 %v2255, %v3855
        %v4656 = vadd.f32 %v2256, %v3856
        %v4657 = vadd.f32 %v2257, %v3857
        %v4658 = vadd.f32 %v2258, %v3858
        %v4659 = vadd.f32 %v2259, %v3859
        %v4660 = vadd.f32 %v2260, %v3860
        %v4661 = vadd.f32 %v2261, %v3861
        %v4662 = vadd.f32 %v2262, %v3862
        %v4663 = vadd.f32 %v2263, %v3863
        %v4664 = vadd.f32 %v2264, %v3864
        %v4665 = vadd.f32 %v2265, %v3865
        %v4666 = vadd.f32 %v2266, %v3866
        %v4667 = vadd.f32 %v2267, %v3867
        %v4668 = vadd.f32 %v2268, %v3868
        %v4669 = vadd.f32 %v2269, %v3869
        %v4670 = vadd.f32 %v2270, %v3870
        %v4671 = vadd.f32 %v2271, %v3871
        %v4672 = vadd.f32 %v2272, %v3872
        %v4673 = vadd.f32 %v2273, %v3873
        %v4674 = vadd.f32 %v2274, %v3874
        %v4675 = vadd.f32 %v2275, %v3875
        %v4676 = vadd.f32 %v2276, %v3876
        %v4677 = vadd.f32 %v2277, %v3877
        %v4678 = vadd.f32 %v2278, %v3878
        %v4679 = vadd.f32 %v2279, %v3879
        %v4680 = vadd.f32 %v2280, %v3880
        %v4681 = vadd.f32 %v2281, %v3881
        %v4682 = vadd.f32 %v2282, %v3882
        %v4683 = vadd.f32 %v2283, %v3883
        %v4684 = vadd.f32 %v2284, %v3884
        %v4685 = vadd.f32 %v2285, %v3885
        %v4686 = vadd.f32 %v2286, %v3886
        %v4687 = vadd.f32 %v2287, %v3887
        %v4688 = vadd.f32 %v2288, %v3888
        %v4689 = vadd.f32 %v2289, %v3889
        %v4690 = vadd.f32 %v2290, %v3890
        %v4691 = vadd.f32 %v2291, %v3891
        %v4692 = vadd.f32 %v2292, %v3892
        %v4693 = vadd.f32 %v2293, %v3893
        %v4694 = vadd.f32 %v2294, %v3894
        %v4695 = vadd.f32 %v2295, %v3895
        %v4696 = vadd.f32 %v2296, %v3896
        %v4697 = vadd.f32 %v2297, %v3897
        %v4698 = vadd.f32 %v2298, %v3898
        %v4699 = vadd.f32 %v2299, %v3899
        %v4700 = vadd.f32 %v2300, %v3900
        %v4701 = vadd.f32 %v2301, %v3901
        %v4702 = vadd.f32 %v2302, %v3902
        %v4703 = vadd.f32 %v2303, %v3903
        %v4704 = vadd.f32 %v2304, %v3904
        %v4705 = vadd.f32 %v2305, %v3905
        %v4706 = vadd.f32 %v2306, %v3906
        %v4707 = vadd.f32 %v2307, %v3907
        %v4708 = vadd.f32 %v2308, %v3908
        %v4709 = vadd.f32 %v2309, %v3909
        %v4710 = vadd.f32 %v2310, %v3910
        %v4711 = vadd.f32 %v2311, %v3911
        %v4712 = vadd.f32 %v2312, %v3912
        %v4713 = vadd.f32 %v2313, %v3913
        %v4714 = vadd.f32 %v2314, %v3914
        %v4715 = vadd.f32 %v2315, %v3915
        %v4716 = vadd.f32 %v2316, %v3916
        %v4717 = vadd.f32 %v2317, %v3917
        %v4718 = vadd.f32 %v2318, %v3918
        %v4719 = vadd.f32 %v2319, %v3919
        %v4720 = vadd.f32 %v2320, %v3920
        %v4721 = vadd.f32 %v2321, %v3921
        %v4722 = vadd.f32 %v2322, %v3922
        %v4723 = vadd.f32 %v2323, %v3923
        %v4724 = vadd.f32 %v2324, %v3924
        %v4725 = vadd.f32 %v2325, %v3925
        %v4726 = vadd.f32 %v2326, %v3926
        %v4727 = vadd.f32 %v2327, %v3927
        %v4728 = vadd.f32 %v2328, %v3928
        %v4729 = vadd.f32 %v2329, %v3929
        %v4730 = vadd.f32 %v2330, %v3930
        %v4731 = vadd.f32 %v2331, %v3931
        %v4732 = vadd.f32 %v2332, %v3932
        %v4733 = vadd.f32 %v2333, %v3933
        %v4734 = vadd.f32 %v2334, %v3934
        %v4735 = vadd.f32 %v2335, %v3935
        %v4736 = vadd.f32 %v2336, %v3936
        %v4737 = vadd.f32 %v2337, %v3937
        %v4738 = vadd.f32 %v2338, %v3938
        %v4739 = vadd.f32 %v2339, %v3939
        %v4740 = vadd.f32 %v2340, %v3940
        %v4741 = vadd.f32 %v2341, %v3941
        %v4742 = vadd.f32 %v2342, %v3942
        %v4743 = vadd.f32 %v2343, %v3943
        %v4744 = vadd.f32 %v2344, %v3944
        %v4745 = vadd.f32 %v2345, %v3945
        %v4746 = vadd.f32 %v2346, %v3946
        %v4747 = vadd.f32 %v2347, %v3947
        %v4748 = vadd.f32 %v2348, %v3948
        %v4749 = vadd.f32 %v2349, %v3949
        %v4750 = vadd.f32 %v2350, %v3950
        %v4751 = vadd.f32 %v2351, %v3951
        %v4752 = vadd.f32 %v2352, %v3952
        %v4753 = vadd.f32 %v2353, %v3953
        %v4754 = vadd.f32 %v2354, %v3954
        %v4755 = vadd.f32 %v2355, %v3955
        %v4756 = vadd.f32 %v2356, %v3956
        %v4757 = vadd.f32 %v2357, %v3957
        %v4758 = vadd.f32 %v2358, %v3958
        %v4759 = vadd.f32 %v2359, %v3959
        %v4760 = vadd.f32 %v2360, %v3960
        %v4761 = vadd.f32 %v2361, %v3961
        %v4762 = vadd.f32 %v2362, %v3962
        %v4763 = vadd.f32 %v2363, %v3963
        %v4764 = vadd.f32 %v2364, %v3964
        %v4765 = vadd.f32 %v2365, %v3965
        %v4766 = vadd.f32 %v2366, %v3966
        %v4767 = vadd.f32 %v2367, %v3967
        %v4768 = vadd.f32 %v2368, %v3968
        %v4769 = vadd.f32 %v2369, %v3969
        %v4770 = vadd.f32 %v2370, %v3970
        %v4771 = vadd.f32 %v2371, %v3971
        %v4772 = vadd.f32 %v2372, %v3972
        %v4773 = vadd.f32 %v2373, %v3973
        %v4774 = vadd.f32 %v2374, %v3974
        %v4775 = vadd.f32 %v2375, %v3975
        %v4776 = vadd.f32 %v2376, %v3976
        %v4777 = vadd.f32 %v2377, %v3977
        %v4778 = vadd.f32 %v2378, %v3978
        %v4779 = vadd.f32 %v2379, %v3979
        %v4780 = vadd.f32 %v2380, %v3980
        %v4781 = vadd.f32 %v2381, %v3981
        %v4782 = vadd.f32 %v2382, %v3982
        %v4783 = vadd.f32 %v2383, %v3983
        %v4784 = vadd.f32 %v2384, %v3984
        %v4785 = vadd.f32 %v2385, %v3985
        %v4786 = vadd.f32 %v2386, %v3986
        %v4787 = vadd.f32 %v2387, %v3987
        %v4788 = vadd.f32 %v2388, %v3988
        %v4789 = vadd.f32 %v2389, %v3989
        %v4790 = vadd.f32 %v2390, %v3990
        %v4791 = vadd.f32 %v2391, %v3991
        %v4792 = vadd.f32 %v2392, %v3992
        %v4793 = vadd.f32 %v2393, %v3993
        %v4794 = vadd.f32 %v2394, %v3994
        %v4795 = vadd.f32 %v2395, %v3995
        %v4796 = vadd.f32 %v2396, %v3996
        %v4797 = vadd.f32 %v2397, %v3997
        %v4798 = vadd.f32 %v2398, %v3998
        %v4799 = vadd.f32 %v2399, %v3999
        %v4800 = vadd.f32 %v2400, %v4000
        %v4801 = vadd.f32 %v2401, %v4001
        %v4802 = vadd.f32 %v2402, %v4002
        %v4803 = vadd.f32 %v2403, %v4003
        %v4804 = vadd.f32 %v2404, %v4004
        %v4805 = vadd.f32 %v2405, %v4005
        %v4806 = vadd.f32 %v2406, %v4006
        %v4807 = vadd.f32 %v2407, %v4007
        %v4808 = vadd.f32 %v2408, %v4008
        %v4809 = vadd.f32 %v2409, %v4009
        %v4810 = vadd.f32 %v2410, %v4010
        %v4811 = vadd.f32 %v2411, %v4011
        %v4812 = vadd.f32 %v2412, %v4012
        %v4813 = vadd.f32 %v2413, %v4013
        %v4814 = vadd.f32 %v2414, %v4014
        %v4815 = vadd.f32 %v2415, %v4015
        %v4816 = vadd.f32 %v2416, %v4016
        %v4817 = vadd.f32 %v2417, %v4017
        %v4818 = vadd.f32 %v2418, %v4018
        %v4819 = vadd.f32 %v2419, %v4019
        %v4820 = vadd.f32 %v2420, %v4020
        %v4821 = vadd.f32 %v2421, %v4021
        %v4822 = vadd.f32 %v2422, %v4022
        %v4823 = vadd.f32 %v2423, %v4023
        %v4824 = vadd.f32 %v2424, %v4024
        %v4825 = vadd.f32 %v2425, %v4025
        %v4826 = vadd.f32 %v2426, %v4026
        %v4827 = vadd.f32 %v2427, %v4027
        %v4828 = vadd.f32 %v2428, %v4028
        %v4829 = vadd.f32 %v2429, %v4029
        %v4830 = vadd.f32 %v2430, %v4030
        %v4831 = vadd.f32 %v2431, %v4031
        %v4832 = vadd.f32 %v2432, %v4032
        %v4833 = vadd.f32 %v2433, %v4033
        %v4834 = vadd.f32 %v2434, %v4034
        %v4835 = vadd.f32 %v2435, %v4035
        %v4836 = vadd.f32 %v2436, %v4036
        %v4837 = vadd.f32 %v2437, %v4037
        %v4838 = vadd.f32 %v2438, %v4038
        %v4839 = vadd.f32 %v2439, %v4039
        %v4840 = vadd.f32 %v2440, %v4040
        %v4841 = vadd.f32 %v2441, %v4041
        %v4842 = vadd.f32 %v2442, %v4042
        %v4843 = vadd.f32 %v2443, %v4043
        %v4844 = vadd.f32 %v2444, %v4044
        %v4845 = vadd.f32 %v2445, %v4045
        %v4846 = vadd.f32 %v2446, %v4046
        %v4847 = vadd.f32 %v2447, %v4047
        %v4848 = vadd.f32 %v2448, %v4048
        %v4849 = vadd.f32 %v2449, %v4049
        %v4850 = vadd.f32 %v2450, %v4050
        %v4851 = vadd.f32 %v2451, %v4051
        %v4852 = vadd.f32 %v2452, %v4052
        %v4853 = vadd.f32 %v2453, %v4053
        %v4854 = vadd.f32 %v2454, %v4054
        %v4855 = vadd.f32 %v2455, %v4055
        %v4856 = vadd.f32 %v2456, %v4056
        %v4857 = vadd.f32 %v2457, %v4057
        %v4858 = vadd.f32 %v2458, %v4058
        %v4859 = vadd.f32 %v2459, %v4059
        %v4860 = vadd.f32 %v2460, %v4060
        %v4861 = vadd.f32 %v2461, %v4061
        %v4862 = vadd.f32 %v2462, %v4062
        %v4863 = vadd.f32 %v2463, %v4063
        %v4864 = vadd.f32 %v2464, %v4064
        %v4865 = vadd.f32 %v2465, %v4065
        %v4866 = vadd.f32 %v2466, %v4066
        %v4867 = vadd.f32 %v2467, %v4067
        %v4868 = vadd.f32 %v2468, %v4068
        %v4869 = vadd.f32 %v2469, %v4069
        %v4870 = vadd.f32 %v2470, %v4070
        %v4871 = vadd.f32 %v2471, %v4071
        %v4872 = vadd.f32 %v2472, %v4072
        %v4873 = vadd.f32 %v2473, %v4073
        %v4874 = vadd.f32 %v2474, %v4074
        %v4875 = vadd.f32 %v2475, %v4075
        %v4876 = vadd.f32 %v2476, %v4076
        %v4877 = vadd.f32 %v2477, %v4077
        %v4878 = vadd.f32 %v2478, %v4078
        %v4879 = vadd.f32 %v2479, %v4079
        %v4880 = vadd.f32 %v2480, %v4080
        %v4881 = vadd.f32 %v2481, %v4081
        %v4882 = vadd.f32 %v2482, %v4082
        %v4883 = vadd.f32 %v2483, %v4083
        %v4884 = vadd.f32 %v2484, %v4084
        %v4885 = vadd.f32 %v2485, %v4085
        %v4886 = vadd.f32 %v2486, %v4086
        %v4887 = vadd.f32 %v2487, %v4087
        %v4888 = vadd.f32 %v2488, %v4088
        %v4889 = vadd.f32 %v2489, %v4089
        %v4890 = vadd.f32 %v2490, %v4090
        %v4891 = vadd.f32 %v2491, %v4091
        %v4892 = vadd.f32 %v2492, %v4092
        %v4893 = vadd.f32 %v2493, %v4093
        %v4894 = vadd.f32 %v2494, %v4094
        %v4895 = vadd.f32 %v2495, %v4095
        %v4896 = vadd.f32 %v2496, %v4096
        %v4897 = vadd.f32 %v2497, %v4097
        %v4898 = vadd.f32 %v2498, %v4098
        %v4899 = vadd.f32 %v2499, %v4099
        %v4900 = vadd.f32 %v2500, %v4100
        %v4901 = vadd.f32 %v2501, %v4101
        %v4902 = vadd.f32 %v2502, %v4102
        %v4903 = vadd.f32 %v2503, %v4103
        %v4904 = vadd.f32 %v2504, %v4104
        %v4905 = vadd.f32 %v2505, %v4105
        %v4906 = vadd.f32 %v2506, %v4106
        %v4907 = vadd.f32 %v2507, %v4107
        %v4908 = vadd.f32 %v2508, %v4108
        %v4909 = vadd.f32 %v2509, %v4109
        %v4910 = vadd.f32 %v2510, %v4110
        %v4911 = vadd.f32 %v2511, %v4111
        %v4912 = vadd.f32 %v2512, %v4112
        %v4913 = vadd.f32 %v2513, %v4113
        %v4914 = vadd.f32 %v2514, %v4114
        %v4915 = vadd.f32 %v2515, %v4115
        %v4916 = vadd.f32 %v2516, %v4116
        %v4917 = vadd.f32 %v2517, %v4117
        %v4918 = vadd.f32 %v2518, %v4118
        %v4919 = vadd.f32 %v2519, %v4119
        %v4920 = vadd.f32 %v2520, %v4120
        %v4921 = vadd.f32 %v2521, %v4121
        %v4922 = vadd.f32 %v2522, %v4122
        %v4923 = vadd.f32 %v2523, %v4123
        %v4924 = vadd.f32 %v2524, %v4124
        %v4925 = vadd.f32 %v2525, %v4125
        %v4926 = vadd.f32 %v2526, %v4126
        %v4927 = vadd.f32 %v2527, %v4127
        %v4928 = vadd.f32 %v2528, %v4128
        %v4929 = vadd.f32 %v2529, %v4129
        %v4930 = vadd.f32 %v2530, %v4130
        %v4931 = vadd.f32 %v2531, %v4131
        %v4932 = vadd.f32 %v2532, %v4132
        %v4933 = vadd.f32 %v2533, %v4133
        %v4934 = vadd.f32 %v2534, %v4134
        %v4935 = vadd.f32 %v2535, %v4135
        %v4936 = vadd.f32 %v2536, %v4136
        %v4937 = vadd.f32 %v2537, %v4137
        %v4938 = vadd.f32 %v2538, %v4138
        %v4939 = vadd.f32 %v2539, %v4139
        %v4940 = vadd.f32 %v2540, %v4140
        %v4941 = vadd.f32 %v2541, %v4141
        %v4942 = vadd.f32 %v2542, %v4142
        %v4943 = vadd.f32 %v2543, %v4143
        %v4944 = vadd.f32 %v2544, %v4144
        %v4945 = vadd.f32 %v2545, %v4145
        %v4946 = vadd.f32 %v2546, %v4146
        %v4947 = vadd.f32 %v2547, %v4147
        %v4948 = vadd.f32 %v2548, %v4148
        %v4949 = vadd.f32 %v2549, %v4149
        %v4950 = vadd.f32 %v2550, %v4150
        %v4951 = vadd.f32 %v2551, %v4151
        %v4952 = vadd.f32 %v2552, %v4152
        %v4953 = vadd.f32 %v2553, %v4153
        %v4954 = vadd.f32 %v2554, %v4154
        %v4955 = vadd.f32 %v2555, %v4155
        %v4956 = vadd.f32 %v2556, %v4156
        %v4957 = vadd.f32 %v2557, %v4157
        %v4958 = vadd.f32 %v2558, %v4158
        %v4959 = vadd.f32 %v2559, %v4159
        %v4960 = vadd.f32 %v2560, %v4160
        %v4961 = vadd.f32 %v2561, %v4161
        %v4962 = vadd.f32 %v2562, %v4162
        %v4963 = vadd.f32 %v2563, %v4163
        %v4964 = vadd.f32 %v2564, %v4164
        %v4965 = vadd.f32 %v2565, %v4165
        %v4966 = vadd.f32 %v2566, %v4166
        %v4967 = vadd.f32 %v2567, %v4167
        %v4968 = vadd.f32 %v2568, %v4168
        %v4969 = vadd.f32 %v2569, %v4169
        %v4970 = vadd.f32 %v2570, %v4170
        %v4971 = vadd.f32 %v2571, %v4171
        %v4972 = vadd.f32 %v2572, %v4172
        %v4973 = vadd.f32 %v2573, %v4173
        %v4974 = vadd.f32 %v2574, %v4174
        %v4975 = vadd.f32 %v2575, %v4175
        %v4976 = vadd.f32 %v2576, %v4176
        %v4977 = vadd.f32 %v2577, %v4177
        %v4978 = vadd.f32 %v2578, %v4178
        %v4979 = vadd.f32 %v2579, %v4179
        %v4980 = vadd.f32 %v2580, %v4180
        %v4981 = vadd.f32 %v2581, %v4181
        %v4982 = vadd.f32 %v2582, %v4182
        %v4983 = vadd.f32 %v2583, %v4183
        %v4984 = vadd.f32 %v2584, %v4184
        %v4985 = vadd.f32 %v2585, %v4185
        %v4986 = vadd.f32 %v2586, %v4186
        %v4987 = vadd.f32 %v2587, %v4187
        %v4988 = vadd.f32 %v2588, %v4188
        %v4989 = vadd.f32 %v2589, %v4189
        %v4990 = vadd.f32 %v2590, %v4190
        %v4991 = vadd.f32 %v2591, %v4191
        %v4992 = vadd.f32 %v2592, %v4192
        %v4993 = vadd.f32 %v2593, %v4193
        %v4994 = vadd.f32 %v2594, %v4194
        %v4995 = vadd.f32 %v2595, %v4195
        %v4996 = vadd.f32 %v2596, %v4196
        %v4997 = vadd.f32 %v2597, %v4197
        %v4998 = vadd.f32 %v2598, %v4198
        %v4999 = vadd.f32 %v2599, %v4199
        %v5000 = vadd.f32 %v2600, %v4200
        %v5001 = vadd.f32 %v2601, %v4201
        %v5002 = vadd.f32 %v2602, %v4202
        %v5003 = vadd.f32 %v2603, %v4203
        %v5004 = vadd.f32 %v2604, %v4204
        %v5005 = vadd.f32 %v2605, %v4205
        %v5006 = vadd.f32 %v2606, %v4206
        %v5007 = vadd.f32 %v2607, %v4207
        %v5008 = vadd.f32 %v2608, %v4208
        %v5009 = vadd.f32 %v2609, %v4209
        %v5010 = vadd.f32 %v2610, %v4210
        %v5011 = vadd.f32 %v2611, %v4211
        %v5012 = vadd.f32 %v2612, %v4212
        %v5013 = vadd.f32 %v2613, %v4213
        %v5014 = vadd.f32 %v2614, %v4214
        %v5015 = vadd.f32 %v2615, %v4215
        %v5016 = vadd.f32 %v2616, %v4216
        %v5017 = vadd.f32 %v2617, %v4217
        %v5018 = vadd.f32 %v2618, %v4218
        %v5019 = vadd.f32 %v2619, %v4219
        %v5020 = vadd.f32 %v2620, %v4220
        %v5021 = vadd.f32 %v2621, %v4221
        %v5022 = vadd.f32 %v2622, %v4222
        %v5023 = vadd.f32 %v2623, %v4223
        %v5024 = vadd.f32 %v2624, %v4224
        %v5025 = vadd.f32 %v2625, %v4225
        %v5026 = vadd.f32 %v2626, %v4226
        %v5027 = vadd.f32 %v2627, %v4227
        %v5028 = vadd.f32 %v2628, %v4228
        %v5029 = vadd.f32 %v2629, %v4229
        %v5030 = vadd.f32 %v2630, %v4230
        %v5031 = vadd.f32 %v2631, %v4231
        %v5032 = vadd.f32 %v2632, %v4232
        %v5033 = vadd.f32 %v2633, %v4233
        %v5034 = vadd.f32 %v2634, %v4234
        %v5035 = vadd.f32 %v2635, %v4235
        %v5036 = vadd.f32 %v2636, %v4236
        %v5037 = vadd.f32 %v2637, %v4237
        %v5038 = vadd.f32 %v2638, %v4238
        %v5039 = vadd.f32 %v2639, %v4239
        %v5040 = vadd.f32 %v2640, %v4240
        %v5041 = vadd.f32 %v2641, %v4241
        %v5042 = vadd.f32 %v2642, %v4242
        %v5043 = vadd.f32 %v2643, %v4243
        %v5044 = vadd.f32 %v2644, %v4244
        %v5045 = vadd.f32 %v2645, %v4245
        %v5046 = vadd.f32 %v2646, %v4246
        %v5047 = vadd.f32 %v2647, %v4247
        %v5048 = vadd.f32 %v2648, %v4248
        %v5049 = vadd.f32 %v2649, %v4249
        %v5050 = vadd.f32 %v2650, %v4250
        %v5051 = vadd.f32 %v2651, %v4251
        %v5052 = vadd.f32 %v2652, %v4252
        %v5053 = vadd.f32 %v2653, %v4253
        %v5054 = vadd.f32 %v2654, %v4254
        %v5055 = vadd.f32 %v2655, %v4255
        %v5056 = vadd.f32 %v2656, %v4256
        %v5057 = vadd.f32 %v2657, %v4257
        %v5058 = vadd.f32 %v2658, %v4258
        %v5059 = vadd.f32 %v2659, %v4259
        %v5060 = vadd.f32 %v2660, %v4260
        %v5061 = vadd.f32 %v2661, %v4261
        %v5062 = vadd.f32 %v2662, %v4262
        %v5063 = vadd.f32 %v2663, %v4263
        %v5064 = vadd.f32 %v2664, %v4264
        %v5065 = vadd.f32 %v2665, %v4265
        %v5066 = vadd.f32 %v2666, %v4266
        %v5067 = vadd.f32 %v2667, %v4267
        %v5068 = vadd.f32 %v2668, %v4268
        %v5069 = vadd.f32 %v2669, %v4269
        %v5070 = vadd.f32 %v2670, %v4270
        %v5071 = vadd.f32 %v2671, %v4271
        %v5072 = vadd.f32 %v2672, %v4272
        %v5073 = vadd.f32 %v2673, %v4273
        %v5074 = vadd.f32 %v2674, %v4274
        %v5075 = vadd.f32 %v2675, %v4275
        %v5076 = vadd.f32 %v2676, %v4276
        %v5077 = vadd.f32 %v2677, %v4277
        %v5078 = vadd.f32 %v2678, %v4278
        %v5079 = vadd.f32 %v2679, %v4279
        %v5080 = vadd.f32 %v2680, %v4280
        %v5081 = vadd.f32 %v2681, %v4281
        %v5082 = vadd.f32 %v2682, %v4282
        %v5083 = vadd.f32 %v2683, %v4283
        %v5084 = vadd.f32 %v2684, %v4284
        %v5085 = vadd.f32 %v2685, %v4285
        %v5086 = vadd.f32 %v2686, %v4286
        %v5087 = vadd.f32 %v2687, %v4287
        %v5088 = vadd.f32 %v2688, %v4288
        %v5089 = vadd.f32 %v2689, %v4289
        %v5090 = vadd.f32 %v2690, %v4290
        %v5091 = vadd.f32 %v2691, %v4291
        %v5092 = vadd.f32 %v2692, %v4292
        %v5093 = vadd.f32 %v2693, %v4293
        %v5094 = vadd.f32 %v2694, %v4294
        %v5095 = vadd.f32 %v2695, %v4295
        %v5096 = vadd.f32 %v2696, %v4296
        %v5097 = vadd.f32 %v2697, %v4297
        %v5098 = vadd.f32 %v2698, %v4298
        %v5099 = vadd.f32 %v2699, %v4299
        %v5100 = vadd.f32 %v2700, %v4300
        %v5101 = vadd.f32 %v2701, %v4301
        %v5102 = vadd.f32 %v2702, %v4302
        %v5103 = vadd.f32 %v2703, %v4303
        %v5104 = vadd.f32 %v2704, %v4304
        %v5105 = vadd.f32 %v2705, %v4305
        %v5106 = vadd.f32 %v2706, %v4306
        %v5107 = vadd.f32 %v2707, %v4307
        %v5108 = vadd.f32 %v2708, %v4308
        %v5109 = vadd.f32 %v2709, %v4309
        %v5110 = vadd.f32 %v2710, %v4310
        %v5111 = vadd.f32 %v2711, %v4311
        %v5112 = vadd.f32 %v2712, %v4312
        %v5113 = vadd.f32 %v2713, %v4313
        %v5114 = vadd.f32 %v2714, %v4314
        %v5115 = vadd.f32 %v2715, %v4315
        %v5116 = vadd.f32 %v2716, %v4316
        %v5117 = vadd.f32 %v2717, %v4317
        %v5118 = vadd.f32 %v2718, %v4318
        %v5119 = vadd.f32 %v2719, %v4319
        %v5120 = vadd.f32 %v2720, %v4320
        %v5121 = vadd.f32 %v2721, %v4321
        %v5122 = vadd.f32 %v2722, %v4322
        %v5123 = vadd.f32 %v2723, %v4323
        %v5124 = vadd.f32 %v2724, %v4324
        %v5125 = vadd.f32 %v2725, %v4325
        %v5126 = vadd.f32 %v2726, %v4326
        %v5127 = vadd.f32 %v2727, %v4327
        %v5128 = vadd.f32 %v2728, %v4328
        %v5129 = vadd.f32 %v2729, %v4329
        %v5130 = vadd.f32 %v2730, %v4330
        %v5131 = vadd.f32 %v2731, %v4331
        %v5132 = vadd.f32 %v2732, %v4332
        %v5133 = vadd.f32 %v2733, %v4333
        %v5134 = vadd.f32 %v2734, %v4334
        %v5135 = vadd.f32 %v2735, %v4335
        %v5136 = vadd.f32 %v2736, %v4336
        %v5137 = vadd.f32 %v2737, %v4337
        %v5138 = vadd.f32 %v2738, %v4338
        %v5139 = vadd.f32 %v2739, %v4339
        %v5140 = vadd.f32 %v2740, %v4340
        %v5141 = vadd.f32 %v2741, %v4341
        %v5142 = vadd.f32 %v2742, %v4342
        %v5143 = vadd.f32 %v2743, %v4343
        %v5144 = vadd.f32 %v2744, %v4344
        %v5145 = vadd.f32 %v2745, %v4345
        %v5146 = vadd.f32 %v2746, %v4346
        %v5147 = vadd.f32 %v2747, %v4347
        %v5148 = vadd.f32 %v2748, %v4348
        %v5149 = vadd.f32 %v2749, %v4349
        %v5150 = vadd.f32 %v2750, %v4350
        %v5151 = vadd.f32 %v2751, %v4351
        %v5152 = vadd.f32 %v2752, %v4352
        %v5153 = vadd.f32 %v2753, %v4353
        %v5154 = vadd.f32 %v2754, %v4354
        %v5155 = vadd.f32 %v2755, %v4355
        %v5156 = vadd.f32 %v2756, %v4356
        %v5157 = vadd.f32 %v2757, %v4357
        %v5158 = vadd.f32 %v2758, %v4358
        %v5159 = vadd.f32 %v2759, %v4359
        %v5160 = vadd.f32 %v2760, %v4360
        %v5161 = vadd.f32 %v2761, %v4361
        %v5162 = vadd.f32 %v2762, %v4362
        %v5163 = vadd.f32 %v2763, %v4363
        %v5164 = vadd.f32 %v2764, %v4364
        %v5165 = vadd.f32 %v2765, %v4365
        %v5166 = vadd.f32 %v2766, %v4366
        %v5167 = vadd.f32 %v2767, %v4367
        %v5168 = vadd.f32 %v2768, %v4368
        %v5169 = vadd.f32 %v2769, %v4369
        %v5170 = vadd.f32 %v2770, %v4370
        %v5171 = vadd.f32 %v2771, %v4371
        %v5172 = vadd.f32 %v2772, %v4372
        %v5173 = vadd.f32 %v2773, %v4373
        %v5174 = vadd.f32 %v2774, %v4374
        %v5175 = vadd.f32 %v2775, %v4375
        %v5176 = vadd.f32 %v2776, %v4376
        %v5177 = vadd.f32 %v2777, %v4377
        %v5178 = vadd.f32 %v2778, %v4378
        %v5179 = vadd.f32 %v2779, %v4379
        %v5180 = vadd.f32 %v2780, %v4380
        %v5181 = vadd.f32 %v2781, %v4381
        %v5182 = vadd.f32 %v2782, %v4382
        %v5183 = vadd.f32 %v2783, %v4383
        %v5184 = vadd.f32 %v2784, %v4384
        %v5185 = vadd.f32 %v2785, %v4385
        %v5186 = vadd.f32 %v2786, %v4386
        %v5187 = vadd.f32 %v2787, %v4387
        %v5188 = vadd.f32 %v2788, %v4388
        %v5189 = vadd.f32 %v2789, %v4389
        %v5190 = vadd.f32 %v2790, %v4390
        %v5191 = vadd.f32 %v2791, %v4391
        %v5192 = vadd.f32 %v2792, %v4392
        %v5193 = vadd.f32 %v2793, %v4393
        %v5194 = vadd.f32 %v2794, %v4394
        %v5195 = vadd.f32 %v2795, %v4395
        %v5196 = vadd.f32 %v2796, %v4396
        %v5197 = vadd.f32 %v2797, %v4397
        %v5198 = vadd.f32 %v2798, %v4398
        %v5199 = vadd.f32 %v2799, %v4399
        %v5200 = vadd.f32 %v2800, %v4400
        %v5201 = vadd.f32 %v2801, %v4401
        %v5202 = vadd.f32 %v2802, %v4402
        %v5203 = vadd.f32 %v2803, %v4403
        %v5204 = vadd.f32 %v2804, %v4404
        %v5205 = vadd.f32 %v2805, %v4405
        %v5206 = vadd.f32 %v2806, %v4406
        %v5207 = vadd.f32 %v2807, %v4407
        %v5208 = vadd.f32 %v2808, %v4408
        %v5209 = vadd.f32 %v2809, %v4409
        %v5210 = vadd.f32 %v2810, %v4410
        %v5211 = vadd.f32 %v2811, %v4411
        %v5212 = vadd.f32 %v2812, %v4412
        %v5213 = vadd.f32 %v2813, %v4413
        %v5214 = vadd.f32 %v2814, %v4414
        %v5215 = vadd.f32 %v2815, %v4415
        %v5216 = vadd.f32 %v2816, %v4416
        %v5217 = vadd.f32 %v2817, %v4417
        %v5218 = vadd.f32 %v2818, %v4418
        %v5219 = vadd.f32 %v2819, %v4419
        %v5220 = vadd.f32 %v2820, %v4420
        %v5221 = vadd.f32 %v2821, %v4421
        %v5222 = vadd.f32 %v2822, %v4422
        %v5223 = vadd.f32 %v2823, %v4423
        %v5224 = vadd.f32 %v2824, %v4424
        %v5225 = vadd.f32 %v2825, %v4425
        %v5226 = vadd.f32 %v2826, %v4426
        %v5227 = vadd.f32 %v2827, %v4427
        %v5228 = vadd.f32 %v2828, %v4428
        %v5229 = vadd.f32 %v2829, %v4429
        %v5230 = vadd.f32 %v2830, %v4430
        %v5231 = vadd.f32 %v2831, %v4431
        %v5232 = vadd.f32 %v2832, %v4432
        %v5233 = vadd.f32 %v2833, %v4433
        %v5234 = vadd.f32 %v2834, %v4434
        %v5235 = vadd.f32 %v2835, %v4435
        %v5236 = vadd.f32 %v2836, %v4436
        %v5237 = vadd.f32 %v2837, %v4437
        %v5238 = vadd.f32 %v2838, %v4438
        %v5239 = vadd.f32 %v2839, %v4439
        %v5240 = vadd.f32 %v2840, %v4440
        %v5241 = vadd.f32 %v2841, %v4441
        %v5242 = vadd.f32 %v2842, %v4442
        %v5243 = vadd.f32 %v2843, %v4443
        %v5244 = vadd.f32 %v2844, %v4444
        %v5245 = vadd.f32 %v2845, %v4445
        %v5246 = vadd.f32 %v2846, %v4446
        %v5247 = vadd.f32 %v2847, %v4447
        %v5248 = vadd.f32 %v2848, %v4448
        %v5249 = vadd.f32 %v2849, %v4449
        %v5250 = vadd.f32 %v2850, %v4450
        %v5251 = vadd.f32 %v2851, %v4451
        %v5252 = vadd.f32 %v2852, %v4452
        %v5253 = vadd.f32 %v2853, %v4453
        %v5254 = vadd.f32 %v2854, %v4454
        %v5255 = vadd.f32 %v2855, %v4455
        %v5256 = vadd.f32 %v2856, %v4456
        %v5257 = vadd.f32 %v2857, %v4457
        %v5258 = vadd.f32 %v2858, %v4458
        %v5259 = vadd.f32 %v2859, %v4459
        %v5260 = vadd.f32 %v2860, %v4460
        %v5261 = vadd.f32 %v2861, %v4461
        %v5262 = vadd.f32 %v2862, %v4462
        %v5263 = vadd.f32 %v2863, %v4463
        %v5264 = vadd.f32 %v2864, %v4464
        %v5265 = vadd.f32 %v2865, %v4465
        %v5266 = vadd.f32 %v2866, %v4466
        %v5267 = vadd.f32 %v2867, %v4467
        %v5268 = vadd.f32 %v2868, %v4468
        %v5269 = vadd.f32 %v2869, %v4469
        %v5270 = vadd.f32 %v2870, %v4470
        %v5271 = vadd.f32 %v2871, %v4471
        %v5272 = vadd.f32 %v2872, %v4472
        %v5273 = vadd.f32 %v2873, %v4473
        %v5274 = vadd.f32 %v2874, %v4474
        %v5275 = vadd.f32 %v2875, %v4475
        %v5276 = vadd.f32 %v2876, %v4476
        %v5277 = vadd.f32 %v2877, %v4477
        %v5278 = vadd.f32 %v2878, %v4478
        %v5279 = vadd.f32 %v2879, %v4479
        %v5280 = vadd.f32 %v2880, %v4480
        %v5281 = vadd.f32 %v2881, %v4481
        %v5282 = vadd.f32 %v2882, %v4482
        %v5283 = vadd.f32 %v2883, %v4483
        %v5284 = vadd.f32 %v2884, %v4484
        %v5285 = vadd.f32 %v2885, %v4485
        %v5286 = vadd.f32 %v2886, %v4486
        %v5287 = vadd.f32 %v2887, %v4487
        %v5288 = vadd.f32 %v2888, %v4488
        %v5289 = vadd.f32 %v2889, %v4489
        %v5290 = vadd.f32 %v2890, %v4490
        %v5291 = vadd.f32 %v2891, %v4491
        %v5292 = vadd.f32 %v2892, %v4492
        %v5293 = vadd.f32 %v2893, %v4493
        %v5294 = vadd.f32 %v2894, %v4494
        %v5295 = vadd.f32 %v2895, %v4495
        %v5296 = vadd.f32 %v2896, %v4496
        %v5297 = vadd.f32 %v2897, %v4497
        %v5298 = vadd.f32 %v2898, %v4498
        %v5299 = vadd.f32 %v2899, %v4499
        %v5300 = vadd.f32 %v2900, %v4500
        %v5301 = vadd.f32 %v2901, %v4501
        %v5302 = vadd.f32 %v2902, %v4502
        %v5303 = vadd.f32 %v2903, %v4503
        %v5304 = vadd.f32 %v2904, %v4504
        %v5305 = vadd.f32 %v2905, %v4505
        %v5306 = vadd.f32 %v2906, %v4506
        %v5307 = vadd.f32 %v2907, %v4507
        %v5308 = vadd.f32 %v2908, %v4508
        %v5309 = vadd.f32 %v2909, %v4509
        %v5310 = vadd.f32 %v2910, %v4510
        %v5311 = vadd.f32 %v2911, %v4511
        %5312 = vst [vmem:[%s240] sm:$0xff] %v4512
        %5313 = vst [vmem:[%s240 + $0x8] sm:$0xff] %v4513
        %5314 = vst [vmem:[%s240 + $0x10] sm:$0xff] %v4514
        %5315 = vst [vmem:[%s240 + $0x18] sm:$0xff] %v4515
        %5316 = vst [vmem:[%s240 + $0x20] sm:$0xff] %v4516
        %5317 = vst [vmem:[%s240 + $0x28] sm:$0xff] %v4517
        %5318 = vst [vmem:[%s240 + $0x30] sm:$0xff] %v4518
        %5319 = vst [vmem:[%s240 + $0x38] sm:$0xff] %v4519
        %5320 = vst [vmem:[%s240 + $0x40] sm:$0xff] %v4520
        %5321 = vst [vmem:[%s240 + $0x48] sm:$0xff] %v4521
        %5322 = vst [vmem:[%s240 + $0x50] sm:$0xff] %v4522
        %5323 = vst [vmem:[%s240 + $0x58] sm:$0xff] %v4523
        %5324 = vst [vmem:[%s240 + $0x60] sm:$0xff] %v4524
        %5325 = vst [vmem:[%s240 + $0x68] sm:$0xff] %v4525
        %5326 = vst [vmem:[%s240 + $0x70] sm:$0xff] %v4526
        %5327 = vst [vmem:[%s240 + $0x78] sm:$0xff] %v4527
        %5328 = vst [vmem:[%s240 + $0x80] sm:$0xff] %v4528
        %5329 = vst [vmem:[%s240 + $0x88] sm:$0xff] %v4529
        %5330 = vst [vmem:[%s240 + $0x90] sm:$0xff] %v4530
        %5331 = vst [vmem:[%s240 + $0x98] sm:$0xff] %v4531
        %5332 = vst [vmem:[%s240 + $0xa0] sm:$0xff] %v4532
        %5333 = vst [vmem:[%s240 + $0xa8] sm:$0xff] %v4533
        %5334 = vst [vmem:[%s240 + $0xb0] sm:$0xff] %v4534
        %5335 = vst [vmem:[%s240 + $0xb8] sm:$0xff] %v4535
        %5336 = vst [vmem:[%s240 + $0xc0] sm:$0xff] %v4536
        %5337 = vst [vmem:[%s240 + $0xc8] sm:$0xff] %v4537
        %5338 = vst [vmem:[%s240 + $0xd0] sm:$0xff] %v4538
        %5339 = vst [vmem:[%s240 + $0xd8] sm:$0xff] %v4539
        %5340 = vst [vmem:[%s240 + $0xe0] sm:$0xff] %v4540
        %5341 = vst [vmem:[%s240 + $0xe8] sm:$0xff] %v4541
        %5342 = vst [vmem:[%s240 + $0xf0] sm:$0xff] %v4542
        %5343 = vst [vmem:[%s240 + $0xf8] sm:$0xff] %v4543
        %5344 = vst [vmem:[%s240 + $0x100] sm:$0xff] %v4544
        %5345 = vst [vmem:[%s240 + $0x108] sm:$0xff] %v4545
        %5346 = vst [vmem:[%s240 + $0x110] sm:$0xff] %v4546
        %5347 = vst [vmem:[%s240 + $0x118] sm:$0xff] %v4547
        %5348 = vst [vmem:[%s240 + $0x120] sm:$0xff] %v4548
        %5349 = vst [vmem:[%s240 + $0x128] sm:$0xff] %v4549
        %5350 = vst [vmem:[%s240 + $0x130] sm:$0xff] %v4550
        %5351 = vst [vmem:[%s240 + $0x138] sm:$0xff] %v4551
        %5352 = vst [vmem:[%s240 + $0x140] sm:$0xff] %v4552
        %5353 = vst [vmem:[%s240 + $0x148] sm:$0xff] %v4553
        %5354 = vst [vmem:[%s240 + $0x150] sm:$0xff] %v4554
        %5355 = vst [vmem:[%s240 + $0x158] sm:$0xff] %v4555
        %5356 = vst [vmem:[%s240 + $0x160] sm:$0xff] %v4556
        %5357 = vst [vmem:[%s240 + $0x168] sm:$0xff] %v4557
        %5358 = vst [vmem:[%s240 + $0x170] sm:$0xff] %v4558
        %5359 = vst [vmem:[%s240 + $0x178] sm:$0xff] %v4559
        %5360 = vst [vmem:[%s240 + $0x180] sm:$0xff] %v4560
        %5361 = vst [vmem:[%s240 + $0x188] sm:$0xff] %v4561
        %5362 = vst [vmem:[%s240 + $0x190] sm:$0xff] %v4562
        %5363 = vst [vmem:[%s240 + $0x198] sm:$0xff] %v4563
        %5364 = vst [vmem:[%s240 + $0x1a0] sm:$0xff] %v4564
        %5365 = vst [vmem:[%s240 + $0x1a8] sm:$0xff] %v4565
        %5366 = vst [vmem:[%s240 + $0x1b0] sm:$0xff] %v4566
        %5367 = vst [vmem:[%s240 + $0x1b8] sm:$0xff] %v4567
        %5368 = vst [vmem:[%s240 + $0x1c0] sm:$0xff] %v4568
        %5369 = vst [vmem:[%s240 + $0x1c8] sm:$0xff] %v4569
        %5370 = vst [vmem:[%s240 + $0x1d0] sm:$0xff] %v4570
        %5371 = vst [vmem:[%s240 + $0x1d8] sm:$0xff] %v4571
        %5372 = vst [vmem:[%s240 + $0x1e0] sm:$0xff] %v4572
        %5373 = vst [vmem:[%s240 + $0x1e8] sm:$0xff] %v4573
        %5374 = vst [vmem:[%s240 + $0x1f0] sm:$0xff] %v4574
        %5375 = vst [vmem:[%s240 + $0x1f8] sm:$0xff] %v4575
        %5376 = vst [vmem:[%s240 + $0x200] sm:$0xff] %v4576
        %5377 = vst [vmem:[%s240 + $0x208] sm:$0xff] %v4577
        %5378 = vst [vmem:[%s240 + $0x210] sm:$0xff] %v4578
        %5379 = vst [vmem:[%s240 + $0x218] sm:$0xff] %v4579
        %5380 = vst [vmem:[%s240 + $0x220] sm:$0xff] %v4580
        %5381 = vst [vmem:[%s240 + $0x228] sm:$0xff] %v4581
        %5382 = vst [vmem:[%s240 + $0x230] sm:$0xff] %v4582
        %5383 = vst [vmem:[%s240 + $0x238] sm:$0xff] %v4583
        %5384 = vst [vmem:[%s240 + $0x240] sm:$0xff] %v4584
        %5385 = vst [vmem:[%s240 + $0x248] sm:$0xff] %v4585
        %5386 = vst [vmem:[%s240 + $0x250] sm:$0xff] %v4586
        %5387 = vst [vmem:[%s240 + $0x258] sm:$0xff] %v4587
        %5388 = vst [vmem:[%s240 + $0x260] sm:$0xff] %v4588
        %5389 = vst [vmem:[%s240 + $0x268] sm:$0xff] %v4589
        %5390 = vst [vmem:[%s240 + $0x270] sm:$0xff] %v4590
        %5391 = vst [vmem:[%s240 + $0x278] sm:$0xff] %v4591
        %5392 = vst [vmem:[%s240 + $0x280] sm:$0xff] %v4592
        %5393 = vst [vmem:[%s240 + $0x288] sm:$0xff] %v4593
        %5394 = vst [vmem:[%s240 + $0x290] sm:$0xff] %v4594
        %5395 = vst [vmem:[%s240 + $0x298] sm:$0xff] %v4595
        %5396 = vst [vmem:[%s240 + $0x2a0] sm:$0xff] %v4596
        %5397 = vst [vmem:[%s240 + $0x2a8] sm:$0xff] %v4597
        %5398 = vst [vmem:[%s240 + $0x2b0] sm:$0xff] %v4598
        %5399 = vst [vmem:[%s240 + $0x2b8] sm:$0xff] %v4599
        %5400 = vst [vmem:[%s240 + $0x2c0] sm:$0xff] %v4600
        %5401 = vst [vmem:[%s240 + $0x2c8] sm:$0xff] %v4601
        %5402 = vst [vmem:[%s240 + $0x2d0] sm:$0xff] %v4602
        %5403 = vst [vmem:[%s240 + $0x2d8] sm:$0xff] %v4603
        %5404 = vst [vmem:[%s240 + $0x2e0] sm:$0xff] %v4604
        %5405 = vst [vmem:[%s240 + $0x2e8] sm:$0xff] %v4605
        %5406 = vst [vmem:[%s240 + $0x2f0] sm:$0xff] %v4606
        %5407 = vst [vmem:[%s240 + $0x2f8] sm:$0xff] %v4607
        %5408 = vst [vmem:[%s240 + $0x300] sm:$0xff] %v4608
        %5409 = vst [vmem:[%s240 + $0x308] sm:$0xff] %v4609
        %5410 = vst [vmem:[%s240 + $0x310] sm:$0xff] %v4610
        %5411 = vst [vmem:[%s240 + $0x318] sm:$0xff] %v4611
        %5412 = vst [vmem:[%s240 + $0x320] sm:$0xff] %v4612
        %5413 = vst [vmem:[%s240 + $0x328] sm:$0xff] %v4613
        %5414 = vst [vmem:[%s240 + $0x330] sm:$0xff] %v4614
        %5415 = vst [vmem:[%s240 + $0x338] sm:$0xff] %v4615
        %5416 = vst [vmem:[%s240 + $0x340] sm:$0xff] %v4616
        %5417 = vst [vmem:[%s240 + $0x348] sm:$0xff] %v4617
        %5418 = vst [vmem:[%s240 + $0x350] sm:$0xff] %v4618
        %5419 = vst [vmem:[%s240 + $0x358] sm:$0xff] %v4619
        %5420 = vst [vmem:[%s240 + $0x360] sm:$0xff] %v4620
        %5421 = vst [vmem:[%s240 + $0x368] sm:$0xff] %v4621
        %5422 = vst [vmem:[%s240 + $0x370] sm:$0xff] %v4622
        %5423 = vst [vmem:[%s240 + $0x378] sm:$0xff] %v4623
        %5424 = vst [vmem:[%s240 + $0x380] sm:$0xff] %v4624
        %5425 = vst [vmem:[%s240 + $0x388] sm:$0xff] %v4625
        %5426 = vst [vmem:[%s240 + $0x390] sm:$0xff] %v4626
        %5427 = vst [vmem:[%s240 + $0x398] sm:$0xff] %v4627
        %5428 = vst [vmem:[%s240 + $0x3a0] sm:$0xff] %v4628
        %5429 = vst [vmem:[%s240 + $0x3a8] sm:$0xff] %v4629
        %5430 = vst [vmem:[%s240 + $0x3b0] sm:$0xff] %v4630
        %5431 = vst [vmem:[%s240 + $0x3b8] sm:$0xff] %v4631
        %5432 = vst [vmem:[%s240 + $0x3c0] sm:$0xff] %v4632
        %5433 = vst [vmem:[%s240 + $0x3c8] sm:$0xff] %v4633
        %5434 = vst [vmem:[%s240 + $0x3d0] sm:$0xff] %v4634
        %5435 = vst [vmem:[%s240 + $0x3d8] sm:$0xff] %v4635
        %5436 = vst [vmem:[%s240 + $0x3e0] sm:$0xff] %v4636
        %5437 = vst [vmem:[%s240 + $0x3e8] sm:$0xff] %v4637
        %5438 = vst [vmem:[%s240 + $0x3f0] sm:$0xff] %v4638
        %5439 = vst [vmem:[%s240 + $0x3f8] sm:$0xff] %v4639
        %5440 = vst [vmem:[%s240 + $0x400] sm:$0xff] %v4640
        %5441 = vst [vmem:[%s240 + $0x408] sm:$0xff] %v4641
        %5442 = vst [vmem:[%s240 + $0x410] sm:$0xff] %v4642
        %5443 = vst [vmem:[%s240 + $0x418] sm:$0xff] %v4643
        %5444 = vst [vmem:[%s240 + $0x420] sm:$0xff] %v4644
        %5445 = vst [vmem:[%s240 + $0x428] sm:$0xff] %v4645
        %5446 = vst [vmem:[%s240 + $0x430] sm:$0xff] %v4646
        %5447 = vst [vmem:[%s240 + $0x438] sm:$0xff] %v4647
        %5448 = vst [vmem:[%s240 + $0x440] sm:$0xff] %v4648
        %5449 = vst [vmem:[%s240 + $0x448] sm:$0xff] %v4649
        %5450 = vst [vmem:[%s240 + $0x450] sm:$0xff] %v4650
        %5451 = vst [vmem:[%s240 + $0x458] sm:$0xff] %v4651
        %5452 = vst [vmem:[%s240 + $0x460] sm:$0xff] %v4652
        %5453 = vst [vmem:[%s240 + $0x468] sm:$0xff] %v4653
        %5454 = vst [vmem:[%s240 + $0x470] sm:$0xff] %v4654
        %5455 = vst [vmem:[%s240 + $0x478] sm:$0xff] %v4655
        %5456 = vst [vmem:[%s240 + $0x480] sm:$0xff] %v4656
        %5457 = vst [vmem:[%s240 + $0x488] sm:$0xff] %v4657
        %5458 = vst [vmem:[%s240 + $0x490] sm:$0xff] %v4658
        %5459 = vst [vmem:[%s240 + $0x498] sm:$0xff] %v4659
        %5460 = vst [vmem:[%s240 + $0x4a0] sm:$0xff] %v4660
        %5461 = vst [vmem:[%s240 + $0x4a8] sm:$0xff] %v4661
        %5462 = vst [vmem:[%s240 + $0x4b0] sm:$0xff] %v4662
        %5463 = vst [vmem:[%s240 + $0x4b8] sm:$0xff] %v4663
        %5464 = vst [vmem:[%s240 + $0x4c0] sm:$0xff] %v4664
        %5465 = vst [vmem:[%s240 + $0x4c8] sm:$0xff] %v4665
        %5466 = vst [vmem:[%s240 + $0x4d0] sm:$0xff] %v4666
        %5467 = vst [vmem:[%s240 + $0x4d8] sm:$0xff] %v4667
        %5468 = vst [vmem:[%s240 + $0x4e0] sm:$0xff] %v4668
        %5469 = vst [vmem:[%s240 + $0x4e8] sm:$0xff] %v4669
        %5470 = vst [vmem:[%s240 + $0x4f0] sm:$0xff] %v4670
        %5471 = vst [vmem:[%s240 + $0x4f8] sm:$0xff] %v4671
        %5472 = vst [vmem:[%s240 + $0x500] sm:$0xff] %v4672
        %5473 = vst [vmem:[%s240 + $0x508] sm:$0xff] %v4673
        %5474 = vst [vmem:[%s240 + $0x510] sm:$0xff] %v4674
        %5475 = vst [vmem:[%s240 + $0x518] sm:$0xff] %v4675
        %5476 = vst [vmem:[%s240 + $0x520] sm:$0xff] %v4676
        %5477 = vst [vmem:[%s240 + $0x528] sm:$0xff] %v4677
        %5478 = vst [vmem:[%s240 + $0x530] sm:$0xff] %v4678
        %5479 = vst [vmem:[%s240 + $0x538] sm:$0xff] %v4679
        %5480 = vst [vmem:[%s240 + $0x540] sm:$0xff] %v4680
        %5481 = vst [vmem:[%s240 + $0x548] sm:$0xff] %v4681
        %5482 = vst [vmem:[%s240 + $0x550] sm:$0xff] %v4682
        %5483 = vst [vmem:[%s240 + $0x558] sm:$0xff] %v4683
        %5484 = vst [vmem:[%s240 + $0x560] sm:$0xff] %v4684
        %5485 = vst [vmem:[%s240 + $0x568] sm:$0xff] %v4685
        %5486 = vst [vmem:[%s240 + $0x570] sm:$0xff] %v4686
        %5487 = vst [vmem:[%s240 + $0x578] sm:$0xff] %v4687
        %5488 = vst [vmem:[%s240 + $0x580] sm:$0xff] %v4688
        %5489 = vst [vmem:[%s240 + $0x588] sm:$0xff] %v4689
        %5490 = vst [vmem:[%s240 + $0x590] sm:$0xff] %v4690
        %5491 = vst [vmem:[%s240 + $0x598] sm:$0xff] %v4691
        %5492 = vst [vmem:[%s240 + $0x5a0] sm:$0xff] %v4692
        %5493 = vst [vmem:[%s240 + $0x5a8] sm:$0xff] %v4693
        %5494 = vst [vmem:[%s240 + $0x5b0] sm:$0xff] %v4694
        %5495 = vst [vmem:[%s240 + $0x5b8] sm:$0xff] %v4695
        %5496 = vst [vmem:[%s240 + $0x5c0] sm:$0xff] %v4696
        %5497 = vst [vmem:[%s240 + $0x5c8] sm:$0xff] %v4697
        %5498 = vst [vmem:[%s240 + $0x5d0] sm:$0xff] %v4698
        %5499 = vst [vmem:[%s240 + $0x5d8] sm:$0xff] %v4699
        %5500 = vst [vmem:[%s240 + $0x5e0] sm:$0xff] %v4700
        %5501 = vst [vmem:[%s240 + $0x5e8] sm:$0xff] %v4701
        %5502 = vst [vmem:[%s240 + $0x5f0] sm:$0xff] %v4702
        %5503 = vst [vmem:[%s240 + $0x5f8] sm:$0xff] %v4703
        %5504 = vst [vmem:[%s240 + $0x600] sm:$0xff] %v4704
        %5505 = vst [vmem:[%s240 + $0x608] sm:$0xff] %v4705
        %5506 = vst [vmem:[%s240 + $0x610] sm:$0xff] %v4706
        %5507 = vst [vmem:[%s240 + $0x618] sm:$0xff] %v4707
        %5508 = vst [vmem:[%s240 + $0x620] sm:$0xff] %v4708
        %5509 = vst [vmem:[%s240 + $0x628] sm:$0xff] %v4709
        %5510 = vst [vmem:[%s240 + $0x630] sm:$0xff] %v4710
        %5511 = vst [vmem:[%s240 + $0x638] sm:$0xff] %v4711
        %5512 = vst [vmem:[%s240 + $0x640] sm:$0xff] %v4712
        %5513 = vst [vmem:[%s240 + $0x648] sm:$0xff] %v4713
        %5514 = vst [vmem:[%s240 + $0x650] sm:$0xff] %v4714
        %5515 = vst [vmem:[%s240 + $0x658] sm:$0xff] %v4715
        %5516 = vst [vmem:[%s240 + $0x660] sm:$0xff] %v4716
        %5517 = vst [vmem:[%s240 + $0x668] sm:$0xff] %v4717
        %5518 = vst [vmem:[%s240 + $0x670] sm:$0xff] %v4718
        %5519 = vst [vmem:[%s240 + $0x678] sm:$0xff] %v4719
        %5520 = vst [vmem:[%s240 + $0x680] sm:$0xff] %v4720
        %5521 = vst [vmem:[%s240 + $0x688] sm:$0xff] %v4721
        %5522 = vst [vmem:[%s240 + $0x690] sm:$0xff] %v4722
        %5523 = vst [vmem:[%s240 + $0x698] sm:$0xff] %v4723
        %5524 = vst [vmem:[%s240 + $0x6a0] sm:$0xff] %v4724
        %5525 = vst [vmem:[%s240 + $0x6a8] sm:$0xff] %v4725
        %5526 = vst [vmem:[%s240 + $0x6b0] sm:$0xff] %v4726
        %5527 = vst [vmem:[%s240 + $0x6b8] sm:$0xff] %v4727
        %5528 = vst [vmem:[%s240 + $0x6c0] sm:$0xff] %v4728
        %5529 = vst [vmem:[%s240 + $0x6c8] sm:$0xff] %v4729
        %5530 = vst [vmem:[%s240 + $0x6d0] sm:$0xff] %v4730
        %5531 = vst [vmem:[%s240 + $0x6d8] sm:$0xff] %v4731
        %5532 = vst [vmem:[%s240 + $0x6e0] sm:$0xff] %v4732
        %5533 = vst [vmem:[%s240 + $0x6e8] sm:$0xff] %v4733
        %5534 = vst [vmem:[%s240 + $0x6f0] sm:$0xff] %v4734
        %5535 = vst [vmem:[%s240 + $0x6f8] sm:$0xff] %v4735
        %5536 = vst [vmem:[%s240 + $0x700] sm:$0xff] %v4736
        %5537 = vst [vmem:[%s240 + $0x708] sm:$0xff] %v4737
        %5538 = vst [vmem:[%s240 + $0x710] sm:$0xff] %v4738
        %5539 = vst [vmem:[%s240 + $0x718] sm:$0xff] %v4739
        %5540 = vst [vmem:[%s240 + $0x720] sm:$0xff] %v4740
        %5541 = vst [vmem:[%s240 + $0x728] sm:$0xff] %v4741
        %5542 = vst [vmem:[%s240 + $0x730] sm:$0xff] %v4742
        %5543 = vst [vmem:[%s240 + $0x738] sm:$0xff] %v4743
        %5544 = vst [vmem:[%s240 + $0x740] sm:$0xff] %v4744
        %5545 = vst [vmem:[%s240 + $0x748] sm:$0xff] %v4745
        %5546 = vst [vmem:[%s240 + $0x750] sm:$0xff] %v4746
        %5547 = vst [vmem:[%s240 + $0x758] sm:$0xff] %v4747
        %5548 = vst [vmem:[%s240 + $0x760] sm:$0xff] %v4748
        %5549 = vst [vmem:[%s240 + $0x768] sm:$0xff] %v4749
        %5550 = vst [vmem:[%s240 + $0x770] sm:$0xff] %v4750
        %5551 = vst [vmem:[%s240 + $0x778] sm:$0xff] %v4751
        %5552 = vst [vmem:[%s240 + $0x780] sm:$0xff] %v4752
        %5553 = vst [vmem:[%s240 + $0x788] sm:$0xff] %v4753
        %5554 = vst [vmem:[%s240 + $0x790] sm:$0xff] %v4754
        %5555 = vst [vmem:[%s240 + $0x798] sm:$0xff] %v4755
        %5556 = vst [vmem:[%s240 + $0x7a0] sm:$0xff] %v4756
        %5557 = vst [vmem:[%s240 + $0x7a8] sm:$0xff] %v4757
        %5558 = vst [vmem:[%s240 + $0x7b0] sm:$0xff] %v4758
        %5559 = vst [vmem:[%s240 + $0x7b8] sm:$0xff] %v4759
        %5560 = vst [vmem:[%s240 + $0x7c0] sm:$0xff] %v4760
        %5561 = vst [vmem:[%s240 + $0x7c8] sm:$0xff] %v4761
        %5562 = vst [vmem:[%s240 + $0x7d0] sm:$0xff] %v4762
        %5563 = vst [vmem:[%s240 + $0x7d8] sm:$0xff] %v4763
        %5564 = vst [vmem:[%s240 + $0x7e0] sm:$0xff] %v4764
        %5565 = vst [vmem:[%s240 + $0x7e8] sm:$0xff] %v4765
        %5566 = vst [vmem:[%s240 + $0x7f0] sm:$0xff] %v4766
        %5567 = vst [vmem:[%s240 + $0x7f8] sm:$0xff] %v4767
        %5568 = vst [vmem:[%s240 + $0x800] sm:$0xff] %v4768
        %5569 = vst [vmem:[%s240 + $0x808] sm:$0xff] %v4769
        %5570 = vst [vmem:[%s240 + $0x810] sm:$0xff] %v4770
        %5571 = vst [vmem:[%s240 + $0x818] sm:$0xff] %v4771
        %5572 = vst [vmem:[%s240 + $0x820] sm:$0xff] %v4772
        %5573 = vst [vmem:[%s240 + $0x828] sm:$0xff] %v4773
        %5574 = vst [vmem:[%s240 + $0x830] sm:$0xff] %v4774
        %5575 = vst [vmem:[%s240 + $0x838] sm:$0xff] %v4775
        %5576 = vst [vmem:[%s240 + $0x840] sm:$0xff] %v4776
        %5577 = vst [vmem:[%s240 + $0x848] sm:$0xff] %v4777
        %5578 = vst [vmem:[%s240 + $0x850] sm:$0xff] %v4778
        %5579 = vst [vmem:[%s240 + $0x858] sm:$0xff] %v4779
        %5580 = vst [vmem:[%s240 + $0x860] sm:$0xff] %v4780
        %5581 = vst [vmem:[%s240 + $0x868] sm:$0xff] %v4781
        %5582 = vst [vmem:[%s240 + $0x870] sm:$0xff] %v4782
        %5583 = vst [vmem:[%s240 + $0x878] sm:$0xff] %v4783
        %5584 = vst [vmem:[%s240 + $0x880] sm:$0xff] %v4784
        %5585 = vst [vmem:[%s240 + $0x888] sm:$0xff] %v4785
        %5586 = vst [vmem:[%s240 + $0x890] sm:$0xff] %v4786
        %5587 = vst [vmem:[%s240 + $0x898] sm:$0xff] %v4787
        %5588 = vst [vmem:[%s240 + $0x8a0] sm:$0xff] %v4788
        %5589 = vst [vmem:[%s240 + $0x8a8] sm:$0xff] %v4789
        %5590 = vst [vmem:[%s240 + $0x8b0] sm:$0xff] %v4790
        %5591 = vst [vmem:[%s240 + $0x8b8] sm:$0xff] %v4791
        %5592 = vst [vmem:[%s240 + $0x8c0] sm:$0xff] %v4792
        %5593 = vst [vmem:[%s240 + $0x8c8] sm:$0xff] %v4793
        %5594 = vst [vmem:[%s240 + $0x8d0] sm:$0xff] %v4794
        %5595 = vst [vmem:[%s240 + $0x8d8] sm:$0xff] %v4795
        %5596 = vst [vmem:[%s240 + $0x8e0] sm:$0xff] %v4796
        %5597 = vst [vmem:[%s240 + $0x8e8] sm:$0xff] %v4797
        %5598 = vst [vmem:[%s240 + $0x8f0] sm:$0xff] %v4798
        %5599 = vst [vmem:[%s240 + $0x8f8] sm:$0xff] %v4799
        %5600 = vst [vmem:[%s240 + $0x900] sm:$0xff] %v4800
        %5601 = vst [vmem:[%s240 + $0x908] sm:$0xff] %v4801
        %5602 = vst [vmem:[%s240 + $0x910] sm:$0xff] %v4802
        %5603 = vst [vmem:[%s240 + $0x918] sm:$0xff] %v4803
        %5604 = vst [vmem:[%s240 + $0x920] sm:$0xff] %v4804
        %5605 = vst [vmem:[%s240 + $0x928] sm:$0xff] %v4805
        %5606 = vst [vmem:[%s240 + $0x930] sm:$0xff] %v4806
        %5607 = vst [vmem:[%s240 + $0x938] sm:$0xff] %v4807
        %5608 = vst [vmem:[%s240 + $0x940] sm:$0xff] %v4808
        %5609 = vst [vmem:[%s240 + $0x948] sm:$0xff] %v4809
        %5610 = vst [vmem:[%s240 + $0x950] sm:$0xff] %v4810
        %5611 = vst [vmem:[%s240 + $0x958] sm:$0xff] %v4811
        %5612 = vst [vmem:[%s240 + $0x960] sm:$0xff] %v4812
        %5613 = vst [vmem:[%s240 + $0x968] sm:$0xff] %v4813
        %5614 = vst [vmem:[%s240 + $0x970] sm:$0xff] %v4814
        %5615 = vst [vmem:[%s240 + $0x978] sm:$0xff] %v4815
        %5616 = vst [vmem:[%s240 + $0x980] sm:$0xff] %v4816
        %5617 = vst [vmem:[%s240 + $0x988] sm:$0xff] %v4817
        %5618 = vst [vmem:[%s240 + $0x990] sm:$0xff] %v4818
        %5619 = vst [vmem:[%s240 + $0x998] sm:$0xff] %v4819
        %5620 = vst [vmem:[%s240 + $0x9a0] sm:$0xff] %v4820
        %5621 = vst [vmem:[%s240 + $0x9a8] sm:$0xff] %v4821
        %5622 = vst [vmem:[%s240 + $0x9b0] sm:$0xff] %v4822
        %5623 = vst [vmem:[%s240 + $0x9b8] sm:$0xff] %v4823
        %5624 = vst [vmem:[%s240 + $0x9c0] sm:$0xff] %v4824
        %5625 = vst [vmem:[%s240 + $0x9c8] sm:$0xff] %v4825
        %5626 = vst [vmem:[%s240 + $0x9d0] sm:$0xff] %v4826
        %5627 = vst [vmem:[%s240 + $0x9d8] sm:$0xff] %v4827
        %5628 = vst [vmem:[%s240 + $0x9e0] sm:$0xff] %v4828
        %5629 = vst [vmem:[%s240 + $0x9e8] sm:$0xff] %v4829
        %5630 = vst [vmem:[%s240 + $0x9f0] sm:$0xff] %v4830
        %5631 = vst [vmem:[%s240 + $0x9f8] sm:$0xff] %v4831
        %5632 = vst [vmem:[%s240 + $0xa00] sm:$0xff] %v4832
        %5633 = vst [vmem:[%s240 + $0xa08] sm:$0xff] %v4833
        %5634 = vst [vmem:[%s240 + $0xa10] sm:$0xff] %v4834
        %5635 = vst [vmem:[%s240 + $0xa18] sm:$0xff] %v4835
        %5636 = vst [vmem:[%s240 + $0xa20] sm:$0xff] %v4836
        %5637 = vst [vmem:[%s240 + $0xa28] sm:$0xff] %v4837
        %5638 = vst [vmem:[%s240 + $0xa30] sm:$0xff] %v4838
        %5639 = vst [vmem:[%s240 + $0xa38] sm:$0xff] %v4839
        %5640 = vst [vmem:[%s240 + $0xa40] sm:$0xff] %v4840
        %5641 = vst [vmem:[%s240 + $0xa48] sm:$0xff] %v4841
        %5642 = vst [vmem:[%s240 + $0xa50] sm:$0xff] %v4842
        %5643 = vst [vmem:[%s240 + $0xa58] sm:$0xff] %v4843
        %5644 = vst [vmem:[%s240 + $0xa60] sm:$0xff] %v4844
        %5645 = vst [vmem:[%s240 + $0xa68] sm:$0xff] %v4845
        %5646 = vst [vmem:[%s240 + $0xa70] sm:$0xff] %v4846
        %5647 = vst [vmem:[%s240 + $0xa78] sm:$0xff] %v4847
        %5648 = vst [vmem:[%s240 + $0xa80] sm:$0xff] %v4848
        %5649 = vst [vmem:[%s240 + $0xa88] sm:$0xff] %v4849
        %5650 = vst [vmem:[%s240 + $0xa90] sm:$0xff] %v4850
        %5651 = vst [vmem:[%s240 + $0xa98] sm:$0xff] %v4851
        %5652 = vst [vmem:[%s240 + $0xaa0] sm:$0xff] %v4852
        %5653 = vst [vmem:[%s240 + $0xaa8] sm:$0xff] %v4853
        %5654 = vst [vmem:[%s240 + $0xab0] sm:$0xff] %v4854
        %5655 = vst [vmem:[%s240 + $0xab8] sm:$0xff] %v4855
        %5656 = vst [vmem:[%s240 + $0xac0] sm:$0xff] %v4856
        %5657 = vst [vmem:[%s240 + $0xac8] sm:$0xff] %v4857
        %5658 = vst [vmem:[%s240 + $0xad0] sm:$0xff] %v4858
        %5659 = vst [vmem:[%s240 + $0xad8] sm:$0xff] %v4859
        %5660 = vst [vmem:[%s240 + $0xae0] sm:$0xff] %v4860
        %5661 = vst [vmem:[%s240 + $0xae8] sm:$0xff] %v4861
        %5662 = vst [vmem:[%s240 + $0xaf0] sm:$0xff] %v4862
        %5663 = vst [vmem:[%s240 + $0xaf8] sm:$0xff] %v4863
        %5664 = vst [vmem:[%s240 + $0xb00] sm:$0xff] %v4864
        %5665 = vst [vmem:[%s240 + $0xb08] sm:$0xff] %v4865
        %5666 = vst [vmem:[%s240 + $0xb10] sm:$0xff] %v4866
        %5667 = vst [vmem:[%s240 + $0xb18] sm:$0xff] %v4867
        %5668 = vst [vmem:[%s240 + $0xb20] sm:$0xff] %v4868
        %5669 = vst [vmem:[%s240 + $0xb28] sm:$0xff] %v4869
        %5670 = vst [vmem:[%s240 + $0xb30] sm:$0xff] %v4870
        %5671 = vst [vmem:[%s240 + $0xb38] sm:$0xff] %v4871
        %5672 = vst [vmem:[%s240 + $0xb40] sm:$0xff] %v4872
        %5673 = vst [vmem:[%s240 + $0xb48] sm:$0xff] %v4873
        %5674 = vst [vmem:[%s240 + $0xb50] sm:$0xff] %v4874
        %5675 = vst [vmem:[%s240 + $0xb58] sm:$0xff] %v4875
        %5676 = vst [vmem:[%s240 + $0xb60] sm:$0xff] %v4876
        %5677 = vst [vmem:[%s240 + $0xb68] sm:$0xff] %v4877
        %5678 = vst [vmem:[%s240 + $0xb70] sm:$0xff] %v4878
        %5679 = vst [vmem:[%s240 + $0xb78] sm:$0xff] %v4879
        %5680 = vst [vmem:[%s240 + $0xb80] sm:$0xff] %v4880
        %5681 = vst [vmem:[%s240 + $0xb88] sm:$0xff] %v4881
        %5682 = vst [vmem:[%s240 + $0xb90] sm:$0xff] %v4882
        %5683 = vst [vmem:[%s240 + $0xb98] sm:$0xff] %v4883
        %5684 = vst [vmem:[%s240 + $0xba0] sm:$0xff] %v4884
        %5685 = vst [vmem:[%s240 + $0xba8] sm:$0xff] %v4885
        %5686 = vst [vmem:[%s240 + $0xbb0] sm:$0xff] %v4886
        %5687 = vst [vmem:[%s240 + $0xbb8] sm:$0xff] %v4887
        %5688 = vst [vmem:[%s240 + $0xbc0] sm:$0xff] %v4888
        %5689 = vst [vmem:[%s240 + $0xbc8] sm:$0xff] %v4889
        %5690 = vst [vmem:[%s240 + $0xbd0] sm:$0xff] %v4890
        %5691 = vst [vmem:[%s240 + $0xbd8] sm:$0xff] %v4891
        %5692 = vst [vmem:[%s240 + $0xbe0] sm:$0xff] %v4892
        %5693 = vst [vmem:[%s240 + $0xbe8] sm:$0xff] %v4893
        %5694 = vst [vmem:[%s240 + $0xbf0] sm:$0xff] %v4894
        %5695 = vst [vmem:[%s240 + $0xbf8] sm:$0xff] %v4895
        %5696 = vst [vmem:[%s240 + $0xc00] sm:$0xff] %v4896
        %5697 = vst [vmem:[%s240 + $0xc08] sm:$0xff] %v4897
        %5698 = vst [vmem:[%s240 + $0xc10] sm:$0xff] %v4898
        %5699 = vst [vmem:[%s240 + $0xc18] sm:$0xff] %v4899
        %5700 = vst [vmem:[%s240 + $0xc20] sm:$0xff] %v4900
        %5701 = vst [vmem:[%s240 + $0xc28] sm:$0xff] %v4901
        %5702 = vst [vmem:[%s240 + $0xc30] sm:$0xff] %v4902
        %5703 = vst [vmem:[%s240 + $0xc38] sm:$0xff] %v4903
        %5704 = vst [vmem:[%s240 + $0xc40] sm:$0xff] %v4904
        %5705 = vst [vmem:[%s240 + $0xc48] sm:$0xff] %v4905
        %5706 = vst [vmem:[%s240 + $0xc50] sm:$0xff] %v4906
        %5707 = vst [vmem:[%s240 + $0xc58] sm:$0xff] %v4907
        %5708 = vst [vmem:[%s240 + $0xc60] sm:$0xff] %v4908
        %5709 = vst [vmem:[%s240 + $0xc68] sm:$0xff] %v4909
        %5710 = vst [vmem:[%s240 + $0xc70] sm:$0xff] %v4910
        %5711 = vst [vmem:[%s240 + $0xc78] sm:$0xff] %v4911
        %5712 = vst [vmem:[%s240 + $0xc80] sm:$0xff] %v4912
        %5713 = vst [vmem:[%s240 + $0xc88] sm:$0xff] %v4913
        %5714 = vst [vmem:[%s240 + $0xc90] sm:$0xff] %v4914
        %5715 = vst [vmem:[%s240 + $0xc98] sm:$0xff] %v4915
        %5716 = vst [vmem:[%s240 + $0xca0] sm:$0xff] %v4916
        %5717 = vst [vmem:[%s240 + $0xca8] sm:$0xff] %v4917
        %5718 = vst [vmem:[%s240 + $0xcb0] sm:$0xff] %v4918
        %5719 = vst [vmem:[%s240 + $0xcb8] sm:$0xff] %v4919
        %5720 = vst [vmem:[%s240 + $0xcc0] sm:$0xff] %v4920
        %5721 = vst [vmem:[%s240 + $0xcc8] sm:$0xff] %v4921
        %5722 = vst [vmem:[%s240 + $0xcd0] sm:$0xff] %v4922
        %5723 = vst [vmem:[%s240 + $0xcd8] sm:$0xff] %v4923
        %5724 = vst [vmem:[%s240 + $0xce0] sm:$0xff] %v4924
        %5725 = vst [vmem:[%s240 + $0xce8] sm:$0xff] %v4925
        %5726 = vst [vmem:[%s240 + $0xcf0] sm:$0xff] %v4926
        %5727 = vst [vmem:[%s240 + $0xcf8] sm:$0xff] %v4927
        %5728 = vst [vmem:[%s240 + $0xd00] sm:$0xff] %v4928
        %5729 = vst [vmem:[%s240 + $0xd08] sm:$0xff] %v4929
        %5730 = vst [vmem:[%s240 + $0xd10] sm:$0xff] %v4930
        %5731 = vst [vmem:[%s240 + $0xd18] sm:$0xff] %v4931
        %5732 = vst [vmem:[%s240 + $0xd20] sm:$0xff] %v4932
        %5733 = vst [vmem:[%s240 + $0xd28] sm:$0xff] %v4933
        %5734 = vst [vmem:[%s240 + $0xd30] sm:$0xff] %v4934
        %5735 = vst [vmem:[%s240 + $0xd38] sm:$0xff] %v4935
        %5736 = vst [vmem:[%s240 + $0xd40] sm:$0xff] %v4936
        %5737 = vst [vmem:[%s240 + $0xd48] sm:$0xff] %v4937
        %5738 = vst [vmem:[%s240 + $0xd50] sm:$0xff] %v4938
        %5739 = vst [vmem:[%s240 + $0xd58] sm:$0xff] %v4939
        %5740 = vst [vmem:[%s240 + $0xd60] sm:$0xff] %v4940
        %5741 = vst [vmem:[%s240 + $0xd68] sm:$0xff] %v4941
        %5742 = vst [vmem:[%s240 + $0xd70] sm:$0xff] %v4942
        %5743 = vst [vmem:[%s240 + $0xd78] sm:$0xff] %v4943
        %5744 = vst [vmem:[%s240 + $0xd80] sm:$0xff] %v4944
        %5745 = vst [vmem:[%s240 + $0xd88] sm:$0xff] %v4945
        %5746 = vst [vmem:[%s240 + $0xd90] sm:$0xff] %v4946
        %5747 = vst [vmem:[%s240 + $0xd98] sm:$0xff] %v4947
        %5748 = vst [vmem:[%s240 + $0xda0] sm:$0xff] %v4948
        %5749 = vst [vmem:[%s240 + $0xda8] sm:$0xff] %v4949
        %5750 = vst [vmem:[%s240 + $0xdb0] sm:$0xff] %v4950
        %5751 = vst [vmem:[%s240 + $0xdb8] sm:$0xff] %v4951
        %5752 = vst [vmem:[%s240 + $0xdc0] sm:$0xff] %v4952
        %5753 = vst [vmem:[%s240 + $0xdc8] sm:$0xff] %v4953
        %5754 = vst [vmem:[%s240 + $0xdd0] sm:$0xff] %v4954
        %5755 = vst [vmem:[%s240 + $0xdd8] sm:$0xff] %v4955
        %5756 = vst [vmem:[%s240 + $0xde0] sm:$0xff] %v4956
        %5757 = vst [vmem:[%s240 + $0xde8] sm:$0xff] %v4957
        %5758 = vst [vmem:[%s240 + $0xdf0] sm:$0xff] %v4958
        %5759 = vst [vmem:[%s240 + $0xdf8] sm:$0xff] %v4959
        %5760 = vst [vmem:[%s240 + $0xe00] sm:$0xff] %v4960
        %5761 = vst [vmem:[%s240 + $0xe08] sm:$0xff] %v4961
        %5762 = vst [vmem:[%s240 + $0xe10] sm:$0xff] %v4962
        %5763 = vst [vmem:[%s240 + $0xe18] sm:$0xff] %v4963
        %5764 = vst [vmem:[%s240 + $0xe20] sm:$0xff] %v4964
        %5765 = vst [vmem:[%s240 + $0xe28] sm:$0xff] %v4965
        %5766 = vst [vmem:[%s240 + $0xe30] sm:$0xff] %v4966
        %5767 = vst [vmem:[%s240 + $0xe38] sm:$0xff] %v4967
        %5768 = vst [vmem:[%s240 + $0xe40] sm:$0xff] %v4968
        %5769 = vst [vmem:[%s240 + $0xe48] sm:$0xff] %v4969
        %5770 = vst [vmem:[%s240 + $0xe50] sm:$0xff] %v4970
        %5771 = vst [vmem:[%s240 + $0xe58] sm:$0xff] %v4971
        %5772 = vst [vmem:[%s240 + $0xe60] sm:$0xff] %v4972
        %5773 = vst [vmem:[%s240 + $0xe68] sm:$0xff] %v4973
        %5774 = vst [vmem:[%s240 + $0xe70] sm:$0xff] %v4974
        %5775 = vst [vmem:[%s240 + $0xe78] sm:$0xff] %v4975
        %5776 = vst [vmem:[%s240 + $0xe80] sm:$0xff] %v4976
        %5777 = vst [vmem:[%s240 + $0xe88] sm:$0xff] %v4977
        %5778 = vst [vmem:[%s240 + $0xe90] sm:$0xff] %v4978
        %5779 = vst [vmem:[%s240 + $0xe98] sm:$0xff] %v4979
        %5780 = vst [vmem:[%s240 + $0xea0] sm:$0xff] %v4980
        %5781 = vst [vmem:[%s240 + $0xea8] sm:$0xff] %v4981
        %5782 = vst [vmem:[%s240 + $0xeb0] sm:$0xff] %v4982
        %5783 = vst [vmem:[%s240 + $0xeb8] sm:$0xff] %v4983
        %5784 = vst [vmem:[%s240 + $0xec0] sm:$0xff] %v4984
        %5785 = vst [vmem:[%s240 + $0xec8] sm:$0xff] %v4985
        %5786 = vst [vmem:[%s240 + $0xed0] sm:$0xff] %v4986
        %5787 = vst [vmem:[%s240 + $0xed8] sm:$0xff] %v4987
        %5788 = vst [vmem:[%s240 + $0xee0] sm:$0xff] %v4988
        %5789 = vst [vmem:[%s240 + $0xee8] sm:$0xff] %v4989
        %5790 = vst [vmem:[%s240 + $0xef0] sm:$0xff] %v4990
        %5791 = vst [vmem:[%s240 + $0xef8] sm:$0xff] %v4991
        %5792 = vst [vmem:[%s240 + $0xf00] sm:$0xff] %v4992
        %5793 = vst [vmem:[%s240 + $0xf08] sm:$0xff] %v4993
        %5794 = vst [vmem:[%s240 + $0xf10] sm:$0xff] %v4994
        %5795 = vst [vmem:[%s240 + $0xf18] sm:$0xff] %v4995
        %5796 = vst [vmem:[%s240 + $0xf20] sm:$0xff] %v4996
        %5797 = vst [vmem:[%s240 + $0xf28] sm:$0xff] %v4997
        %5798 = vst [vmem:[%s240 + $0xf30] sm:$0xff] %v4998
        %5799 = vst [vmem:[%s240 + $0xf38] sm:$0xff] %v4999
        %5800 = vst [vmem:[%s240 + $0xf40] sm:$0xff] %v5000
        %5801 = vst [vmem:[%s240 + $0xf48] sm:$0xff] %v5001
        %5802 = vst [vmem:[%s240 + $0xf50] sm:$0xff] %v5002
        %5803 = vst [vmem:[%s240 + $0xf58] sm:$0xff] %v5003
        %5804 = vst [vmem:[%s240 + $0xf60] sm:$0xff] %v5004
        %5805 = vst [vmem:[%s240 + $0xf68] sm:$0xff] %v5005
        %5806 = vst [vmem:[%s240 + $0xf70] sm:$0xff] %v5006
        %5807 = vst [vmem:[%s240 + $0xf78] sm:$0xff] %v5007
        %5808 = vst [vmem:[%s240 + $0xf80] sm:$0xff] %v5008
        %5809 = vst [vmem:[%s240 + $0xf88] sm:$0xff] %v5009
        %5810 = vst [vmem:[%s240 + $0xf90] sm:$0xff] %v5010
        %5811 = vst [vmem:[%s240 + $0xf98] sm:$0xff] %v5011
        %5812 = vst [vmem:[%s240 + $0xfa0] sm:$0xff] %v5012
        %5813 = vst [vmem:[%s240 + $0xfa8] sm:$0xff] %v5013
        %5814 = vst [vmem:[%s240 + $0xfb0] sm:$0xff] %v5014
        %5815 = vst [vmem:[%s240 + $0xfb8] sm:$0xff] %v5015
        %5816 = vst [vmem:[%s240 + $0xfc0] sm:$0xff] %v5016
        %5817 = vst [vmem:[%s240 + $0xfc8] sm:$0xff] %v5017
        %5818 = vst [vmem:[%s240 + $0xfd0] sm:$0xff] %v5018
        %5819 = vst [vmem:[%s240 + $0xfd8] sm:$0xff] %v5019
        %5820 = vst [vmem:[%s240 + $0xfe0] sm:$0xff] %v5020
        %5821 = vst [vmem:[%s240 + $0xfe8] sm:$0xff] %v5021
        %5822 = vst [vmem:[%s240 + $0xff0] sm:$0xff] %v5022
        %5823 = vst [vmem:[%s240 + $0xff8] sm:$0xff] %v5023
        %5824 = vst [vmem:[%s240 + $0x1000] sm:$0xff] %v5024
        %5825 = vst [vmem:[%s240 + $0x1008] sm:$0xff] %v5025
        %5826 = vst [vmem:[%s240 + $0x1010] sm:$0xff] %v5026
        %5827 = vst [vmem:[%s240 + $0x1018] sm:$0xff] %v5027
        %5828 = vst [vmem:[%s240 + $0x1020] sm:$0xff] %v5028
        %5829 = vst [vmem:[%s240 + $0x1028] sm:$0xff] %v5029
        %5830 = vst [vmem:[%s240 + $0x1030] sm:$0xff] %v5030
        %5831 = vst [vmem:[%s240 + $0x1038] sm:$0xff] %v5031
        %5832 = vst [vmem:[%s240 + $0x1040] sm:$0xff] %v5032
        %5833 = vst [vmem:[%s240 + $0x1048] sm:$0xff] %v5033
        %5834 = vst [vmem:[%s240 + $0x1050] sm:$0xff] %v5034
        %5835 = vst [vmem:[%s240 + $0x1058] sm:$0xff] %v5035
        %5836 = vst [vmem:[%s240 + $0x1060] sm:$0xff] %v5036
        %5837 = vst [vmem:[%s240 + $0x1068] sm:$0xff] %v5037
        %5838 = vst [vmem:[%s240 + $0x1070] sm:$0xff] %v5038
        %5839 = vst [vmem:[%s240 + $0x1078] sm:$0xff] %v5039
        %5840 = vst [vmem:[%s240 + $0x1080] sm:$0xff] %v5040
        %5841 = vst [vmem:[%s240 + $0x1088] sm:$0xff] %v5041
        %5842 = vst [vmem:[%s240 + $0x1090] sm:$0xff] %v5042
        %5843 = vst [vmem:[%s240 + $0x1098] sm:$0xff] %v5043
        %5844 = vst [vmem:[%s240 + $0x10a0] sm:$0xff] %v5044
        %5845 = vst [vmem:[%s240 + $0x10a8] sm:$0xff] %v5045
        %5846 = vst [vmem:[%s240 + $0x10b0] sm:$0xff] %v5046
        %5847 = vst [vmem:[%s240 + $0x10b8] sm:$0xff] %v5047
        %5848 = vst [vmem:[%s240 + $0x10c0] sm:$0xff] %v5048
        %5849 = vst [vmem:[%s240 + $0x10c8] sm:$0xff] %v5049
        %5850 = vst [vmem:[%s240 + $0x10d0] sm:$0xff] %v5050
        %5851 = vst [vmem:[%s240 + $0x10d8] sm:$0xff] %v5051
        %5852 = vst [vmem:[%s240 + $0x10e0] sm:$0xff] %v5052
        %5853 = vst [vmem:[%s240 + $0x10e8] sm:$0xff] %v5053
        %5854 = vst [vmem:[%s240 + $0x10f0] sm:$0xff] %v5054
        %5855 = vst [vmem:[%s240 + $0x10f8] sm:$0xff] %v5055
        %5856 = vst [vmem:[%s240 + $0x1100] sm:$0xff] %v5056
        %5857 = vst [vmem:[%s240 + $0x1108] sm:$0xff] %v5057
        %5858 = vst [vmem:[%s240 + $0x1110] sm:$0xff] %v5058
        %5859 = vst [vmem:[%s240 + $0x1118] sm:$0xff] %v5059
        %5860 = vst [vmem:[%s240 + $0x1120] sm:$0xff] %v5060
        %5861 = vst [vmem:[%s240 + $0x1128] sm:$0xff] %v5061
        %5862 = vst [vmem:[%s240 + $0x1130] sm:$0xff] %v5062
        %5863 = vst [vmem:[%s240 + $0x1138] sm:$0xff] %v5063
        %5864 = vst [vmem:[%s240 + $0x1140] sm:$0xff] %v5064
        %5865 = vst [vmem:[%s240 + $0x1148] sm:$0xff] %v5065
        %5866 = vst [vmem:[%s240 + $0x1150] sm:$0xff] %v5066
        %5867 = vst [vmem:[%s240 + $0x1158] sm:$0xff] %v5067
        %5868 = vst [vmem:[%s240 + $0x1160] sm:$0xff] %v5068
        %5869 = vst [vmem:[%s240 + $0x1168] sm:$0xff] %v5069
        %5870 = vst [vmem:[%s240 + $0x1170] sm:$0xff] %v5070
        %5871 = vst [vmem:[%s240 + $0x1178] sm:$0xff] %v5071
        %5872 = vst [vmem:[%s240 + $0x1180] sm:$0xff] %v5072
        %5873 = vst [vmem:[%s240 + $0x1188] sm:$0xff] %v5073
        %5874 = vst [vmem:[%s240 + $0x1190] sm:$0xff] %v5074
        %5875 = vst [vmem:[%s240 + $0x1198] sm:$0xff] %v5075
        %5876 = vst [vmem:[%s240 + $0x11a0] sm:$0xff] %v5076
        %5877 = vst [vmem:[%s240 + $0x11a8] sm:$0xff] %v5077
        %5878 = vst [vmem:[%s240 + $0x11b0] sm:$0xff] %v5078
        %5879 = vst [vmem:[%s240 + $0x11b8] sm:$0xff] %v5079
        %5880 = vst [vmem:[%s240 + $0x11c0] sm:$0xff] %v5080
        %5881 = vst [vmem:[%s240 + $0x11c8] sm:$0xff] %v5081
        %5882 = vst [vmem:[%s240 + $0x11d0] sm:$0xff] %v5082
        %5883 = vst [vmem:[%s240 + $0x11d8] sm:$0xff] %v5083
        %5884 = vst [vmem:[%s240 + $0x11e0] sm:$0xff] %v5084
        %5885 = vst [vmem:[%s240 + $0x11e8] sm:$0xff] %v5085
        %5886 = vst [vmem:[%s240 + $0x11f0] sm:$0xff] %v5086
        %5887 = vst [vmem:[%s240 + $0x11f8] sm:$0xff] %v5087
        %5888 = vst [vmem:[%s240 + $0x1200] sm:$0xff] %v5088
        %5889 = vst [vmem:[%s240 + $0x1208] sm:$0xff] %v5089
        %5890 = vst [vmem:[%s240 + $0x1210] sm:$0xff] %v5090
        %5891 = vst [vmem:[%s240 + $0x1218] sm:$0xff] %v5091
        %5892 = vst [vmem:[%s240 + $0x1220] sm:$0xff] %v5092
        %5893 = vst [vmem:[%s240 + $0x1228] sm:$0xff] %v5093
        %5894 = vst [vmem:[%s240 + $0x1230] sm:$0xff] %v5094
        %5895 = vst [vmem:[%s240 + $0x1238] sm:$0xff] %v5095
        %5896 = vst [vmem:[%s240 + $0x1240] sm:$0xff] %v5096
        %5897 = vst [vmem:[%s240 + $0x1248] sm:$0xff] %v5097
        %5898 = vst [vmem:[%s240 + $0x1250] sm:$0xff] %v5098
        %5899 = vst [vmem:[%s240 + $0x1258] sm:$0xff] %v5099
        %5900 = vst [vmem:[%s240 + $0x1260] sm:$0xff] %v5100
        %5901 = vst [vmem:[%s240 + $0x1268] sm:$0xff] %v5101
        %5902 = vst [vmem:[%s240 + $0x1270] sm:$0xff] %v5102
        %5903 = vst [vmem:[%s240 + $0x1278] sm:$0xff] %v5103
        %5904 = vst [vmem:[%s240 + $0x1280] sm:$0xff] %v5104
        %5905 = vst [vmem:[%s240 + $0x1288] sm:$0xff] %v5105
        %5906 = vst [vmem:[%s240 + $0x1290] sm:$0xff] %v5106
        %5907 = vst [vmem:[%s240 + $0x1298] sm:$0xff] %v5107
        %5908 = vst [vmem:[%s240 + $0x12a0] sm:$0xff] %v5108
        %5909 = vst [vmem:[%s240 + $0x12a8] sm:$0xff] %v5109
        %5910 = vst [vmem:[%s240 + $0x12b0] sm:$0xff] %v5110
        %5911 = vst [vmem:[%s240 + $0x12b8] sm:$0xff] %v5111
        %5912 = vst [vmem:[%s240 + $0x12c0] sm:$0xff] %v5112
        %5913 = vst [vmem:[%s240 + $0x12c8] sm:$0xff] %v5113
        %5914 = vst [vmem:[%s240 + $0x12d0] sm:$0xff] %v5114
        %5915 = vst [vmem:[%s240 + $0x12d8] sm:$0xff] %v5115
        %5916 = vst [vmem:[%s240 + $0x12e0] sm:$0xff] %v5116
        %5917 = vst [vmem:[%s240 + $0x12e8] sm:$0xff] %v5117
        %5918 = vst [vmem:[%s240 + $0x12f0] sm:$0xff] %v5118
        %5919 = vst [vmem:[%s240 + $0x12f8] sm:$0xff] %v5119
        %5920 = vst [vmem:[%s240 + $0x1300] sm:$0xff] %v5120
        %5921 = vst [vmem:[%s240 + $0x1308] sm:$0xff] %v5121
        %5922 = vst [vmem:[%s240 + $0x1310] sm:$0xff] %v5122
        %5923 = vst [vmem:[%s240 + $0x1318] sm:$0xff] %v5123
        %5924 = vst [vmem:[%s240 + $0x1320] sm:$0xff] %v5124
        %5925 = vst [vmem:[%s240 + $0x1328] sm:$0xff] %v5125
        %5926 = vst [vmem:[%s240 + $0x1330] sm:$0xff] %v5126
        %5927 = vst [vmem:[%s240 + $0x1338] sm:$0xff] %v5127
        %5928 = vst [vmem:[%s240 + $0x1340] sm:$0xff] %v5128
        %5929 = vst [vmem:[%s240 + $0x1348] sm:$0xff] %v5129
        %5930 = vst [vmem:[%s240 + $0x1350] sm:$0xff] %v5130
        %5931 = vst [vmem:[%s240 + $0x1358] sm:$0xff] %v5131
        %5932 = vst [vmem:[%s240 + $0x1360] sm:$0xff] %v5132
        %5933 = vst [vmem:[%s240 + $0x1368] sm:$0xff] %v5133
        %5934 = vst [vmem:[%s240 + $0x1370] sm:$0xff] %v5134
        %5935 = vst [vmem:[%s240 + $0x1378] sm:$0xff] %v5135
        %5936 = vst [vmem:[%s240 + $0x1380] sm:$0xff] %v5136
        %5937 = vst [vmem:[%s240 + $0x1388] sm:$0xff] %v5137
        %5938 = vst [vmem:[%s240 + $0x1390] sm:$0xff] %v5138
        %5939 = vst [vmem:[%s240 + $0x1398] sm:$0xff] %v5139
        %5940 = vst [vmem:[%s240 + $0x13a0] sm:$0xff] %v5140
        %5941 = vst [vmem:[%s240 + $0x13a8] sm:$0xff] %v5141
        %5942 = vst [vmem:[%s240 + $0x13b0] sm:$0xff] %v5142
        %5943 = vst [vmem:[%s240 + $0x13b8] sm:$0xff] %v5143
        %5944 = vst [vmem:[%s240 + $0x13c0] sm:$0xff] %v5144
        %5945 = vst [vmem:[%s240 + $0x13c8] sm:$0xff] %v5145
        %5946 = vst [vmem:[%s240 + $0x13d0] sm:$0xff] %v5146
        %5947 = vst [vmem:[%s240 + $0x13d8] sm:$0xff] %v5147
        %5948 = vst [vmem:[%s240 + $0x13e0] sm:$0xff] %v5148
        %5949 = vst [vmem:[%s240 + $0x13e8] sm:$0xff] %v5149
        %5950 = vst [vmem:[%s240 + $0x13f0] sm:$0xff] %v5150
        %5951 = vst [vmem:[%s240 + $0x13f8] sm:$0xff] %v5151
        %5952 = vst [vmem:[%s240 + $0x1400] sm:$0xff] %v5152
        %5953 = vst [vmem:[%s240 + $0x1408] sm:$0xff] %v5153
        %5954 = vst [vmem:[%s240 + $0x1410] sm:$0xff] %v5154
        %5955 = vst [vmem:[%s240 + $0x1418] sm:$0xff] %v5155
        %5956 = vst [vmem:[%s240 + $0x1420] sm:$0xff] %v5156
        %5957 = vst [vmem:[%s240 + $0x1428] sm:$0xff] %v5157
        %5958 = vst [vmem:[%s240 + $0x1430] sm:$0xff] %v5158
        %5959 = vst [vmem:[%s240 + $0x1438] sm:$0xff] %v5159
        %5960 = vst [vmem:[%s240 + $0x1440] sm:$0xff] %v5160
        %5961 = vst [vmem:[%s240 + $0x1448] sm:$0xff] %v5161
        %5962 = vst [vmem:[%s240 + $0x1450] sm:$0xff] %v5162
        %5963 = vst [vmem:[%s240 + $0x1458] sm:$0xff] %v5163
        %5964 = vst [vmem:[%s240 + $0x1460] sm:$0xff] %v5164
        %5965 = vst [vmem:[%s240 + $0x1468] sm:$0xff] %v5165
        %5966 = vst [vmem:[%s240 + $0x1470] sm:$0xff] %v5166
        %5967 = vst [vmem:[%s240 + $0x1478] sm:$0xff] %v5167
        %5968 = vst [vmem:[%s240 + $0x1480] sm:$0xff] %v5168
        %5969 = vst [vmem:[%s240 + $0x1488] sm:$0xff] %v5169
        %5970 = vst [vmem:[%s240 + $0x1490] sm:$0xff] %v5170
        %5971 = vst [vmem:[%s240 + $0x1498] sm:$0xff] %v5171
        %5972 = vst [vmem:[%s240 + $0x14a0] sm:$0xff] %v5172
        %5973 = vst [vmem:[%s240 + $0x14a8] sm:$0xff] %v5173
        %5974 = vst [vmem:[%s240 + $0x14b0] sm:$0xff] %v5174
        %5975 = vst [vmem:[%s240 + $0x14b8] sm:$0xff] %v5175
        %5976 = vst [vmem:[%s240 + $0x14c0] sm:$0xff] %v5176
        %5977 = vst [vmem:[%s240 + $0x14c8] sm:$0xff] %v5177
        %5978 = vst [vmem:[%s240 + $0x14d0] sm:$0xff] %v5178
        %5979 = vst [vmem:[%s240 + $0x14d8] sm:$0xff] %v5179
        %5980 = vst [vmem:[%s240 + $0x14e0] sm:$0xff] %v5180
        %5981 = vst [vmem:[%s240 + $0x14e8] sm:$0xff] %v5181
        %5982 = vst [vmem:[%s240 + $0x14f0] sm:$0xff] %v5182
        %5983 = vst [vmem:[%s240 + $0x14f8] sm:$0xff] %v5183
        %5984 = vst [vmem:[%s240 + $0x1500] sm:$0xff] %v5184
        %5985 = vst [vmem:[%s240 + $0x1508] sm:$0xff] %v5185
        %5986 = vst [vmem:[%s240 + $0x1510] sm:$0xff] %v5186
        %5987 = vst [vmem:[%s240 + $0x1518] sm:$0xff] %v5187
        %5988 = vst [vmem:[%s240 + $0x1520] sm:$0xff] %v5188
        %5989 = vst [vmem:[%s240 + $0x1528] sm:$0xff] %v5189
        %5990 = vst [vmem:[%s240 + $0x1530] sm:$0xff] %v5190
        %5991 = vst [vmem:[%s240 + $0x1538] sm:$0xff] %v5191
        %5992 = vst [vmem:[%s240 + $0x1540] sm:$0xff] %v5192
        %5993 = vst [vmem:[%s240 + $0x1548] sm:$0xff] %v5193
        %5994 = vst [vmem:[%s240 + $0x1550] sm:$0xff] %v5194
        %5995 = vst [vmem:[%s240 + $0x1558] sm:$0xff] %v5195
        %5996 = vst [vmem:[%s240 + $0x1560] sm:$0xff] %v5196
        %5997 = vst [vmem:[%s240 + $0x1568] sm:$0xff] %v5197
        %5998 = vst [vmem:[%s240 + $0x1570] sm:$0xff] %v5198
        %5999 = vst [vmem:[%s240 + $0x1578] sm:$0xff] %v5199
        %6000 = vst [vmem:[%s240 + $0x1580] sm:$0xff] %v5200
        %6001 = vst [vmem:[%s240 + $0x1588] sm:$0xff] %v5201
        %6002 = vst [vmem:[%s240 + $0x1590] sm:$0xff] %v5202
        %6003 = vst [vmem:[%s240 + $0x1598] sm:$0xff] %v5203
        %6004 = vst [vmem:[%s240 + $0x15a0] sm:$0xff] %v5204
        %6005 = vst [vmem:[%s240 + $0x15a8] sm:$0xff] %v5205
        %6006 = vst [vmem:[%s240 + $0x15b0] sm:$0xff] %v5206
        %6007 = vst [vmem:[%s240 + $0x15b8] sm:$0xff] %v5207
        %6008 = vst [vmem:[%s240 + $0x15c0] sm:$0xff] %v5208
        %6009 = vst [vmem:[%s240 + $0x15c8] sm:$0xff] %v5209
        %6010 = vst [vmem:[%s240 + $0x15d0] sm:$0xff] %v5210
        %6011 = vst [vmem:[%s240 + $0x15d8] sm:$0xff] %v5211
        %6012 = vst [vmem:[%s240 + $0x15e0] sm:$0xff] %v5212
        %6013 = vst [vmem:[%s240 + $0x15e8] sm:$0xff] %v5213
        %6014 = vst [vmem:[%s240 + $0x15f0] sm:$0xff] %v5214
        %6015 = vst [vmem:[%s240 + $0x15f8] sm:$0xff] %v5215
        %6016 = vst [vmem:[%s240 + $0x1600] sm:$0xff] %v5216
        %6017 = vst [vmem:[%s240 + $0x1608] sm:$0xff] %v5217
        %6018 = vst [vmem:[%s240 + $0x1610] sm:$0xff] %v5218
        %6019 = vst [vmem:[%s240 + $0x1618] sm:$0xff] %v5219
        %6020 = vst [vmem:[%s240 + $0x1620] sm:$0xff] %v5220
        %6021 = vst [vmem:[%s240 + $0x1628] sm:$0xff] %v5221
        %6022 = vst [vmem:[%s240 + $0x1630] sm:$0xff] %v5222
        %6023 = vst [vmem:[%s240 + $0x1638] sm:$0xff] %v5223
        %6024 = vst [vmem:[%s240 + $0x1640] sm:$0xff] %v5224
        %6025 = vst [vmem:[%s240 + $0x1648] sm:$0xff] %v5225
        %6026 = vst [vmem:[%s240 + $0x1650] sm:$0xff] %v5226
        %6027 = vst [vmem:[%s240 + $0x1658] sm:$0xff] %v5227
        %6028 = vst [vmem:[%s240 + $0x1660] sm:$0xff] %v5228
        %6029 = vst [vmem:[%s240 + $0x1668] sm:$0xff] %v5229
        %6030 = vst [vmem:[%s240 + $0x1670] sm:$0xff] %v5230
        %6031 = vst [vmem:[%s240 + $0x1678] sm:$0xff] %v5231
        %6032 = vst [vmem:[%s240 + $0x1680] sm:$0xff] %v5232
        %6033 = vst [vmem:[%s240 + $0x1688] sm:$0xff] %v5233
        %6034 = vst [vmem:[%s240 + $0x1690] sm:$0xff] %v5234
        %6035 = vst [vmem:[%s240 + $0x1698] sm:$0xff] %v5235
        %6036 = vst [vmem:[%s240 + $0x16a0] sm:$0xff] %v5236
        %6037 = vst [vmem:[%s240 + $0x16a8] sm:$0xff] %v5237
        %6038 = vst [vmem:[%s240 + $0x16b0] sm:$0xff] %v5238
        %6039 = vst [vmem:[%s240 + $0x16b8] sm:$0xff] %v5239
        %6040 = vst [vmem:[%s240 + $0x16c0] sm:$0xff] %v5240
        %6041 = vst [vmem:[%s240 + $0x16c8] sm:$0xff] %v5241
        %6042 = vst [vmem:[%s240 + $0x16d0] sm:$0xff] %v5242
        %6043 = vst [vmem:[%s240 + $0x16d8] sm:$0xff] %v5243
        %6044 = vst [vmem:[%s240 + $0x16e0] sm:$0xff] %v5244
        %6045 = vst [vmem:[%s240 + $0x16e8] sm:$0xff] %v5245
        %6046 = vst [vmem:[%s240 + $0x16f0] sm:$0xff] %v5246
        %6047 = vst [vmem:[%s240 + $0x16f8] sm:$0xff] %v5247
        %6048 = vst [vmem:[%s240 + $0x1700] sm:$0xff] %v5248
        %6049 = vst [vmem:[%s240 + $0x1708] sm:$0xff] %v5249
        %6050 = vst [vmem:[%s240 + $0x1710] sm:$0xff] %v5250
        %6051 = vst [vmem:[%s240 + $0x1718] sm:$0xff] %v5251
        %6052 = vst [vmem:[%s240 + $0x1720] sm:$0xff] %v5252
        %6053 = vst [vmem:[%s240 + $0x1728] sm:$0xff] %v5253
        %6054 = vst [vmem:[%s240 + $0x1730] sm:$0xff] %v5254
        %6055 = vst [vmem:[%s240 + $0x1738] sm:$0xff] %v5255
        %6056 = vst [vmem:[%s240 + $0x1740] sm:$0xff] %v5256
        %6057 = vst [vmem:[%s240 + $0x1748] sm:$0xff] %v5257
        %6058 = vst [vmem:[%s240 + $0x1750] sm:$0xff] %v5258
        %6059 = vst [vmem:[%s240 + $0x1758] sm:$0xff] %v5259
        %6060 = vst [vmem:[%s240 + $0x1760] sm:$0xff] %v5260
        %6061 = vst [vmem:[%s240 + $0x1768] sm:$0xff] %v5261
        %6062 = vst [vmem:[%s240 + $0x1770] sm:$0xff] %v5262
        %6063 = vst [vmem:[%s240 + $0x1778] sm:$0xff] %v5263
        %6064 = vst [vmem:[%s240 + $0x1780] sm:$0xff] %v5264
        %6065 = vst [vmem:[%s240 + $0x1788] sm:$0xff] %v5265
        %6066 = vst [vmem:[%s240 + $0x1790] sm:$0xff] %v5266
        %6067 = vst [vmem:[%s240 + $0x1798] sm:$0xff] %v5267
        %6068 = vst [vmem:[%s240 + $0x17a0] sm:$0xff] %v5268
        %6069 = vst [vmem:[%s240 + $0x17a8] sm:$0xff] %v5269
        %6070 = vst [vmem:[%s240 + $0x17b0] sm:$0xff] %v5270
        %6071 = vst [vmem:[%s240 + $0x17b8] sm:$0xff] %v5271
        %6072 = vst [vmem:[%s240 + $0x17c0] sm:$0xff] %v5272
        %6073 = vst [vmem:[%s240 + $0x17c8] sm:$0xff] %v5273
        %6074 = vst [vmem:[%s240 + $0x17d0] sm:$0xff] %v5274
        %6075 = vst [vmem:[%s240 + $0x17d8] sm:$0xff] %v5275
        %6076 = vst [vmem:[%s240 + $0x17e0] sm:$0xff] %v5276
        %6077 = vst [vmem:[%s240 + $0x17e8] sm:$0xff] %v5277
        %6078 = vst [vmem:[%s240 + $0x17f0] sm:$0xff] %v5278
        %6079 = vst [vmem:[%s240 + $0x17f8] sm:$0xff] %v5279
        %6080 = vst [vmem:[%s240 + $0x1800] sm:$0xff] %v5280
        %6081 = vst [vmem:[%s240 + $0x1808] sm:$0xff] %v5281
        %6082 = vst [vmem:[%s240 + $0x1810] sm:$0xff] %v5282
        %6083 = vst [vmem:[%s240 + $0x1818] sm:$0xff] %v5283
        %6084 = vst [vmem:[%s240 + $0x1820] sm:$0xff] %v5284
        %6085 = vst [vmem:[%s240 + $0x1828] sm:$0xff] %v5285
        %6086 = vst [vmem:[%s240 + $0x1830] sm:$0xff] %v5286
        %6087 = vst [vmem:[%s240 + $0x1838] sm:$0xff] %v5287
        %6088 = vst [vmem:[%s240 + $0x1840] sm:$0xff] %v5288
        %6089 = vst [vmem:[%s240 + $0x1848] sm:$0xff] %v5289
        %6090 = vst [vmem:[%s240 + $0x1850] sm:$0xff] %v5290
        %6091 = vst [vmem:[%s240 + $0x1858] sm:$0xff] %v5291
        %6092 = vst [vmem:[%s240 + $0x1860] sm:$0xff] %v5292
        %6093 = vst [vmem:[%s240 + $0x1868] sm:$0xff] %v5293
        %6094 = vst [vmem:[%s240 + $0x1870] sm:$0xff] %v5294
        %6095 = vst [vmem:[%s240 + $0x1878] sm:$0xff] %v5295
        %6096 = vst [vmem:[%s240 + $0x1880] sm:$0xff] %v5296
        %6097 = vst [vmem:[%s240 + $0x1888] sm:$0xff] %v5297
        %6098 = vst [vmem:[%s240 + $0x1890] sm:$0xff] %v5298
        %6099 = vst [vmem:[%s240 + $0x1898] sm:$0xff] %v5299
        %6100 = vst [vmem:[%s240 + $0x18a0] sm:$0xff] %v5300
        %6101 = vst [vmem:[%s240 + $0x18a8] sm:$0xff] %v5301
        %6102 = vst [vmem:[%s240 + $0x18b0] sm:$0xff] %v5302
        %6103 = vst [vmem:[%s240 + $0x18b8] sm:$0xff] %v5303
        %6104 = vst [vmem:[%s240 + $0x18c0] sm:$0xff] %v5304
        %6105 = vst [vmem:[%s240 + $0x18c8] sm:$0xff] %v5305
        %6106 = vst [vmem:[%s240 + $0x18d0] sm:$0xff] %v5306
        %6107 = vst [vmem:[%s240 + $0x18d8] sm:$0xff] %v5307
        %6108 = vst [vmem:[%s240 + $0x18e0] sm:$0xff] %v5308
        %6109 = vst [vmem:[%s240 + $0x18e8] sm:$0xff] %v5309
        %6110 = vst [vmem:[%s240 + $0x18f0] sm:$0xff] %v5310
        %6111 = vst [vmem:[%s240 + $0x18f8] sm:$0xff] %v5311
        %s6112 = sand.u32 %s102, 1
        %s6113 = scalar_lea.sflag [#allocation4], %s6112
        %s6114 = sand.u32 %s102, 1
        %s6115 = smul.addr %s6114, 6400
        %s6116 = scalar_lea.vmem [#allocation8], %s6115
        // Predicated region
        $region45: #{tpu_custom_call.1} parent=31 // pred_check
          %p6117 = pneg %p112
        $region46: #{tpu_custom_call.1} parent=31 // pred_check_branch
          %6119 = sbr.rel (%p6117) target = $region48
        $region47: #{tpu_custom_call.1} parent=31 // pred_region
          %s6120 = smul.u32 4, %s21
          %s6122 = ssub.s32 102400, 102400
          %6123 = vsyncadd %s6113, %s6122
          %s6124 = smul.addr %s6120, 200
          %s6125 = smul.addr %s6124, 128
          %s6126 = scalar_lea.hbm %s3, %s6125
          %s6127 = sshll.u32 %s6116, 4
          %s6128 = int_to_ptr.vmem [resolvable:$true] %s6127
          %6133 = dma.vmem_to_hbm [thread:$0]  %s6128, 102400, %s6126, %s6113, 640, 640, 40
        $region48: #{tpu_custom_call.1} parent=31 // pred_fallthru
          _
      $region32: #{tpu_custom_call.1} parent=5 // pred_fallthru
        _
      %p6134 = scmp.le.s32.totalorder 2, %s16
      // Predicated region
      $region49: #{tpu_custom_call.1} parent=5 // pred_check
        %p6135 = pneg %p6134
      $region50: #{tpu_custom_call.1} parent=5 // pred_check_branch
        %6137 = sbr.rel (%p6135) target = $region52
      $region51: #{tpu_custom_call.1} parent=5 // pred_region
        %s6138 = ssub.s32 %s16, 2
        // Predicated region
        $region53: #{tpu_custom_call.1} parent=51 // pred_check
          %p6139 = pneg %p118
        $region54: #{tpu_custom_call.1} parent=51 // pred_check_branch
          %6141 = sbr.rel (%p6139) target = $region56
        $region55: #{tpu_custom_call.1} parent=51 // pred_region
          %s6142 = sand.u32 %s103, 1
          %s6143 = scalar_lea.sflag [#allocation4], %s6142
          %s6144 = sand.u32 %s103, 1
          %s6145 = smul.addr %s6144, 6400
          %s6146 = scalar_lea.vmem [#allocation8], %s6145
          %6147 = dma.done %s6143, 102400
        $region56: #{tpu_custom_call.1} parent=51 // pred_fallthru
          _
      $region52: #{tpu_custom_call.1} parent=5 // pred_fallthru
        _
    $region6: #{tpu_custom_call.1} parent=1 // loop_footer
      %s20 = sadd.s32 1, %s16
    $region7: #{tpu_custom_call.1} parent=1 // loop_footer_branch
      %15 = sbr.rel target = $region3
    $region8: #{tpu_custom_call.1} parent=1 // loop_exit
      _
    %6148 = vsyncpa [#allocation3], 1
    %s6149 = scalar_lea.sflag [#allocation3], 1
    %6150 = vsyncpa %s6149, 1
    %6151 = vsyncpa [#allocation6], 1
    %s6152 = scalar_lea.sflag [#allocation6], 1
    %6153 = vsyncpa %s6152, 1
    %6154 = vsyncpa [#allocation4], 1
    %s6155 = scalar_lea.sflag [#allocation4], 1
    %6156 = vsyncpa %s6155, 1

</llo_original>
